<compile_context>
chip_gen: v7x
topology: tpu7x:2x2x1
jax: 0.10.0
libtpu: 0.0.40
codegen_flags: <defaults>
</compile_context>

<pallas_src>
import functools

import jax
import jax.numpy as jnp
from jax import lax
from jax.experimental import pallas as pl
from jax.experimental.pallas import tpu as pltpu

INPUT_SIZE = 66
PADDED_INPUT = 128          # lane-dense K for the hoisted gate matmul
HIDDEN = 256
FC1_OUT = 50
NUM_CLASSES = 3

# Set to jnp.bfloat16 on v6e/v7x for ~2x MXU throughput (accumulation stays f32).
MATMUL_DTYPE = jnp.float32


# --------------------------------------------------------------------------
# Fused kernel: biLSTM recurrence + fc1 -> relu -> fc2 -> log_softmax
# --------------------------------------------------------------------------
def lstm_fc_kernel(x_ref,       # (T*B, Dp)  time-major rows: [t0b0, t0b1, t1b0, ...]
                   wih_ref,     # (Dp, 8H)   [fwd gates | bwd gates], rows >= D are zero
                   whh_ref,     # (2, H, 4H) hidden->gate weights (pre-transposed)
                   b_ref,       # (1, 8H)    (b_ih + b_hh) for fwd ++ bwd
                   w1_ref,      # (2H, F1)
                   b1_ref,      # (1, F1)
                   w2_ref,      # (F1, C)
                   b2_ref,      # (1, C)
                   out_ref,     # (B, C)
                   xgf_ref,     # VMEM scratch (T*B, 4H)  forward precomputed gates
                   xgb_ref):    # VMEM scratch (T*B, 4H)  backward precomputed gates
    B = out_ref.shape[0]
    TB, _ = x_ref.shape
    T = TB // B
    H = whh_ref.shape[1]
    G = 4 * H

    def mm(a, w):
        return jnp.dot(a.astype(MATMUL_DTYPE), w.astype(MATMUL_DTYPE),
                       preferred_element_type=jnp.float32)

    # (1) Hoisted input->gate matmul for BOTH directions in one MXU pass,
    #     bias folded in once (removes the per-step bias broadcast+add).
    xg = mm(x_ref[...], wih_ref[...]) + b_ref[...]     # (T*B, 8H)
    xgf_ref[...] = xg[:, :G]
    xgb_ref[...] = xg[:, G:]

    whh_f = whh_ref[0]    # (H, 4H)
    whh_b = whh_ref[1]    # (H, 4H)

    def cell(pre, c):
        # PyTorch gate order: i, f, g, o  (all slices lane-aligned, multiples of H)
        i_g = jax.nn.sigmoid(pre[:, 0 * H:1 * H])
        f_g = jax.nn.sigmoid(pre[:, 1 * H:2 * H])
        g_g = jnp.tanh(pre[:, 2 * H:3 * H])
        o_g = jax.nn.sigmoid(pre[:, 3 * H:4 * H])
        c_new = f_g * c + i_g * g_g
        h_new = o_g * jnp.tanh(c_new)
        return h_new, c_new

    # (2) Both directions fused into a single recurrence loop: two independent
    #     matmul -> EUP -> VPU chains per iteration hide each other's latency.
    def step(t, carry):
        h_f, c_f, h_b, c_b = carry
        pre_f = xgf_ref[pl.ds(t * B, B), :] + mm(h_f, whh_f)
        pre_b = xgb_ref[pl.ds((T - 1 - t) * B, B), :] + mm(h_b, whh_b)
        h_f, c_f = cell(pre_f, c_f)
        h_b, c_b = cell(pre_b, c_b)
        return h_f, c_f, h_b, c_b

    z0 = jnp.zeros((B, H), jnp.float32)
    h_f, _, h_b, _ = lax.fori_loop(0, T, step, (z0, z0, z0, z0), unroll=True)

    # (3) Reproduce PyTorch's `h.view(B, 2H)` raw row-major reinterpretation of
    #     h_n = (2, B, H) exactly, using static slices + concats (no relayout-heavy
    #     reshape in-kernel). Flat chunk k = d*B + b; h_hat row r = chunks 2r, 2r+1.
    hs = (h_f, h_b)
    chunks = [hs[d][b:b + 1, :] for d in range(2) for b in range(B)]   # each (1, H)
    h_hat = jnp.concatenate(
        [jnp.concatenate(chunks[2 * r:2 * r + 2], axis=1) for r in range(B)],
        axis=0)                                                        # (B, 2H)

    # (4) Fused fc head: fc1 -> relu -> fc2 -> log_softmax (stabilized).
    z1 = jnp.maximum(mm(h_hat, w1_ref[...]) + b1_ref[...], 0.0)
    z2 = mm(z1, w2_ref[...]) + b2_ref[...]                             # (B, C)
    m = jnp.max(z2, axis=-1, keepdims=True)
    lse = jnp.log(jnp.sum(jnp.exp(z2 - m), axis=-1, keepdims=True)) + m
    out_ref[...] = z2 - lse


# --------------------------------------------------------------------------
# Wrapper
# --------------------------------------------------------------------------
@jax.jit
def model_lstm_fc(x, kp):
    """Forward pass matching Model_LstmFc.forward. x: (B, T, 66) float32."""
    B, T, D = x.shape
    DP = kp["w_ih_cat"].shape[0]
    H = kp["w_hh"].shape[1]

    # Time-major + zero-pad features to the 128-lane boundary. Trivial at these
    # sizes; at production sequence lengths keep x in HBM (memory_space=pl.ANY)
    # and pipeline per-timestep DMAs instead of staging the whole slab in VMEM.
    x2d = jnp.transpose(x, (1, 0, 2)).reshape(T * B, D)
    x2d = jnp.pad(x2d, ((0, 0), (0, DP - D)))

    return pl.pallas_call(
        lstm_fc_kernel,
        out_shape=jax.ShapeDtypeStruct((B, NUM_CLASSES), jnp.float32),
        in_specs=[pl.BlockSpec(memory_space=pltpu.MemorySpace.VMEM)] * 8,
        out_specs=pl.BlockSpec(memory_space=pltpu.MemorySpace.VMEM),
        scratch_shapes=[pltpu.VMEM((T * B, 4 * H), jnp.float32),
                        pltpu.VMEM((T * B, 4 * H), jnp.float32)],
    )(x2d, kp["w_ih_cat"], kp["w_hh"], kp["b_cat"],
      kp["fc1_w"], kp["fc1_b"], kp["fc2_w"], kp["fc2_b"])


# --------------------------------------------------------------------------
# Parameters: raw (torch-equivalent) + kernel-ready packing
# --------------------------------------------------------------------------
def init_params(key):
    ks = jax.random.split(key, 10)
    H, D = HIDDEN, INPUT_SIZE
    s_lstm = 1.0 / jnp.sqrt(H)
    s_fc1 = 1.0 / jnp.sqrt(2 * H)
    s_fc2 = 1.0 / jnp.sqrt(FC1_OUT)
    u = lambda k, shape, s: jax.random.uniform(k, shape, jnp.float32, -s, s)
    # LSTM weights stored pre-transposed: (dir, in, 4H) / (dir, H, 4H).
    w_ih = u(ks[0], (2, D, 4 * H), s_lstm)
    w_hh = u(ks[1], (2, H, 4 * H), s_lstm)
    b_lstm = u(ks[2], (2, 1, 4 * H), s_lstm) + u(ks[3], (2, 1, 4 * H), s_lstm)  # b_ih + b_hh
    fc1_w = u(ks[4], (2 * H, FC1_OUT), s_fc1)   # torch Linear weight (50,512) transposed
    fc1_b = u(ks[5], (1, FC1_OUT), s_fc1)
    fc2_w = u(ks[6], (FC1_OUT, NUM_CLASSES), s_fc2)
    fc2_b = u(ks[7], (1, NUM_CLASSES), s_fc2)
    return dict(w_ih=w_ih, w_hh=w_hh, b_lstm=b_lstm,
                fc1_w=fc1_w, fc1_b=fc1_b, fc2_w=fc2_w, fc2_b=fc2_b)


def pack_params(p, d_pad=PADDED_INPUT):
    """Pack raw params into kernel layout: pad K to 128, concat both directions."""
    w_ih = p["w_ih"]                                            # (2, D, 4H)
    D = w_ih.shape[1]
    w_ih = jnp.pad(w_ih, ((0, 0), (0, d_pad - D), (0, 0)))       # zero rows for pad lanes
    w_ih_cat = jnp.concatenate([w_ih[0], w_ih[1]], axis=-1)      # (Dp, 8H)
    b_cat = jnp.concatenate([p["b_lstm"][0], p["b_lstm"][1]], axis=-1)  # (1, 8H)
    return dict(w_ih_cat=w_ih_cat, w_hh=p["w_hh"], b_cat=b_cat,
                fc1_w=p["fc1_w"], fc1_b=p["fc1_b"],
                fc2_w=p["fc2_w"], fc2_b=p["fc2_b"])


# --------------------------------------------------------------------------
# Pure-JAX reference (same math) for a correctness check.
# --------------------------------------------------------------------------
def reference_forward(x, params):
    B, T, D = x.shape
    H = HIDDEN
    hs = []
    for d in range(2):
        w_ih = params["w_ih"][d]
        w_hh = params["w_hh"][d]
        bias = params["b_lstm"][d]
        h = jnp.zeros((B, H), jnp.float32)
        c = jnp.zeros((B, H), jnp.float32)
        order = range(T) if d == 0 else range(T - 1, -1, -1)
        for t in order:
            gates = x[:, t, :] @ w_ih + h @ w_hh + bias
            i_g = jax.nn.sigmoid(gates[:, 0 * H:1 * H])
            f_g = jax.nn.sigmoid(gates[:, 1 * H:2 * H])
            g_g = jnp.tanh(gates[:, 2 * H:3 * H])
            o_g = jax.nn.sigmoid(gates[:, 3 * H:4 * H])
            c = f_g * c + i_g * g_g
            h = o_g * jnp.tanh(c)
        hs.append(h)
    h_n = jnp.stack(hs, axis=0)
    # Reproduces torch's `h.view(h.shape[1], h.shape[0]*h.shape[2])` reinterpretation.
    h_hat = h_n.reshape(B, 2 * H)
    z1 = jnp.maximum(h_hat @ params["fc1_w"] + params["fc1_b"], 0.0)
    z2 = z1 @ params["fc2_w"] + params["fc2_b"]
    return jax.nn.log_softmax(z2, axis=-1)


if __name__ == "__main__":
    key = jax.random.PRNGKey(0)
    k_x, k_p = jax.random.split(key)

    B, T = 2, 8
    x = jax.random.normal(k_x, (B, T, INPUT_SIZE), jnp.float32)
    params = init_params(k_p)
    kparams = pack_params(params)

    out = model_lstm_fc(x, kparams)
    out = jax.block_until_ready(out)

    ref = reference_forward(x, params)
    assert out.shape == (B, NUM_CLASSES)
    assert bool(jnp.all(jnp.isfinite(out)))
    assert bool(jnp.allclose(out, ref, atol=1e-3, rtol=1e-3)), (out, ref)

    print("KERNEL_OK")
</pallas_src>

<mosaic_0001>
module attributes {stable_mosaic.version = 11 : i64} {
  func.func @lstm_fc_kernel(%arg0: memref<16x128xf32, #tpu.memory_space<vmem>>, %arg1: memref<128x2048xf32, #tpu.memory_space<vmem>>, %arg2: memref<2x256x1024xf32, #tpu.memory_space<vmem>>, %arg3: memref<1x2048xf32, #tpu.memory_space<vmem>>, %arg4: memref<512x50xf32, #tpu.memory_space<vmem>>, %arg5: memref<1x50xf32, #tpu.memory_space<vmem>>, %arg6: memref<50x3xf32, #tpu.memory_space<vmem>>, %arg7: memref<1x3xf32, #tpu.memory_space<vmem>>, %arg8: memref<2x3xf32, #tpu.memory_space<vmem>>, %arg9: memref<16x1024xf32, #tpu.memory_space<vmem>>, %arg10: memref<16x1024xf32, #tpu.memory_space<vmem>>) attributes {dimension_semantics = [], scalar_prefetch = 0 : i64, scratch_operands = 2 : i64, tpu.core_type = #tpu.core_type<tc>} {
    %c0 = arith.constant 0 : index
    %c0_0 = arith.constant 0 : index
    %0 = vector.load %arg0[%c0, %c0_0] : memref<16x128xf32, #tpu.memory_space<vmem>>, vector<16x128xf32>
    %c0_1 = arith.constant 0 : index
    %c0_2 = arith.constant 0 : index
    %1 = vector.load %arg1[%c0_1, %c0_2] : memref<128x2048xf32, #tpu.memory_space<vmem>>, vector<128x2048xf32>
    %cst = arith.constant dense<0.000000e+00> : vector<16x2048xf32>
    %2 = tpu.matmul %0, %1, %cst {dimension_numbers = #tpu.dot_dimension_numbers<[1], [0], [0], [1], [0, 0, 1, 1], [], []>} : vector<16x128xf32>, vector<128x2048xf32>, vector<16x2048xf32> -> vector<16x2048xf32>
    %c0_3 = arith.constant 0 : index
    %c0_4 = arith.constant 0 : index
    %3 = vector.load %arg3[%c0_3, %c0_4] : memref<1x2048xf32, #tpu.memory_space<vmem>>, vector<1x2048xf32>
    %4 = vector.broadcast %3 : vector<1x2048xf32> to vector<16x2048xf32>
    %5 = arith.addf %2, %4 : vector<16x2048xf32>
    %6 = vector.extract_strided_slice %5 {offsets = [0, 0], sizes = [16, 1024], strides = [1, 1]} : vector<16x2048xf32> to vector<16x1024xf32>
    %c0_5 = arith.constant 0 : index
    %c0_6 = arith.constant 0 : index
    %7 = vector.load %arg9[%c0_5, %c0_6] : memref<16x1024xf32, #tpu.memory_space<vmem>>, vector<16x1024xf32>
    tpu.vector_store %arg9[%c0_5, %c0_6], %6 {strides = array<i32>} : memref<16x1024xf32, #tpu.memory_space<vmem>>, vector<16x1024xf32>,
    %8 = vector.extract_strided_slice %5 {offsets = [0, 1024], sizes = [16, 1024], strides = [1, 1]} : vector<16x2048xf32> to vector<16x1024xf32>
    %c0_7 = arith.constant 0 : index
    %c0_8 = arith.constant 0 : index
    %9 = vector.load %arg10[%c0_7, %c0_8] : memref<16x1024xf32, #tpu.memory_space<vmem>>, vector<16x1024xf32>
    tpu.vector_store %arg10[%c0_7, %c0_8], %8 {strides = array<i32>} : memref<16x1024xf32, #tpu.memory_space<vmem>>, vector<16x1024xf32>,
    %c0_9 = arith.constant 0 : index
    %c0_10 = arith.constant 0 : index
    %c0_11 = arith.constant 0 : index
    %10 = vector.load %arg2[%c0_9, %c0_10, %c0_11] : memref<2x256x1024xf32, #tpu.memory_space<vmem>>, vector<1x256x1024xf32>
    %11 = vector.shape_cast %10 : vector<1x256x1024xf32> to vector<256x1024xf32>
    %c1 = arith.constant 1 : index
    %c0_12 = arith.constant 0 : index
    %c0_13 = arith.constant 0 : index
    %12 = vector.load %arg2[%c1, %c0_12, %c0_13] : memref<2x256x1024xf32, #tpu.memory_space<vmem>>, vector<1x256x1024xf32>
    %13 = vector.shape_cast %12 : vector<1x256x1024xf32> to vector<256x1024xf32>
    %cst_14 = arith.constant 0.000000e+00 : f32
    %14 = vector.broadcast %cst_14 : f32 to vector<2x256xf32>
    %c0_i32 = arith.constant 0 : i32
    %c2_i32 = arith.constant 2 : i32
    %15 = arith.muli %c0_i32, %c2_i32 : i32
    %16 = arith.index_cast %15 : i32 to index
    %c0_15 = arith.constant 0 : index
    %17 = vector.load %arg9[%16, %c0_15] : memref<16x1024xf32, #tpu.memory_space<vmem>>, vector<2x1024xf32>
    %cst_16 = arith.constant dense<0.000000e+00> : vector<2x1024xf32>
    %18 = tpu.matmul %14, %11, %cst_16 {dimension_numbers = #tpu.dot_dimension_numbers<[1], [0], [0], [1], [0, 0, 1, 1], [], []>} : vector<2x256xf32>, vector<256x1024xf32>, vector<2x1024xf32> -> vector<2x1024xf32>
    %19 = arith.addf %17, %18 : vector<2x1024xf32>
    %c7_i32 = arith.constant 7 : i32
    %20 = arith.subi %c7_i32, %c0_i32 : i32
    %c2_i32_17 = arith.constant 2 : i32
    %21 = arith.muli %20, %c2_i32_17 : i32
    %22 = arith.index_cast %21 : i32 to index
    %c0_18 = arith.constant 0 : index
    %23 = vector.load %arg10[%22, %c0_18] : memref<16x1024xf32, #tpu.memory_space<vmem>>, vector<2x1024xf32>
    %cst_19 = arith.constant dense<0.000000e+00> : vector<2x1024xf32>
    %24 = tpu.matmul %14, %13, %cst_19 {dimension_numbers = #tpu.dot_dimension_numbers<[1], [0], [0], [1], [0, 0, 1, 1], [], []>} : vector<2x256xf32>, vector<256x1024xf32>, vector<2x1024xf32> -> vector<2x1024xf32>
    %25 = arith.addf %23, %24 : vector<2x1024xf32>
    %26 = vector.extract_strided_slice %19 {offsets = [0, 0], sizes = [2, 256], strides = [1, 1]} : vector<2x1024xf32> to vector<2x256xf32>
    %27 = arith.negf %26 : vector<2x256xf32>
    %28 = math.exp %27 : vector<2x256xf32>
    %cst_20 = arith.constant 1.000000e+00 : f32
    %29 = vector.broadcast %cst_20 : f32 to vector<2x256xf32>
    %30 = arith.addf %29, %28 : vector<2x256xf32>
    %31 = arith.divf %29, %30 : vector<2x256xf32>
    %32 = vector.extract_strided_slice %19 {offsets = [0, 256], sizes = [2, 256], strides = [1, 1]} : vector<2x1024xf32> to vector<2x256xf32>
    %33 = arith.negf %32 : vector<2x256xf32>
    %34 = math.exp %33 : vector<2x256xf32>
    %cst_21 = arith.constant 1.000000e+00 : f32
    %35 = vector.broadcast %cst_21 : f32 to vector<2x256xf32>
    %36 = arith.addf %35, %34 : vector<2x256xf32>
    %37 = arith.divf %35, %36 : vector<2x256xf32>
    %38 = vector.extract_strided_slice %19 {offsets = [0, 512], sizes = [2, 256], strides = [1, 1]} : vector<2x1024xf32> to vector<2x256xf32>
    %39 = math.tanh %38 : vector<2x256xf32>
    %40 = vector.extract_strided_slice %19 {offsets = [0, 768], sizes = [2, 256], strides = [1, 1]} : vector<2x1024xf32> to vector<2x256xf32>
    %41 = arith.negf %40 : vector<2x256xf32>
    %42 = math.exp %41 : vector<2x256xf32>
    %cst_22 = arith.constant 1.000000e+00 : f32
    %43 = vector.broadcast %cst_22 : f32 to vector<2x256xf32>
    %44 = arith.addf %43, %42 : vector<2x256xf32>
    %45 = arith.divf %43, %44 : vector<2x256xf32>
    %46 = arith.mulf %37, %14 : vector<2x256xf32>
    %47 = arith.mulf %31, %39 : vector<2x256xf32>
    %48 = arith.addf %46, %47 : vector<2x256xf32>
    %49 = math.tanh %48 : vector<2x256xf32>
    %50 = arith.mulf %45, %49 : vector<2x256xf32>
    %51 = vector.extract_strided_slice %25 {offsets = [0, 0], sizes = [2, 256], strides = [1, 1]} : vector<2x1024xf32> to vector<2x256xf32>
    %52 = arith.negf %51 : vector<2x256xf32>
    %53 = math.exp %52 : vector<2x256xf32>
    %cst_23 = arith.constant 1.000000e+00 : f32
    %54 = vector.broadcast %cst_23 : f32 to vector<2x256xf32>
    %55 = arith.addf %54, %53 : vector<2x256xf32>
    %56 = arith.divf %54, %55 : vector<2x256xf32>
    %57 = vector.extract_strided_slice %25 {offsets = [0, 256], sizes = [2, 256], strides = [1, 1]} : vector<2x1024xf32> to vector<2x256xf32>
    %58 = arith.negf %57 : vector<2x256xf32>
    %59 = math.exp %58 : vector<2x256xf32>
    %cst_24 = arith.constant 1.000000e+00 : f32
    %60 = vector.broadcast %cst_24 : f32 to vector<2x256xf32>
    %61 = arith.addf %60, %59 : vector<2x256xf32>
    %62 = arith.divf %60, %61 : vector<2x256xf32>
    %63 = vector.extract_strided_slice %25 {offsets = [0, 512], sizes = [2, 256], strides = [1, 1]} : vector<2x1024xf32> to vector<2x256xf32>
    %64 = math.tanh %63 : vector<2x256xf32>
    %65 = vector.extract_strided_slice %25 {offsets = [0, 768], sizes = [2, 256], strides = [1, 1]} : vector<2x1024xf32> to vector<2x256xf32>
    %66 = arith.negf %65 : vector<2x256xf32>
    %67 = math.exp %66 : vector<2x256xf32>
    %cst_25 = arith.constant 1.000000e+00 : f32
    %68 = vector.broadcast %cst_25 : f32 to vector<2x256xf32>
    %69 = arith.addf %68, %67 : vector<2x256xf32>
    %70 = arith.divf %68, %69 : vector<2x256xf32>
    %71 = arith.mulf %62, %14 : vector<2x256xf32>
    %72 = arith.mulf %56, %64 : vector<2x256xf32>
    %73 = arith.addf %71, %72 : vector<2x256xf32>
    %74 = math.tanh %73 : vector<2x256xf32>
    %75 = arith.mulf %70, %74 : vector<2x256xf32>
    %c1_i32 = arith.constant 1 : i32
    %c2_i32_26 = arith.constant 2 : i32
    %76 = arith.muli %c1_i32, %c2_i32_26 : i32
    %77 = arith.index_cast %76 : i32 to index
    %c0_27 = arith.constant 0 : index
    %78 = vector.load %arg9[%77, %c0_27] : memref<16x1024xf32, #tpu.memory_space<vmem>>, vector<2x1024xf32>
    %cst_28 = arith.constant dense<0.000000e+00> : vector<2x1024xf32>
    %79 = tpu.matmul %50, %11, %cst_28 {dimension_numbers = #tpu.dot_dimension_numbers<[1], [0], [0], [1], [0, 0, 1, 1], [], []>} : vector<2x256xf32>, vector<256x1024xf32>, vector<2x1024xf32> -> vector<2x1024xf32>
    %80 = arith.addf %78, %79 : vector<2x1024xf32>
    %c7_i32_29 = arith.constant 7 : i32
    %81 = arith.subi %c7_i32_29, %c1_i32 : i32
    %c2_i32_30 = arith.constant 2 : i32
    %82 = arith.muli %81, %c2_i32_30 : i32
    %83 = arith.index_cast %82 : i32 to index
    %c0_31 = arith.constant 0 : index
    %84 = vector.load %arg10[%83, %c0_31] : memref<16x1024xf32, #tpu.memory_space<vmem>>, vector<2x1024xf32>
    %cst_32 = arith.constant dense<0.000000e+00> : vector<2x1024xf32>
    %85 = tpu.matmul %75, %13, %cst_32 {dimension_numbers = #tpu.dot_dimension_numbers<[1], [0], [0], [1], [0, 0, 1, 1], [], []>} : vector<2x256xf32>, vector<256x1024xf32>, vector<2x1024xf32> -> vector<2x1024xf32>
    %86 = arith.addf %84, %85 : vector<2x1024xf32>
    %87 = vector.extract_strided_slice %80 {offsets = [0, 0], sizes = [2, 256], strides = [1, 1]} : vector<2x1024xf32> to vector<2x256xf32>
    %88 = arith.negf %87 : vector<2x256xf32>
    %89 = math.exp %88 : vector<2x256xf32>
    %cst_33 = arith.constant 1.000000e+00 : f32
    %90 = vector.broadcast %cst_33 : f32 to vector<2x256xf32>
    %91 = arith.addf %90, %89 : vector<2x256xf32>
    %92 = arith.divf %90, %91 : vector<2x256xf32>
    %93 = vector.extract_strided_slice %80 {offsets = [0, 256], sizes = [2, 256], strides = [1, 1]} : vector<2x1024xf32> to vector<2x256xf32>
    %94 = arith.negf %93 : vector<2x256xf32>
    %95 = math.exp %94 : vector<2x256xf32>
    %cst_34 = arith.constant 1.000000e+00 : f32
    %96 = vector.broadcast %cst_34 : f32 to vector<2x256xf32>
    %97 = arith.addf %96, %95 : vector<2x256xf32>
    %98 = arith.divf %96, %97 : vector<2x256xf32>
    %99 = vector.extract_strided_slice %80 {offsets = [0, 512], sizes = [2, 256], strides = [1, 1]} : vector<2x1024xf32> to vector<2x256xf32>
    %100 = math.tanh %99 : vector<2x256xf32>
    %101 = vector.extract_strided_slice %80 {offsets = [0, 768], sizes = [2, 256], strides = [1, 1]} : vector<2x1024xf32> to vector<2x256xf32>
    %102 = arith.negf %101 : vector<2x256xf32>
    %103 = math.exp %102 : vector<2x256xf32>
    %cst_35 = arith.constant 1.000000e+00 : f32
    %104 = vector.broadcast %cst_35 : f32 to vector<2x256xf32>
    %105 = arith.addf %104, %103 : vector<2x256xf32>
    %106 = arith.divf %104, %105 : vector<2x256xf32>
    %107 = arith.mulf %98, %48 : vector<2x256xf32>
    %108 = arith.mulf %92, %100 : vector<2x256xf32>
    %109 = arith.addf %107, %108 : vector<2x256xf32>
    %110 = math.tanh %109 : vector<2x256xf32>
    %111 = arith.mulf %106, %110 : vector<2x256xf32>
    %112 = vector.extract_strided_slice %86 {offsets = [0, 0], sizes = [2, 256], strides = [1, 1]} : vector<2x1024xf32> to vector<2x256xf32>
    %113 = arith.negf %112 : vector<2x256xf32>
    %114 = math.exp %113 : vector<2x256xf32>
    %cst_36 = arith.constant 1.000000e+00 : f32
    %115 = vector.broadcast %cst_36 : f32 to vector<2x256xf32>
    %116 = arith.addf %115, %114 : vector<2x256xf32>
    %117 = arith.divf %115, %116 : vector<2x256xf32>
    %118 = vector.extract_strided_slice %86 {offsets = [0, 256], sizes = [2, 256], strides = [1, 1]} : vector<2x1024xf32> to vector<2x256xf32>
    %119 = arith.negf %118 : vector<2x256xf32>
    %120 = math.exp %119 : vector<2x256xf32>
    %cst_37 = arith.constant 1.000000e+00 : f32
    %121 = vector.broadcast %cst_37 : f32 to vector<2x256xf32>
    %122 = arith.addf %121, %120 : vector<2x256xf32>
    %123 = arith.divf %121, %122 : vector<2x256xf32>
    %124 = vector.extract_strided_slice %86 {offsets = [0, 512], sizes = [2, 256], strides = [1, 1]} : vector<2x1024xf32> to vector<2x256xf32>
    %125 = math.tanh %124 : vector<2x256xf32>
    %126 = vector.extract_strided_slice %86 {offsets = [0, 768], sizes = [2, 256], strides = [1, 1]} : vector<2x1024xf32> to vector<2x256xf32>
    %127 = arith.negf %126 : vector<2x256xf32>
    %128 = math.exp %127 : vector<2x256xf32>
    %cst_38 = arith.constant 1.000000e+00 : f32
    %129 = vector.broadcast %cst_38 : f32 to vector<2x256xf32>
    %130 = arith.addf %129, %128 : vector<2x256xf32>
    %131 = arith.divf %129, %130 : vector<2x256xf32>
    %132 = arith.mulf %123, %73 : vector<2x256xf32>
    %133 = arith.mulf %117, %125 : vector<2x256xf32>
    %134 = arith.addf %132, %133 : vector<2x256xf32>
    %135 = math.tanh %134 : vector<2x256xf32>
    %136 = arith.mulf %131, %135 : vector<2x256xf32>
    %c2_i32_39 = arith.constant 2 : i32
    %c2_i32_40 = arith.constant 2 : i32
    %137 = arith.muli %c2_i32_39, %c2_i32_40 : i32
    %138 = arith.index_cast %137 : i32 to index
    %c0_41 = arith.constant 0 : index
    %139 = vector.load %arg9[%138, %c0_41] : memref<16x1024xf32, #tpu.memory_space<vmem>>, vector<2x1024xf32>
    %cst_42 = arith.constant dense<0.000000e+00> : vector<2x1024xf32>
    %140 = tpu.matmul %111, %11, %cst_42 {dimension_numbers = #tpu.dot_dimension_numbers<[1], [0], [0], [1], [0, 0, 1, 1], [], []>} : vector<2x256xf32>, vector<256x1024xf32>, vector<2x1024xf32> -> vector<2x1024xf32>
    %141 = arith.addf %139, %140 : vector<2x1024xf32>
    %c7_i32_43 = arith.constant 7 : i32
    %142 = arith.subi %c7_i32_43, %c2_i32_39 : i32
    %c2_i32_44 = arith.constant 2 : i32
    %143 = arith.muli %142, %c2_i32_44 : i32
    %144 = arith.index_cast %143 : i32 to index
    %c0_45 = arith.constant 0 : index
    %145 = vector.load %arg10[%144, %c0_45] : memref<16x1024xf32, #tpu.memory_space<vmem>>, vector<2x1024xf32>
    %cst_46 = arith.constant dense<0.000000e+00> : vector<2x1024xf32>
    %146 = tpu.matmul %136, %13, %cst_46 {dimension_numbers = #tpu.dot_dimension_numbers<[1], [0], [0], [1], [0, 0, 1, 1], [], []>} : vector<2x256xf32>, vector<256x1024xf32>, vector<2x1024xf32> -> vector<2x1024xf32>
    %147 = arith.addf %145, %146 : vector<2x1024xf32>
    %148 = vector.extract_strided_slice %141 {offsets = [0, 0], sizes = [2, 256], strides = [1, 1]} : vector<2x1024xf32> to vector<2x256xf32>
    %149 = arith.negf %148 : vector<2x256xf32>
    %150 = math.exp %149 : vector<2x256xf32>
    %cst_47 = arith.constant 1.000000e+00 : f32
    %151 = vector.broadcast %cst_47 : f32 to vector<2x256xf32>
    %152 = arith.addf %151, %150 : vector<2x256xf32>
    %153 = arith.divf %151, %152 : vector<2x256xf32>
    %154 = vector.extract_strided_slice %141 {offsets = [0, 256], sizes = [2, 256], strides = [1, 1]} : vector<2x1024xf32> to vector<2x256xf32>
    %155 = arith.negf %154 : vector<2x256xf32>
    %156 = math.exp %155 : vector<2x256xf32>
    %cst_48 = arith.constant 1.000000e+00 : f32
    %157 = vector.broadcast %cst_48 : f32 to vector<2x256xf32>
    %158 = arith.addf %157, %156 : vector<2x256xf32>
    %159 = arith.divf %157, %158 : vector<2x256xf32>
    %160 = vector.extract_strided_slice %141 {offsets = [0, 512], sizes = [2, 256], strides = [1, 1]} : vector<2x1024xf32> to vector<2x256xf32>
    %161 = math.tanh %160 : vector<2x256xf32>
    %162 = vector.extract_strided_slice %141 {offsets = [0, 768], sizes = [2, 256], strides = [1, 1]} : vector<2x1024xf32> to vector<2x256xf32>
    %163 = arith.negf %162 : vector<2x256xf32>
    %164 = math.exp %163 : vector<2x256xf32>
    %cst_49 = arith.constant 1.000000e+00 : f32
    %165 = vector.broadcast %cst_49 : f32 to vector<2x256xf32>
    %166 = arith.addf %165, %164 : vector<2x256xf32>
    %167 = arith.divf %165, %166 : vector<2x256xf32>
    %168 = arith.mulf %159, %109 : vector<2x256xf32>
    %169 = arith.mulf %153, %161 : vector<2x256xf32>
    %170 = arith.addf %168, %169 : vector<2x256xf32>
    %171 = math.tanh %170 : vector<2x256xf32>
    %172 = arith.mulf %167, %171 : vector<2x256xf32>
    %173 = vector.extract_strided_slice %147 {offsets = [0, 0], sizes = [2, 256], strides = [1, 1]} : vector<2x1024xf32> to vector<2x256xf32>
    %174 = arith.negf %173 : vector<2x256xf32>
    %175 = math.exp %174 : vector<2x256xf32>
    %cst_50 = arith.constant 1.000000e+00 : f32
    %176 = vector.broadcast %cst_50 : f32 to vector<2x256xf32>
    %177 = arith.addf %176, %175 : vector<2x256xf32>
    %178 = arith.divf %176, %177 : vector<2x256xf32>
    %179 = vector.extract_strided_slice %147 {offsets = [0, 256], sizes = [2, 256], strides = [1, 1]} : vector<2x1024xf32> to vector<2x256xf32>
    %180 = arith.negf %179 : vector<2x256xf32>
    %181 = math.exp %180 : vector<2x256xf32>
    %cst_51 = arith.constant 1.000000e+00 : f32
    %182 = vector.broadcast %cst_51 : f32 to vector<2x256xf32>
    %183 = arith.addf %182, %181 : vector<2x256xf32>
    %184 = arith.divf %182, %183 : vector<2x256xf32>
    %185 = vector.extract_strided_slice %147 {offsets = [0, 512], sizes = [2, 256], strides = [1, 1]} : vector<2x1024xf32> to vector<2x256xf32>
    %186 = math.tanh %185 : vector<2x256xf32>
    %187 = vector.extract_strided_slice %147 {offsets = [0, 768], sizes = [2, 256], strides = [1, 1]} : vector<2x1024xf32> to vector<2x256xf32>
    %188 = arith.negf %187 : vector<2x256xf32>
    %189 = math.exp %188 : vector<2x256xf32>
    %cst_52 = arith.constant 1.000000e+00 : f32
    %190 = vector.broadcast %cst_52 : f32 to vector<2x256xf32>
    %191 = arith.addf %190, %189 : vector<2x256xf32>
    %192 = arith.divf %190, %191 : vector<2x256xf32>
    %193 = arith.mulf %184, %134 : vector<2x256xf32>
    %194 = arith.mulf %178, %186 : vector<2x256xf32>
    %195 = arith.addf %193, %194 : vector<2x256xf32>
    %196 = math.tanh %195 : vector<2x256xf32>
    %197 = arith.mulf %192, %196 : vector<2x256xf32>
    %c3_i32 = arith.constant 3 : i32
    %c2_i32_53 = arith.constant 2 : i32
    %198 = arith.muli %c3_i32, %c2_i32_53 : i32
    %199 = arith.index_cast %198 : i32 to index
    %c0_54 = arith.constant 0 : index
    %200 = vector.load %arg9[%199, %c0_54] : memref<16x1024xf32, #tpu.memory_space<vmem>>, vector<2x1024xf32>
    %cst_55 = arith.constant dense<0.000000e+00> : vector<2x1024xf32>
    %201 = tpu.matmul %172, %11, %cst_55 {dimension_numbers = #tpu.dot_dimension_numbers<[1], [0], [0], [1], [0, 0, 1, 1], [], []>} : vector<2x256xf32>, vector<256x1024xf32>, vector<2x1024xf32> -> vector<2x1024xf32>
    %202 = arith.addf %200, %201 : vector<2x1024xf32>
    %c7_i32_56 = arith.constant 7 : i32
    %203 = arith.subi %c7_i32_56, %c3_i32 : i32
    %c2_i32_57 = arith.constant 2 : i32
    %204 = arith.muli %203, %c2_i32_57 : i32
    %205 = arith.index_cast %204 : i32 to index
    %c0_58 = arith.constant 0 : index
    %206 = vector.load %arg10[%205, %c0_58] : memref<16x1024xf32, #tpu.memory_space<vmem>>, vector<2x1024xf32>
    %cst_59 = arith.constant dense<0.000000e+00> : vector<2x1024xf32>
    %207 = tpu.matmul %197, %13, %cst_59 {dimension_numbers = #tpu.dot_dimension_numbers<[1], [0], [0], [1], [0, 0, 1, 1], [], []>} : vector<2x256xf32>, vector<256x1024xf32>, vector<2x1024xf32> -> vector<2x1024xf32>
    %208 = arith.addf %206, %207 : vector<2x1024xf32>
    %209 = vector.extract_strided_slice %202 {offsets = [0, 0], sizes = [2, 256], strides = [1, 1]} : vector<2x1024xf32> to vector<2x256xf32>
    %210 = arith.negf %209 : vector<2x256xf32>
    %211 = math.exp %210 : vector<2x256xf32>
    %cst_60 = arith.constant 1.000000e+00 : f32
    %212 = vector.broadcast %cst_60 : f32 to vector<2x256xf32>
    %213 = arith.addf %212, %211 : vector<2x256xf32>
    %214 = arith.divf %212, %213 : vector<2x256xf32>
    %215 = vector.extract_strided_slice %202 {offsets = [0, 256], sizes = [2, 256], strides = [1, 1]} : vector<2x1024xf32> to vector<2x256xf32>
    %216 = arith.negf %215 : vector<2x256xf32>
    %217 = math.exp %216 : vector<2x256xf32>
    %cst_61 = arith.constant 1.000000e+00 : f32
    %218 = vector.broadcast %cst_61 : f32 to vector<2x256xf32>
    %219 = arith.addf %218, %217 : vector<2x256xf32>
    %220 = arith.divf %218, %219 : vector<2x256xf32>
    %221 = vector.extract_strided_slice %202 {offsets = [0, 512], sizes = [2, 256], strides = [1, 1]} : vector<2x1024xf32> to vector<2x256xf32>
    %222 = math.tanh %221 : vector<2x256xf32>
    %223 = vector.extract_strided_slice %202 {offsets = [0, 768], sizes = [2, 256], strides = [1, 1]} : vector<2x1024xf32> to vector<2x256xf32>
    %224 = arith.negf %223 : vector<2x256xf32>
    %225 = math.exp %224 : vector<2x256xf32>
    %cst_62 = arith.constant 1.000000e+00 : f32
    %226 = vector.broadcast %cst_62 : f32 to vector<2x256xf32>
    %227 = arith.addf %226, %225 : vector<2x256xf32>
    %228 = arith.divf %226, %227 : vector<2x256xf32>
    %229 = arith.mulf %220, %170 : vector<2x256xf32>
    %230 = arith.mulf %214, %222 : vector<2x256xf32>
    %231 = arith.addf %229, %230 : vector<2x256xf32>
    %232 = math.tanh %231 : vector<2x256xf32>
    %233 = arith.mulf %228, %232 : vector<2x256xf32>
    %234 = vector.extract_strided_slice %208 {offsets = [0, 0], sizes = [2, 256], strides = [1, 1]} : vector<2x1024xf32> to vector<2x256xf32>
    %235 = arith.negf %234 : vector<2x256xf32>
    %236 = math.exp %235 : vector<2x256xf32>
    %cst_63 = arith.constant 1.000000e+00 : f32
    %237 = vector.broadcast %cst_63 : f32 to vector<2x256xf32>
    %238 = arith.addf %237, %236 : vector<2x256xf32>
    %239 = arith.divf %237, %238 : vector<2x256xf32>
    %240 = vector.extract_strided_slice %208 {offsets = [0, 256], sizes = [2, 256], strides = [1, 1]} : vector<2x1024xf32> to vector<2x256xf32>
    %241 = arith.negf %240 : vector<2x256xf32>
    %242 = math.exp %241 : vector<2x256xf32>
    %cst_64 = arith.constant 1.000000e+00 : f32
    %243 = vector.broadcast %cst_64 : f32 to vector<2x256xf32>
    %244 = arith.addf %243, %242 : vector<2x256xf32>
    %245 = arith.divf %243, %244 : vector<2x256xf32>
    %246 = vector.extract_strided_slice %208 {offsets = [0, 512], sizes = [2, 256], strides = [1, 1]} : vector<2x1024xf32> to vector<2x256xf32>
    %247 = math.tanh %246 : vector<2x256xf32>
    %248 = vector.extract_strided_slice %208 {offsets = [0, 768], sizes = [2, 256], strides = [1, 1]} : vector<2x1024xf32> to vector<2x256xf32>
    %249 = arith.negf %248 : vector<2x256xf32>
    %250 = math.exp %249 : vector<2x256xf32>
    %cst_65 = arith.constant 1.000000e+00 : f32
    %251 = vector.broadcast %cst_65 : f32 to vector<2x256xf32>
    %252 = arith.addf %251, %250 : vector<2x256xf32>
    %253 = arith.divf %251, %252 : vector<2x256xf32>
    %254 = arith.mulf %245, %195 : vector<2x256xf32>
    %255 = arith.mulf %239, %247 : vector<2x256xf32>
    %256 = arith.addf %254, %255 : vector<2x256xf32>
    %257 = math.tanh %256 : vector<2x256xf32>
    %258 = arith.mulf %253, %257 : vector<2x256xf32>
    %c4_i32 = arith.constant 4 : i32
    %c2_i32_66 = arith.constant 2 : i32
    %259 = arith.muli %c4_i32, %c2_i32_66 : i32
    %260 = arith.index_cast %259 : i32 to index
    %c0_67 = arith.constant 0 : index
    %261 = vector.load %arg9[%260, %c0_67] : memref<16x1024xf32, #tpu.memory_space<vmem>>, vector<2x1024xf32>
    %cst_68 = arith.constant dense<0.000000e+00> : vector<2x1024xf32>
    %262 = tpu.matmul %233, %11, %cst_68 {dimension_numbers = #tpu.dot_dimension_numbers<[1], [0], [0], [1], [0, 0, 1, 1], [], []>} : vector<2x256xf32>, vector<256x1024xf32>, vector<2x1024xf32> -> vector<2x1024xf32>
    %263 = arith.addf %261, %262 : vector<2x1024xf32>
    %c7_i32_69 = arith.constant 7 : i32
    %264 = arith.subi %c7_i32_69, %c4_i32 : i32
    %c2_i32_70 = arith.constant 2 : i32
    %265 = arith.muli %264, %c2_i32_70 : i32
    %266 = arith.index_cast %265 : i32 to index
    %c0_71 = arith.constant 0 : index
    %267 = vector.load %arg10[%266, %c0_71] : memref<16x1024xf32, #tpu.memory_space<vmem>>, vector<2x1024xf32>
    %cst_72 = arith.constant dense<0.000000e+00> : vector<2x1024xf32>
    %268 = tpu.matmul %258, %13, %cst_72 {dimension_numbers = #tpu.dot_dimension_numbers<[1], [0], [0], [1], [0, 0, 1, 1], [], []>} : vector<2x256xf32>, vector<256x1024xf32>, vector<2x1024xf32> -> vector<2x1024xf32>
    %269 = arith.addf %267, %268 : vector<2x1024xf32>
    %270 = vector.extract_strided_slice %263 {offsets = [0, 0], sizes = [2, 256], strides = [1, 1]} : vector<2x1024xf32> to vector<2x256xf32>
    %271 = arith.negf %270 : vector<2x256xf32>
    %272 = math.exp %271 : vector<2x256xf32>
    %cst_73 = arith.constant 1.000000e+00 : f32
    %273 = vector.broadcast %cst_73 : f32 to vector<2x256xf32>
    %274 = arith.addf %273, %272 : vector<2x256xf32>
    %275 = arith.divf %273, %274 : vector<2x256xf32>
    %276 = vector.extract_strided_slice %263 {offsets = [0, 256], sizes = [2, 256], strides = [1, 1]} : vector<2x1024xf32> to vector<2x256xf32>
    %277 = arith.negf %276 : vector<2x256xf32>
    %278 = math.exp %277 : vector<2x256xf32>
    %cst_74 = arith.constant 1.000000e+00 : f32
    %279 = vector.broadcast %cst_74 : f32 to vector<2x256xf32>
    %280 = arith.addf %279, %278 : vector<2x256xf32>
    %281 = arith.divf %279, %280 : vector<2x256xf32>
    %282 = vector.extract_strided_slice %263 {offsets = [0, 512], sizes = [2, 256], strides = [1, 1]} : vector<2x1024xf32> to vector<2x256xf32>
    %283 = math.tanh %282 : vector<2x256xf32>
    %284 = vector.extract_strided_slice %263 {offsets = [0, 768], sizes = [2, 256], strides = [1, 1]} : vector<2x1024xf32> to vector<2x256xf32>
    %285 = arith.negf %284 : vector<2x256xf32>
    %286 = math.exp %285 : vector<2x256xf32>
    %cst_75 = arith.constant 1.000000e+00 : f32
    %287 = vector.broadcast %cst_75 : f32 to vector<2x256xf32>
    %288 = arith.addf %287, %286 : vector<2x256xf32>
    %289 = arith.divf %287, %288 : vector<2x256xf32>
    %290 = arith.mulf %281, %231 : vector<2x256xf32>
    %291 = arith.mulf %275, %283 : vector<2x256xf32>
    %292 = arith.addf %290, %291 : vector<2x256xf32>
    %293 = math.tanh %292 : vector<2x256xf32>
    %294 = arith.mulf %289, %293 : vector<2x256xf32>
    %295 = vector.extract_strided_slice %269 {offsets = [0, 0], sizes = [2, 256], strides = [1, 1]} : vector<2x1024xf32> to vector<2x256xf32>
    %296 = arith.negf %295 : vector<2x256xf32>
    %297 = math.exp %296 : vector<2x256xf32>
    %cst_76 = arith.constant 1.000000e+00 : f32
    %298 = vector.broadcast %cst_76 : f32 to vector<2x256xf32>
    %299 = arith.addf %298, %297 : vector<2x256xf32>
    %300 = arith.divf %298, %299 : vector<2x256xf32>
    %301 = vector.extract_strided_slice %269 {offsets = [0, 256], sizes = [2, 256], strides = [1, 1]} : vector<2x1024xf32> to vector<2x256xf32>
    %302 = arith.negf %301 : vector<2x256xf32>
    %303 = math.exp %302 : vector<2x256xf32>
    %cst_77 = arith.constant 1.000000e+00 : f32
    %304 = vector.broadcast %cst_77 : f32 to vector<2x256xf32>
    %305 = arith.addf %304, %303 : vector<2x256xf32>
    %306 = arith.divf %304, %305 : vector<2x256xf32>
    %307 = vector.extract_strided_slice %269 {offsets = [0, 512], sizes = [2, 256], strides = [1, 1]} : vector<2x1024xf32> to vector<2x256xf32>
    %308 = math.tanh %307 : vector<2x256xf32>
    %309 = vector.extract_strided_slice %269 {offsets = [0, 768], sizes = [2, 256], strides = [1, 1]} : vector<2x1024xf32> to vector<2x256xf32>
    %310 = arith.negf %309 : vector<2x256xf32>
    %311 = math.exp %310 : vector<2x256xf32>
    %cst_78 = arith.constant 1.000000e+00 : f32
    %312 = vector.broadcast %cst_78 : f32 to vector<2x256xf32>
    %313 = arith.addf %312, %311 : vector<2x256xf32>
    %314 = arith.divf %312, %313 : vector<2x256xf32>
    %315 = arith.mulf %306, %256 : vector<2x256xf32>
    %316 = arith.mulf %300, %308 : vector<2x256xf32>
    %317 = arith.addf %315, %316 : vector<2x256xf32>
    %318 = math.tanh %317 : vector<2x256xf32>
    %319 = arith.mulf %314, %318 : vector<2x256xf32>
    %c5_i32 = arith.constant 5 : i32
    %c2_i32_79 = arith.constant 2 : i32
    %320 = arith.muli %c5_i32, %c2_i32_79 : i32
    %321 = arith.index_cast %320 : i32 to index
    %c0_80 = arith.constant 0 : index
    %322 = vector.load %arg9[%321, %c0_80] : memref<16x1024xf32, #tpu.memory_space<vmem>>, vector<2x1024xf32>
    %cst_81 = arith.constant dense<0.000000e+00> : vector<2x1024xf32>
    %323 = tpu.matmul %294, %11, %cst_81 {dimension_numbers = #tpu.dot_dimension_numbers<[1], [0], [0], [1], [0, 0, 1, 1], [], []>} : vector<2x256xf32>, vector<256x1024xf32>, vector<2x1024xf32> -> vector<2x1024xf32>
    %324 = arith.addf %322, %323 : vector<2x1024xf32>
    %c7_i32_82 = arith.constant 7 : i32
    %325 = arith.subi %c7_i32_82, %c5_i32 : i32
    %c2_i32_83 = arith.constant 2 : i32
    %326 = arith.muli %325, %c2_i32_83 : i32
    %327 = arith.index_cast %326 : i32 to index
    %c0_84 = arith.constant 0 : index
    %328 = vector.load %arg10[%327, %c0_84] : memref<16x1024xf32, #tpu.memory_space<vmem>>, vector<2x1024xf32>
    %cst_85 = arith.constant dense<0.000000e+00> : vector<2x1024xf32>
    %329 = tpu.matmul %319, %13, %cst_85 {dimension_numbers = #tpu.dot_dimension_numbers<[1], [0], [0], [1], [0, 0, 1, 1], [], []>} : vector<2x256xf32>, vector<256x1024xf32>, vector<2x1024xf32> -> vector<2x1024xf32>
    %330 = arith.addf %328, %329 : vector<2x1024xf32>
    %331 = vector.extract_strided_slice %324 {offsets = [0, 0], sizes = [2, 256], strides = [1, 1]} : vector<2x1024xf32> to vector<2x256xf32>
    %332 = arith.negf %331 : vector<2x256xf32>
    %333 = math.exp %332 : vector<2x256xf32>
    %cst_86 = arith.constant 1.000000e+00 : f32
    %334 = vector.broadcast %cst_86 : f32 to vector<2x256xf32>
    %335 = arith.addf %334, %333 : vector<2x256xf32>
    %336 = arith.divf %334, %335 : vector<2x256xf32>
    %337 = vector.extract_strided_slice %324 {offsets = [0, 256], sizes = [2, 256], strides = [1, 1]} : vector<2x1024xf32> to vector<2x256xf32>
    %338 = arith.negf %337 : vector<2x256xf32>
    %339 = math.exp %338 : vector<2x256xf32>
    %cst_87 = arith.constant 1.000000e+00 : f32
    %340 = vector.broadcast %cst_87 : f32 to vector<2x256xf32>
    %341 = arith.addf %340, %339 : vector<2x256xf32>
    %342 = arith.divf %340, %341 : vector<2x256xf32>
    %343 = vector.extract_strided_slice %324 {offsets = [0, 512], sizes = [2, 256], strides = [1, 1]} : vector<2x1024xf32> to vector<2x256xf32>
    %344 = math.tanh %343 : vector<2x256xf32>
    %345 = vector.extract_strided_slice %324 {offsets = [0, 768], sizes = [2, 256], strides = [1, 1]} : vector<2x1024xf32> to vector<2x256xf32>
    %346 = arith.negf %345 : vector<2x256xf32>
    %347 = math.exp %346 : vector<2x256xf32>
    %cst_88 = arith.constant 1.000000e+00 : f32
    %348 = vector.broadcast %cst_88 : f32 to vector<2x256xf32>
    %349 = arith.addf %348, %347 : vector<2x256xf32>
    %350 = arith.divf %348, %349 : vector<2x256xf32>
    %351 = arith.mulf %342, %292 : vector<2x256xf32>
    %352 = arith.mulf %336, %344 : vector<2x256xf32>
    %353 = arith.addf %351, %352 : vector<2x256xf32>
    %354 = math.tanh %353 : vector<2x256xf32>
    %355 = arith.mulf %350, %354 : vector<2x256xf32>
    %356 = vector.extract_strided_slice %330 {offsets = [0, 0], sizes = [2, 256], strides = [1, 1]} : vector<2x1024xf32> to vector<2x256xf32>
    %357 = arith.negf %356 : vector<2x256xf32>
    %358 = math.exp %357 : vector<2x256xf32>
    %cst_89 = arith.constant 1.000000e+00 : f32
    %359 = vector.broadcast %cst_89 : f32 to vector<2x256xf32>
    %360 = arith.addf %359, %358 : vector<2x256xf32>
    %361 = arith.divf %359, %360 : vector<2x256xf32>
    %362 = vector.extract_strided_slice %330 {offsets = [0, 256], sizes = [2, 256], strides = [1, 1]} : vector<2x1024xf32> to vector<2x256xf32>
    %363 = arith.negf %362 : vector<2x256xf32>
    %364 = math.exp %363 : vector<2x256xf32>
    %cst_90 = arith.constant 1.000000e+00 : f32
    %365 = vector.broadcast %cst_90 : f32 to vector<2x256xf32>
    %366 = arith.addf %365, %364 : vector<2x256xf32>
    %367 = arith.divf %365, %366 : vector<2x256xf32>
    %368 = vector.extract_strided_slice %330 {offsets = [0, 512], sizes = [2, 256], strides = [1, 1]} : vector<2x1024xf32> to vector<2x256xf32>
    %369 = math.tanh %368 : vector<2x256xf32>
    %370 = vector.extract_strided_slice %330 {offsets = [0, 768], sizes = [2, 256], strides = [1, 1]} : vector<2x1024xf32> to vector<2x256xf32>
    %371 = arith.negf %370 : vector<2x256xf32>
    %372 = math.exp %371 : vector<2x256xf32>
    %cst_91 = arith.constant 1.000000e+00 : f32
    %373 = vector.broadcast %cst_91 : f32 to vector<2x256xf32>
    %374 = arith.addf %373, %372 : vector<2x256xf32>
    %375 = arith.divf %373, %374 : vector<2x256xf32>
    %376 = arith.mulf %367, %317 : vector<2x256xf32>
    %377 = arith.mulf %361, %369 : vector<2x256xf32>
    %378 = arith.addf %376, %377 : vector<2x256xf32>
    %379 = math.tanh %378 : vector<2x256xf32>
    %380 = arith.mulf %375, %379 : vector<2x256xf32>
    %c6_i32 = arith.constant 6 : i32
    %c2_i32_92 = arith.constant 2 : i32
    %381 = arith.muli %c6_i32, %c2_i32_92 : i32
    %382 = arith.index_cast %381 : i32 to index
    %c0_93 = arith.constant 0 : index
    %383 = vector.load %arg9[%382, %c0_93] : memref<16x1024xf32, #tpu.memory_space<vmem>>, vector<2x1024xf32>
    %cst_94 = arith.constant dense<0.000000e+00> : vector<2x1024xf32>
    %384 = tpu.matmul %355, %11, %cst_94 {dimension_numbers = #tpu.dot_dimension_numbers<[1], [0], [0], [1], [0, 0, 1, 1], [], []>} : vector<2x256xf32>, vector<256x1024xf32>, vector<2x1024xf32> -> vector<2x1024xf32>
    %385 = arith.addf %383, %384 : vector<2x1024xf32>
    %c7_i32_95 = arith.constant 7 : i32
    %386 = arith.subi %c7_i32_95, %c6_i32 : i32
    %c2_i32_96 = arith.constant 2 : i32
    %387 = arith.muli %386, %c2_i32_96 : i32
    %388 = arith.index_cast %387 : i32 to index
    %c0_97 = arith.constant 0 : index
    %389 = vector.load %arg10[%388, %c0_97] : memref<16x1024xf32, #tpu.memory_space<vmem>>, vector<2x1024xf32>
    %cst_98 = arith.constant dense<0.000000e+00> : vector<2x1024xf32>
    %390 = tpu.matmul %380, %13, %cst_98 {dimension_numbers = #tpu.dot_dimension_numbers<[1], [0], [0], [1], [0, 0, 1, 1], [], []>} : vector<2x256xf32>, vector<256x1024xf32>, vector<2x1024xf32> -> vector<2x1024xf32>
    %391 = arith.addf %389, %390 : vector<2x1024xf32>
    %392 = vector.extract_strided_slice %385 {offsets = [0, 0], sizes = [2, 256], strides = [1, 1]} : vector<2x1024xf32> to vector<2x256xf32>
    %393 = arith.negf %392 : vector<2x256xf32>
    %394 = math.exp %393 : vector<2x256xf32>
    %cst_99 = arith.constant 1.000000e+00 : f32
    %395 = vector.broadcast %cst_99 : f32 to vector<2x256xf32>
    %396 = arith.addf %395, %394 : vector<2x256xf32>
    %397 = arith.divf %395, %396 : vector<2x256xf32>
    %398 = vector.extract_strided_slice %385 {offsets = [0, 256], sizes = [2, 256], strides = [1, 1]} : vector<2x1024xf32> to vector<2x256xf32>
    %399 = arith.negf %398 : vector<2x256xf32>
    %400 = math.exp %399 : vector<2x256xf32>
    %cst_100 = arith.constant 1.000000e+00 : f32
    %401 = vector.broadcast %cst_100 : f32 to vector<2x256xf32>
    %402 = arith.addf %401, %400 : vector<2x256xf32>
    %403 = arith.divf %401, %402 : vector<2x256xf32>
    %404 = vector.extract_strided_slice %385 {offsets = [0, 512], sizes = [2, 256], strides = [1, 1]} : vector<2x1024xf32> to vector<2x256xf32>
    %405 = math.tanh %404 : vector<2x256xf32>
    %406 = vector.extract_strided_slice %385 {offsets = [0, 768], sizes = [2, 256], strides = [1, 1]} : vector<2x1024xf32> to vector<2x256xf32>
    %407 = arith.negf %406 : vector<2x256xf32>
    %408 = math.exp %407 : vector<2x256xf32>
    %cst_101 = arith.constant 1.000000e+00 : f32
    %409 = vector.broadcast %cst_101 : f32 to vector<2x256xf32>
    %410 = arith.addf %409, %408 : vector<2x256xf32>
    %411 = arith.divf %409, %410 : vector<2x256xf32>
    %412 = arith.mulf %403, %353 : vector<2x256xf32>
    %413 = arith.mulf %397, %405 : vector<2x256xf32>
    %414 = arith.addf %412, %413 : vector<2x256xf32>
    %415 = math.tanh %414 : vector<2x256xf32>
    %416 = arith.mulf %411, %415 : vector<2x256xf32>
    %417 = vector.extract_strided_slice %391 {offsets = [0, 0], sizes = [2, 256], strides = [1, 1]} : vector<2x1024xf32> to vector<2x256xf32>
    %418 = arith.negf %417 : vector<2x256xf32>
    %419 = math.exp %418 : vector<2x256xf32>
    %cst_102 = arith.constant 1.000000e+00 : f32
    %420 = vector.broadcast %cst_102 : f32 to vector<2x256xf32>
    %421 = arith.addf %420, %419 : vector<2x256xf32>
    %422 = arith.divf %420, %421 : vector<2x256xf32>
    %423 = vector.extract_strided_slice %391 {offsets = [0, 256], sizes = [2, 256], strides = [1, 1]} : vector<2x1024xf32> to vector<2x256xf32>
    %424 = arith.negf %423 : vector<2x256xf32>
    %425 = math.exp %424 : vector<2x256xf32>
    %cst_103 = arith.constant 1.000000e+00 : f32
    %426 = vector.broadcast %cst_103 : f32 to vector<2x256xf32>
    %427 = arith.addf %426, %425 : vector<2x256xf32>
    %428 = arith.divf %426, %427 : vector<2x256xf32>
    %429 = vector.extract_strided_slice %391 {offsets = [0, 512], sizes = [2, 256], strides = [1, 1]} : vector<2x1024xf32> to vector<2x256xf32>
    %430 = math.tanh %429 : vector<2x256xf32>
    %431 = vector.extract_strided_slice %391 {offsets = [0, 768], sizes = [2, 256], strides = [1, 1]} : vector<2x1024xf32> to vector<2x256xf32>
    %432 = arith.negf %431 : vector<2x256xf32>
    %433 = math.exp %432 : vector<2x256xf32>
    %cst_104 = arith.constant 1.000000e+00 : f32
    %434 = vector.broadcast %cst_104 : f32 to vector<2x256xf32>
    %435 = arith.addf %434, %433 : vector<2x256xf32>
    %436 = arith.divf %434, %435 : vector<2x256xf32>
    %437 = arith.mulf %428, %378 : vector<2x256xf32>
    %438 = arith.mulf %422, %430 : vector<2x256xf32>
    %439 = arith.addf %437, %438 : vector<2x256xf32>
    %440 = math.tanh %439 : vector<2x256xf32>
    %441 = arith.mulf %436, %440 : vector<2x256xf32>
    %c7_i32_105 = arith.constant 7 : i32
    %c2_i32_106 = arith.constant 2 : i32
    %442 = arith.muli %c7_i32_105, %c2_i32_106 : i32
    %443 = arith.index_cast %442 : i32 to index
    %c0_107 = arith.constant 0 : index
    %444 = vector.load %arg9[%443, %c0_107] : memref<16x1024xf32, #tpu.memory_space<vmem>>, vector<2x1024xf32>
    %cst_108 = arith.constant dense<0.000000e+00> : vector<2x1024xf32>
    %445 = tpu.matmul %416, %11, %cst_108 {dimension_numbers = #tpu.dot_dimension_numbers<[1], [0], [0], [1], [0, 0, 1, 1], [], []>} : vector<2x256xf32>, vector<256x1024xf32>, vector<2x1024xf32> -> vector<2x1024xf32>
    %446 = arith.addf %444, %445 : vector<2x1024xf32>
    %c7_i32_109 = arith.constant 7 : i32
    %447 = arith.subi %c7_i32_109, %c7_i32_105 : i32
    %c2_i32_110 = arith.constant 2 : i32
    %448 = arith.muli %447, %c2_i32_110 : i32
    %449 = arith.index_cast %448 : i32 to index
    %c0_111 = arith.constant 0 : index
    %450 = vector.load %arg10[%449, %c0_111] : memref<16x1024xf32, #tpu.memory_space<vmem>>, vector<2x1024xf32>
    %cst_112 = arith.constant dense<0.000000e+00> : vector<2x1024xf32>
    %451 = tpu.matmul %441, %13, %cst_112 {dimension_numbers = #tpu.dot_dimension_numbers<[1], [0], [0], [1], [0, 0, 1, 1], [], []>} : vector<2x256xf32>, vector<256x1024xf32>, vector<2x1024xf32> -> vector<2x1024xf32>
    %452 = arith.addf %450, %451 : vector<2x1024xf32>
    %453 = vector.extract_strided_slice %446 {offsets = [0, 0], sizes = [2, 256], strides = [1, 1]} : vector<2x1024xf32> to vector<2x256xf32>
    %454 = arith.negf %453 : vector<2x256xf32>
    %455 = math.exp %454 : vector<2x256xf32>
    %cst_113 = arith.constant 1.000000e+00 : f32
    %456 = vector.broadcast %cst_113 : f32 to vector<2x256xf32>
    %457 = arith.addf %456, %455 : vector<2x256xf32>
    %458 = arith.divf %456, %457 : vector<2x256xf32>
    %459 = vector.extract_strided_slice %446 {offsets = [0, 256], sizes = [2, 256], strides = [1, 1]} : vector<2x1024xf32> to vector<2x256xf32>
    %460 = arith.negf %459 : vector<2x256xf32>
    %461 = math.exp %460 : vector<2x256xf32>
    %cst_114 = arith.constant 1.000000e+00 : f32
    %462 = vector.broadcast %cst_114 : f32 to vector<2x256xf32>
    %463 = arith.addf %462, %461 : vector<2x256xf32>
    %464 = arith.divf %462, %463 : vector<2x256xf32>
    %465 = vector.extract_strided_slice %446 {offsets = [0, 512], sizes = [2, 256], strides = [1, 1]} : vector<2x1024xf32> to vector<2x256xf32>
    %466 = math.tanh %465 : vector<2x256xf32>
    %467 = vector.extract_strided_slice %446 {offsets = [0, 768], sizes = [2, 256], strides = [1, 1]} : vector<2x1024xf32> to vector<2x256xf32>
    %468 = arith.negf %467 : vector<2x256xf32>
    %469 = math.exp %468 : vector<2x256xf32>
    %cst_115 = arith.constant 1.000000e+00 : f32
    %470 = vector.broadcast %cst_115 : f32 to vector<2x256xf32>
    %471 = arith.addf %470, %469 : vector<2x256xf32>
    %472 = arith.divf %470, %471 : vector<2x256xf32>
    %473 = arith.mulf %464, %414 : vector<2x256xf32>
    %474 = arith.mulf %458, %466 : vector<2x256xf32>
    %475 = arith.addf %473, %474 : vector<2x256xf32>
    %476 = math.tanh %475 : vector<2x256xf32>
    %477 = arith.mulf %472, %476 : vector<2x256xf32>
    %478 = vector.extract_strided_slice %452 {offsets = [0, 0], sizes = [2, 256], strides = [1, 1]} : vector<2x1024xf32> to vector<2x256xf32>
    %479 = arith.negf %478 : vector<2x256xf32>
    %480 = math.exp %479 : vector<2x256xf32>
    %cst_116 = arith.constant 1.000000e+00 : f32
    %481 = vector.broadcast %cst_116 : f32 to vector<2x256xf32>
    %482 = arith.addf %481, %480 : vector<2x256xf32>
    %483 = arith.divf %481, %482 : vector<2x256xf32>
    %484 = vector.extract_strided_slice %452 {offsets = [0, 256], sizes = [2, 256], strides = [1, 1]} : vector<2x1024xf32> to vector<2x256xf32>
    %485 = arith.negf %484 : vector<2x256xf32>
    %486 = math.exp %485 : vector<2x256xf32>
    %cst_117 = arith.constant 1.000000e+00 : f32
    %487 = vector.broadcast %cst_117 : f32 to vector<2x256xf32>
    %488 = arith.addf %487, %486 : vector<2x256xf32>
    %489 = arith.divf %487, %488 : vector<2x256xf32>
    %490 = vector.extract_strided_slice %452 {offsets = [0, 512], sizes = [2, 256], strides = [1, 1]} : vector<2x1024xf32> to vector<2x256xf32>
    %491 = math.tanh %490 : vector<2x256xf32>
    %492 = vector.extract_strided_slice %452 {offsets = [0, 768], sizes = [2, 256], strides = [1, 1]} : vector<2x1024xf32> to vector<2x256xf32>
    %493 = arith.negf %492 : vector<2x256xf32>
    %494 = math.exp %493 : vector<2x256xf32>
    %cst_118 = arith.constant 1.000000e+00 : f32
    %495 = vector.broadcast %cst_118 : f32 to vector<2x256xf32>
    %496 = arith.addf %495, %494 : vector<2x256xf32>
    %497 = arith.divf %495, %496 : vector<2x256xf32>
    %498 = arith.mulf %489, %439 : vector<2x256xf32>
    %499 = arith.mulf %483, %491 : vector<2x256xf32>
    %500 = arith.addf %498, %499 : vector<2x256xf32>
    %501 = math.tanh %500 : vector<2x256xf32>
    %502 = arith.mulf %497, %501 : vector<2x256xf32>
    %c8_i32 = arith.constant 8 : i32
    %503 = vector.extract_strided_slice %477 {offsets = [0, 0], sizes = [1, 256], strides = [1, 1]} : vector<2x256xf32> to vector<1x256xf32>
    %504 = vector.extract_strided_slice %477 {offsets = [1, 0], sizes = [1, 256], strides = [1, 1]} : vector<2x256xf32> to vector<1x256xf32>
    %505 = vector.extract_strided_slice %502 {offsets = [0, 0], sizes = [1, 256], strides = [1, 1]} : vector<2x256xf32> to vector<1x256xf32>
    %506 = vector.extract_strided_slice %502 {offsets = [1, 0], sizes = [1, 256], strides = [1, 1]} : vector<2x256xf32> to vector<1x256xf32>
    %507 = tpu.concatenate %503, %504 in 1 : vector<1x256xf32>, vector<1x256xf32> -> vector<1x512xf32>
    %508 = tpu.concatenate %505, %506 in 1 : vector<1x256xf32>, vector<1x256xf32> -> vector<1x512xf32>
    %509 = tpu.concatenate %507, %508 in 0 : vector<1x512xf32>, vector<1x512xf32> -> vector<2x512xf32>
    %c0_119 = arith.constant 0 : index
    %c0_120 = arith.constant 0 : index
    %510 = vector.load %arg4[%c0_119, %c0_120] : memref<512x50xf32, #tpu.memory_space<vmem>>, vector<512x50xf32>
    %cst_121 = arith.constant dense<0.000000e+00> : vector<2x50xf32>
    %511 = tpu.matmul %509, %510, %cst_121 {dimension_numbers = #tpu.dot_dimension_numbers<[1], [0], [0], [1], [0, 0, 1, 1], [], []>} : vector<2x512xf32>, vector<512x50xf32>, vector<2x50xf32> -> vector<2x50xf32>
    %c0_122 = arith.constant 0 : index
    %c0_123 = arith.constant 0 : index
    %512 = vector.load %arg5[%c0_122, %c0_123] : memref<1x50xf32, #tpu.memory_space<vmem>>, vector<1x50xf32>
    %513 = vector.broadcast %512 : vector<1x50xf32> to vector<2x50xf32>
    %514 = arith.addf %511, %513 : vector<2x50xf32>
    %cst_124 = arith.constant 0.000000e+00 : f32
    %515 = vector.broadcast %cst_124 : f32 to vector<2x50xf32>
    %516 = arith.maximumf %514, %515 : vector<2x50xf32>
    %c0_125 = arith.constant 0 : index
    %c0_126 = arith.constant 0 : index
    %517 = vector.load %arg6[%c0_125, %c0_126] : memref<50x3xf32, #tpu.memory_space<vmem>>, vector<50x3xf32>
    %cst_127 = arith.constant dense<0.000000e+00> : vector<2x3xf32>
    %518 = tpu.matmul %516, %517, %cst_127 {dimension_numbers = #tpu.dot_dimension_numbers<[1], [0], [0], [1], [0, 0, 1, 1], [], []>} : vector<2x50xf32>, vector<50x3xf32>, vector<2x3xf32> -> vector<2x3xf32>
    %c0_128 = arith.constant 0 : index
    %c0_129 = arith.constant 0 : index
    %519 = vector.load %arg7[%c0_128, %c0_129] : memref<1x3xf32, #tpu.memory_space<vmem>>, vector<1x3xf32>
    %520 = vector.broadcast %519 : vector<1x3xf32> to vector<2x3xf32>
    %521 = arith.addf %518, %520 : vector<2x3xf32>
    %cst_130 = arith.constant dense<0xFF800000> : vector<2xf32>
    %522 = vector.multi_reduction <maximumf>, %521, %cst_130 [1] : vector<2x3xf32> to vector<2xf32>
    %523 = vector.shape_cast %522 : vector<2xf32> to vector<2x1xf32>
    %524 = vector.broadcast %523 : vector<2x1xf32> to vector<2x3xf32>
    %525 = arith.subf %521, %524 : vector<2x3xf32>
    %526 = math.exp %525 : vector<2x3xf32>
    %cst_131 = arith.constant dense<0.000000e+00> : vector<2xf32>
    %527 = vector.multi_reduction <add>, %526, %cst_131 [1] : vector<2x3xf32> to vector<2xf32>
    %528 = vector.shape_cast %527 : vector<2xf32> to vector<2x1xf32>
    %529 = math.log %528 : vector<2x1xf32>
    %530 = arith.addf %529, %523 : vector<2x1xf32>
    %531 = vector.broadcast %530 : vector<2x1xf32> to vector<2x3xf32>
    %532 = arith.subf %521, %531 : vector<2x3xf32>
    %c0_132 = arith.constant 0 : index
    %c0_133 = arith.constant 0 : index
    %533 = vector.load %arg8[%c0_132, %c0_133] : memref<2x3xf32, #tpu.memory_space<vmem>>, vector<2x3xf32>
    tpu.vector_store %arg8[%c0_132, %c0_133], %532 {strides = array<i32>} : memref<2x3xf32, #tpu.memory_space<vmem>>, vector<2x3xf32>,
    return
  }
}

</mosaic_0001>

<llo_original>
// kernel: model_lstm_fc.1
$region0: #{model_lstm_fc.1}
  #allocation0 [shape = 'u32[]', space=smem, size = 0x4, offset = 0x4, fixed_abs, tag = 'smem constant byte address 0x4 - core index']
  #allocation1 [shape = 'u32[144,128]{1,0:T(1,128)}', space=vmem, size = 0x12000, scoped, tag = 'internal scratch']
  #allocation2 [shape = 'f32[16,1024]{1,0:T(8,128)}', space=vmem, size = 0x10000, scoped, tag = 'scratch operand']
  #allocation3 [shape = 'f32[16,1024]{1,0:T(8,128)}', space=vmem, size = 0x10000, scoped, tag = 'scratch operand']
  %s0 = inlined_call_operand.vmem [shape: f32[16,128], index: 0, kind: input, shape index: {}]
  %s1 = inlined_call_operand.hbm [shape: f32[128,2048], index: 1, kind: input, shape index: {}]
  %s2 = inlined_call_operand.hbm [shape: f32[2,256,1024], index: 2, kind: input, shape index: {}]
  %s3 = inlined_call_operand.hbm [shape: f32[1,2048], index: 3, kind: input, shape index: {}]
  %s4 = inlined_call_operand.vmem [shape: f32[512,50], index: 4, kind: input, shape index: {}]
  %s5 = inlined_call_operand.hbm [shape: f32[1,50], index: 5, kind: input, shape index: {}]
  %s6 = inlined_call_operand.vmem [shape: f32[50,3], index: 6, kind: input, shape index: {}]
  %s7 = inlined_call_operand.hbm [shape: f32[1,3], index: 7, kind: input, shape index: {}]
  %s8 = inlined_call_operand.hbm [shape: f32[2,3], index: 8, kind: output, shape index: {}]
  %s9 = sld [smem:[#allocation0]]
  $region62: #{model_lstm_fc.1} parent=0
    _
  %s11 = ssub.s32 1, %s9
  %s12 = scalar_select 0, %s11, %s9
  $region1: #{model_lstm_fc.1} parent=0
    #allocation4 [shape = 'u8[1048576]{0}', space=vmem, size = 0x100000, scoped, tag = 'input window, operand 1, single buffered']
    #allocation5 [shape = 's32[1]{0}', space=sflag, size = 0x4, scoped, tag = 'scoped memory for model_lstm_fc.1']
    #allocation6 [shape = 's32[1]{0}', space=sflag, size = 0x4, scoped, tag = 'scoped memory for model_lstm_fc.1']
    #allocation7 [shape = 'u8[2097152]{0}', space=vmem, size = 0x200000, scoped, tag = 'input window, operand 2, single buffered']
    #allocation8 [shape = 's32[1]{0}', space=sflag, size = 0x4, scoped, tag = 'scoped memory for model_lstm_fc.1']
    #allocation9 [shape = 'u8[8192]{0}', space=vmem, size = 0x2000, scoped, tag = 'input window, operand 3, single buffered']
    #allocation10 [shape = 'u8[512]{0}', space=vmem, size = 0x400, scoped, tag = 'input window, operand 5, single buffered']
    #allocation11 [shape = 's32[1]{0}', space=sflag, size = 0x4, scoped, tag = 'scoped memory for model_lstm_fc.1']
    #allocation12 [shape = 'u8[512]{0}', space=vmem, size = 0x400, scoped, tag = 'input window, operand 7, single buffered']
    #allocation13 [shape = 'u8[1024]{0}', space=vmem, size = 0x400, scoped, tag = 'output window, operand 0, single buffered']
    %13 = vsyncpa [#allocation5], 0
    %14 = vsyncpa [#allocation8], 0
    %15 = vsyncpa [#allocation11], 0
    %16 = vsyncpa [#allocation6], 0
    // Predicated region
    $region2: #{model_lstm_fc.1} parent=1 // pred_check
      _
    $region3: #{model_lstm_fc.1} parent=1 // pred_check_branch
      %18 = sbr.rel (0) target = $region5
    $region4: #{model_lstm_fc.1} parent=1 // pred_region
      _
    $region5: #{model_lstm_fc.1} parent=1 // pred_fallthru
      _
    // Predicated region
    $region6: #{model_lstm_fc.1} parent=1 // pred_check
      _
    $region7: #{model_lstm_fc.1} parent=1 // pred_check_branch
      %20 = sbr.rel (0) target = $region9
    $region8: #{model_lstm_fc.1} parent=1 // pred_region
      %s22 = ssub.s32 32768, 32768
      %23 = vsyncadd [#allocation5], %s22
      %s24 = sshll.u32 [#allocation4], 4
      %s25 = int_to_ptr.vmem [resolvable:$true] %s24
      %30 = dma.hbm_to_vmem [thread:$0]  %s1, 32768, %s25, [#allocation5], 2048, 2048, 128
    $region9: #{model_lstm_fc.1} parent=1 // pred_fallthru
      _
    // Predicated region
    $region10: #{model_lstm_fc.1} parent=1 // pred_check
      _
    $region11: #{model_lstm_fc.1} parent=1 // pred_check_branch
      %32 = sbr.rel (0) target = $region13
    $region12: #{model_lstm_fc.1} parent=1 // pred_region
      %s34 = ssub.s32 65536, 65536
      %35 = vsyncadd [#allocation8], %s34
      %s36 = sshll.u32 [#allocation7], 4
      %s37 = int_to_ptr.vmem [resolvable:$true] %s36
      %42 = dma.hbm_to_vmem [thread:$0]  %s2, 65536, %s37, [#allocation8], 1024, 1024, 64
    $region13: #{model_lstm_fc.1} parent=1 // pred_fallthru
      _
    // Predicated region
    $region14: #{model_lstm_fc.1} parent=1 // pred_check
      _
    $region15: #{model_lstm_fc.1} parent=1 // pred_check_branch
      %44 = sbr.rel (0) target = $region17
    $region16: #{model_lstm_fc.1} parent=1 // pred_region
      %s46 = ssub.s32 256, 256
      %47 = vsyncadd [#allocation8], %s46
      %s49 = sshll.u32 [#allocation9], 4
      %s50 = int_to_ptr.vmem [resolvable:$true] %s49
      %52 = dma.hbm_to_vmem [thread:$0]  %s3, 256, %s50, [#allocation8]
    $region17: #{model_lstm_fc.1} parent=1 // pred_fallthru
      _
    // Predicated region
    $region18: #{model_lstm_fc.1} parent=1 // pred_check
      _
    $region19: #{model_lstm_fc.1} parent=1 // pred_check_branch
      %54 = sbr.rel (0) target = $region21
    $region20: #{model_lstm_fc.1} parent=1 // pred_region
      _
    $region21: #{model_lstm_fc.1} parent=1 // pred_fallthru
      _
    // Predicated region
    $region22: #{model_lstm_fc.1} parent=1 // pred_check
      _
    $region23: #{model_lstm_fc.1} parent=1 // pred_check_branch
      %56 = sbr.rel (0) target = $region25
    $region24: #{model_lstm_fc.1} parent=1 // pred_region
      %s58 = ssub.s32 16, 16
      %59 = vsyncadd [#allocation11], %s58
      %s61 = sshll.u32 [#allocation10], 4
      %s62 = int_to_ptr.vmem [resolvable:$true] %s61
      %64 = dma.hbm_to_vmem [thread:$0]  %s5, 16, %s62, [#allocation11]
    $region25: #{model_lstm_fc.1} parent=1 // pred_fallthru
      _
    // Predicated region
    $region26: #{model_lstm_fc.1} parent=1 // pred_check
      _
    $region27: #{model_lstm_fc.1} parent=1 // pred_check_branch
      %66 = sbr.rel (0) target = $region29
    $region28: #{model_lstm_fc.1} parent=1 // pred_region
      _
    $region29: #{model_lstm_fc.1} parent=1 // pred_fallthru
      _
    // Predicated region
    $region30: #{model_lstm_fc.1} parent=1 // pred_check
      _
    $region31: #{model_lstm_fc.1} parent=1 // pred_check_branch
      %68 = sbr.rel (0) target = $region33
    $region32: #{model_lstm_fc.1} parent=1 // pred_region
      %s70 = ssub.s32 16, 16
      %71 = vsyncadd [#allocation11], %s70
      %s73 = sshll.u32 [#allocation12], 4
      %s74 = int_to_ptr.vmem [resolvable:$true] %s73
      %76 = dma.hbm_to_vmem [thread:$0]  %s7, 16, %s74, [#allocation11]
    $region33: #{model_lstm_fc.1} parent=1 // pred_fallthru
      _
    // Predicated region
    $region34: #{model_lstm_fc.1} parent=1 // pred_check
      _
    $region35: #{model_lstm_fc.1} parent=1 // pred_check_branch
      %78 = sbr.rel (0) target = $region37
    $region36: #{model_lstm_fc.1} parent=1 // pred_region
      %79 = dma.done [#allocation5], 32768
    $region37: #{model_lstm_fc.1} parent=1 // pred_fallthru
      _
    // Predicated region
    $region38: #{model_lstm_fc.1} parent=1 // pred_check
      _
    $region39: #{model_lstm_fc.1} parent=1 // pred_check_branch
      %81 = sbr.rel (0) target = $region41
    $region40: #{model_lstm_fc.1} parent=1 // pred_region
      %82 = dma.done [#allocation8], 65536
    $region41: #{model_lstm_fc.1} parent=1 // pred_fallthru
      _
    // Predicated region
    $region42: #{model_lstm_fc.1} parent=1 // pred_check
      _
    $region43: #{model_lstm_fc.1} parent=1 // pred_check_branch
      %84 = sbr.rel (0) target = $region45
    $region44: #{model_lstm_fc.1} parent=1 // pred_region
      %85 = dma.done [#allocation8], 256
    $region45: #{model_lstm_fc.1} parent=1 // pred_fallthru
      _
    // Predicated region
    $region46: #{model_lstm_fc.1} parent=1 // pred_check
      _
    $region47: #{model_lstm_fc.1} parent=1 // pred_check_branch
      %87 = sbr.rel (0) target = $region49
    $region48: #{model_lstm_fc.1} parent=1 // pred_region
      %88 = dma.done [#allocation11], 16
    $region49: #{model_lstm_fc.1} parent=1 // pred_fallthru
      _
    // Predicated region
    $region50: #{model_lstm_fc.1} parent=1 // pred_check
      _
    $region51: #{model_lstm_fc.1} parent=1 // pred_check_branch
      %90 = sbr.rel (0) target = $region53
    $region52: #{model_lstm_fc.1} parent=1 // pred_region
      %91 = dma.done [#allocation11], 16
    $region53: #{model_lstm_fc.1} parent=1 // pred_fallthru
      _
    %v92 = vld [vmem:[%s0] sm:$0xff]
    %v93 = vld [vmem:[%s0 + $0x8] sm:$0xff]
    %v94 = vld [vmem:[#allocation4] sm:$0xff]
    %v95 = vld [vmem:[#allocation4 + $0x8] sm:$0xff]
    %v96 = vld [vmem:[#allocation4 + $0x10] sm:$0xff]
    %v97 = vld [vmem:[#allocation4 + $0x18] sm:$0xff]
    %v98 = vld [vmem:[#allocation4 + $0x20] sm:$0xff]
    %v99 = vld [vmem:[#allocation4 + $0x28] sm:$0xff]
    %v100 = vld [vmem:[#allocation4 + $0x30] sm:$0xff]
    %v101 = vld [vmem:[#allocation4 + $0x38] sm:$0xff]
    %v102 = vld [vmem:[#allocation4 + $0x40] sm:$0xff]
    %v103 = vld [vmem:[#allocation4 + $0x48] sm:$0xff]
    %v104 = vld [vmem:[#allocation4 + $0x50] sm:$0xff]
    %v105 = vld [vmem:[#allocation4 + $0x58] sm:$0xff]
    %v106 = vld [vmem:[#allocation4 + $0x60] sm:$0xff]
    %v107 = vld [vmem:[#allocation4 + $0x68] sm:$0xff]
    %v108 = vld [vmem:[#allocation4 + $0x70] sm:$0xff]
    %v109 = vld [vmem:[#allocation4 + $0x78] sm:$0xff]
    %v110 = vld [vmem:[#allocation4 + $0x80] sm:$0xff]
    %v111 = vld [vmem:[#allocation4 + $0x88] sm:$0xff]
    %v112 = vld [vmem:[#allocation4 + $0x90] sm:$0xff]
    %v113 = vld [vmem:[#allocation4 + $0x98] sm:$0xff]
    %v114 = vld [vmem:[#allocation4 + $0xa0] sm:$0xff]
    %v115 = vld [vmem:[#allocation4 + $0xa8] sm:$0xff]
    %v116 = vld [vmem:[#allocation4 + $0xb0] sm:$0xff]
    %v117 = vld [vmem:[#allocation4 + $0xb8] sm:$0xff]
    %v118 = vld [vmem:[#allocation4 + $0xc0] sm:$0xff]
    %v119 = vld [vmem:[#allocation4 + $0xc8] sm:$0xff]
    %v120 = vld [vmem:[#allocation4 + $0xd0] sm:$0xff]
    %v121 = vld [vmem:[#allocation4 + $0xd8] sm:$0xff]
    %v122 = vld [vmem:[#allocation4 + $0xe0] sm:$0xff]
    %v123 = vld [vmem:[#allocation4 + $0xe8] sm:$0xff]
    %v124 = vld [vmem:[#allocation4 + $0xf0] sm:$0xff]
    %v125 = vld [vmem:[#allocation4 + $0xf8] sm:$0xff]
    %v126 = vld [vmem:[#allocation4 + $0x100] sm:$0xff]
    %v127 = vld [vmem:[#allocation4 + $0x108] sm:$0xff]
    %v128 = vld [vmem:[#allocation4 + $0x110] sm:$0xff]
    %v129 = vld [vmem:[#allocation4 + $0x118] sm:$0xff]
    %v130 = vld [vmem:[#allocation4 + $0x120] sm:$0xff]
    %v131 = vld [vmem:[#allocation4 + $0x128] sm:$0xff]
    %v132 = vld [vmem:[#allocation4 + $0x130] sm:$0xff]
    %v133 = vld [vmem:[#allocation4 + $0x138] sm:$0xff]
    %v134 = vld [vmem:[#allocation4 + $0x140] sm:$0xff]
    %v135 = vld [vmem:[#allocation4 + $0x148] sm:$0xff]
    %v136 = vld [vmem:[#allocation4 + $0x150] sm:$0xff]
    %v137 = vld [vmem:[#allocation4 + $0x158] sm:$0xff]
    %v138 = vld [vmem:[#allocation4 + $0x160] sm:$0xff]
    %v139 = vld [vmem:[#allocation4 + $0x168] sm:$0xff]
    %v140 = vld [vmem:[#allocation4 + $0x170] sm:$0xff]
    %v141 = vld [vmem:[#allocation4 + $0x178] sm:$0xff]
    %v142 = vld [vmem:[#allocation4 + $0x180] sm:$0xff]
    %v143 = vld [vmem:[#allocation4 + $0x188] sm:$0xff]
    %v144 = vld [vmem:[#allocation4 + $0x190] sm:$0xff]
    %v145 = vld [vmem:[#allocation4 + $0x198] sm:$0xff]
    %v146 = vld [vmem:[#allocation4 + $0x1a0] sm:$0xff]
    %v147 = vld [vmem:[#allocation4 + $0x1a8] sm:$0xff]
    %v148 = vld [vmem:[#allocation4 + $0x1b0] sm:$0xff]
    %v149 = vld [vmem:[#allocation4 + $0x1b8] sm:$0xff]
    %v150 = vld [vmem:[#allocation4 + $0x1c0] sm:$0xff]
    %v151 = vld [vmem:[#allocation4 + $0x1c8] sm:$0xff]
    %v152 = vld [vmem:[#allocation4 + $0x1d0] sm:$0xff]
    %v153 = vld [vmem:[#allocation4 + $0x1d8] sm:$0xff]
    %v154 = vld [vmem:[#allocation4 + $0x1e0] sm:$0xff]
    %v155 = vld [vmem:[#allocation4 + $0x1e8] sm:$0xff]
    %v156 = vld [vmem:[#allocation4 + $0x1f0] sm:$0xff]
    %v157 = vld [vmem:[#allocation4 + $0x1f8] sm:$0xff]
    %v158 = vld [vmem:[#allocation4 + $0x200] sm:$0xff]
    %v159 = vld [vmem:[#allocation4 + $0x208] sm:$0xff]
    %v160 = vld [vmem:[#allocation4 + $0x210] sm:$0xff]
    %v161 = vld [vmem:[#allocation4 + $0x218] sm:$0xff]
    %v162 = vld [vmem:[#allocation4 + $0x220] sm:$0xff]
    %v163 = vld [vmem:[#allocation4 + $0x228] sm:$0xff]
    %v164 = vld [vmem:[#allocation4 + $0x230] sm:$0xff]
    %v165 = vld [vmem:[#allocation4 + $0x238] sm:$0xff]
    %v166 = vld [vmem:[#allocation4 + $0x240] sm:$0xff]
    %v167 = vld [vmem:[#allocation4 + $0x248] sm:$0xff]
    %v168 = vld [vmem:[#allocation4 + $0x250] sm:$0xff]
    %v169 = vld [vmem:[#allocation4 + $0x258] sm:$0xff]
    %v170 = vld [vmem:[#allocation4 + $0x260] sm:$0xff]
    %v171 = vld [vmem:[#allocation4 + $0x268] sm:$0xff]
    %v172 = vld [vmem:[#allocation4 + $0x270] sm:$0xff]
    %v173 = vld [vmem:[#allocation4 + $0x278] sm:$0xff]
    %v174 = vld [vmem:[#allocation4 + $0x280] sm:$0xff]
    %v175 = vld [vmem:[#allocation4 + $0x288] sm:$0xff]
    %v176 = vld [vmem:[#allocation4 + $0x290] sm:$0xff]
    %v177 = vld [vmem:[#allocation4 + $0x298] sm:$0xff]
    %v178 = vld [vmem:[#allocation4 + $0x2a0] sm:$0xff]
    %v179 = vld [vmem:[#allocation4 + $0x2a8] sm:$0xff]
    %v180 = vld [vmem:[#allocation4 + $0x2b0] sm:$0xff]
    %v181 = vld [vmem:[#allocation4 + $0x2b8] sm:$0xff]
    %v182 = vld [vmem:[#allocation4 + $0x2c0] sm:$0xff]
    %v183 = vld [vmem:[#allocation4 + $0x2c8] sm:$0xff]
    %v184 = vld [vmem:[#allocation4 + $0x2d0] sm:$0xff]
    %v185 = vld [vmem:[#allocation4 + $0x2d8] sm:$0xff]
    %v186 = vld [vmem:[#allocation4 + $0x2e0] sm:$0xff]
    %v187 = vld [vmem:[#allocation4 + $0x2e8] sm:$0xff]
    %v188 = vld [vmem:[#allocation4 + $0x2f0] sm:$0xff]
    %v189 = vld [vmem:[#allocation4 + $0x2f8] sm:$0xff]
    %v190 = vld [vmem:[#allocation4 + $0x300] sm:$0xff]
    %v191 = vld [vmem:[#allocation4 + $0x308] sm:$0xff]
    %v192 = vld [vmem:[#allocation4 + $0x310] sm:$0xff]
    %v193 = vld [vmem:[#allocation4 + $0x318] sm:$0xff]
    %v194 = vld [vmem:[#allocation4 + $0x320] sm:$0xff]
    %v195 = vld [vmem:[#allocation4 + $0x328] sm:$0xff]
    %v196 = vld [vmem:[#allocation4 + $0x330] sm:$0xff]
    %v197 = vld [vmem:[#allocation4 + $0x338] sm:$0xff]
    %v198 = vld [vmem:[#allocation4 + $0x340] sm:$0xff]
    %v199 = vld [vmem:[#allocation4 + $0x348] sm:$0xff]
    %v200 = vld [vmem:[#allocation4 + $0x350] sm:$0xff]
    %v201 = vld [vmem:[#allocation4 + $0x358] sm:$0xff]
    %v202 = vld [vmem:[#allocation4 + $0x360] sm:$0xff]
    %v203 = vld [vmem:[#allocation4 + $0x368] sm:$0xff]
    %v204 = vld [vmem:[#allocation4 + $0x370] sm:$0xff]
    %v205 = vld [vmem:[#allocation4 + $0x378] sm:$0xff]
    %v206 = vld [vmem:[#allocation4 + $0x380] sm:$0xff]
    %v207 = vld [vmem:[#allocation4 + $0x388] sm:$0xff]
    %v208 = vld [vmem:[#allocation4 + $0x390] sm:$0xff]
    %v209 = vld [vmem:[#allocation4 + $0x398] sm:$0xff]
    %v210 = vld [vmem:[#allocation4 + $0x3a0] sm:$0xff]
    %v211 = vld [vmem:[#allocation4 + $0x3a8] sm:$0xff]
    %v212 = vld [vmem:[#allocation4 + $0x3b0] sm:$0xff]
    %v213 = vld [vmem:[#allocation4 + $0x3b8] sm:$0xff]
    %v214 = vld [vmem:[#allocation4 + $0x3c0] sm:$0xff]
    %v215 = vld [vmem:[#allocation4 + $0x3c8] sm:$0xff]
    %v216 = vld [vmem:[#allocation4 + $0x3d0] sm:$0xff]
    %v217 = vld [vmem:[#allocation4 + $0x3d8] sm:$0xff]
    %v218 = vld [vmem:[#allocation4 + $0x3e0] sm:$0xff]
    %v219 = vld [vmem:[#allocation4 + $0x3e8] sm:$0xff]
    %v220 = vld [vmem:[#allocation4 + $0x3f0] sm:$0xff]
    %v221 = vld [vmem:[#allocation4 + $0x3f8] sm:$0xff]
    %v222 = vld [vmem:[#allocation4 + $0x400] sm:$0xff]
    %v223 = vld [vmem:[#allocation4 + $0x408] sm:$0xff]
    %v224 = vld [vmem:[#allocation4 + $0x410] sm:$0xff]
    %v225 = vld [vmem:[#allocation4 + $0x418] sm:$0xff]
    %v226 = vld [vmem:[#allocation4 + $0x420] sm:$0xff]
    %v227 = vld [vmem:[#allocation4 + $0x428] sm:$0xff]
    %v228 = vld [vmem:[#allocation4 + $0x430] sm:$0xff]
    %v229 = vld [vmem:[#allocation4 + $0x438] sm:$0xff]
    %v230 = vld [vmem:[#allocation4 + $0x440] sm:$0xff]
    %v231 = vld [vmem:[#allocation4 + $0x448] sm:$0xff]
    %v232 = vld [vmem:[#allocation4 + $0x450] sm:$0xff]
    %v233 = vld [vmem:[#allocation4 + $0x458] sm:$0xff]
    %v234 = vld [vmem:[#allocation4 + $0x460] sm:$0xff]
    %v235 = vld [vmem:[#allocation4 + $0x468] sm:$0xff]
    %v236 = vld [vmem:[#allocation4 + $0x470] sm:$0xff]
    %v237 = vld [vmem:[#allocation4 + $0x478] sm:$0xff]
    %v238 = vld [vmem:[#allocation4 + $0x480] sm:$0xff]
    %v239 = vld [vmem:[#allocation4 + $0x488] sm:$0xff]
    %v240 = vld [vmem:[#allocation4 + $0x490] sm:$0xff]
    %v241 = vld [vmem:[#allocation4 + $0x498] sm:$0xff]
    %v242 = vld [vmem:[#allocation4 + $0x4a0] sm:$0xff]
    %v243 = vld [vmem:[#allocation4 + $0x4a8] sm:$0xff]
    %v244 = vld [vmem:[#allocation4 + $0x4b0] sm:$0xff]
    %v245 = vld [vmem:[#allocation4 + $0x4b8] sm:$0xff]
    %v246 = vld [vmem:[#allocation4 + $0x4c0] sm:$0xff]
    %v247 = vld [vmem:[#allocation4 + $0x4c8] sm:$0xff]
    %v248 = vld [vmem:[#allocation4 + $0x4d0] sm:$0xff]
    %v249 = vld [vmem:[#allocation4 + $0x4d8] sm:$0xff]
    %v250 = vld [vmem:[#allocation4 + $0x4e0] sm:$0xff]
    %v251 = vld [vmem:[#allocation4 + $0x4e8] sm:$0xff]
    %v252 = vld [vmem:[#allocation4 + $0x4f0] sm:$0xff]
    %v253 = vld [vmem:[#allocation4 + $0x4f8] sm:$0xff]
    %v254 = vld [vmem:[#allocation4 + $0x500] sm:$0xff]
    %v255 = vld [vmem:[#allocation4 + $0x508] sm:$0xff]
    %v256 = vld [vmem:[#allocation4 + $0x510] sm:$0xff]
    %v257 = vld [vmem:[#allocation4 + $0x518] sm:$0xff]
    %v258 = vld [vmem:[#allocation4 + $0x520] sm:$0xff]
    %v259 = vld [vmem:[#allocation4 + $0x528] sm:$0xff]
    %v260 = vld [vmem:[#allocation4 + $0x530] sm:$0xff]
    %v261 = vld [vmem:[#allocation4 + $0x538] sm:$0xff]
    %v262 = vld [vmem:[#allocation4 + $0x540] sm:$0xff]
    %v263 = vld [vmem:[#allocation4 + $0x548] sm:$0xff]
    %v264 = vld [vmem:[#allocation4 + $0x550] sm:$0xff]
    %v265 = vld [vmem:[#allocation4 + $0x558] sm:$0xff]
    %v266 = vld [vmem:[#allocation4 + $0x560] sm:$0xff]
    %v267 = vld [vmem:[#allocation4 + $0x568] sm:$0xff]
    %v268 = vld [vmem:[#allocation4 + $0x570] sm:$0xff]
    %v269 = vld [vmem:[#allocation4 + $0x578] sm:$0xff]
    %v270 = vld [vmem:[#allocation4 + $0x580] sm:$0xff]
    %v271 = vld [vmem:[#allocation4 + $0x588] sm:$0xff]
    %v272 = vld [vmem:[#allocation4 + $0x590] sm:$0xff]
    %v273 = vld [vmem:[#allocation4 + $0x598] sm:$0xff]
    %v274 = vld [vmem:[#allocation4 + $0x5a0] sm:$0xff]
    %v275 = vld [vmem:[#allocation4 + $0x5a8] sm:$0xff]
    %v276 = vld [vmem:[#allocation4 + $0x5b0] sm:$0xff]
    %v277 = vld [vmem:[#allocation4 + $0x5b8] sm:$0xff]
    %v278 = vld [vmem:[#allocation4 + $0x5c0] sm:$0xff]
    %v279 = vld [vmem:[#allocation4 + $0x5c8] sm:$0xff]
    %v280 = vld [vmem:[#allocation4 + $0x5d0] sm:$0xff]
    %v281 = vld [vmem:[#allocation4 + $0x5d8] sm:$0xff]
    %v282 = vld [vmem:[#allocation4 + $0x5e0] sm:$0xff]
    %v283 = vld [vmem:[#allocation4 + $0x5e8] sm:$0xff]
    %v284 = vld [vmem:[#allocation4 + $0x5f0] sm:$0xff]
    %v285 = vld [vmem:[#allocation4 + $0x5f8] sm:$0xff]
    %v286 = vld [vmem:[#allocation4 + $0x600] sm:$0xff]
    %v287 = vld [vmem:[#allocation4 + $0x608] sm:$0xff]
    %v288 = vld [vmem:[#allocation4 + $0x610] sm:$0xff]
    %v289 = vld [vmem:[#allocation4 + $0x618] sm:$0xff]
    %v290 = vld [vmem:[#allocation4 + $0x620] sm:$0xff]
    %v291 = vld [vmem:[#allocation4 + $0x628] sm:$0xff]
    %v292 = vld [vmem:[#allocation4 + $0x630] sm:$0xff]
    %v293 = vld [vmem:[#allocation4 + $0x638] sm:$0xff]
    %v294 = vld [vmem:[#allocation4 + $0x640] sm:$0xff]
    %v295 = vld [vmem:[#allocation4 + $0x648] sm:$0xff]
    %v296 = vld [vmem:[#allocation4 + $0x650] sm:$0xff]
    %v297 = vld [vmem:[#allocation4 + $0x658] sm:$0xff]
    %v298 = vld [vmem:[#allocation4 + $0x660] sm:$0xff]
    %v299 = vld [vmem:[#allocation4 + $0x668] sm:$0xff]
    %v300 = vld [vmem:[#allocation4 + $0x670] sm:$0xff]
    %v301 = vld [vmem:[#allocation4 + $0x678] sm:$0xff]
    %v302 = vld [vmem:[#allocation4 + $0x680] sm:$0xff]
    %v303 = vld [vmem:[#allocation4 + $0x688] sm:$0xff]
    %v304 = vld [vmem:[#allocation4 + $0x690] sm:$0xff]
    %v305 = vld [vmem:[#allocation4 + $0x698] sm:$0xff]
    %v306 = vld [vmem:[#allocation4 + $0x6a0] sm:$0xff]
    %v307 = vld [vmem:[#allocation4 + $0x6a8] sm:$0xff]
    %v308 = vld [vmem:[#allocation4 + $0x6b0] sm:$0xff]
    %v309 = vld [vmem:[#allocation4 + $0x6b8] sm:$0xff]
    %v310 = vld [vmem:[#allocation4 + $0x6c0] sm:$0xff]
    %v311 = vld [vmem:[#allocation4 + $0x6c8] sm:$0xff]
    %v312 = vld [vmem:[#allocation4 + $0x6d0] sm:$0xff]
    %v313 = vld [vmem:[#allocation4 + $0x6d8] sm:$0xff]
    %v314 = vld [vmem:[#allocation4 + $0x6e0] sm:$0xff]
    %v315 = vld [vmem:[#allocation4 + $0x6e8] sm:$0xff]
    %v316 = vld [vmem:[#allocation4 + $0x6f0] sm:$0xff]
    %v317 = vld [vmem:[#allocation4 + $0x6f8] sm:$0xff]
    %v318 = vld [vmem:[#allocation4 + $0x700] sm:$0xff]
    %v319 = vld [vmem:[#allocation4 + $0x708] sm:$0xff]
    %v320 = vld [vmem:[#allocation4 + $0x710] sm:$0xff]
    %v321 = vld [vmem:[#allocation4 + $0x718] sm:$0xff]
    %v322 = vld [vmem:[#allocation4 + $0x720] sm:$0xff]
    %v323 = vld [vmem:[#allocation4 + $0x728] sm:$0xff]
    %v324 = vld [vmem:[#allocation4 + $0x730] sm:$0xff]
    %v325 = vld [vmem:[#allocation4 + $0x738] sm:$0xff]
    %v326 = vld [vmem:[#allocation4 + $0x740] sm:$0xff]
    %v327 = vld [vmem:[#allocation4 + $0x748] sm:$0xff]
    %v328 = vld [vmem:[#allocation4 + $0x750] sm:$0xff]
    %v329 = vld [vmem:[#allocation4 + $0x758] sm:$0xff]
    %v330 = vld [vmem:[#allocation4 + $0x760] sm:$0xff]
    %v331 = vld [vmem:[#allocation4 + $0x768] sm:$0xff]
    %v332 = vld [vmem:[#allocation4 + $0x770] sm:$0xff]
    %v333 = vld [vmem:[#allocation4 + $0x778] sm:$0xff]
    %v334 = vld [vmem:[#allocation4 + $0x780] sm:$0xff]
    %v335 = vld [vmem:[#allocation4 + $0x788] sm:$0xff]
    %v336 = vld [vmem:[#allocation4 + $0x790] sm:$0xff]
    %v337 = vld [vmem:[#allocation4 + $0x798] sm:$0xff]
    %v338 = vld [vmem:[#allocation4 + $0x7a0] sm:$0xff]
    %v339 = vld [vmem:[#allocation4 + $0x7a8] sm:$0xff]
    %v340 = vld [vmem:[#allocation4 + $0x7b0] sm:$0xff]
    %v341 = vld [vmem:[#allocation4 + $0x7b8] sm:$0xff]
    %v342 = vld [vmem:[#allocation4 + $0x7c0] sm:$0xff]
    %v343 = vld [vmem:[#allocation4 + $0x7c8] sm:$0xff]
    %v344 = vld [vmem:[#allocation4 + $0x7d0] sm:$0xff]
    %v345 = vld [vmem:[#allocation4 + $0x7d8] sm:$0xff]
    %v346 = vld [vmem:[#allocation4 + $0x7e0] sm:$0xff]
    %v347 = vld [vmem:[#allocation4 + $0x7e8] sm:$0xff]
    %v348 = vld [vmem:[#allocation4 + $0x7f0] sm:$0xff]
    %v349 = vld [vmem:[#allocation4 + $0x7f8] sm:$0xff]
    %v350 = vld [vmem:[#allocation9] sm:$0xff]
    %v351 = vld [vmem:[#allocation9 + $0x8] sm:$0xff]
    %v354 = vlaneseq
    %v355 = vshrl.u32 %v354, 7
    %v356 = vsub.s32 0, %v355
    %v357 = vrot.slane %v350, %v356
    %v358 = vlaneseq
    %v359 = vshrl.u32 %v358, 7
    %v360 = vsub.s32 1, %v359
    %v361 = vrot.slane %v350, %v360
    %v362 = vlaneseq
    %v363 = vshrl.u32 %v362, 7
    %v364 = vsub.s32 2, %v363
    %v365 = vrot.slane %v350, %v364
    %v366 = vlaneseq
    %v367 = vshrl.u32 %v366, 7
    %v368 = vsub.s32 3, %v367
    %v369 = vrot.slane %v350, %v368
    %v370 = vlaneseq
    %v371 = vshrl.u32 %v370, 7
    %v372 = vsub.s32 4, %v371
    %v373 = vrot.slane %v350, %v372
    %v374 = vlaneseq
    %v375 = vshrl.u32 %v374, 7
    %v376 = vsub.s32 5, %v375
    %v377 = vrot.slane %v350, %v376
    %v378 = vlaneseq
    %v379 = vshrl.u32 %v378, 7
    %v380 = vsub.s32 6, %v379
    %v381 = vrot.slane %v350, %v380
    %v382 = vlaneseq
    %v383 = vshrl.u32 %v382, 7
    %v384 = vsub.s32 7, %v383
    %v385 = vrot.slane %v350, %v384
    %v386 = vlaneseq
    %v387 = vshrl.u32 %v386, 7
    %v388 = vsub.s32 0, %v387
    %v389 = vrot.slane %v351, %v388
    %v390 = vlaneseq
    %v391 = vshrl.u32 %v390, 7
    %v392 = vsub.s32 1, %v391
    %v393 = vrot.slane %v351, %v392
    %v394 = vlaneseq
    %v395 = vshrl.u32 %v394, 7
    %v396 = vsub.s32 2, %v395
    %v397 = vrot.slane %v351, %v396
    %v398 = vlaneseq
    %v399 = vshrl.u32 %v398, 7
    %v400 = vsub.s32 3, %v399
    %v401 = vrot.slane %v351, %v400
    %v402 = vlaneseq
    %v403 = vshrl.u32 %v402, 7
    %v404 = vsub.s32 4, %v403
    %v405 = vrot.slane %v351, %v404
    %v406 = vlaneseq
    %v407 = vshrl.u32 %v406, 7
    %v408 = vsub.s32 5, %v407
    %v409 = vrot.slane %v351, %v408
    %v410 = vlaneseq
    %v411 = vshrl.u32 %v410, 7
    %v412 = vsub.s32 6, %v411
    %v413 = vrot.slane %v351, %v412
    %v414 = vlaneseq
    %v415 = vshrl.u32 %v414, 7
    %v416 = vsub.s32 7, %v415
    %v417 = vrot.slane %v351, %v416
    %434 = vmatprep.subr.mxu0 %v95
    %435 = vmatpush1.msra.mxu0 %v94
    %436 = vmatprep.subr.mxu0 %v111
    %437 = vmatpush1.msra.mxu0 %v110
    %438 = vmatprep.subr.mxu0 %v127
    %439 = vmatpush1.msra.mxu0 %v126
    %440 = vmatprep.subr.mxu0 %v143
    %441 = vmatpush1.msra.mxu0 %v142
    %442 = vmatprep.subr.mxu0 %v159
    %443 = vmatpush1.msra.mxu0 %v158
    %444 = vmatprep.subr.mxu0 %v175
    %445 = vmatpush1.msra.mxu0 %v174
    %446 = vmatprep.subr.mxu0 %v191
    %447 = vmatpush1.msra.mxu0 %v190
    %448 = vmatprep.subr.mxu0 %v207
    %449 = vmatpush1.msra.mxu0 %v206
    %450 = vmatprep.subr.mxu0 %v223
    %451 = vmatpush1.msra.mxu0 %v222
    %452 = vmatprep.subr.mxu0 %v239
    %453 = vmatpush1.msra.mxu0 %v238
    %454 = vmatprep.subr.mxu0 %v255
    %455 = vmatpush1.msra.mxu0 %v254
    %456 = vmatprep.subr.mxu0 %v271
    %457 = vmatpush1.msra.mxu0 %v270
    %458 = vmatprep.subr.mxu0 %v287
    %459 = vmatpush1.msra.mxu0 %v286
    %460 = vmatprep.subr.mxu0 %v303
    %461 = vmatpush1.msra.mxu0 %v302
    %462 = vmatprep.subr.mxu0 %v319
    %463 = vmatpush1.msra.mxu0 %v318
    %464 = vmatprep.subr.mxu0 %v335
    %465 = vmatpush1.msra.mxu0 %v334
    %466 = vmatprep.subr.mxu0 0.0
    %467 = vmatpush1.msra.mxu0 0.0
    %468 = vmatprep.subr.mxu0 0.0
    %469 = vmatpush1.msra.mxu0 0.0
    %470 = vmatprep.subr.mxu0 0.0
    %471 = vmatpush1.msra.mxu0 0.0
    %472 = vmatprep.subr.mxu0 0.0
    %473 = vmatpush1.msra.mxu0 0.0
    %474 = vmatprep.subr.mxu0 0.0
    %475 = vmatpush1.msra.mxu0 0.0
    %476 = vmatprep.subr.mxu0 0.0
    %477 = vmatpush1.msra.mxu0 0.0
    %478 = vmatprep.subr.mxu0 0.0
    %479 = vmatpush1.msra.mxu0 0.0
    %480 = vmatprep.subr.mxu0 0.0
    %481 = vmatpush1.msra.mxu0 0.0
    %482 = vmatprep.subr.mxu0 0.0
    %483 = vmatpush1.msra.mxu0 0.0
    %484 = vmatprep.subr.mxu0 0.0
    %485 = vmatpush1.msra.mxu0 0.0
    %486 = vmatprep.subr.mxu0 0.0
    %487 = vmatpush1.msra.mxu0 0.0
    %488 = vmatprep.subr.mxu0 0.0
    %489 = vmatpush1.msra.mxu0 0.0
    %490 = vmatprep.subr.mxu0 0.0
    %491 = vmatpush1.msra.mxu0 0.0
    %492 = vmatprep.subr.mxu0 0.0
    %493 = vmatpush1.msra.mxu0 0.0
    %494 = vmatprep.subr.mxu0 0.0
    %495 = vmatpush1.msra.mxu0 0.0
    %496 = vmatprep.subr.mxu0 0.0
    %497 = vmatpush1.msra.mxu0 0.0
    %498 = vmatprep.mubr.f32.mxu0 0.0
    %499 = vmatmul.mubr.f32.gmra.mrb[0].mxu0 %v92
    %v500 = vpop.f32.mrb[0].mxu0
    %v501 = vadd.f32 %v357, %v500
    %v502 = vpop.f32.mrb[0].mxu0
    %v503 = vadd.f32 %v361, %v502
    %504 = vmatprep.mubr.f32.mxu0 0.0
    %505 = vmatmul.mubr.f32.gmra.mrb[0].mxu0 %v93
    %v506 = vpop.f32.mrb[0].mxu0
    %v507 = vadd.f32 %v357, %v506
    %v508 = vpop.f32.mrb[0].mxu0
    %v509 = vadd.f32 %v361, %v508
    %510 = vdwg.mxu0
    %511 = vmatprep.subr.mxu0 %v97
    %512 = vmatpush1.msra.mxu0 %v96
    %513 = vmatprep.subr.mxu0 %v113
    %514 = vmatpush1.msra.mxu0 %v112
    %515 = vmatprep.subr.mxu0 %v129
    %516 = vmatpush1.msra.mxu0 %v128
    %517 = vmatprep.subr.mxu0 %v145
    %518 = vmatpush1.msra.mxu0 %v144
    %519 = vmatprep.subr.mxu0 %v161
    %520 = vmatpush1.msra.mxu0 %v160
    %521 = vmatprep.subr.mxu0 %v177
    %522 = vmatpush1.msra.mxu0 %v176
    %523 = vmatprep.subr.mxu0 %v193
    %524 = vmatpush1.msra.mxu0 %v192
    %525 = vmatprep.subr.mxu0 %v209
    %526 = vmatpush1.msra.mxu0 %v208
    %527 = vmatprep.subr.mxu0 %v225
    %528 = vmatpush1.msra.mxu0 %v224
    %529 = vmatprep.subr.mxu0 %v241
    %530 = vmatpush1.msra.mxu0 %v240
    %531 = vmatprep.subr.mxu0 %v257
    %532 = vmatpush1.msra.mxu0 %v256
    %533 = vmatprep.subr.mxu0 %v273
    %534 = vmatpush1.msra.mxu0 %v272
    %535 = vmatprep.subr.mxu0 %v289
    %536 = vmatpush1.msra.mxu0 %v288
    %537 = vmatprep.subr.mxu0 %v305
    %538 = vmatpush1.msra.mxu0 %v304
    %539 = vmatprep.subr.mxu0 %v321
    %540 = vmatpush1.msra.mxu0 %v320
    %541 = vmatprep.subr.mxu0 %v337
    %542 = vmatpush1.msra.mxu0 %v336
    %543 = vmatprep.subr.mxu0 0.0
    %544 = vmatpush1.msra.mxu0 0.0
    %545 = vmatprep.subr.mxu0 0.0
    %546 = vmatpush1.msra.mxu0 0.0
    %547 = vmatprep.subr.mxu0 0.0
    %548 = vmatpush1.msra.mxu0 0.0
    %549 = vmatprep.subr.mxu0 0.0
    %550 = vmatpush1.msra.mxu0 0.0
    %551 = vmatprep.subr.mxu0 0.0
    %552 = vmatpush1.msra.mxu0 0.0
    %553 = vmatprep.subr.mxu0 0.0
    %554 = vmatpush1.msra.mxu0 0.0
    %555 = vmatprep.subr.mxu0 0.0
    %556 = vmatpush1.msra.mxu0 0.0
    %557 = vmatprep.subr.mxu0 0.0
    %558 = vmatpush1.msra.mxu0 0.0
    %559 = vmatprep.subr.mxu0 0.0
    %560 = vmatpush1.msra.mxu0 0.0
    %561 = vmatprep.subr.mxu0 0.0
    %562 = vmatpush1.msra.mxu0 0.0
    %563 = vmatprep.subr.mxu0 0.0
    %564 = vmatpush1.msra.mxu0 0.0
    %565 = vmatprep.subr.mxu0 0.0
    %566 = vmatpush1.msra.mxu0 0.0
    %567 = vmatprep.subr.mxu0 0.0
    %568 = vmatpush1.msra.mxu0 0.0
    %569 = vmatprep.subr.mxu0 0.0
    %570 = vmatpush1.msra.mxu0 0.0
    %571 = vmatprep.subr.mxu0 0.0
    %572 = vmatpush1.msra.mxu0 0.0
    %573 = vmatprep.subr.mxu0 0.0
    %574 = vmatpush1.msra.mxu0 0.0
    %575 = vmatprep.mubr.f32.mxu0 0.0
    %576 = vmatmul.mubr.f32.gmra.mrb[0].mxu0 %v92
    %v577 = vpop.f32.mrb[0].mxu0
    %v578 = vadd.f32 %v365, %v577
    %v579 = vpop.f32.mrb[0].mxu0
    %v580 = vadd.f32 %v369, %v579
    %581 = vmatprep.mubr.f32.mxu0 0.0
    %582 = vmatmul.mubr.f32.gmra.mrb[0].mxu0 %v93
    %v583 = vpop.f32.mrb[0].mxu0
    %v584 = vadd.f32 %v365, %v583
    %v585 = vpop.f32.mrb[0].mxu0
    %v586 = vadd.f32 %v369, %v585
    %587 = vdwg.mxu0
    %588 = vmatprep.subr.mxu0 %v99
    %589 = vmatpush1.msra.mxu0 %v98
    %590 = vmatprep.subr.mxu0 %v115
    %591 = vmatpush1.msra.mxu0 %v114
    %592 = vmatprep.subr.mxu0 %v131
    %593 = vmatpush1.msra.mxu0 %v130
    %594 = vmatprep.subr.mxu0 %v147
    %595 = vmatpush1.msra.mxu0 %v146
    %596 = vmatprep.subr.mxu0 %v163
    %597 = vmatpush1.msra.mxu0 %v162
    %598 = vmatprep.subr.mxu0 %v179
    %599 = vmatpush1.msra.mxu0 %v178
    %600 = vmatprep.subr.mxu0 %v195
    %601 = vmatpush1.msra.mxu0 %v194
    %602 = vmatprep.subr.mxu0 %v211
    %603 = vmatpush1.msra.mxu0 %v210
    %604 = vmatprep.subr.mxu0 %v227
    %605 = vmatpush1.msra.mxu0 %v226
    %606 = vmatprep.subr.mxu0 %v243
    %607 = vmatpush1.msra.mxu0 %v242
    %608 = vmatprep.subr.mxu0 %v259
    %609 = vmatpush1.msra.mxu0 %v258
    %610 = vmatprep.subr.mxu0 %v275
    %611 = vmatpush1.msra.mxu0 %v274
    %612 = vmatprep.subr.mxu0 %v291
    %613 = vmatpush1.msra.mxu0 %v290
    %614 = vmatprep.subr.mxu0 %v307
    %615 = vmatpush1.msra.mxu0 %v306
    %616 = vmatprep.subr.mxu0 %v323
    %617 = vmatpush1.msra.mxu0 %v322
    %618 = vmatprep.subr.mxu0 %v339
    %619 = vmatpush1.msra.mxu0 %v338
    %620 = vmatprep.subr.mxu0 0.0
    %621 = vmatpush1.msra.mxu0 0.0
    %622 = vmatprep.subr.mxu0 0.0
    %623 = vmatpush1.msra.mxu0 0.0
    %624 = vmatprep.subr.mxu0 0.0
    %625 = vmatpush1.msra.mxu0 0.0
    %626 = vmatprep.subr.mxu0 0.0
    %627 = vmatpush1.msra.mxu0 0.0
    %628 = vmatprep.subr.mxu0 0.0
    %629 = vmatpush1.msra.mxu0 0.0
    %630 = vmatprep.subr.mxu0 0.0
    %631 = vmatpush1.msra.mxu0 0.0
    %632 = vmatprep.subr.mxu0 0.0
    %633 = vmatpush1.msra.mxu0 0.0
    %634 = vmatprep.subr.mxu0 0.0
    %635 = vmatpush1.msra.mxu0 0.0
    %636 = vmatprep.subr.mxu0 0.0
    %637 = vmatpush1.msra.mxu0 0.0
    %638 = vmatprep.subr.mxu0 0.0
    %639 = vmatpush1.msra.mxu0 0.0
    %640 = vmatprep.subr.mxu0 0.0
    %641 = vmatpush1.msra.mxu0 0.0
    %642 = vmatprep.subr.mxu0 0.0
    %643 = vmatpush1.msra.mxu0 0.0
    %644 = vmatprep.subr.mxu0 0.0
    %645 = vmatpush1.msra.mxu0 0.0
    %646 = vmatprep.subr.mxu0 0.0
    %647 = vmatpush1.msra.mxu0 0.0
    %648 = vmatprep.subr.mxu0 0.0
    %649 = vmatpush1.msra.mxu0 0.0
    %650 = vmatprep.subr.mxu0 0.0
    %651 = vmatpush1.msra.mxu0 0.0
    %652 = vmatprep.mubr.f32.mxu0 0.0
    %653 = vmatmul.mubr.f32.gmra.mrb[0].mxu0 %v92
    %v654 = vpop.f32.mrb[0].mxu0
    %v655 = vadd.f32 %v373, %v654
    %v656 = vpop.f32.mrb[0].mxu0
    %v657 = vadd.f32 %v377, %v656
    %658 = vmatprep.mubr.f32.mxu0 0.0
    %659 = vmatmul.mubr.f32.gmra.mrb[0].mxu0 %v93
    %v660 = vpop.f32.mrb[0].mxu0
    %v661 = vadd.f32 %v373, %v660
    %v662 = vpop.f32.mrb[0].mxu0
    %v663 = vadd.f32 %v377, %v662
    %664 = vdwg.mxu0
    %665 = vmatprep.subr.mxu0 %v101
    %666 = vmatpush1.msra.mxu0 %v100
    %667 = vmatprep.subr.mxu0 %v117
    %668 = vmatpush1.msra.mxu0 %v116
    %669 = vmatprep.subr.mxu0 %v133
    %670 = vmatpush1.msra.mxu0 %v132
    %671 = vmatprep.subr.mxu0 %v149
    %672 = vmatpush1.msra.mxu0 %v148
    %673 = vmatprep.subr.mxu0 %v165
    %674 = vmatpush1.msra.mxu0 %v164
    %675 = vmatprep.subr.mxu0 %v181
    %676 = vmatpush1.msra.mxu0 %v180
    %677 = vmatprep.subr.mxu0 %v197
    %678 = vmatpush1.msra.mxu0 %v196
    %679 = vmatprep.subr.mxu0 %v213
    %680 = vmatpush1.msra.mxu0 %v212
    %681 = vmatprep.subr.mxu0 %v229
    %682 = vmatpush1.msra.mxu0 %v228
    %683 = vmatprep.subr.mxu0 %v245
    %684 = vmatpush1.msra.mxu0 %v244
    %685 = vmatprep.subr.mxu0 %v261
    %686 = vmatpush1.msra.mxu0 %v260
    %687 = vmatprep.subr.mxu0 %v277
    %688 = vmatpush1.msra.mxu0 %v276
    %689 = vmatprep.subr.mxu0 %v293
    %690 = vmatpush1.msra.mxu0 %v292
    %691 = vmatprep.subr.mxu0 %v309
    %692 = vmatpush1.msra.mxu0 %v308
    %693 = vmatprep.subr.mxu0 %v325
    %694 = vmatpush1.msra.mxu0 %v324
    %695 = vmatprep.subr.mxu0 %v341
    %696 = vmatpush1.msra.mxu0 %v340
    %697 = vmatprep.subr.mxu0 0.0
    %698 = vmatpush1.msra.mxu0 0.0
    %699 = vmatprep.subr.mxu0 0.0
    %700 = vmatpush1.msra.mxu0 0.0
    %701 = vmatprep.subr.mxu0 0.0
    %702 = vmatpush1.msra.mxu0 0.0
    %703 = vmatprep.subr.mxu0 0.0
    %704 = vmatpush1.msra.mxu0 0.0
    %705 = vmatprep.subr.mxu0 0.0
    %706 = vmatpush1.msra.mxu0 0.0
    %707 = vmatprep.subr.mxu0 0.0
    %708 = vmatpush1.msra.mxu0 0.0
    %709 = vmatprep.subr.mxu0 0.0
    %710 = vmatpush1.msra.mxu0 0.0
    %711 = vmatprep.subr.mxu0 0.0
    %712 = vmatpush1.msra.mxu0 0.0
    %713 = vmatprep.subr.mxu0 0.0
    %714 = vmatpush1.msra.mxu0 0.0
    %715 = vmatprep.subr.mxu0 0.0
    %716 = vmatpush1.msra.mxu0 0.0
    %717 = vmatprep.subr.mxu0 0.0
    %718 = vmatpush1.msra.mxu0 0.0
    %719 = vmatprep.subr.mxu0 0.0
    %720 = vmatpush1.msra.mxu0 0.0
    %721 = vmatprep.subr.mxu0 0.0
    %722 = vmatpush1.msra.mxu0 0.0
    %723 = vmatprep.subr.mxu0 0.0
    %724 = vmatpush1.msra.mxu0 0.0
    %725 = vmatprep.subr.mxu0 0.0
    %726 = vmatpush1.msra.mxu0 0.0
    %727 = vmatprep.subr.mxu0 0.0
    %728 = vmatpush1.msra.mxu0 0.0
    %729 = vmatprep.mubr.f32.mxu0 0.0
    %730 = vmatmul.mubr.f32.gmra.mrb[0].mxu0 %v92
    %v731 = vpop.f32.mrb[0].mxu0
    %v732 = vadd.f32 %v381, %v731
    %v733 = vpop.f32.mrb[0].mxu0
    %v734 = vadd.f32 %v385, %v733
    %735 = vmatprep.mubr.f32.mxu0 0.0
    %736 = vmatmul.mubr.f32.gmra.mrb[0].mxu0 %v93
    %v737 = vpop.f32.mrb[0].mxu0
    %v738 = vadd.f32 %v381, %v737
    %v739 = vpop.f32.mrb[0].mxu0
    %v740 = vadd.f32 %v385, %v739
    %741 = vdwg.mxu0
    %742 = vmatprep.subr.mxu0 %v103
    %743 = vmatpush1.msra.mxu0 %v102
    %744 = vmatprep.subr.mxu0 %v119
    %745 = vmatpush1.msra.mxu0 %v118
    %746 = vmatprep.subr.mxu0 %v135
    %747 = vmatpush1.msra.mxu0 %v134
    %748 = vmatprep.subr.mxu0 %v151
    %749 = vmatpush1.msra.mxu0 %v150
    %750 = vmatprep.subr.mxu0 %v167
    %751 = vmatpush1.msra.mxu0 %v166
    %752 = vmatprep.subr.mxu0 %v183
    %753 = vmatpush1.msra.mxu0 %v182
    %754 = vmatprep.subr.mxu0 %v199
    %755 = vmatpush1.msra.mxu0 %v198
    %756 = vmatprep.subr.mxu0 %v215
    %757 = vmatpush1.msra.mxu0 %v214
    %758 = vmatprep.subr.mxu0 %v231
    %759 = vmatpush1.msra.mxu0 %v230
    %760 = vmatprep.subr.mxu0 %v247
    %761 = vmatpush1.msra.mxu0 %v246
    %762 = vmatprep.subr.mxu0 %v263
    %763 = vmatpush1.msra.mxu0 %v262
    %764 = vmatprep.subr.mxu0 %v279
    %765 = vmatpush1.msra.mxu0 %v278
    %766 = vmatprep.subr.mxu0 %v295
    %767 = vmatpush1.msra.mxu0 %v294
    %768 = vmatprep.subr.mxu0 %v311
    %769 = vmatpush1.msra.mxu0 %v310
    %770 = vmatprep.subr.mxu0 %v327
    %771 = vmatpush1.msra.mxu0 %v326
    %772 = vmatprep.subr.mxu0 %v343
    %773 = vmatpush1.msra.mxu0 %v342
    %774 = vmatprep.subr.mxu0 0.0
    %775 = vmatpush1.msra.mxu0 0.0
    %776 = vmatprep.subr.mxu0 0.0
    %777 = vmatpush1.msra.mxu0 0.0
    %778 = vmatprep.subr.mxu0 0.0
    %779 = vmatpush1.msra.mxu0 0.0
    %780 = vmatprep.subr.mxu0 0.0
    %781 = vmatpush1.msra.mxu0 0.0
    %782 = vmatprep.subr.mxu0 0.0
    %783 = vmatpush1.msra.mxu0 0.0
    %784 = vmatprep.subr.mxu0 0.0
    %785 = vmatpush1.msra.mxu0 0.0
    %786 = vmatprep.subr.mxu0 0.0
    %787 = vmatpush1.msra.mxu0 0.0
    %788 = vmatprep.subr.mxu0 0.0
    %789 = vmatpush1.msra.mxu0 0.0
    %790 = vmatprep.subr.mxu0 0.0
    %791 = vmatpush1.msra.mxu0 0.0
    %792 = vmatprep.subr.mxu0 0.0
    %793 = vmatpush1.msra.mxu0 0.0
    %794 = vmatprep.subr.mxu0 0.0
    %795 = vmatpush1.msra.mxu0 0.0
    %796 = vmatprep.subr.mxu0 0.0
    %797 = vmatpush1.msra.mxu0 0.0
    %798 = vmatprep.subr.mxu0 0.0
    %799 = vmatpush1.msra.mxu0 0.0
    %800 = vmatprep.subr.mxu0 0.0
    %801 = vmatpush1.msra.mxu0 0.0
    %802 = vmatprep.subr.mxu0 0.0
    %803 = vmatpush1.msra.mxu0 0.0
    %804 = vmatprep.subr.mxu0 0.0
    %805 = vmatpush1.msra.mxu0 0.0
    %806 = vmatprep.mubr.f32.mxu0 0.0
    %807 = vmatmul.mubr.f32.gmra.mrb[0].mxu0 %v92
    %v808 = vpop.f32.mrb[0].mxu0
    %v809 = vadd.f32 %v389, %v808
    %v810 = vpop.f32.mrb[0].mxu0
    %v811 = vadd.f32 %v393, %v810
    %812 = vmatprep.mubr.f32.mxu0 0.0
    %813 = vmatmul.mubr.f32.gmra.mrb[0].mxu0 %v93
    %v814 = vpop.f32.mrb[0].mxu0
    %v815 = vadd.f32 %v389, %v814
    %v816 = vpop.f32.mrb[0].mxu0
    %v817 = vadd.f32 %v393, %v816
    %818 = vdwg.mxu0
    %819 = vmatprep.subr.mxu0 %v105
    %820 = vmatpush1.msra.mxu0 %v104
    %821 = vmatprep.subr.mxu0 %v121
    %822 = vmatpush1.msra.mxu0 %v120
    %823 = vmatprep.subr.mxu0 %v137
    %824 = vmatpush1.msra.mxu0 %v136
    %825 = vmatprep.subr.mxu0 %v153
    %826 = vmatpush1.msra.mxu0 %v152
    %827 = vmatprep.subr.mxu0 %v169
    %828 = vmatpush1.msra.mxu0 %v168
    %829 = vmatprep.subr.mxu0 %v185
    %830 = vmatpush1.msra.mxu0 %v184
    %831 = vmatprep.subr.mxu0 %v201
    %832 = vmatpush1.msra.mxu0 %v200
    %833 = vmatprep.subr.mxu0 %v217
    %834 = vmatpush1.msra.mxu0 %v216
    %835 = vmatprep.subr.mxu0 %v233
    %836 = vmatpush1.msra.mxu0 %v232
    %837 = vmatprep.subr.mxu0 %v249
    %838 = vmatpush1.msra.mxu0 %v248
    %839 = vmatprep.subr.mxu0 %v265
    %840 = vmatpush1.msra.mxu0 %v264
    %841 = vmatprep.subr.mxu0 %v281
    %842 = vmatpush1.msra.mxu0 %v280
    %843 = vmatprep.subr.mxu0 %v297
    %844 = vmatpush1.msra.mxu0 %v296
    %845 = vmatprep.subr.mxu0 %v313
    %846 = vmatpush1.msra.mxu0 %v312
    %847 = vmatprep.subr.mxu0 %v329
    %848 = vmatpush1.msra.mxu0 %v328
    %849 = vmatprep.subr.mxu0 %v345
    %850 = vmatpush1.msra.mxu0 %v344
    %851 = vmatprep.subr.mxu0 0.0
    %852 = vmatpush1.msra.mxu0 0.0
    %853 = vmatprep.subr.mxu0 0.0
    %854 = vmatpush1.msra.mxu0 0.0
    %855 = vmatprep.subr.mxu0 0.0
    %856 = vmatpush1.msra.mxu0 0.0
    %857 = vmatprep.subr.mxu0 0.0
    %858 = vmatpush1.msra.mxu0 0.0
    %859 = vmatprep.subr.mxu0 0.0
    %860 = vmatpush1.msra.mxu0 0.0
    %861 = vmatprep.subr.mxu0 0.0
    %862 = vmatpush1.msra.mxu0 0.0
    %863 = vmatprep.subr.mxu0 0.0
    %864 = vmatpush1.msra.mxu0 0.0
    %865 = vmatprep.subr.mxu0 0.0
    %866 = vmatpush1.msra.mxu0 0.0
    %867 = vmatprep.subr.mxu0 0.0
    %868 = vmatpush1.msra.mxu0 0.0
    %869 = vmatprep.subr.mxu0 0.0
    %870 = vmatpush1.msra.mxu0 0.0
    %871 = vmatprep.subr.mxu0 0.0
    %872 = vmatpush1.msra.mxu0 0.0
    %873 = vmatprep.subr.mxu0 0.0
    %874 = vmatpush1.msra.mxu0 0.0
    %875 = vmatprep.subr.mxu0 0.0
    %876 = vmatpush1.msra.mxu0 0.0
    %877 = vmatprep.subr.mxu0 0.0
    %878 = vmatpush1.msra.mxu0 0.0
    %879 = vmatprep.subr.mxu0 0.0
    %880 = vmatpush1.msra.mxu0 0.0
    %881 = vmatprep.subr.mxu0 0.0
    %882 = vmatpush1.msra.mxu0 0.0
    %883 = vmatprep.mubr.f32.mxu0 0.0
    %884 = vmatmul.mubr.f32.gmra.mrb[0].mxu0 %v92
    %v885 = vpop.f32.mrb[0].mxu0
    %v886 = vadd.f32 %v397, %v885
    %v887 = vpop.f32.mrb[0].mxu0
    %v888 = vadd.f32 %v401, %v887
    %889 = vmatprep.mubr.f32.mxu0 0.0
    %890 = vmatmul.mubr.f32.gmra.mrb[0].mxu0 %v93
    %v891 = vpop.f32.mrb[0].mxu0
    %v892 = vadd.f32 %v397, %v891
    %v893 = vpop.f32.mrb[0].mxu0
    %v894 = vadd.f32 %v401, %v893
    %895 = vdwg.mxu0
    %896 = vmatprep.subr.mxu0 %v107
    %897 = vmatpush1.msra.mxu0 %v106
    %898 = vmatprep.subr.mxu0 %v123
    %899 = vmatpush1.msra.mxu0 %v122
    %900 = vmatprep.subr.mxu0 %v139
    %901 = vmatpush1.msra.mxu0 %v138
    %902 = vmatprep.subr.mxu0 %v155
    %903 = vmatpush1.msra.mxu0 %v154
    %904 = vmatprep.subr.mxu0 %v171
    %905 = vmatpush1.msra.mxu0 %v170
    %906 = vmatprep.subr.mxu0 %v187
    %907 = vmatpush1.msra.mxu0 %v186
    %908 = vmatprep.subr.mxu0 %v203
    %909 = vmatpush1.msra.mxu0 %v202
    %910 = vmatprep.subr.mxu0 %v219
    %911 = vmatpush1.msra.mxu0 %v218
    %912 = vmatprep.subr.mxu0 %v235
    %913 = vmatpush1.msra.mxu0 %v234
    %914 = vmatprep.subr.mxu0 %v251
    %915 = vmatpush1.msra.mxu0 %v250
    %916 = vmatprep.subr.mxu0 %v267
    %917 = vmatpush1.msra.mxu0 %v266
    %918 = vmatprep.subr.mxu0 %v283
    %919 = vmatpush1.msra.mxu0 %v282
    %920 = vmatprep.subr.mxu0 %v299
    %921 = vmatpush1.msra.mxu0 %v298
    %922 = vmatprep.subr.mxu0 %v315
    %923 = vmatpush1.msra.mxu0 %v314
    %924 = vmatprep.subr.mxu0 %v331
    %925 = vmatpush1.msra.mxu0 %v330
    %926 = vmatprep.subr.mxu0 %v347
    %927 = vmatpush1.msra.mxu0 %v346
    %928 = vmatprep.subr.mxu0 0.0
    %929 = vmatpush1.msra.mxu0 0.0
    %930 = vmatprep.subr.mxu0 0.0
    %931 = vmatpush1.msra.mxu0 0.0
    %932 = vmatprep.subr.mxu0 0.0
    %933 = vmatpush1.msra.mxu0 0.0
    %934 = vmatprep.subr.mxu0 0.0
    %935 = vmatpush1.msra.mxu0 0.0
    %936 = vmatprep.subr.mxu0 0.0
    %937 = vmatpush1.msra.mxu0 0.0
    %938 = vmatprep.subr.mxu0 0.0
    %939 = vmatpush1.msra.mxu0 0.0
    %940 = vmatprep.subr.mxu0 0.0
    %941 = vmatpush1.msra.mxu0 0.0
    %942 = vmatprep.subr.mxu0 0.0
    %943 = vmatpush1.msra.mxu0 0.0
    %944 = vmatprep.subr.mxu0 0.0
    %945 = vmatpush1.msra.mxu0 0.0
    %946 = vmatprep.subr.mxu0 0.0
    %947 = vmatpush1.msra.mxu0 0.0
    %948 = vmatprep.subr.mxu0 0.0
    %949 = vmatpush1.msra.mxu0 0.0
    %950 = vmatprep.subr.mxu0 0.0
    %951 = vmatpush1.msra.mxu0 0.0
    %952 = vmatprep.subr.mxu0 0.0
    %953 = vmatpush1.msra.mxu0 0.0
    %954 = vmatprep.subr.mxu0 0.0
    %955 = vmatpush1.msra.mxu0 0.0
    %956 = vmatprep.subr.mxu0 0.0
    %957 = vmatpush1.msra.mxu0 0.0
    %958 = vmatprep.subr.mxu0 0.0
    %959 = vmatpush1.msra.mxu0 0.0
    %960 = vmatprep.mubr.f32.mxu0 0.0
    %961 = vmatmul.mubr.f32.gmra.mrb[0].mxu0 %v92
    %v962 = vpop.f32.mrb[0].mxu0
    %v963 = vadd.f32 %v405, %v962
    %v964 = vpop.f32.mrb[0].mxu0
    %v965 = vadd.f32 %v409, %v964
    %966 = vmatprep.mubr.f32.mxu0 0.0
    %967 = vmatmul.mubr.f32.gmra.mrb[0].mxu0 %v93
    %v968 = vpop.f32.mrb[0].mxu0
    %v969 = vadd.f32 %v405, %v968
    %v970 = vpop.f32.mrb[0].mxu0
    %v971 = vadd.f32 %v409, %v970
    %972 = vdwg.mxu0
    %973 = vmatprep.subr.mxu0 %v109
    %974 = vmatpush1.msra.mxu0 %v108
    %975 = vmatprep.subr.mxu0 %v125
    %976 = vmatpush1.msra.mxu0 %v124
    %977 = vmatprep.subr.mxu0 %v141
    %978 = vmatpush1.msra.mxu0 %v140
    %979 = vmatprep.subr.mxu0 %v157
    %980 = vmatpush1.msra.mxu0 %v156
    %981 = vmatprep.subr.mxu0 %v173
    %982 = vmatpush1.msra.mxu0 %v172
    %983 = vmatprep.subr.mxu0 %v189
    %984 = vmatpush1.msra.mxu0 %v188
    %985 = vmatprep.subr.mxu0 %v205
    %986 = vmatpush1.msra.mxu0 %v204
    %987 = vmatprep.subr.mxu0 %v221
    %988 = vmatpush1.msra.mxu0 %v220
    %989 = vmatprep.subr.mxu0 %v237
    %990 = vmatpush1.msra.mxu0 %v236
    %991 = vmatprep.subr.mxu0 %v253
    %992 = vmatpush1.msra.mxu0 %v252
    %993 = vmatprep.subr.mxu0 %v269
    %994 = vmatpush1.msra.mxu0 %v268
    %995 = vmatprep.subr.mxu0 %v285
    %996 = vmatpush1.msra.mxu0 %v284
    %997 = vmatprep.subr.mxu0 %v301
    %998 = vmatpush1.msra.mxu0 %v300
    %999 = vmatprep.subr.mxu0 %v317
    %1000 = vmatpush1.msra.mxu0 %v316
    %1001 = vmatprep.subr.mxu0 %v333
    %1002 = vmatpush1.msra.mxu0 %v332
    %1003 = vmatprep.subr.mxu0 %v349
    %1004 = vmatpush1.msra.mxu0 %v348
    %1005 = vmatprep.subr.mxu0 0.0
    %1006 = vmatpush1.msra.mxu0 0.0
    %1007 = vmatprep.subr.mxu0 0.0
    %1008 = vmatpush1.msra.mxu0 0.0
    %1009 = vmatprep.subr.mxu0 0.0
    %1010 = vmatpush1.msra.mxu0 0.0
    %1011 = vmatprep.subr.mxu0 0.0
    %1012 = vmatpush1.msra.mxu0 0.0
    %1013 = vmatprep.subr.mxu0 0.0
    %1014 = vmatpush1.msra.mxu0 0.0
    %1015 = vmatprep.subr.mxu0 0.0
    %1016 = vmatpush1.msra.mxu0 0.0
    %1017 = vmatprep.subr.mxu0 0.0
    %1018 = vmatpush1.msra.mxu0 0.0
    %1019 = vmatprep.subr.mxu0 0.0
    %1020 = vmatpush1.msra.mxu0 0.0
    %1021 = vmatprep.subr.mxu0 0.0
    %1022 = vmatpush1.msra.mxu0 0.0
    %1023 = vmatprep.subr.mxu0 0.0
    %1024 = vmatpush1.msra.mxu0 0.0
    %1025 = vmatprep.subr.mxu0 0.0
    %1026 = vmatpush1.msra.mxu0 0.0
    %1027 = vmatprep.subr.mxu0 0.0
    %1028 = vmatpush1.msra.mxu0 0.0
    %1029 = vmatprep.subr.mxu0 0.0
    %1030 = vmatpush1.msra.mxu0 0.0
    %1031 = vmatprep.subr.mxu0 0.0
    %1032 = vmatpush1.msra.mxu0 0.0
    %1033 = vmatprep.subr.mxu0 0.0
    %1034 = vmatpush1.msra.mxu0 0.0
    %1035 = vmatprep.subr.mxu0 0.0
    %1036 = vmatpush1.msra.mxu0 0.0
    %1037 = vmatprep.mubr.f32.mxu0 0.0
    %1038 = vmatmul.mubr.f32.gmra.mrb[0].mxu0 %v92
    %v1039 = vpop.f32.mrb[0].mxu0
    %v1040 = vadd.f32 %v413, %v1039
    %v1041 = vpop.f32.mrb[0].mxu0
    %v1042 = vadd.f32 %v417, %v1041
    %1043 = vmatprep.mubr.f32.mxu0 0.0
    %1044 = vmatmul.mubr.f32.gmra.mrb[0].mxu0 %v93
    %v1045 = vpop.f32.mrb[0].mxu0
    %v1046 = vadd.f32 %v413, %v1045
    %v1047 = vpop.f32.mrb[0].mxu0
    %v1048 = vadd.f32 %v417, %v1047
    %1049 = vdwg.mxu0
    %1050 = vst [vmem:[#allocation2] sm:$0xff] %v501
    %1051 = vst [vmem:[#allocation2 + $0x8] sm:$0xff] %v503
    %1052 = vst [vmem:[#allocation2 + $0x10] sm:$0xff] %v578
    %1053 = vst [vmem:[#allocation2 + $0x18] sm:$0xff] %v580
    %1054 = vst [vmem:[#allocation2 + $0x20] sm:$0xff] %v655
    %1055 = vst [vmem:[#allocation2 + $0x28] sm:$0xff] %v657
    %1056 = vst [vmem:[#allocation2 + $0x30] sm:$0xff] %v732
    %1057 = vst [vmem:[#allocation2 + $0x38] sm:$0xff] %v734
    %1058 = vst [vmem:[#allocation2 + $0x40] sm:$0xff] %v507
    %1059 = vst [vmem:[#allocation2 + $0x48] sm:$0xff] %v509
    %1060 = vst [vmem:[#allocation2 + $0x50] sm:$0xff] %v584
    %1061 = vst [vmem:[#allocation2 + $0x58] sm:$0xff] %v586
    %1062 = vst [vmem:[#allocation2 + $0x60] sm:$0xff] %v661
    %1063 = vst [vmem:[#allocation2 + $0x68] sm:$0xff] %v663
    %1064 = vst [vmem:[#allocation2 + $0x70] sm:$0xff] %v738
    %1065 = vst [vmem:[#allocation2 + $0x78] sm:$0xff] %v740
    %1066 = vst [vmem:[#allocation3] sm:$0xff] %v809
    %1067 = vst [vmem:[#allocation3 + $0x8] sm:$0xff] %v811
    %1068 = vst [vmem:[#allocation3 + $0x10] sm:$0xff] %v886
    %1069 = vst [vmem:[#allocation3 + $0x18] sm:$0xff] %v888
    %1070 = vst [vmem:[#allocation3 + $0x20] sm:$0xff] %v963
    %1071 = vst [vmem:[#allocation3 + $0x28] sm:$0xff] %v965
    %1072 = vst [vmem:[#allocation3 + $0x30] sm:$0xff] %v1040
    %1073 = vst [vmem:[#allocation3 + $0x38] sm:$0xff] %v1042
    %1074 = vst [vmem:[#allocation3 + $0x40] sm:$0xff] %v815
    %1075 = vst [vmem:[#allocation3 + $0x48] sm:$0xff] %v817
    %1076 = vst [vmem:[#allocation3 + $0x50] sm:$0xff] %v892
    %1077 = vst [vmem:[#allocation3 + $0x58] sm:$0xff] %v894
    %1078 = vst [vmem:[#allocation3 + $0x60] sm:$0xff] %v969
    %1079 = vst [vmem:[#allocation3 + $0x68] sm:$0xff] %v971
    %1080 = vst [vmem:[#allocation3 + $0x70] sm:$0xff] %v1046
    %1081 = vst [vmem:[#allocation3 + $0x78] sm:$0xff] %v1048
    %v1082 = vld [vmem:[#allocation7] sm:$0xff]
    %v1083 = vld [vmem:[#allocation7 + $0x8] sm:$0xff]
    %v1084 = vld [vmem:[#allocation7 + $0x10] sm:$0xff]
    %v1085 = vld [vmem:[#allocation7 + $0x18] sm:$0xff]
    %v1086 = vld [vmem:[#allocation7 + $0x20] sm:$0xff]
    %v1087 = vld [vmem:[#allocation7 + $0x28] sm:$0xff]
    %v1088 = vld [vmem:[#allocation7 + $0x30] sm:$0xff]
    %v1089 = vld [vmem:[#allocation7 + $0x38] sm:$0xff]
    %v1090 = vld [vmem:[#allocation7 + $0x40] sm:$0xff]
    %v1091 = vld [vmem:[#allocation7 + $0x48] sm:$0xff]
    %v1092 = vld [vmem:[#allocation7 + $0x50] sm:$0xff]
    %v1093 = vld [vmem:[#allocation7 + $0x58] sm:$0xff]
    %v1094 = vld [vmem:[#allocation7 + $0x60] sm:$0xff]
    %v1095 = vld [vmem:[#allocation7 + $0x68] sm:$0xff]
    %v1096 = vld [vmem:[#allocation7 + $0x70] sm:$0xff]
    %v1097 = vld [vmem:[#allocation7 + $0x78] sm:$0xff]
    %v1098 = vld [vmem:[#allocation7 + $0x80] sm:$0xff]
    %v1099 = vld [vmem:[#allocation7 + $0x88] sm:$0xff]
    %v1100 = vld [vmem:[#allocation7 + $0x90] sm:$0xff]
    %v1101 = vld [vmem:[#allocation7 + $0x98] sm:$0xff]
    %v1102 = vld [vmem:[#allocation7 + $0xa0] sm:$0xff]
    %v1103 = vld [vmem:[#allocation7 + $0xa8] sm:$0xff]
    %v1104 = vld [vmem:[#allocation7 + $0xb0] sm:$0xff]
    %v1105 = vld [vmem:[#allocation7 + $0xb8] sm:$0xff]
    %v1106 = vld [vmem:[#allocation7 + $0xc0] sm:$0xff]
    %v1107 = vld [vmem:[#allocation7 + $0xc8] sm:$0xff]
    %v1108 = vld [vmem:[#allocation7 + $0xd0] sm:$0xff]
    %v1109 = vld [vmem:[#allocation7 + $0xd8] sm:$0xff]
    %v1110 = vld [vmem:[#allocation7 + $0xe0] sm:$0xff]
    %v1111 = vld [vmem:[#allocation7 + $0xe8] sm:$0xff]
    %v1112 = vld [vmem:[#allocation7 + $0xf0] sm:$0xff]
    %v1113 = vld [vmem:[#allocation7 + $0xf8] sm:$0xff]
    %v1114 = vld [vmem:[#allocation7 + $0x100] sm:$0xff]
    %v1115 = vld [vmem:[#allocation7 + $0x108] sm:$0xff]
    %v1116 = vld [vmem:[#allocation7 + $0x110] sm:$0xff]
    %v1117 = vld [vmem:[#allocation7 + $0x118] sm:$0xff]
    %v1118 = vld [vmem:[#allocation7 + $0x120] sm:$0xff]
    %v1119 = vld [vmem:[#allocation7 + $0x128] sm:$0xff]
    %v1120 = vld [vmem:[#allocation7 + $0x130] sm:$0xff]
    %v1121 = vld [vmem:[#allocation7 + $0x138] sm:$0xff]
    %v1122 = vld [vmem:[#allocation7 + $0x140] sm:$0xff]
    %v1123 = vld [vmem:[#allocation7 + $0x148] sm:$0xff]
    %v1124 = vld [vmem:[#allocation7 + $0x150] sm:$0xff]
    %v1125 = vld [vmem:[#allocation7 + $0x158] sm:$0xff]
    %v1126 = vld [vmem:[#allocation7 + $0x160] sm:$0xff]
    %v1127 = vld [vmem:[#allocation7 + $0x168] sm:$0xff]
    %v1128 = vld [vmem:[#allocation7 + $0x170] sm:$0xff]
    %v1129 = vld [vmem:[#allocation7 + $0x178] sm:$0xff]
    %v1130 = vld [vmem:[#allocation7 + $0x180] sm:$0xff]
    %v1131 = vld [vmem:[#allocation7 + $0x188] sm:$0xff]
    %v1132 = vld [vmem:[#allocation7 + $0x190] sm:$0xff]
    %v1133 = vld [vmem:[#allocation7 + $0x198] sm:$0xff]
    %v1134 = vld [vmem:[#allocation7 + $0x1a0] sm:$0xff]
    %v1135 = vld [vmem:[#allocation7 + $0x1a8] sm:$0xff]
    %v1136 = vld [vmem:[#allocation7 + $0x1b0] sm:$0xff]
    %v1137 = vld [vmem:[#allocation7 + $0x1b8] sm:$0xff]
    %v1138 = vld [vmem:[#allocation7 + $0x1c0] sm:$0xff]
    %v1139 = vld [vmem:[#allocation7 + $0x1c8] sm:$0xff]
    %v1140 = vld [vmem:[#allocation7 + $0x1d0] sm:$0xff]
    %v1141 = vld [vmem:[#allocation7 + $0x1d8] sm:$0xff]
    %v1142 = vld [vmem:[#allocation7 + $0x1e0] sm:$0xff]
    %v1143 = vld [vmem:[#allocation7 + $0x1e8] sm:$0xff]
    %v1144 = vld [vmem:[#allocation7 + $0x1f0] sm:$0xff]
    %v1145 = vld [vmem:[#allocation7 + $0x1f8] sm:$0xff]
    %v1146 = vld [vmem:[#allocation7 + $0x200] sm:$0xff]
    %v1147 = vld [vmem:[#allocation7 + $0x208] sm:$0xff]
    %v1148 = vld [vmem:[#allocation7 + $0x210] sm:$0xff]
    %v1149 = vld [vmem:[#allocation7 + $0x218] sm:$0xff]
    %v1150 = vld [vmem:[#allocation7 + $0x220] sm:$0xff]
    %v1151 = vld [vmem:[#allocation7 + $0x228] sm:$0xff]
    %v1152 = vld [vmem:[#allocation7 + $0x230] sm:$0xff]
    %v1153 = vld [vmem:[#allocation7 + $0x238] sm:$0xff]
    %v1154 = vld [vmem:[#allocation7 + $0x240] sm:$0xff]
    %v1155 = vld [vmem:[#allocation7 + $0x248] sm:$0xff]
    %v1156 = vld [vmem:[#allocation7 + $0x250] sm:$0xff]
    %v1157 = vld [vmem:[#allocation7 + $0x258] sm:$0xff]
    %v1158 = vld [vmem:[#allocation7 + $0x260] sm:$0xff]
    %v1159 = vld [vmem:[#allocation7 + $0x268] sm:$0xff]
    %v1160 = vld [vmem:[#allocation7 + $0x270] sm:$0xff]
    %v1161 = vld [vmem:[#allocation7 + $0x278] sm:$0xff]
    %v1162 = vld [vmem:[#allocation7 + $0x280] sm:$0xff]
    %v1163 = vld [vmem:[#allocation7 + $0x288] sm:$0xff]
    %v1164 = vld [vmem:[#allocation7 + $0x290] sm:$0xff]
    %v1165 = vld [vmem:[#allocation7 + $0x298] sm:$0xff]
    %v1166 = vld [vmem:[#allocation7 + $0x2a0] sm:$0xff]
    %v1167 = vld [vmem:[#allocation7 + $0x2a8] sm:$0xff]
    %v1168 = vld [vmem:[#allocation7 + $0x2b0] sm:$0xff]
    %v1169 = vld [vmem:[#allocation7 + $0x2b8] sm:$0xff]
    %v1170 = vld [vmem:[#allocation7 + $0x2c0] sm:$0xff]
    %v1171 = vld [vmem:[#allocation7 + $0x2c8] sm:$0xff]
    %v1172 = vld [vmem:[#allocation7 + $0x2d0] sm:$0xff]
    %v1173 = vld [vmem:[#allocation7 + $0x2d8] sm:$0xff]
    %v1174 = vld [vmem:[#allocation7 + $0x2e0] sm:$0xff]
    %v1175 = vld [vmem:[#allocation7 + $0x2e8] sm:$0xff]
    %v1176 = vld [vmem:[#allocation7 + $0x2f0] sm:$0xff]
    %v1177 = vld [vmem:[#allocation7 + $0x2f8] sm:$0xff]
    %v1178 = vld [vmem:[#allocation7 + $0x300] sm:$0xff]
    %v1179 = vld [vmem:[#allocation7 + $0x308] sm:$0xff]
    %v1180 = vld [vmem:[#allocation7 + $0x310] sm:$0xff]
    %v1181 = vld [vmem:[#allocation7 + $0x318] sm:$0xff]
    %v1182 = vld [vmem:[#allocation7 + $0x320] sm:$0xff]
    %v1183 = vld [vmem:[#allocation7 + $0x328] sm:$0xff]
    %v1184 = vld [vmem:[#allocation7 + $0x330] sm:$0xff]
    %v1185 = vld [vmem:[#allocation7 + $0x338] sm:$0xff]
    %v1186 = vld [vmem:[#allocation7 + $0x340] sm:$0xff]
    %v1187 = vld [vmem:[#allocation7 + $0x348] sm:$0xff]
    %v1188 = vld [vmem:[#allocation7 + $0x350] sm:$0xff]
    %v1189 = vld [vmem:[#allocation7 + $0x358] sm:$0xff]
    %v1190 = vld [vmem:[#allocation7 + $0x360] sm:$0xff]
    %v1191 = vld [vmem:[#allocation7 + $0x368] sm:$0xff]
    %v1192 = vld [vmem:[#allocation7 + $0x370] sm:$0xff]
    %v1193 = vld [vmem:[#allocation7 + $0x378] sm:$0xff]
    %v1194 = vld [vmem:[#allocation7 + $0x380] sm:$0xff]
    %v1195 = vld [vmem:[#allocation7 + $0x388] sm:$0xff]
    %v1196 = vld [vmem:[#allocation7 + $0x390] sm:$0xff]
    %v1197 = vld [vmem:[#allocation7 + $0x398] sm:$0xff]
    %v1198 = vld [vmem:[#allocation7 + $0x3a0] sm:$0xff]
    %v1199 = vld [vmem:[#allocation7 + $0x3a8] sm:$0xff]
    %v1200 = vld [vmem:[#allocation7 + $0x3b0] sm:$0xff]
    %v1201 = vld [vmem:[#allocation7 + $0x3b8] sm:$0xff]
    %v1202 = vld [vmem:[#allocation7 + $0x3c0] sm:$0xff]
    %v1203 = vld [vmem:[#allocation7 + $0x3c8] sm:$0xff]
    %v1204 = vld [vmem:[#allocation7 + $0x3d0] sm:$0xff]
    %v1205 = vld [vmem:[#allocation7 + $0x3d8] sm:$0xff]
    %v1206 = vld [vmem:[#allocation7 + $0x3e0] sm:$0xff]
    %v1207 = vld [vmem:[#allocation7 + $0x3e8] sm:$0xff]
    %v1208 = vld [vmem:[#allocation7 + $0x3f0] sm:$0xff]
    %v1209 = vld [vmem:[#allocation7 + $0x3f8] sm:$0xff]
    %v1210 = vld [vmem:[#allocation7 + $0x400] sm:$0xff]
    %v1211 = vld [vmem:[#allocation7 + $0x408] sm:$0xff]
    %v1212 = vld [vmem:[#allocation7 + $0x410] sm:$0xff]
    %v1213 = vld [vmem:[#allocation7 + $0x418] sm:$0xff]
    %v1214 = vld [vmem:[#allocation7 + $0x420] sm:$0xff]
    %v1215 = vld [vmem:[#allocation7 + $0x428] sm:$0xff]
    %v1216 = vld [vmem:[#allocation7 + $0x430] sm:$0xff]
    %v1217 = vld [vmem:[#allocation7 + $0x438] sm:$0xff]
    %v1218 = vld [vmem:[#allocation7 + $0x440] sm:$0xff]
    %v1219 = vld [vmem:[#allocation7 + $0x448] sm:$0xff]
    %v1220 = vld [vmem:[#allocation7 + $0x450] sm:$0xff]
    %v1221 = vld [vmem:[#allocation7 + $0x458] sm:$0xff]
    %v1222 = vld [vmem:[#allocation7 + $0x460] sm:$0xff]
    %v1223 = vld [vmem:[#allocation7 + $0x468] sm:$0xff]
    %v1224 = vld [vmem:[#allocation7 + $0x470] sm:$0xff]
    %v1225 = vld [vmem:[#allocation7 + $0x478] sm:$0xff]
    %v1226 = vld [vmem:[#allocation7 + $0x480] sm:$0xff]
    %v1227 = vld [vmem:[#allocation7 + $0x488] sm:$0xff]
    %v1228 = vld [vmem:[#allocation7 + $0x490] sm:$0xff]
    %v1229 = vld [vmem:[#allocation7 + $0x498] sm:$0xff]
    %v1230 = vld [vmem:[#allocation7 + $0x4a0] sm:$0xff]
    %v1231 = vld [vmem:[#allocation7 + $0x4a8] sm:$0xff]
    %v1232 = vld [vmem:[#allocation7 + $0x4b0] sm:$0xff]
    %v1233 = vld [vmem:[#allocation7 + $0x4b8] sm:$0xff]
    %v1234 = vld [vmem:[#allocation7 + $0x4c0] sm:$0xff]
    %v1235 = vld [vmem:[#allocation7 + $0x4c8] sm:$0xff]
    %v1236 = vld [vmem:[#allocation7 + $0x4d0] sm:$0xff]
    %v1237 = vld [vmem:[#allocation7 + $0x4d8] sm:$0xff]
    %v1238 = vld [vmem:[#allocation7 + $0x4e0] sm:$0xff]
    %v1239 = vld [vmem:[#allocation7 + $0x4e8] sm:$0xff]
    %v1240 = vld [vmem:[#allocation7 + $0x4f0] sm:$0xff]
    %v1241 = vld [vmem:[#allocation7 + $0x4f8] sm:$0xff]
    %v1242 = vld [vmem:[#allocation7 + $0x500] sm:$0xff]
    %v1243 = vld [vmem:[#allocation7 + $0x508] sm:$0xff]
    %v1244 = vld [vmem:[#allocation7 + $0x510] sm:$0xff]
    %v1245 = vld [vmem:[#allocation7 + $0x518] sm:$0xff]
    %v1246 = vld [vmem:[#allocation7 + $0x520] sm:$0xff]
    %v1247 = vld [vmem:[#allocation7 + $0x528] sm:$0xff]
    %v1248 = vld [vmem:[#allocation7 + $0x530] sm:$0xff]
    %v1249 = vld [vmem:[#allocation7 + $0x538] sm:$0xff]
    %v1250 = vld [vmem:[#allocation7 + $0x540] sm:$0xff]
    %v1251 = vld [vmem:[#allocation7 + $0x548] sm:$0xff]
    %v1252 = vld [vmem:[#allocation7 + $0x550] sm:$0xff]
    %v1253 = vld [vmem:[#allocation7 + $0x558] sm:$0xff]
    %v1254 = vld [vmem:[#allocation7 + $0x560] sm:$0xff]
    %v1255 = vld [vmem:[#allocation7 + $0x568] sm:$0xff]
    %v1256 = vld [vmem:[#allocation7 + $0x570] sm:$0xff]
    %v1257 = vld [vmem:[#allocation7 + $0x578] sm:$0xff]
    %v1258 = vld [vmem:[#allocation7 + $0x580] sm:$0xff]
    %v1259 = vld [vmem:[#allocation7 + $0x588] sm:$0xff]
    %v1260 = vld [vmem:[#allocation7 + $0x590] sm:$0xff]
    %v1261 = vld [vmem:[#allocation7 + $0x598] sm:$0xff]
    %v1262 = vld [vmem:[#allocation7 + $0x5a0] sm:$0xff]
    %v1263 = vld [vmem:[#allocation7 + $0x5a8] sm:$0xff]
    %v1264 = vld [vmem:[#allocation7 + $0x5b0] sm:$0xff]
    %v1265 = vld [vmem:[#allocation7 + $0x5b8] sm:$0xff]
    %v1266 = vld [vmem:[#allocation7 + $0x5c0] sm:$0xff]
    %v1267 = vld [vmem:[#allocation7 + $0x5c8] sm:$0xff]
    %v1268 = vld [vmem:[#allocation7 + $0x5d0] sm:$0xff]
    %v1269 = vld [vmem:[#allocation7 + $0x5d8] sm:$0xff]
    %v1270 = vld [vmem:[#allocation7 + $0x5e0] sm:$0xff]
    %v1271 = vld [vmem:[#allocation7 + $0x5e8] sm:$0xff]
    %v1272 = vld [vmem:[#allocation7 + $0x5f0] sm:$0xff]
    %v1273 = vld [vmem:[#allocation7 + $0x5f8] sm:$0xff]
    %v1274 = vld [vmem:[#allocation7 + $0x600] sm:$0xff]
    %v1275 = vld [vmem:[#allocation7 + $0x608] sm:$0xff]
    %v1276 = vld [vmem:[#allocation7 + $0x610] sm:$0xff]
    %v1277 = vld [vmem:[#allocation7 + $0x618] sm:$0xff]
    %v1278 = vld [vmem:[#allocation7 + $0x620] sm:$0xff]
    %v1279 = vld [vmem:[#allocation7 + $0x628] sm:$0xff]
    %v1280 = vld [vmem:[#allocation7 + $0x630] sm:$0xff]
    %v1281 = vld [vmem:[#allocation7 + $0x638] sm:$0xff]
    %v1282 = vld [vmem:[#allocation7 + $0x640] sm:$0xff]
    %v1283 = vld [vmem:[#allocation7 + $0x648] sm:$0xff]
    %v1284 = vld [vmem:[#allocation7 + $0x650] sm:$0xff]
    %v1285 = vld [vmem:[#allocation7 + $0x658] sm:$0xff]
    %v1286 = vld [vmem:[#allocation7 + $0x660] sm:$0xff]
    %v1287 = vld [vmem:[#allocation7 + $0x668] sm:$0xff]
    %v1288 = vld [vmem:[#allocation7 + $0x670] sm:$0xff]
    %v1289 = vld [vmem:[#allocation7 + $0x678] sm:$0xff]
    %v1290 = vld [vmem:[#allocation7 + $0x680] sm:$0xff]
    %v1291 = vld [vmem:[#allocation7 + $0x688] sm:$0xff]
    %v1292 = vld [vmem:[#allocation7 + $0x690] sm:$0xff]
    %v1293 = vld [vmem:[#allocation7 + $0x698] sm:$0xff]
    %v1294 = vld [vmem:[#allocation7 + $0x6a0] sm:$0xff]
    %v1295 = vld [vmem:[#allocation7 + $0x6a8] sm:$0xff]
    %v1296 = vld [vmem:[#allocation7 + $0x6b0] sm:$0xff]
    %v1297 = vld [vmem:[#allocation7 + $0x6b8] sm:$0xff]
    %v1298 = vld [vmem:[#allocation7 + $0x6c0] sm:$0xff]
    %v1299 = vld [vmem:[#allocation7 + $0x6c8] sm:$0xff]
    %v1300 = vld [vmem:[#allocation7 + $0x6d0] sm:$0xff]
    %v1301 = vld [vmem:[#allocation7 + $0x6d8] sm:$0xff]
    %v1302 = vld [vmem:[#allocation7 + $0x6e0] sm:$0xff]
    %v1303 = vld [vmem:[#allocation7 + $0x6e8] sm:$0xff]
    %v1304 = vld [vmem:[#allocation7 + $0x6f0] sm:$0xff]
    %v1305 = vld [vmem:[#allocation7 + $0x6f8] sm:$0xff]
    %v1306 = vld [vmem:[#allocation7 + $0x700] sm:$0xff]
    %v1307 = vld [vmem:[#allocation7 + $0x708] sm:$0xff]
    %v1308 = vld [vmem:[#allocation7 + $0x710] sm:$0xff]
    %v1309 = vld [vmem:[#allocation7 + $0x718] sm:$0xff]
    %v1310 = vld [vmem:[#allocation7 + $0x720] sm:$0xff]
    %v1311 = vld [vmem:[#allocation7 + $0x728] sm:$0xff]
    %v1312 = vld [vmem:[#allocation7 + $0x730] sm:$0xff]
    %v1313 = vld [vmem:[#allocation7 + $0x738] sm:$0xff]
    %v1314 = vld [vmem:[#allocation7 + $0x740] sm:$0xff]
    %v1315 = vld [vmem:[#allocation7 + $0x748] sm:$0xff]
    %v1316 = vld [vmem:[#allocation7 + $0x750] sm:$0xff]
    %v1317 = vld [vmem:[#allocation7 + $0x758] sm:$0xff]
    %v1318 = vld [vmem:[#allocation7 + $0x760] sm:$0xff]
    %v1319 = vld [vmem:[#allocation7 + $0x768] sm:$0xff]
    %v1320 = vld [vmem:[#allocation7 + $0x770] sm:$0xff]
    %v1321 = vld [vmem:[#allocation7 + $0x778] sm:$0xff]
    %v1322 = vld [vmem:[#allocation7 + $0x780] sm:$0xff]
    %v1323 = vld [vmem:[#allocation7 + $0x788] sm:$0xff]
    %v1324 = vld [vmem:[#allocation7 + $0x790] sm:$0xff]
    %v1325 = vld [vmem:[#allocation7 + $0x798] sm:$0xff]
    %v1326 = vld [vmem:[#allocation7 + $0x7a0] sm:$0xff]
    %v1327 = vld [vmem:[#allocation7 + $0x7a8] sm:$0xff]
    %v1328 = vld [vmem:[#allocation7 + $0x7b0] sm:$0xff]
    %v1329 = vld [vmem:[#allocation7 + $0x7b8] sm:$0xff]
    %v1330 = vld [vmem:[#allocation7 + $0x7c0] sm:$0xff]
    %v1331 = vld [vmem:[#allocation7 + $0x7c8] sm:$0xff]
    %v1332 = vld [vmem:[#allocation7 + $0x7d0] sm:$0xff]
    %v1333 = vld [vmem:[#allocation7 + $0x7d8] sm:$0xff]
    %v1334 = vld [vmem:[#allocation7 + $0x7e0] sm:$0xff]
    %v1335 = vld [vmem:[#allocation7 + $0x7e8] sm:$0xff]
    %v1336 = vld [vmem:[#allocation7 + $0x7f0] sm:$0xff]
    %v1337 = vld [vmem:[#allocation7 + $0x7f8] sm:$0xff]
    %s1338 = scalar_lea.vmem [#allocation7], 2048
    %v1339 = vld [vmem:[%s1338] sm:$0xff]
    %v1340 = vld [vmem:[%s1338 + $0x8] sm:$0xff]
    %v1341 = vld [vmem:[%s1338 + $0x10] sm:$0xff]
    %v1342 = vld [vmem:[%s1338 + $0x18] sm:$0xff]
    %v1343 = vld [vmem:[%s1338 + $0x20] sm:$0xff]
    %v1344 = vld [vmem:[%s1338 + $0x28] sm:$0xff]
    %v1345 = vld [vmem:[%s1338 + $0x30] sm:$0xff]
    %v1346 = vld [vmem:[%s1338 + $0x38] sm:$0xff]
    %v1347 = vld [vmem:[%s1338 + $0x40] sm:$0xff]
    %v1348 = vld [vmem:[%s1338 + $0x48] sm:$0xff]
    %v1349 = vld [vmem:[%s1338 + $0x50] sm:$0xff]
    %v1350 = vld [vmem:[%s1338 + $0x58] sm:$0xff]
    %v1351 = vld [vmem:[%s1338 + $0x60] sm:$0xff]
    %v1352 = vld [vmem:[%s1338 + $0x68] sm:$0xff]
    %v1353 = vld [vmem:[%s1338 + $0x70] sm:$0xff]
    %v1354 = vld [vmem:[%s1338 + $0x78] sm:$0xff]
    %v1355 = vld [vmem:[%s1338 + $0x80] sm:$0xff]
    %v1356 = vld [vmem:[%s1338 + $0x88] sm:$0xff]
    %v1357 = vld [vmem:[%s1338 + $0x90] sm:$0xff]
    %v1358 = vld [vmem:[%s1338 + $0x98] sm:$0xff]
    %v1359 = vld [vmem:[%s1338 + $0xa0] sm:$0xff]
    %v1360 = vld [vmem:[%s1338 + $0xa8] sm:$0xff]
    %v1361 = vld [vmem:[%s1338 + $0xb0] sm:$0xff]
    %v1362 = vld [vmem:[%s1338 + $0xb8] sm:$0xff]
    %v1363 = vld [vmem:[%s1338 + $0xc0] sm:$0xff]
    %v1364 = vld [vmem:[%s1338 + $0xc8] sm:$0xff]
    %v1365 = vld [vmem:[%s1338 + $0xd0] sm:$0xff]
    %v1366 = vld [vmem:[%s1338 + $0xd8] sm:$0xff]
    %v1367 = vld [vmem:[%s1338 + $0xe0] sm:$0xff]
    %v1368 = vld [vmem:[%s1338 + $0xe8] sm:$0xff]
    %v1369 = vld [vmem:[%s1338 + $0xf0] sm:$0xff]
    %v1370 = vld [vmem:[%s1338 + $0xf8] sm:$0xff]
    %v1371 = vld [vmem:[%s1338 + $0x100] sm:$0xff]
    %v1372 = vld [vmem:[%s1338 + $0x108] sm:$0xff]
    %v1373 = vld [vmem:[%s1338 + $0x110] sm:$0xff]
    %v1374 = vld [vmem:[%s1338 + $0x118] sm:$0xff]
    %v1375 = vld [vmem:[%s1338 + $0x120] sm:$0xff]
    %v1376 = vld [vmem:[%s1338 + $0x128] sm:$0xff]
    %v1377 = vld [vmem:[%s1338 + $0x130] sm:$0xff]
    %v1378 = vld [vmem:[%s1338 + $0x138] sm:$0xff]
    %v1379 = vld [vmem:[%s1338 + $0x140] sm:$0xff]
    %v1380 = vld [vmem:[%s1338 + $0x148] sm:$0xff]
    %v1381 = vld [vmem:[%s1338 + $0x150] sm:$0xff]
    %v1382 = vld [vmem:[%s1338 + $0x158] sm:$0xff]
    %v1383 = vld [vmem:[%s1338 + $0x160] sm:$0xff]
    %v1384 = vld [vmem:[%s1338 + $0x168] sm:$0xff]
    %v1385 = vld [vmem:[%s1338 + $0x170] sm:$0xff]
    %v1386 = vld [vmem:[%s1338 + $0x178] sm:$0xff]
    %v1387 = vld [vmem:[%s1338 + $0x180] sm:$0xff]
    %v1388 = vld [vmem:[%s1338 + $0x188] sm:$0xff]
    %v1389 = vld [vmem:[%s1338 + $0x190] sm:$0xff]
    %v1390 = vld [vmem:[%s1338 + $0x198] sm:$0xff]
    %v1391 = vld [vmem:[%s1338 + $0x1a0] sm:$0xff]
    %v1392 = vld [vmem:[%s1338 + $0x1a8] sm:$0xff]
    %v1393 = vld [vmem:[%s1338 + $0x1b0] sm:$0xff]
    %v1394 = vld [vmem:[%s1338 + $0x1b8] sm:$0xff]
    %v1395 = vld [vmem:[%s1338 + $0x1c0] sm:$0xff]
    %v1396 = vld [vmem:[%s1338 + $0x1c8] sm:$0xff]
    %v1397 = vld [vmem:[%s1338 + $0x1d0] sm:$0xff]
    %v1398 = vld [vmem:[%s1338 + $0x1d8] sm:$0xff]
    %v1399 = vld [vmem:[%s1338 + $0x1e0] sm:$0xff]
    %v1400 = vld [vmem:[%s1338 + $0x1e8] sm:$0xff]
    %v1401 = vld [vmem:[%s1338 + $0x1f0] sm:$0xff]
    %v1402 = vld [vmem:[%s1338 + $0x1f8] sm:$0xff]
    %v1403 = vld [vmem:[%s1338 + $0x200] sm:$0xff]
    %v1404 = vld [vmem:[%s1338 + $0x208] sm:$0xff]
    %v1405 = vld [vmem:[%s1338 + $0x210] sm:$0xff]
    %v1406 = vld [vmem:[%s1338 + $0x218] sm:$0xff]
    %v1407 = vld [vmem:[%s1338 + $0x220] sm:$0xff]
    %v1408 = vld [vmem:[%s1338 + $0x228] sm:$0xff]
    %v1409 = vld [vmem:[%s1338 + $0x230] sm:$0xff]
    %v1410 = vld [vmem:[%s1338 + $0x238] sm:$0xff]
    %v1411 = vld [vmem:[%s1338 + $0x240] sm:$0xff]
    %v1412 = vld [vmem:[%s1338 + $0x248] sm:$0xff]
    %v1413 = vld [vmem:[%s1338 + $0x250] sm:$0xff]
    %v1414 = vld [vmem:[%s1338 + $0x258] sm:$0xff]
    %v1415 = vld [vmem:[%s1338 + $0x260] sm:$0xff]
    %v1416 = vld [vmem:[%s1338 + $0x268] sm:$0xff]
    %v1417 = vld [vmem:[%s1338 + $0x270] sm:$0xff]
    %v1418 = vld [vmem:[%s1338 + $0x278] sm:$0xff]
    %v1419 = vld [vmem:[%s1338 + $0x280] sm:$0xff]
    %v1420 = vld [vmem:[%s1338 + $0x288] sm:$0xff]
    %v1421 = vld [vmem:[%s1338 + $0x290] sm:$0xff]
    %v1422 = vld [vmem:[%s1338 + $0x298] sm:$0xff]
    %v1423 = vld [vmem:[%s1338 + $0x2a0] sm:$0xff]
    %v1424 = vld [vmem:[%s1338 + $0x2a8] sm:$0xff]
    %v1425 = vld [vmem:[%s1338 + $0x2b0] sm:$0xff]
    %v1426 = vld [vmem:[%s1338 + $0x2b8] sm:$0xff]
    %v1427 = vld [vmem:[%s1338 + $0x2c0] sm:$0xff]
    %v1428 = vld [vmem:[%s1338 + $0x2c8] sm:$0xff]
    %v1429 = vld [vmem:[%s1338 + $0x2d0] sm:$0xff]
    %v1430 = vld [vmem:[%s1338 + $0x2d8] sm:$0xff]
    %v1431 = vld [vmem:[%s1338 + $0x2e0] sm:$0xff]
    %v1432 = vld [vmem:[%s1338 + $0x2e8] sm:$0xff]
    %v1433 = vld [vmem:[%s1338 + $0x2f0] sm:$0xff]
    %v1434 = vld [vmem:[%s1338 + $0x2f8] sm:$0xff]
    %v1435 = vld [vmem:[%s1338 + $0x300] sm:$0xff]
    %v1436 = vld [vmem:[%s1338 + $0x308] sm:$0xff]
    %v1437 = vld [vmem:[%s1338 + $0x310] sm:$0xff]
    %v1438 = vld [vmem:[%s1338 + $0x318] sm:$0xff]
    %v1439 = vld [vmem:[%s1338 + $0x320] sm:$0xff]
    %v1440 = vld [vmem:[%s1338 + $0x328] sm:$0xff]
    %v1441 = vld [vmem:[%s1338 + $0x330] sm:$0xff]
    %v1442 = vld [vmem:[%s1338 + $0x338] sm:$0xff]
    %v1443 = vld [vmem:[%s1338 + $0x340] sm:$0xff]
    %v1444 = vld [vmem:[%s1338 + $0x348] sm:$0xff]
    %v1445 = vld [vmem:[%s1338 + $0x350] sm:$0xff]
    %v1446 = vld [vmem:[%s1338 + $0x358] sm:$0xff]
    %v1447 = vld [vmem:[%s1338 + $0x360] sm:$0xff]
    %v1448 = vld [vmem:[%s1338 + $0x368] sm:$0xff]
    %v1449 = vld [vmem:[%s1338 + $0x370] sm:$0xff]
    %v1450 = vld [vmem:[%s1338 + $0x378] sm:$0xff]
    %v1451 = vld [vmem:[%s1338 + $0x380] sm:$0xff]
    %v1452 = vld [vmem:[%s1338 + $0x388] sm:$0xff]
    %v1453 = vld [vmem:[%s1338 + $0x390] sm:$0xff]
    %v1454 = vld [vmem:[%s1338 + $0x398] sm:$0xff]
    %v1455 = vld [vmem:[%s1338 + $0x3a0] sm:$0xff]
    %v1456 = vld [vmem:[%s1338 + $0x3a8] sm:$0xff]
    %v1457 = vld [vmem:[%s1338 + $0x3b0] sm:$0xff]
    %v1458 = vld [vmem:[%s1338 + $0x3b8] sm:$0xff]
    %v1459 = vld [vmem:[%s1338 + $0x3c0] sm:$0xff]
    %v1460 = vld [vmem:[%s1338 + $0x3c8] sm:$0xff]
    %v1461 = vld [vmem:[%s1338 + $0x3d0] sm:$0xff]
    %v1462 = vld [vmem:[%s1338 + $0x3d8] sm:$0xff]
    %v1463 = vld [vmem:[%s1338 + $0x3e0] sm:$0xff]
    %v1464 = vld [vmem:[%s1338 + $0x3e8] sm:$0xff]
    %v1465 = vld [vmem:[%s1338 + $0x3f0] sm:$0xff]
    %v1466 = vld [vmem:[%s1338 + $0x3f8] sm:$0xff]
    %v1467 = vld [vmem:[%s1338 + $0x400] sm:$0xff]
    %v1468 = vld [vmem:[%s1338 + $0x408] sm:$0xff]
    %v1469 = vld [vmem:[%s1338 + $0x410] sm:$0xff]
    %v1470 = vld [vmem:[%s1338 + $0x418] sm:$0xff]
    %v1471 = vld [vmem:[%s1338 + $0x420] sm:$0xff]
    %v1472 = vld [vmem:[%s1338 + $0x428] sm:$0xff]
    %v1473 = vld [vmem:[%s1338 + $0x430] sm:$0xff]
    %v1474 = vld [vmem:[%s1338 + $0x438] sm:$0xff]
    %v1475 = vld [vmem:[%s1338 + $0x440] sm:$0xff]
    %v1476 = vld [vmem:[%s1338 + $0x448] sm:$0xff]
    %v1477 = vld [vmem:[%s1338 + $0x450] sm:$0xff]
    %v1478 = vld [vmem:[%s1338 + $0x458] sm:$0xff]
    %v1479 = vld [vmem:[%s1338 + $0x460] sm:$0xff]
    %v1480 = vld [vmem:[%s1338 + $0x468] sm:$0xff]
    %v1481 = vld [vmem:[%s1338 + $0x470] sm:$0xff]
    %v1482 = vld [vmem:[%s1338 + $0x478] sm:$0xff]
    %v1483 = vld [vmem:[%s1338 + $0x480] sm:$0xff]
    %v1484 = vld [vmem:[%s1338 + $0x488] sm:$0xff]
    %v1485 = vld [vmem:[%s1338 + $0x490] sm:$0xff]
    %v1486 = vld [vmem:[%s1338 + $0x498] sm:$0xff]
    %v1487 = vld [vmem:[%s1338 + $0x4a0] sm:$0xff]
    %v1488 = vld [vmem:[%s1338 + $0x4a8] sm:$0xff]
    %v1489 = vld [vmem:[%s1338 + $0x4b0] sm:$0xff]
    %v1490 = vld [vmem:[%s1338 + $0x4b8] sm:$0xff]
    %v1491 = vld [vmem:[%s1338 + $0x4c0] sm:$0xff]
    %v1492 = vld [vmem:[%s1338 + $0x4c8] sm:$0xff]
    %v1493 = vld [vmem:[%s1338 + $0x4d0] sm:$0xff]
    %v1494 = vld [vmem:[%s1338 + $0x4d8] sm:$0xff]
    %v1495 = vld [vmem:[%s1338 + $0x4e0] sm:$0xff]
    %v1496 = vld [vmem:[%s1338 + $0x4e8] sm:$0xff]
    %v1497 = vld [vmem:[%s1338 + $0x4f0] sm:$0xff]
    %v1498 = vld [vmem:[%s1338 + $0x4f8] sm:$0xff]
    %v1499 = vld [vmem:[%s1338 + $0x500] sm:$0xff]
    %v1500 = vld [vmem:[%s1338 + $0x508] sm:$0xff]
    %v1501 = vld [vmem:[%s1338 + $0x510] sm:$0xff]
    %v1502 = vld [vmem:[%s1338 + $0x518] sm:$0xff]
    %v1503 = vld [vmem:[%s1338 + $0x520] sm:$0xff]
    %v1504 = vld [vmem:[%s1338 + $0x528] sm:$0xff]
    %v1505 = vld [vmem:[%s1338 + $0x530] sm:$0xff]
    %v1506 = vld [vmem:[%s1338 + $0x538] sm:$0xff]
    %v1507 = vld [vmem:[%s1338 + $0x540] sm:$0xff]
    %v1508 = vld [vmem:[%s1338 + $0x548] sm:$0xff]
    %v1509 = vld [vmem:[%s1338 + $0x550] sm:$0xff]
    %v1510 = vld [vmem:[%s1338 + $0x558] sm:$0xff]
    %v1511 = vld [vmem:[%s1338 + $0x560] sm:$0xff]
    %v1512 = vld [vmem:[%s1338 + $0x568] sm:$0xff]
    %v1513 = vld [vmem:[%s1338 + $0x570] sm:$0xff]
    %v1514 = vld [vmem:[%s1338 + $0x578] sm:$0xff]
    %v1515 = vld [vmem:[%s1338 + $0x580] sm:$0xff]
    %v1516 = vld [vmem:[%s1338 + $0x588] sm:$0xff]
    %v1517 = vld [vmem:[%s1338 + $0x590] sm:$0xff]
    %v1518 = vld [vmem:[%s1338 + $0x598] sm:$0xff]
    %v1519 = vld [vmem:[%s1338 + $0x5a0] sm:$0xff]
    %v1520 = vld [vmem:[%s1338 + $0x5a8] sm:$0xff]
    %v1521 = vld [vmem:[%s1338 + $0x5b0] sm:$0xff]
    %v1522 = vld [vmem:[%s1338 + $0x5b8] sm:$0xff]
    %v1523 = vld [vmem:[%s1338 + $0x5c0] sm:$0xff]
    %v1524 = vld [vmem:[%s1338 + $0x5c8] sm:$0xff]
    %v1525 = vld [vmem:[%s1338 + $0x5d0] sm:$0xff]
    %v1526 = vld [vmem:[%s1338 + $0x5d8] sm:$0xff]
    %v1527 = vld [vmem:[%s1338 + $0x5e0] sm:$0xff]
    %v1528 = vld [vmem:[%s1338 + $0x5e8] sm:$0xff]
    %v1529 = vld [vmem:[%s1338 + $0x5f0] sm:$0xff]
    %v1530 = vld [vmem:[%s1338 + $0x5f8] sm:$0xff]
    %v1531 = vld [vmem:[%s1338 + $0x600] sm:$0xff]
    %v1532 = vld [vmem:[%s1338 + $0x608] sm:$0xff]
    %v1533 = vld [vmem:[%s1338 + $0x610] sm:$0xff]
    %v1534 = vld [vmem:[%s1338 + $0x618] sm:$0xff]
    %v1535 = vld [vmem:[%s1338 + $0x620] sm:$0xff]
    %v1536 = vld [vmem:[%s1338 + $0x628] sm:$0xff]
    %v1537 = vld [vmem:[%s1338 + $0x630] sm:$0xff]
    %v1538 = vld [vmem:[%s1338 + $0x638] sm:$0xff]
    %v1539 = vld [vmem:[%s1338 + $0x640] sm:$0xff]
    %v1540 = vld [vmem:[%s1338 + $0x648] sm:$0xff]
    %v1541 = vld [vmem:[%s1338 + $0x650] sm:$0xff]
    %v1542 = vld [vmem:[%s1338 + $0x658] sm:$0xff]
    %v1543 = vld [vmem:[%s1338 + $0x660] sm:$0xff]
    %v1544 = vld [vmem:[%s1338 + $0x668] sm:$0xff]
    %v1545 = vld [vmem:[%s1338 + $0x670] sm:$0xff]
    %v1546 = vld [vmem:[%s1338 + $0x678] sm:$0xff]
    %v1547 = vld [vmem:[%s1338 + $0x680] sm:$0xff]
    %v1548 = vld [vmem:[%s1338 + $0x688] sm:$0xff]
    %v1549 = vld [vmem:[%s1338 + $0x690] sm:$0xff]
    %v1550 = vld [vmem:[%s1338 + $0x698] sm:$0xff]
    %v1551 = vld [vmem:[%s1338 + $0x6a0] sm:$0xff]
    %v1552 = vld [vmem:[%s1338 + $0x6a8] sm:$0xff]
    %v1553 = vld [vmem:[%s1338 + $0x6b0] sm:$0xff]
    %v1554 = vld [vmem:[%s1338 + $0x6b8] sm:$0xff]
    %v1555 = vld [vmem:[%s1338 + $0x6c0] sm:$0xff]
    %v1556 = vld [vmem:[%s1338 + $0x6c8] sm:$0xff]
    %v1557 = vld [vmem:[%s1338 + $0x6d0] sm:$0xff]
    %v1558 = vld [vmem:[%s1338 + $0x6d8] sm:$0xff]
    %v1559 = vld [vmem:[%s1338 + $0x6e0] sm:$0xff]
    %v1560 = vld [vmem:[%s1338 + $0x6e8] sm:$0xff]
    %v1561 = vld [vmem:[%s1338 + $0x6f0] sm:$0xff]
    %v1562 = vld [vmem:[%s1338 + $0x6f8] sm:$0xff]
    %v1563 = vld [vmem:[%s1338 + $0x700] sm:$0xff]
    %v1564 = vld [vmem:[%s1338 + $0x708] sm:$0xff]
    %v1565 = vld [vmem:[%s1338 + $0x710] sm:$0xff]
    %v1566 = vld [vmem:[%s1338 + $0x718] sm:$0xff]
    %v1567 = vld [vmem:[%s1338 + $0x720] sm:$0xff]
    %v1568 = vld [vmem:[%s1338 + $0x728] sm:$0xff]
    %v1569 = vld [vmem:[%s1338 + $0x730] sm:$0xff]
    %v1570 = vld [vmem:[%s1338 + $0x738] sm:$0xff]
    %v1571 = vld [vmem:[%s1338 + $0x740] sm:$0xff]
    %v1572 = vld [vmem:[%s1338 + $0x748] sm:$0xff]
    %v1573 = vld [vmem:[%s1338 + $0x750] sm:$0xff]
    %v1574 = vld [vmem:[%s1338 + $0x758] sm:$0xff]
    %v1575 = vld [vmem:[%s1338 + $0x760] sm:$0xff]
    %v1576 = vld [vmem:[%s1338 + $0x768] sm:$0xff]
    %v1577 = vld [vmem:[%s1338 + $0x770] sm:$0xff]
    %v1578 = vld [vmem:[%s1338 + $0x778] sm:$0xff]
    %v1579 = vld [vmem:[%s1338 + $0x780] sm:$0xff]
    %v1580 = vld [vmem:[%s1338 + $0x788] sm:$0xff]
    %v1581 = vld [vmem:[%s1338 + $0x790] sm:$0xff]
    %v1582 = vld [vmem:[%s1338 + $0x798] sm:$0xff]
    %v1583 = vld [vmem:[%s1338 + $0x7a0] sm:$0xff]
    %v1584 = vld [vmem:[%s1338 + $0x7a8] sm:$0xff]
    %v1585 = vld [vmem:[%s1338 + $0x7b0] sm:$0xff]
    %v1586 = vld [vmem:[%s1338 + $0x7b8] sm:$0xff]
    %v1587 = vld [vmem:[%s1338 + $0x7c0] sm:$0xff]
    %v1588 = vld [vmem:[%s1338 + $0x7c8] sm:$0xff]
    %v1589 = vld [vmem:[%s1338 + $0x7d0] sm:$0xff]
    %v1590 = vld [vmem:[%s1338 + $0x7d8] sm:$0xff]
    %v1591 = vld [vmem:[%s1338 + $0x7e0] sm:$0xff]
    %v1592 = vld [vmem:[%s1338 + $0x7e8] sm:$0xff]
    %v1593 = vld [vmem:[%s1338 + $0x7f0] sm:$0xff]
    %v1594 = vld [vmem:[%s1338 + $0x7f8] sm:$0xff]
    %v1595 = vld [vmem:[#allocation2] sm:$0x3]
    %v1596 = vld [vmem:[#allocation2 + $0x8] sm:$0x3]
    %v1597 = vld [vmem:[#allocation2 + $0x10] sm:$0x3]
    %v1598 = vld [vmem:[#allocation2 + $0x18] sm:$0x3]
    %v1599 = vld [vmem:[#allocation2 + $0x20] sm:$0x3]
    %v1600 = vld [vmem:[#allocation2 + $0x28] sm:$0x3]
    %v1601 = vld [vmem:[#allocation2 + $0x30] sm:$0x3]
    %v1602 = vld [vmem:[#allocation2 + $0x38] sm:$0x3]
    %1603 = vmatprep.subr.mxu0 %v1083
    %1604 = vmatpush1.msra.mxu0 %v1082
    %1605 = vmatprep.subr.mxu0 %v1091
    %1606 = vmatpush1.msra.mxu0 %v1090
    %1607 = vmatprep.subr.mxu0 %v1099
    %1608 = vmatpush1.msra.mxu0 %v1098
    %1609 = vmatprep.subr.mxu0 %v1107
    %1610 = vmatpush1.msra.mxu0 %v1106
    %1611 = vmatprep.subr.mxu0 %v1115
    %1612 = vmatpush1.msra.mxu0 %v1114
    %1613 = vmatprep.subr.mxu0 %v1123
    %1614 = vmatpush1.msra.mxu0 %v1122
    %1615 = vmatprep.subr.mxu0 %v1131
    %1616 = vmatpush1.msra.mxu0 %v1130
    %1617 = vmatprep.subr.mxu0 %v1139
    %1618 = vmatpush1.msra.mxu0 %v1138
    %1619 = vmatprep.subr.mxu0 %v1147
    %1620 = vmatpush1.msra.mxu0 %v1146
    %1621 = vmatprep.subr.mxu0 %v1155
    %1622 = vmatpush1.msra.mxu0 %v1154
    %1623 = vmatprep.subr.mxu0 %v1163
    %1624 = vmatpush1.msra.mxu0 %v1162
    %1625 = vmatprep.subr.mxu0 %v1171
    %1626 = vmatpush1.msra.mxu0 %v1170
    %1627 = vmatprep.subr.mxu0 %v1179
    %1628 = vmatpush1.msra.mxu0 %v1178
    %1629 = vmatprep.subr.mxu0 %v1187
    %1630 = vmatpush1.msra.mxu0 %v1186
    %1631 = vmatprep.subr.mxu0 %v1195
    %1632 = vmatpush1.msra.mxu0 %v1194
    %1633 = vmatprep.subr.mxu0 %v1203
    %1634 = vmatpush1.msra.mxu0 %v1202
    %1635 = vmatprep.subr.mxu0 %v1211
    %1636 = vmatpush1.msra.mxu0 %v1210
    %1637 = vmatprep.subr.mxu0 %v1219
    %1638 = vmatpush1.msra.mxu0 %v1218
    %1639 = vmatprep.subr.mxu0 %v1227
    %1640 = vmatpush1.msra.mxu0 %v1226
    %1641 = vmatprep.subr.mxu0 %v1235
    %1642 = vmatpush1.msra.mxu0 %v1234
    %1643 = vmatprep.subr.mxu0 %v1243
    %1644 = vmatpush1.msra.mxu0 %v1242
    %1645 = vmatprep.subr.mxu0 %v1251
    %1646 = vmatpush1.msra.mxu0 %v1250
    %1647 = vmatprep.subr.mxu0 %v1259
    %1648 = vmatpush1.msra.mxu0 %v1258
    %1649 = vmatprep.subr.mxu0 %v1267
    %1650 = vmatpush1.msra.mxu0 %v1266
    %1651 = vmatprep.subr.mxu0 %v1275
    %1652 = vmatpush1.msra.mxu0 %v1274
    %1653 = vmatprep.subr.mxu0 %v1283
    %1654 = vmatpush1.msra.mxu0 %v1282
    %1655 = vmatprep.subr.mxu0 %v1291
    %1656 = vmatpush1.msra.mxu0 %v1290
    %1657 = vmatprep.subr.mxu0 %v1299
    %1658 = vmatpush1.msra.mxu0 %v1298
    %1659 = vmatprep.subr.mxu0 %v1307
    %1660 = vmatpush1.msra.mxu0 %v1306
    %1661 = vmatprep.subr.mxu0 %v1315
    %1662 = vmatpush1.msra.mxu0 %v1314
    %1663 = vmatprep.subr.mxu0 %v1323
    %1664 = vmatpush1.msra.mxu0 %v1322
    %1665 = vmatprep.subr.mxu0 %v1331
    %1666 = vmatpush1.msra.mxu0 %v1330
    %1667 = vmatprep.mubr.f32.mxu0 0.0
    %1668 = vmatmul.mubr.f32.gmra.mrb[0].mxu0 0.0
    %v1669 = vpop.f32.mrb[0].mxu0
    %v1670 = vadd.f32 0.0, %v1669
    %v1671 = vpop.f32.mrb[0].mxu0
    %v1672 = vadd.f32 0.0, %v1671
    %1673 = vdwg.mxu0
    %1674 = vmatprep.subr.mxu0 %v1085
    %1675 = vmatpush1.msra.mxu0 %v1084
    %1676 = vmatprep.subr.mxu0 %v1093
    %1677 = vmatpush1.msra.mxu0 %v1092
    %1678 = vmatprep.subr.mxu0 %v1101
    %1679 = vmatpush1.msra.mxu0 %v1100
    %1680 = vmatprep.subr.mxu0 %v1109
    %1681 = vmatpush1.msra.mxu0 %v1108
    %1682 = vmatprep.subr.mxu0 %v1117
    %1683 = vmatpush1.msra.mxu0 %v1116
    %1684 = vmatprep.subr.mxu0 %v1125
    %1685 = vmatpush1.msra.mxu0 %v1124
    %1686 = vmatprep.subr.mxu0 %v1133
    %1687 = vmatpush1.msra.mxu0 %v1132
    %1688 = vmatprep.subr.mxu0 %v1141
    %1689 = vmatpush1.msra.mxu0 %v1140
    %1690 = vmatprep.subr.mxu0 %v1149
    %1691 = vmatpush1.msra.mxu0 %v1148
    %1692 = vmatprep.subr.mxu0 %v1157
    %1693 = vmatpush1.msra.mxu0 %v1156
    %1694 = vmatprep.subr.mxu0 %v1165
    %1695 = vmatpush1.msra.mxu0 %v1164
    %1696 = vmatprep.subr.mxu0 %v1173
    %1697 = vmatpush1.msra.mxu0 %v1172
    %1698 = vmatprep.subr.mxu0 %v1181
    %1699 = vmatpush1.msra.mxu0 %v1180
    %1700 = vmatprep.subr.mxu0 %v1189
    %1701 = vmatpush1.msra.mxu0 %v1188
    %1702 = vmatprep.subr.mxu0 %v1197
    %1703 = vmatpush1.msra.mxu0 %v1196
    %1704 = vmatprep.subr.mxu0 %v1205
    %1705 = vmatpush1.msra.mxu0 %v1204
    %1706 = vmatprep.subr.mxu0 %v1213
    %1707 = vmatpush1.msra.mxu0 %v1212
    %1708 = vmatprep.subr.mxu0 %v1221
    %1709 = vmatpush1.msra.mxu0 %v1220
    %1710 = vmatprep.subr.mxu0 %v1229
    %1711 = vmatpush1.msra.mxu0 %v1228
    %1712 = vmatprep.subr.mxu0 %v1237
    %1713 = vmatpush1.msra.mxu0 %v1236
    %1714 = vmatprep.subr.mxu0 %v1245
    %1715 = vmatpush1.msra.mxu0 %v1244
    %1716 = vmatprep.subr.mxu0 %v1253
    %1717 = vmatpush1.msra.mxu0 %v1252
    %1718 = vmatprep.subr.mxu0 %v1261
    %1719 = vmatpush1.msra.mxu0 %v1260
    %1720 = vmatprep.subr.mxu0 %v1269
    %1721 = vmatpush1.msra.mxu0 %v1268
    %1722 = vmatprep.subr.mxu0 %v1277
    %1723 = vmatpush1.msra.mxu0 %v1276
    %1724 = vmatprep.subr.mxu0 %v1285
    %1725 = vmatpush1.msra.mxu0 %v1284
    %1726 = vmatprep.subr.mxu0 %v1293
    %1727 = vmatpush1.msra.mxu0 %v1292
    %1728 = vmatprep.subr.mxu0 %v1301
    %1729 = vmatpush1.msra.mxu0 %v1300
    %1730 = vmatprep.subr.mxu0 %v1309
    %1731 = vmatpush1.msra.mxu0 %v1308
    %1732 = vmatprep.subr.mxu0 %v1317
    %1733 = vmatpush1.msra.mxu0 %v1316
    %1734 = vmatprep.subr.mxu0 %v1325
    %1735 = vmatpush1.msra.mxu0 %v1324
    %1736 = vmatprep.subr.mxu0 %v1333
    %1737 = vmatpush1.msra.mxu0 %v1332
    %1738 = vmatprep.mubr.f32.mxu0 0.0
    %1739 = vmatmul.mubr.f32.gmra.mrb[0].mxu0 0.0
    %v1740 = vpop.f32.mrb[0].mxu0
    %v1741 = vadd.f32 0.0, %v1740
    %v1742 = vpop.f32.mrb[0].mxu0
    %v1743 = vadd.f32 0.0, %v1742
    %1744 = vdwg.mxu0
    %1745 = vmatprep.subr.mxu0 %v1087
    %1746 = vmatpush1.msra.mxu0 %v1086
    %1747 = vmatprep.subr.mxu0 %v1095
    %1748 = vmatpush1.msra.mxu0 %v1094
    %1749 = vmatprep.subr.mxu0 %v1103
    %1750 = vmatpush1.msra.mxu0 %v1102
    %1751 = vmatprep.subr.mxu0 %v1111
    %1752 = vmatpush1.msra.mxu0 %v1110
    %1753 = vmatprep.subr.mxu0 %v1119
    %1754 = vmatpush1.msra.mxu0 %v1118
    %1755 = vmatprep.subr.mxu0 %v1127
    %1756 = vmatpush1.msra.mxu0 %v1126
    %1757 = vmatprep.subr.mxu0 %v1135
    %1758 = vmatpush1.msra.mxu0 %v1134
    %1759 = vmatprep.subr.mxu0 %v1143
    %1760 = vmatpush1.msra.mxu0 %v1142
    %1761 = vmatprep.subr.mxu0 %v1151
    %1762 = vmatpush1.msra.mxu0 %v1150
    %1763 = vmatprep.subr.mxu0 %v1159
    %1764 = vmatpush1.msra.mxu0 %v1158
    %1765 = vmatprep.subr.mxu0 %v1167
    %1766 = vmatpush1.msra.mxu0 %v1166
    %1767 = vmatprep.subr.mxu0 %v1175
    %1768 = vmatpush1.msra.mxu0 %v1174
    %1769 = vmatprep.subr.mxu0 %v1183
    %1770 = vmatpush1.msra.mxu0 %v1182
    %1771 = vmatprep.subr.mxu0 %v1191
    %1772 = vmatpush1.msra.mxu0 %v1190
    %1773 = vmatprep.subr.mxu0 %v1199
    %1774 = vmatpush1.msra.mxu0 %v1198
    %1775 = vmatprep.subr.mxu0 %v1207
    %1776 = vmatpush1.msra.mxu0 %v1206
    %1777 = vmatprep.subr.mxu0 %v1215
    %1778 = vmatpush1.msra.mxu0 %v1214
    %1779 = vmatprep.subr.mxu0 %v1223
    %1780 = vmatpush1.msra.mxu0 %v1222
    %1781 = vmatprep.subr.mxu0 %v1231
    %1782 = vmatpush1.msra.mxu0 %v1230
    %1783 = vmatprep.subr.mxu0 %v1239
    %1784 = vmatpush1.msra.mxu0 %v1238
    %1785 = vmatprep.subr.mxu0 %v1247
    %1786 = vmatpush1.msra.mxu0 %v1246
    %1787 = vmatprep.subr.mxu0 %v1255
    %1788 = vmatpush1.msra.mxu0 %v1254
    %1789 = vmatprep.subr.mxu0 %v1263
    %1790 = vmatpush1.msra.mxu0 %v1262
    %1791 = vmatprep.subr.mxu0 %v1271
    %1792 = vmatpush1.msra.mxu0 %v1270
    %1793 = vmatprep.subr.mxu0 %v1279
    %1794 = vmatpush1.msra.mxu0 %v1278
    %1795 = vmatprep.subr.mxu0 %v1287
    %1796 = vmatpush1.msra.mxu0 %v1286
    %1797 = vmatprep.subr.mxu0 %v1295
    %1798 = vmatpush1.msra.mxu0 %v1294
    %1799 = vmatprep.subr.mxu0 %v1303
    %1800 = vmatpush1.msra.mxu0 %v1302
    %1801 = vmatprep.subr.mxu0 %v1311
    %1802 = vmatpush1.msra.mxu0 %v1310
    %1803 = vmatprep.subr.mxu0 %v1319
    %1804 = vmatpush1.msra.mxu0 %v1318
    %1805 = vmatprep.subr.mxu0 %v1327
    %1806 = vmatpush1.msra.mxu0 %v1326
    %1807 = vmatprep.subr.mxu0 %v1335
    %1808 = vmatpush1.msra.mxu0 %v1334
    %1809 = vmatprep.mubr.f32.mxu0 0.0
    %1810 = vmatmul.mubr.f32.gmra.mrb[0].mxu0 0.0
    %v1811 = vpop.f32.mrb[0].mxu0
    %v1812 = vadd.f32 0.0, %v1811
    %v1813 = vpop.f32.mrb[0].mxu0
    %v1814 = vadd.f32 0.0, %v1813
    %1815 = vdwg.mxu0
    %1816 = vmatprep.subr.mxu0 %v1089
    %1817 = vmatpush1.msra.mxu0 %v1088
    %1818 = vmatprep.subr.mxu0 %v1097
    %1819 = vmatpush1.msra.mxu0 %v1096
    %1820 = vmatprep.subr.mxu0 %v1105
    %1821 = vmatpush1.msra.mxu0 %v1104
    %1822 = vmatprep.subr.mxu0 %v1113
    %1823 = vmatpush1.msra.mxu0 %v1112
    %1824 = vmatprep.subr.mxu0 %v1121
    %1825 = vmatpush1.msra.mxu0 %v1120
    %1826 = vmatprep.subr.mxu0 %v1129
    %1827 = vmatpush1.msra.mxu0 %v1128
    %1828 = vmatprep.subr.mxu0 %v1137
    %1829 = vmatpush1.msra.mxu0 %v1136
    %1830 = vmatprep.subr.mxu0 %v1145
    %1831 = vmatpush1.msra.mxu0 %v1144
    %1832 = vmatprep.subr.mxu0 %v1153
    %1833 = vmatpush1.msra.mxu0 %v1152
    %1834 = vmatprep.subr.mxu0 %v1161
    %1835 = vmatpush1.msra.mxu0 %v1160
    %1836 = vmatprep.subr.mxu0 %v1169
    %1837 = vmatpush1.msra.mxu0 %v1168
    %1838 = vmatprep.subr.mxu0 %v1177
    %1839 = vmatpush1.msra.mxu0 %v1176
    %1840 = vmatprep.subr.mxu0 %v1185
    %1841 = vmatpush1.msra.mxu0 %v1184
    %1842 = vmatprep.subr.mxu0 %v1193
    %1843 = vmatpush1.msra.mxu0 %v1192
    %1844 = vmatprep.subr.mxu0 %v1201
    %1845 = vmatpush1.msra.mxu0 %v1200
    %1846 = vmatprep.subr.mxu0 %v1209
    %1847 = vmatpush1.msra.mxu0 %v1208
    %1848 = vmatprep.subr.mxu0 %v1217
    %1849 = vmatpush1.msra.mxu0 %v1216
    %1850 = vmatprep.subr.mxu0 %v1225
    %1851 = vmatpush1.msra.mxu0 %v1224
    %1852 = vmatprep.subr.mxu0 %v1233
    %1853 = vmatpush1.msra.mxu0 %v1232
    %1854 = vmatprep.subr.mxu0 %v1241
    %1855 = vmatpush1.msra.mxu0 %v1240
    %1856 = vmatprep.subr.mxu0 %v1249
    %1857 = vmatpush1.msra.mxu0 %v1248
    %1858 = vmatprep.subr.mxu0 %v1257
    %1859 = vmatpush1.msra.mxu0 %v1256
    %1860 = vmatprep.subr.mxu0 %v1265
    %1861 = vmatpush1.msra.mxu0 %v1264
    %1862 = vmatprep.subr.mxu0 %v1273
    %1863 = vmatpush1.msra.mxu0 %v1272
    %1864 = vmatprep.subr.mxu0 %v1281
    %1865 = vmatpush1.msra.mxu0 %v1280
    %1866 = vmatprep.subr.mxu0 %v1289
    %1867 = vmatpush1.msra.mxu0 %v1288
    %1868 = vmatprep.subr.mxu0 %v1297
    %1869 = vmatpush1.msra.mxu0 %v1296
    %1870 = vmatprep.subr.mxu0 %v1305
    %1871 = vmatpush1.msra.mxu0 %v1304
    %1872 = vmatprep.subr.mxu0 %v1313
    %1873 = vmatpush1.msra.mxu0 %v1312
    %1874 = vmatprep.subr.mxu0 %v1321
    %1875 = vmatpush1.msra.mxu0 %v1320
    %1876 = vmatprep.subr.mxu0 %v1329
    %1877 = vmatpush1.msra.mxu0 %v1328
    %1878 = vmatprep.subr.mxu0 %v1337
    %1879 = vmatpush1.msra.mxu0 %v1336
    %1880 = vmatprep.mubr.f32.mxu0 0.0
    %1881 = vmatmul.mubr.f32.gmra.mrb[0].mxu0 0.0
    %v1882 = vpop.f32.mrb[0].mxu0
    %v1883 = vadd.f32 0.0, %v1882
    %v1884 = vpop.f32.mrb[0].mxu0
    %v1885 = vadd.f32 0.0, %v1884
    %1886 = vdwg.mxu0
    %v1887 = vadd.f32 %v1595, %v1670
    %v1888 = vadd.f32 %v1596, %v1672
    %v1889 = vadd.f32 %v1597, %v1741
    %v1890 = vadd.f32 %v1598, %v1743
    %v1891 = vadd.f32 %v1599, %v1812
    %v1892 = vadd.f32 %v1600, %v1814
    %v1893 = vadd.f32 %v1601, %v1883
    %v1894 = vadd.f32 %v1602, %v1885
    %v1895 = vld [vmem:[#allocation3 + $0x40] sm:$0xc0]
    %v1896 = vld [vmem:[#allocation3 + $0x48] sm:$0xc0]
    %v1897 = vld [vmem:[#allocation3 + $0x50] sm:$0xc0]
    %v1898 = vld [vmem:[#allocation3 + $0x58] sm:$0xc0]
    %v1899 = vld [vmem:[#allocation3 + $0x60] sm:$0xc0]
    %v1900 = vld [vmem:[#allocation3 + $0x68] sm:$0xc0]
    %v1901 = vld [vmem:[#allocation3 + $0x70] sm:$0xc0]
    %v1902 = vld [vmem:[#allocation3 + $0x78] sm:$0xc0]
    %1903 = vmatprep.subr.mxu0 %v1340
    %1904 = vmatpush1.msra.mxu0 %v1339
    %1905 = vmatprep.subr.mxu0 %v1348
    %1906 = vmatpush1.msra.mxu0 %v1347
    %1907 = vmatprep.subr.mxu0 %v1356
    %1908 = vmatpush1.msra.mxu0 %v1355
    %1909 = vmatprep.subr.mxu0 %v1364
    %1910 = vmatpush1.msra.mxu0 %v1363
    %1911 = vmatprep.subr.mxu0 %v1372
    %1912 = vmatpush1.msra.mxu0 %v1371
    %1913 = vmatprep.subr.mxu0 %v1380
    %1914 = vmatpush1.msra.mxu0 %v1379
    %1915 = vmatprep.subr.mxu0 %v1388
    %1916 = vmatpush1.msra.mxu0 %v1387
    %1917 = vmatprep.subr.mxu0 %v1396
    %1918 = vmatpush1.msra.mxu0 %v1395
    %1919 = vmatprep.subr.mxu0 %v1404
    %1920 = vmatpush1.msra.mxu0 %v1403
    %1921 = vmatprep.subr.mxu0 %v1412
    %1922 = vmatpush1.msra.mxu0 %v1411
    %1923 = vmatprep.subr.mxu0 %v1420
    %1924 = vmatpush1.msra.mxu0 %v1419
    %1925 = vmatprep.subr.mxu0 %v1428
    %1926 = vmatpush1.msra.mxu0 %v1427
    %1927 = vmatprep.subr.mxu0 %v1436
    %1928 = vmatpush1.msra.mxu0 %v1435
    %1929 = vmatprep.subr.mxu0 %v1444
    %1930 = vmatpush1.msra.mxu0 %v1443
    %1931 = vmatprep.subr.mxu0 %v1452
    %1932 = vmatpush1.msra.mxu0 %v1451
    %1933 = vmatprep.subr.mxu0 %v1460
    %1934 = vmatpush1.msra.mxu0 %v1459
    %1935 = vmatprep.subr.mxu0 %v1468
    %1936 = vmatpush1.msra.mxu0 %v1467
    %1937 = vmatprep.subr.mxu0 %v1476
    %1938 = vmatpush1.msra.mxu0 %v1475
    %1939 = vmatprep.subr.mxu0 %v1484
    %1940 = vmatpush1.msra.mxu0 %v1483
    %1941 = vmatprep.subr.mxu0 %v1492
    %1942 = vmatpush1.msra.mxu0 %v1491
    %1943 = vmatprep.subr.mxu0 %v1500
    %1944 = vmatpush1.msra.mxu0 %v1499
    %1945 = vmatprep.subr.mxu0 %v1508
    %1946 = vmatpush1.msra.mxu0 %v1507
    %1947 = vmatprep.subr.mxu0 %v1516
    %1948 = vmatpush1.msra.mxu0 %v1515
    %1949 = vmatprep.subr.mxu0 %v1524
    %1950 = vmatpush1.msra.mxu0 %v1523
    %1951 = vmatprep.subr.mxu0 %v1532
    %1952 = vmatpush1.msra.mxu0 %v1531
    %1953 = vmatprep.subr.mxu0 %v1540
    %1954 = vmatpush1.msra.mxu0 %v1539
    %1955 = vmatprep.subr.mxu0 %v1548
    %1956 = vmatpush1.msra.mxu0 %v1547
    %1957 = vmatprep.subr.mxu0 %v1556
    %1958 = vmatpush1.msra.mxu0 %v1555
    %1959 = vmatprep.subr.mxu0 %v1564
    %1960 = vmatpush1.msra.mxu0 %v1563
    %1961 = vmatprep.subr.mxu0 %v1572
    %1962 = vmatpush1.msra.mxu0 %v1571
    %1963 = vmatprep.subr.mxu0 %v1580
    %1964 = vmatpush1.msra.mxu0 %v1579
    %1965 = vmatprep.subr.mxu0 %v1588
    %1966 = vmatpush1.msra.mxu0 %v1587
    %1967 = vmatprep.mubr.f32.mxu0 0.0
    %1968 = vmatmul.mubr.f32.gmra.mrb[0].mxu0 0.0
    %v1969 = vpop.f32.mrb[0].mxu0
    %v1970 = vadd.f32 0.0, %v1969
    %v1971 = vpop.f32.mrb[0].mxu0
    %v1972 = vadd.f32 0.0, %v1971
    %1973 = vdwg.mxu0
    %1974 = vmatprep.subr.mxu0 %v1342
    %1975 = vmatpush1.msra.mxu0 %v1341
    %1976 = vmatprep.subr.mxu0 %v1350
    %1977 = vmatpush1.msra.mxu0 %v1349
    %1978 = vmatprep.subr.mxu0 %v1358
    %1979 = vmatpush1.msra.mxu0 %v1357
    %1980 = vmatprep.subr.mxu0 %v1366
    %1981 = vmatpush1.msra.mxu0 %v1365
    %1982 = vmatprep.subr.mxu0 %v1374
    %1983 = vmatpush1.msra.mxu0 %v1373
    %1984 = vmatprep.subr.mxu0 %v1382
    %1985 = vmatpush1.msra.mxu0 %v1381
    %1986 = vmatprep.subr.mxu0 %v1390
    %1987 = vmatpush1.msra.mxu0 %v1389
    %1988 = vmatprep.subr.mxu0 %v1398
    %1989 = vmatpush1.msra.mxu0 %v1397
    %1990 = vmatprep.subr.mxu0 %v1406
    %1991 = vmatpush1.msra.mxu0 %v1405
    %1992 = vmatprep.subr.mxu0 %v1414
    %1993 = vmatpush1.msra.mxu0 %v1413
    %1994 = vmatprep.subr.mxu0 %v1422
    %1995 = vmatpush1.msra.mxu0 %v1421
    %1996 = vmatprep.subr.mxu0 %v1430
    %1997 = vmatpush1.msra.mxu0 %v1429
    %1998 = vmatprep.subr.mxu0 %v1438
    %1999 = vmatpush1.msra.mxu0 %v1437
    %2000 = vmatprep.subr.mxu0 %v1446
    %2001 = vmatpush1.msra.mxu0 %v1445
    %2002 = vmatprep.subr.mxu0 %v1454
    %2003 = vmatpush1.msra.mxu0 %v1453
    %2004 = vmatprep.subr.mxu0 %v1462
    %2005 = vmatpush1.msra.mxu0 %v1461
    %2006 = vmatprep.subr.mxu0 %v1470
    %2007 = vmatpush1.msra.mxu0 %v1469
    %2008 = vmatprep.subr.mxu0 %v1478
    %2009 = vmatpush1.msra.mxu0 %v1477
    %2010 = vmatprep.subr.mxu0 %v1486
    %2011 = vmatpush1.msra.mxu0 %v1485
    %2012 = vmatprep.subr.mxu0 %v1494
    %2013 = vmatpush1.msra.mxu0 %v1493
    %2014 = vmatprep.subr.mxu0 %v1502
    %2015 = vmatpush1.msra.mxu0 %v1501
    %2016 = vmatprep.subr.mxu0 %v1510
    %2017 = vmatpush1.msra.mxu0 %v1509
    %2018 = vmatprep.subr.mxu0 %v1518
    %2019 = vmatpush1.msra.mxu0 %v1517
    %2020 = vmatprep.subr.mxu0 %v1526
    %2021 = vmatpush1.msra.mxu0 %v1525
    %2022 = vmatprep.subr.mxu0 %v1534
    %2023 = vmatpush1.msra.mxu0 %v1533
    %2024 = vmatprep.subr.mxu0 %v1542
    %2025 = vmatpush1.msra.mxu0 %v1541
    %2026 = vmatprep.subr.mxu0 %v1550
    %2027 = vmatpush1.msra.mxu0 %v1549
    %2028 = vmatprep.subr.mxu0 %v1558
    %2029 = vmatpush1.msra.mxu0 %v1557
    %2030 = vmatprep.subr.mxu0 %v1566
    %2031 = vmatpush1.msra.mxu0 %v1565
    %2032 = vmatprep.subr.mxu0 %v1574
    %2033 = vmatpush1.msra.mxu0 %v1573
    %2034 = vmatprep.subr.mxu0 %v1582
    %2035 = vmatpush1.msra.mxu0 %v1581
    %2036 = vmatprep.subr.mxu0 %v1590
    %2037 = vmatpush1.msra.mxu0 %v1589
    %2038 = vmatprep.mubr.f32.mxu0 0.0
    %2039 = vmatmul.mubr.f32.gmra.mrb[0].mxu0 0.0
    %v2040 = vpop.f32.mrb[0].mxu0
    %v2041 = vadd.f32 0.0, %v2040
    %v2042 = vpop.f32.mrb[0].mxu0
    %v2043 = vadd.f32 0.0, %v2042
    %2044 = vdwg.mxu0
    %2045 = vmatprep.subr.mxu0 %v1344
    %2046 = vmatpush1.msra.mxu0 %v1343
    %2047 = vmatprep.subr.mxu0 %v1352
    %2048 = vmatpush1.msra.mxu0 %v1351
    %2049 = vmatprep.subr.mxu0 %v1360
    %2050 = vmatpush1.msra.mxu0 %v1359
    %2051 = vmatprep.subr.mxu0 %v1368
    %2052 = vmatpush1.msra.mxu0 %v1367
    %2053 = vmatprep.subr.mxu0 %v1376
    %2054 = vmatpush1.msra.mxu0 %v1375
    %2055 = vmatprep.subr.mxu0 %v1384
    %2056 = vmatpush1.msra.mxu0 %v1383
    %2057 = vmatprep.subr.mxu0 %v1392
    %2058 = vmatpush1.msra.mxu0 %v1391
    %2059 = vmatprep.subr.mxu0 %v1400
    %2060 = vmatpush1.msra.mxu0 %v1399
    %2061 = vmatprep.subr.mxu0 %v1408
    %2062 = vmatpush1.msra.mxu0 %v1407
    %2063 = vmatprep.subr.mxu0 %v1416
    %2064 = vmatpush1.msra.mxu0 %v1415
    %2065 = vmatprep.subr.mxu0 %v1424
    %2066 = vmatpush1.msra.mxu0 %v1423
    %2067 = vmatprep.subr.mxu0 %v1432
    %2068 = vmatpush1.msra.mxu0 %v1431
    %2069 = vmatprep.subr.mxu0 %v1440
    %2070 = vmatpush1.msra.mxu0 %v1439
    %2071 = vmatprep.subr.mxu0 %v1448
    %2072 = vmatpush1.msra.mxu0 %v1447
    %2073 = vmatprep.subr.mxu0 %v1456
    %2074 = vmatpush1.msra.mxu0 %v1455
    %2075 = vmatprep.subr.mxu0 %v1464
    %2076 = vmatpush1.msra.mxu0 %v1463
    %2077 = vmatprep.subr.mxu0 %v1472
    %2078 = vmatpush1.msra.mxu0 %v1471
    %2079 = vmatprep.subr.mxu0 %v1480
    %2080 = vmatpush1.msra.mxu0 %v1479
    %2081 = vmatprep.subr.mxu0 %v1488
    %2082 = vmatpush1.msra.mxu0 %v1487
    %2083 = vmatprep.subr.mxu0 %v1496
    %2084 = vmatpush1.msra.mxu0 %v1495
    %2085 = vmatprep.subr.mxu0 %v1504
    %2086 = vmatpush1.msra.mxu0 %v1503
    %2087 = vmatprep.subr.mxu0 %v1512
    %2088 = vmatpush1.msra.mxu0 %v1511
    %2089 = vmatprep.subr.mxu0 %v1520
    %2090 = vmatpush1.msra.mxu0 %v1519
    %2091 = vmatprep.subr.mxu0 %v1528
    %2092 = vmatpush1.msra.mxu0 %v1527
    %2093 = vmatprep.subr.mxu0 %v1536
    %2094 = vmatpush1.msra.mxu0 %v1535
    %2095 = vmatprep.subr.mxu0 %v1544
    %2096 = vmatpush1.msra.mxu0 %v1543
    %2097 = vmatprep.subr.mxu0 %v1552
    %2098 = vmatpush1.msra.mxu0 %v1551
    %2099 = vmatprep.subr.mxu0 %v1560
    %2100 = vmatpush1.msra.mxu0 %v1559
    %2101 = vmatprep.subr.mxu0 %v1568
    %2102 = vmatpush1.msra.mxu0 %v1567
    %2103 = vmatprep.subr.mxu0 %v1576
    %2104 = vmatpush1.msra.mxu0 %v1575
    %2105 = vmatprep.subr.mxu0 %v1584
    %2106 = vmatpush1.msra.mxu0 %v1583
    %2107 = vmatprep.subr.mxu0 %v1592
    %2108 = vmatpush1.msra.mxu0 %v1591
    %2109 = vmatprep.mubr.f32.mxu0 0.0
    %2110 = vmatmul.mubr.f32.gmra.mrb[0].mxu0 0.0
    %v2111 = vpop.f32.mrb[0].mxu0
    %v2112 = vadd.f32 0.0, %v2111
    %v2113 = vpop.f32.mrb[0].mxu0
    %v2114 = vadd.f32 0.0, %v2113
    %2115 = vdwg.mxu0
    %2116 = vmatprep.subr.mxu0 %v1346
    %2117 = vmatpush1.msra.mxu0 %v1345
    %2118 = vmatprep.subr.mxu0 %v1354
    %2119 = vmatpush1.msra.mxu0 %v1353
    %2120 = vmatprep.subr.mxu0 %v1362
    %2121 = vmatpush1.msra.mxu0 %v1361
    %2122 = vmatprep.subr.mxu0 %v1370
    %2123 = vmatpush1.msra.mxu0 %v1369
    %2124 = vmatprep.subr.mxu0 %v1378
    %2125 = vmatpush1.msra.mxu0 %v1377
    %2126 = vmatprep.subr.mxu0 %v1386
    %2127 = vmatpush1.msra.mxu0 %v1385
    %2128 = vmatprep.subr.mxu0 %v1394
    %2129 = vmatpush1.msra.mxu0 %v1393
    %2130 = vmatprep.subr.mxu0 %v1402
    %2131 = vmatpush1.msra.mxu0 %v1401
    %2132 = vmatprep.subr.mxu0 %v1410
    %2133 = vmatpush1.msra.mxu0 %v1409
    %2134 = vmatprep.subr.mxu0 %v1418
    %2135 = vmatpush1.msra.mxu0 %v1417
    %2136 = vmatprep.subr.mxu0 %v1426
    %2137 = vmatpush1.msra.mxu0 %v1425
    %2138 = vmatprep.subr.mxu0 %v1434
    %2139 = vmatpush1.msra.mxu0 %v1433
    %2140 = vmatprep.subr.mxu0 %v1442
    %2141 = vmatpush1.msra.mxu0 %v1441
    %2142 = vmatprep.subr.mxu0 %v1450
    %2143 = vmatpush1.msra.mxu0 %v1449
    %2144 = vmatprep.subr.mxu0 %v1458
    %2145 = vmatpush1.msra.mxu0 %v1457
    %2146 = vmatprep.subr.mxu0 %v1466
    %2147 = vmatpush1.msra.mxu0 %v1465
    %2148 = vmatprep.subr.mxu0 %v1474
    %2149 = vmatpush1.msra.mxu0 %v1473
    %2150 = vmatprep.subr.mxu0 %v1482
    %2151 = vmatpush1.msra.mxu0 %v1481
    %2152 = vmatprep.subr.mxu0 %v1490
    %2153 = vmatpush1.msra.mxu0 %v1489
    %2154 = vmatprep.subr.mxu0 %v1498
    %2155 = vmatpush1.msra.mxu0 %v1497
    %2156 = vmatprep.subr.mxu0 %v1506
    %2157 = vmatpush1.msra.mxu0 %v1505
    %2158 = vmatprep.subr.mxu0 %v1514
    %2159 = vmatpush1.msra.mxu0 %v1513
    %2160 = vmatprep.subr.mxu0 %v1522
    %2161 = vmatpush1.msra.mxu0 %v1521
    %2162 = vmatprep.subr.mxu0 %v1530
    %2163 = vmatpush1.msra.mxu0 %v1529
    %2164 = vmatprep.subr.mxu0 %v1538
    %2165 = vmatpush1.msra.mxu0 %v1537
    %2166 = vmatprep.subr.mxu0 %v1546
    %2167 = vmatpush1.msra.mxu0 %v1545
    %2168 = vmatprep.subr.mxu0 %v1554
    %2169 = vmatpush1.msra.mxu0 %v1553
    %2170 = vmatprep.subr.mxu0 %v1562
    %2171 = vmatpush1.msra.mxu0 %v1561
    %2172 = vmatprep.subr.mxu0 %v1570
    %2173 = vmatpush1.msra.mxu0 %v1569
    %2174 = vmatprep.subr.mxu0 %v1578
    %2175 = vmatpush1.msra.mxu0 %v1577
    %2176 = vmatprep.subr.mxu0 %v1586
    %2177 = vmatpush1.msra.mxu0 %v1585
    %2178 = vmatprep.subr.mxu0 %v1594
    %2179 = vmatpush1.msra.mxu0 %v1593
    %2180 = vmatprep.mubr.f32.mxu0 0.0
    %2181 = vmatmul.mubr.f32.gmra.mrb[0].mxu0 0.0
    %v2182 = vpop.f32.mrb[0].mxu0
    %v2183 = vadd.f32 0.0, %v2182
    %v2184 = vpop.f32.mrb[0].mxu0
    %v2185 = vadd.f32 0.0, %v2184
    %2186 = vdwg.mxu0
    %v2195 = vrot.slane %v1970, 2
    %v2196 = vrot.slane %v1972, 2
    %v2197 = vrot.slane %v2041, 2
    %v2198 = vrot.slane %v2043, 2
    %v2199 = vrot.slane %v2112, 2
    %v2200 = vrot.slane %v2114, 2
    %v2201 = vrot.slane %v2183, 2
    %v2202 = vrot.slane %v2185, 2
    %v2211 = vadd.f32 %v1895, %v2195
    %v2212 = vadd.f32 %v1896, %v2196
    %v2213 = vadd.f32 %v1897, %v2197
    %v2214 = vadd.f32 %v1898, %v2198
    %v2215 = vadd.f32 %v1899, %v2199
    %v2216 = vadd.f32 %v1900, %v2200
    %v2217 = vadd.f32 %v1901, %v2201
    %v2218 = vadd.f32 %v1902, %v2202
    %v2219 = vxor.u32 %v1887, 2147483648
    %v2220 = vxor.u32 %v1888, 2147483648
    %v2221 = vmul.f32 %v2219, 1.442695
    %v2222 = vpow.pop %v2221
    %v2223 = vmul.f32 %v2220, 1.442695
    %v2224 = vpow.pop %v2223
    %v2225 = vadd.f32 %v2222, 1.0
    %v2226 = vadd.f32 %v2224, 1.0
    %v2227 = vrcp.pop %v2225
    %v2228 = vmul.f32 1.0, %v2227
    %v2229 = vrcp.pop %v2226
    %v2230 = vmul.f32 1.0, %v2229
    %v2231 = vxor.u32 %v1889, 2147483648
    %v2232 = vxor.u32 %v1890, 2147483648
    %v2233 = vmul.f32 %v2231, 1.442695
    %v2234 = vpow.pop %v2233
    %v2235 = vmul.f32 %v2232, 1.442695
    %v2236 = vpow.pop %v2235
    %v2237 = vadd.f32 %v2234, 1.0
    %v2238 = vadd.f32 %v2236, 1.0
    %v2239 = vrcp.pop %v2237
    %v2240 = vmul.f32 1.0, %v2239
    %v2241 = vrcp.pop %v2238
    %v2242 = vmul.f32 1.0, %v2241
    %v2243 = vtanh.pop %v1891
    %v2244 = vtanh.pop %v1892
    %v2245 = vxor.u32 %v1893, 2147483648
    %v2246 = vxor.u32 %v1894, 2147483648
    %v2247 = vmul.f32 %v2245, 1.442695
    %v2248 = vpow.pop %v2247
    %v2249 = vmul.f32 %v2246, 1.442695
    %v2250 = vpow.pop %v2249
    %v2251 = vadd.f32 %v2248, 1.0
    %v2252 = vadd.f32 %v2250, 1.0
    %v2253 = vrcp.pop %v2251
    %v2254 = vmul.f32 1.0, %v2253
    %v2255 = vrcp.pop %v2252
    %v2256 = vmul.f32 1.0, %v2255
    %v2257 = vmul.f32 %v2240, 0.0
    %v2258 = vmul.f32 %v2242, 0.0
    %v2259 = vmul.f32 %v2228, %v2243
    %v2260 = vmul.f32 %v2230, %v2244
    %v2261 = vadd.f32 %v2257, %v2259
    %v2262 = vadd.f32 %v2258, %v2260
    %v2263 = vtanh.pop %v2261
    %v2264 = vtanh.pop %v2262
    %v2265 = vmul.f32 %v2254, %v2263
    %v2266 = vmul.f32 %v2256, %v2264
    %v2267 = vxor.u32 %v2211, 2147483648
    %v2268 = vxor.u32 %v2212, 2147483648
    %v2269 = vmul.f32 %v2267, 1.442695
    %v2270 = vpow.pop %v2269
    %v2271 = vmul.f32 %v2268, 1.442695
    %v2272 = vpow.pop %v2271
    %v2273 = vadd.f32 %v2270, 1.0
    %v2274 = vadd.f32 %v2272, 1.0
    %v2275 = vrcp.pop %v2273
    %v2276 = vmul.f32 1.0, %v2275
    %v2277 = vrcp.pop %v2274
    %v2278 = vmul.f32 1.0, %v2277
    %v2279 = vxor.u32 %v2213, 2147483648
    %v2280 = vxor.u32 %v2214, 2147483648
    %v2281 = vmul.f32 %v2279, 1.442695
    %v2282 = vpow.pop %v2281
    %v2283 = vmul.f32 %v2280, 1.442695
    %v2284 = vpow.pop %v2283
    %v2285 = vadd.f32 %v2282, 1.0
    %v2286 = vadd.f32 %v2284, 1.0
    %v2287 = vrcp.pop %v2285
    %v2288 = vmul.f32 1.0, %v2287
    %v2289 = vrcp.pop %v2286
    %v2290 = vmul.f32 1.0, %v2289
    %v2291 = vtanh.pop %v2215
    %v2292 = vtanh.pop %v2216
    %v2293 = vxor.u32 %v2217, 2147483648
    %v2294 = vxor.u32 %v2218, 2147483648
    %v2295 = vmul.f32 %v2293, 1.442695
    %v2296 = vpow.pop %v2295
    %v2297 = vmul.f32 %v2294, 1.442695
    %v2298 = vpow.pop %v2297
    %v2299 = vadd.f32 %v2296, 1.0
    %v2300 = vadd.f32 %v2298, 1.0
    %v2301 = vrcp.pop %v2299
    %v2302 = vmul.f32 1.0, %v2301
    %v2303 = vrcp.pop %v2300
    %v2304 = vmul.f32 1.0, %v2303
    %v2305 = vmul.f32 %v2288, 0.0
    %v2306 = vmul.f32 %v2290, 0.0
    %v2307 = vmul.f32 %v2276, %v2291
    %v2308 = vmul.f32 %v2278, %v2292
    %v2309 = vadd.f32 %v2305, %v2307
    %v2310 = vadd.f32 %v2306, %v2308
    %v2311 = vtanh.pop %v2309
    %v2312 = vtanh.pop %v2310
    %v2313 = vmul.f32 %v2302, %v2311
    %v2314 = vmul.f32 %v2304, %v2312
    %v2315 = vld [vmem:[#allocation2] sm:$0xc]
    %v2316 = vld [vmem:[#allocation2 + $0x8] sm:$0xc]
    %v2317 = vld [vmem:[#allocation2 + $0x10] sm:$0xc]
    %v2318 = vld [vmem:[#allocation2 + $0x18] sm:$0xc]
    %v2319 = vld [vmem:[#allocation2 + $0x20] sm:$0xc]
    %v2320 = vld [vmem:[#allocation2 + $0x28] sm:$0xc]
    %v2321 = vld [vmem:[#allocation2 + $0x30] sm:$0xc]
    %v2322 = vld [vmem:[#allocation2 + $0x38] sm:$0xc]
    %2323 = vmatprep.subr.mxu0 %v1083
    %2324 = vmatpush1.msra.mxu0 %v1082
    %2325 = vmatprep.subr.mxu0 %v1091
    %2326 = vmatpush1.msra.mxu0 %v1090
    %2327 = vmatprep.subr.mxu0 %v1099
    %2328 = vmatpush1.msra.mxu0 %v1098
    %2329 = vmatprep.subr.mxu0 %v1107
    %2330 = vmatpush1.msra.mxu0 %v1106
    %2331 = vmatprep.subr.mxu0 %v1115
    %2332 = vmatpush1.msra.mxu0 %v1114
    %2333 = vmatprep.subr.mxu0 %v1123
    %2334 = vmatpush1.msra.mxu0 %v1122
    %2335 = vmatprep.subr.mxu0 %v1131
    %2336 = vmatpush1.msra.mxu0 %v1130
    %2337 = vmatprep.subr.mxu0 %v1139
    %2338 = vmatpush1.msra.mxu0 %v1138
    %2339 = vmatprep.subr.mxu0 %v1147
    %2340 = vmatpush1.msra.mxu0 %v1146
    %2341 = vmatprep.subr.mxu0 %v1155
    %2342 = vmatpush1.msra.mxu0 %v1154
    %2343 = vmatprep.subr.mxu0 %v1163
    %2344 = vmatpush1.msra.mxu0 %v1162
    %2345 = vmatprep.subr.mxu0 %v1171
    %2346 = vmatpush1.msra.mxu0 %v1170
    %2347 = vmatprep.subr.mxu0 %v1179
    %2348 = vmatpush1.msra.mxu0 %v1178
    %2349 = vmatprep.subr.mxu0 %v1187
    %2350 = vmatpush1.msra.mxu0 %v1186
    %2351 = vmatprep.subr.mxu0 %v1195
    %2352 = vmatpush1.msra.mxu0 %v1194
    %2353 = vmatprep.subr.mxu0 %v1203
    %2354 = vmatpush1.msra.mxu0 %v1202
    %2355 = vmatprep.subr.mxu0 %v1211
    %2356 = vmatpush1.msra.mxu0 %v1210
    %2357 = vmatprep.subr.mxu0 %v1219
    %2358 = vmatpush1.msra.mxu0 %v1218
    %2359 = vmatprep.subr.mxu0 %v1227
    %2360 = vmatpush1.msra.mxu0 %v1226
    %2361 = vmatprep.subr.mxu0 %v1235
    %2362 = vmatpush1.msra.mxu0 %v1234
    %2363 = vmatprep.subr.mxu0 %v1243
    %2364 = vmatpush1.msra.mxu0 %v1242
    %2365 = vmatprep.subr.mxu0 %v1251
    %2366 = vmatpush1.msra.mxu0 %v1250
    %2367 = vmatprep.subr.mxu0 %v1259
    %2368 = vmatpush1.msra.mxu0 %v1258
    %2369 = vmatprep.subr.mxu0 %v1267
    %2370 = vmatpush1.msra.mxu0 %v1266
    %2371 = vmatprep.subr.mxu0 %v1275
    %2372 = vmatpush1.msra.mxu0 %v1274
    %2373 = vmatprep.subr.mxu0 %v1283
    %2374 = vmatpush1.msra.mxu0 %v1282
    %2375 = vmatprep.subr.mxu0 %v1291
    %2376 = vmatpush1.msra.mxu0 %v1290
    %2377 = vmatprep.subr.mxu0 %v1299
    %2378 = vmatpush1.msra.mxu0 %v1298
    %2379 = vmatprep.subr.mxu0 %v1307
    %2380 = vmatpush1.msra.mxu0 %v1306
    %2381 = vmatprep.subr.mxu0 %v1315
    %2382 = vmatpush1.msra.mxu0 %v1314
    %2383 = vmatprep.subr.mxu0 %v1323
    %2384 = vmatpush1.msra.mxu0 %v1322
    %2385 = vmatprep.subr.mxu0 %v1331
    %2386 = vmatpush1.msra.mxu0 %v1330
    %2387 = vmatprep.mubr.f32.mxu0 %v2266
    %2388 = vmatmul.mubr.f32.gmra.mrb[0].mxu0 %v2265
    %v2389 = vpop.f32.mrb[0].mxu0
    %v2390 = vadd.f32 0.0, %v2389
    %v2391 = vpop.f32.mrb[0].mxu0
    %v2392 = vadd.f32 0.0, %v2391
    %2393 = vdwg.mxu0
    %2394 = vmatprep.subr.mxu0 %v1085
    %2395 = vmatpush1.msra.mxu0 %v1084
    %2396 = vmatprep.subr.mxu0 %v1093
    %2397 = vmatpush1.msra.mxu0 %v1092
    %2398 = vmatprep.subr.mxu0 %v1101
    %2399 = vmatpush1.msra.mxu0 %v1100
    %2400 = vmatprep.subr.mxu0 %v1109
    %2401 = vmatpush1.msra.mxu0 %v1108
    %2402 = vmatprep.subr.mxu0 %v1117
    %2403 = vmatpush1.msra.mxu0 %v1116
    %2404 = vmatprep.subr.mxu0 %v1125
    %2405 = vmatpush1.msra.mxu0 %v1124
    %2406 = vmatprep.subr.mxu0 %v1133
    %2407 = vmatpush1.msra.mxu0 %v1132
    %2408 = vmatprep.subr.mxu0 %v1141
    %2409 = vmatpush1.msra.mxu0 %v1140
    %2410 = vmatprep.subr.mxu0 %v1149
    %2411 = vmatpush1.msra.mxu0 %v1148
    %2412 = vmatprep.subr.mxu0 %v1157
    %2413 = vmatpush1.msra.mxu0 %v1156
    %2414 = vmatprep.subr.mxu0 %v1165
    %2415 = vmatpush1.msra.mxu0 %v1164
    %2416 = vmatprep.subr.mxu0 %v1173
    %2417 = vmatpush1.msra.mxu0 %v1172
    %2418 = vmatprep.subr.mxu0 %v1181
    %2419 = vmatpush1.msra.mxu0 %v1180
    %2420 = vmatprep.subr.mxu0 %v1189
    %2421 = vmatpush1.msra.mxu0 %v1188
    %2422 = vmatprep.subr.mxu0 %v1197
    %2423 = vmatpush1.msra.mxu0 %v1196
    %2424 = vmatprep.subr.mxu0 %v1205
    %2425 = vmatpush1.msra.mxu0 %v1204
    %2426 = vmatprep.subr.mxu0 %v1213
    %2427 = vmatpush1.msra.mxu0 %v1212
    %2428 = vmatprep.subr.mxu0 %v1221
    %2429 = vmatpush1.msra.mxu0 %v1220
    %2430 = vmatprep.subr.mxu0 %v1229
    %2431 = vmatpush1.msra.mxu0 %v1228
    %2432 = vmatprep.subr.mxu0 %v1237
    %2433 = vmatpush1.msra.mxu0 %v1236
    %2434 = vmatprep.subr.mxu0 %v1245
    %2435 = vmatpush1.msra.mxu0 %v1244
    %2436 = vmatprep.subr.mxu0 %v1253
    %2437 = vmatpush1.msra.mxu0 %v1252
    %2438 = vmatprep.subr.mxu0 %v1261
    %2439 = vmatpush1.msra.mxu0 %v1260
    %2440 = vmatprep.subr.mxu0 %v1269
    %2441 = vmatpush1.msra.mxu0 %v1268
    %2442 = vmatprep.subr.mxu0 %v1277
    %2443 = vmatpush1.msra.mxu0 %v1276
    %2444 = vmatprep.subr.mxu0 %v1285
    %2445 = vmatpush1.msra.mxu0 %v1284
    %2446 = vmatprep.subr.mxu0 %v1293
    %2447 = vmatpush1.msra.mxu0 %v1292
    %2448 = vmatprep.subr.mxu0 %v1301
    %2449 = vmatpush1.msra.mxu0 %v1300
    %2450 = vmatprep.subr.mxu0 %v1309
    %2451 = vmatpush1.msra.mxu0 %v1308
    %2452 = vmatprep.subr.mxu0 %v1317
    %2453 = vmatpush1.msra.mxu0 %v1316
    %2454 = vmatprep.subr.mxu0 %v1325
    %2455 = vmatpush1.msra.mxu0 %v1324
    %2456 = vmatprep.subr.mxu0 %v1333
    %2457 = vmatpush1.msra.mxu0 %v1332
    %2458 = vmatprep.mubr.f32.mxu0 %v2266
    %2459 = vmatmul.mubr.f32.gmra.mrb[0].mxu0 %v2265
    %v2460 = vpop.f32.mrb[0].mxu0
    %v2461 = vadd.f32 0.0, %v2460
    %v2462 = vpop.f32.mrb[0].mxu0
    %v2463 = vadd.f32 0.0, %v2462
    %2464 = vdwg.mxu0
    %2465 = vmatprep.subr.mxu0 %v1087
    %2466 = vmatpush1.msra.mxu0 %v1086
    %2467 = vmatprep.subr.mxu0 %v1095
    %2468 = vmatpush1.msra.mxu0 %v1094
    %2469 = vmatprep.subr.mxu0 %v1103
    %2470 = vmatpush1.msra.mxu0 %v1102
    %2471 = vmatprep.subr.mxu0 %v1111
    %2472 = vmatpush1.msra.mxu0 %v1110
    %2473 = vmatprep.subr.mxu0 %v1119
    %2474 = vmatpush1.msra.mxu0 %v1118
    %2475 = vmatprep.subr.mxu0 %v1127
    %2476 = vmatpush1.msra.mxu0 %v1126
    %2477 = vmatprep.subr.mxu0 %v1135
    %2478 = vmatpush1.msra.mxu0 %v1134
    %2479 = vmatprep.subr.mxu0 %v1143
    %2480 = vmatpush1.msra.mxu0 %v1142
    %2481 = vmatprep.subr.mxu0 %v1151
    %2482 = vmatpush1.msra.mxu0 %v1150
    %2483 = vmatprep.subr.mxu0 %v1159
    %2484 = vmatpush1.msra.mxu0 %v1158
    %2485 = vmatprep.subr.mxu0 %v1167
    %2486 = vmatpush1.msra.mxu0 %v1166
    %2487 = vmatprep.subr.mxu0 %v1175
    %2488 = vmatpush1.msra.mxu0 %v1174
    %2489 = vmatprep.subr.mxu0 %v1183
    %2490 = vmatpush1.msra.mxu0 %v1182
    %2491 = vmatprep.subr.mxu0 %v1191
    %2492 = vmatpush1.msra.mxu0 %v1190
    %2493 = vmatprep.subr.mxu0 %v1199
    %2494 = vmatpush1.msra.mxu0 %v1198
    %2495 = vmatprep.subr.mxu0 %v1207
    %2496 = vmatpush1.msra.mxu0 %v1206
    %2497 = vmatprep.subr.mxu0 %v1215
    %2498 = vmatpush1.msra.mxu0 %v1214
    %2499 = vmatprep.subr.mxu0 %v1223
    %2500 = vmatpush1.msra.mxu0 %v1222
    %2501 = vmatprep.subr.mxu0 %v1231
    %2502 = vmatpush1.msra.mxu0 %v1230
    %2503 = vmatprep.subr.mxu0 %v1239
    %2504 = vmatpush1.msra.mxu0 %v1238
    %2505 = vmatprep.subr.mxu0 %v1247
    %2506 = vmatpush1.msra.mxu0 %v1246
    %2507 = vmatprep.subr.mxu0 %v1255
    %2508 = vmatpush1.msra.mxu0 %v1254
    %2509 = vmatprep.subr.mxu0 %v1263
    %2510 = vmatpush1.msra.mxu0 %v1262
    %2511 = vmatprep.subr.mxu0 %v1271
    %2512 = vmatpush1.msra.mxu0 %v1270
    %2513 = vmatprep.subr.mxu0 %v1279
    %2514 = vmatpush1.msra.mxu0 %v1278
    %2515 = vmatprep.subr.mxu0 %v1287
    %2516 = vmatpush1.msra.mxu0 %v1286
    %2517 = vmatprep.subr.mxu0 %v1295
    %2518 = vmatpush1.msra.mxu0 %v1294
    %2519 = vmatprep.subr.mxu0 %v1303
    %2520 = vmatpush1.msra.mxu0 %v1302
    %2521 = vmatprep.subr.mxu0 %v1311
    %2522 = vmatpush1.msra.mxu0 %v1310
    %2523 = vmatprep.subr.mxu0 %v1319
    %2524 = vmatpush1.msra.mxu0 %v1318
    %2525 = vmatprep.subr.mxu0 %v1327
    %2526 = vmatpush1.msra.mxu0 %v1326
    %2527 = vmatprep.subr.mxu0 %v1335
    %2528 = vmatpush1.msra.mxu0 %v1334
    %2529 = vmatprep.mubr.f32.mxu0 %v2266
    %2530 = vmatmul.mubr.f32.gmra.mrb[0].mxu0 %v2265
    %v2531 = vpop.f32.mrb[0].mxu0
    %v2532 = vadd.f32 0.0, %v2531
    %v2533 = vpop.f32.mrb[0].mxu0
    %v2534 = vadd.f32 0.0, %v2533
    %2535 = vdwg.mxu0
    %2536 = vmatprep.subr.mxu0 %v1089
    %2537 = vmatpush1.msra.mxu0 %v1088
    %2538 = vmatprep.subr.mxu0 %v1097
    %2539 = vmatpush1.msra.mxu0 %v1096
    %2540 = vmatprep.subr.mxu0 %v1105
    %2541 = vmatpush1.msra.mxu0 %v1104
    %2542 = vmatprep.subr.mxu0 %v1113
    %2543 = vmatpush1.msra.mxu0 %v1112
    %2544 = vmatprep.subr.mxu0 %v1121
    %2545 = vmatpush1.msra.mxu0 %v1120
    %2546 = vmatprep.subr.mxu0 %v1129
    %2547 = vmatpush1.msra.mxu0 %v1128
    %2548 = vmatprep.subr.mxu0 %v1137
    %2549 = vmatpush1.msra.mxu0 %v1136
    %2550 = vmatprep.subr.mxu0 %v1145
    %2551 = vmatpush1.msra.mxu0 %v1144
    %2552 = vmatprep.subr.mxu0 %v1153
    %2553 = vmatpush1.msra.mxu0 %v1152
    %2554 = vmatprep.subr.mxu0 %v1161
    %2555 = vmatpush1.msra.mxu0 %v1160
    %2556 = vmatprep.subr.mxu0 %v1169
    %2557 = vmatpush1.msra.mxu0 %v1168
    %2558 = vmatprep.subr.mxu0 %v1177
    %2559 = vmatpush1.msra.mxu0 %v1176
    %2560 = vmatprep.subr.mxu0 %v1185
    %2561 = vmatpush1.msra.mxu0 %v1184
    %2562 = vmatprep.subr.mxu0 %v1193
    %2563 = vmatpush1.msra.mxu0 %v1192
    %2564 = vmatprep.subr.mxu0 %v1201
    %2565 = vmatpush1.msra.mxu0 %v1200
    %2566 = vmatprep.subr.mxu0 %v1209
    %2567 = vmatpush1.msra.mxu0 %v1208
    %2568 = vmatprep.subr.mxu0 %v1217
    %2569 = vmatpush1.msra.mxu0 %v1216
    %2570 = vmatprep.subr.mxu0 %v1225
    %2571 = vmatpush1.msra.mxu0 %v1224
    %2572 = vmatprep.subr.mxu0 %v1233
    %2573 = vmatpush1.msra.mxu0 %v1232
    %2574 = vmatprep.subr.mxu0 %v1241
    %2575 = vmatpush1.msra.mxu0 %v1240
    %2576 = vmatprep.subr.mxu0 %v1249
    %2577 = vmatpush1.msra.mxu0 %v1248
    %2578 = vmatprep.subr.mxu0 %v1257
    %2579 = vmatpush1.msra.mxu0 %v1256
    %2580 = vmatprep.subr.mxu0 %v1265
    %2581 = vmatpush1.msra.mxu0 %v1264
    %2582 = vmatprep.subr.mxu0 %v1273
    %2583 = vmatpush1.msra.mxu0 %v1272
    %2584 = vmatprep.subr.mxu0 %v1281
    %2585 = vmatpush1.msra.mxu0 %v1280
    %2586 = vmatprep.subr.mxu0 %v1289
    %2587 = vmatpush1.msra.mxu0 %v1288
    %2588 = vmatprep.subr.mxu0 %v1297
    %2589 = vmatpush1.msra.mxu0 %v1296
    %2590 = vmatprep.subr.mxu0 %v1305
    %2591 = vmatpush1.msra.mxu0 %v1304
    %2592 = vmatprep.subr.mxu0 %v1313
    %2593 = vmatpush1.msra.mxu0 %v1312
    %2594 = vmatprep.subr.mxu0 %v1321
    %2595 = vmatpush1.msra.mxu0 %v1320
    %2596 = vmatprep.subr.mxu0 %v1329
    %2597 = vmatpush1.msra.mxu0 %v1328
    %2598 = vmatprep.subr.mxu0 %v1337
    %2599 = vmatpush1.msra.mxu0 %v1336
    %2600 = vmatprep.mubr.f32.mxu0 %v2266
    %2601 = vmatmul.mubr.f32.gmra.mrb[0].mxu0 %v2265
    %v2602 = vpop.f32.mrb[0].mxu0
    %v2603 = vadd.f32 0.0, %v2602
    %v2604 = vpop.f32.mrb[0].mxu0
    %v2605 = vadd.f32 0.0, %v2604
    %2606 = vdwg.mxu0
    %v2615 = vrot.slane %v2390, 6
    %v2616 = vrot.slane %v2392, 6
    %v2617 = vrot.slane %v2461, 6
    %v2618 = vrot.slane %v2463, 6
    %v2619 = vrot.slane %v2532, 6
    %v2620 = vrot.slane %v2534, 6
    %v2621 = vrot.slane %v2603, 6
    %v2622 = vrot.slane %v2605, 6
    %v2631 = vadd.f32 %v2315, %v2615
    %v2632 = vadd.f32 %v2316, %v2616
    %v2633 = vadd.f32 %v2317, %v2617
    %v2634 = vadd.f32 %v2318, %v2618
    %v2635 = vadd.f32 %v2319, %v2619
    %v2636 = vadd.f32 %v2320, %v2620
    %v2637 = vadd.f32 %v2321, %v2621
    %v2638 = vadd.f32 %v2322, %v2622
    %v2639 = vld [vmem:[#allocation3 + $0x40] sm:$0x30]
    %v2640 = vld [vmem:[#allocation3 + $0x48] sm:$0x30]
    %v2641 = vld [vmem:[#allocation3 + $0x50] sm:$0x30]
    %v2642 = vld [vmem:[#allocation3 + $0x58] sm:$0x30]
    %v2643 = vld [vmem:[#allocation3 + $0x60] sm:$0x30]
    %v2644 = vld [vmem:[#allocation3 + $0x68] sm:$0x30]
    %v2645 = vld [vmem:[#allocation3 + $0x70] sm:$0x30]
    %v2646 = vld [vmem:[#allocation3 + $0x78] sm:$0x30]
    %v2649 = vrot.slane %v2313, 6
    %v2650 = vrot.slane %v2314, 6
    %2653 = vmatprep.subr.mxu0 %v1340
    %2654 = vmatpush1.msra.mxu0 %v1339
    %2655 = vmatprep.subr.mxu0 %v1348
    %2656 = vmatpush1.msra.mxu0 %v1347
    %2657 = vmatprep.subr.mxu0 %v1356
    %2658 = vmatpush1.msra.mxu0 %v1355
    %2659 = vmatprep.subr.mxu0 %v1364
    %2660 = vmatpush1.msra.mxu0 %v1363
    %2661 = vmatprep.subr.mxu0 %v1372
    %2662 = vmatpush1.msra.mxu0 %v1371
    %2663 = vmatprep.subr.mxu0 %v1380
    %2664 = vmatpush1.msra.mxu0 %v1379
    %2665 = vmatprep.subr.mxu0 %v1388
    %2666 = vmatpush1.msra.mxu0 %v1387
    %2667 = vmatprep.subr.mxu0 %v1396
    %2668 = vmatpush1.msra.mxu0 %v1395
    %2669 = vmatprep.subr.mxu0 %v1404
    %2670 = vmatpush1.msra.mxu0 %v1403
    %2671 = vmatprep.subr.mxu0 %v1412
    %2672 = vmatpush1.msra.mxu0 %v1411
    %2673 = vmatprep.subr.mxu0 %v1420
    %2674 = vmatpush1.msra.mxu0 %v1419
    %2675 = vmatprep.subr.mxu0 %v1428
    %2676 = vmatpush1.msra.mxu0 %v1427
    %2677 = vmatprep.subr.mxu0 %v1436
    %2678 = vmatpush1.msra.mxu0 %v1435
    %2679 = vmatprep.subr.mxu0 %v1444
    %2680 = vmatpush1.msra.mxu0 %v1443
    %2681 = vmatprep.subr.mxu0 %v1452
    %2682 = vmatpush1.msra.mxu0 %v1451
    %2683 = vmatprep.subr.mxu0 %v1460
    %2684 = vmatpush1.msra.mxu0 %v1459
    %2685 = vmatprep.subr.mxu0 %v1468
    %2686 = vmatpush1.msra.mxu0 %v1467
    %2687 = vmatprep.subr.mxu0 %v1476
    %2688 = vmatpush1.msra.mxu0 %v1475
    %2689 = vmatprep.subr.mxu0 %v1484
    %2690 = vmatpush1.msra.mxu0 %v1483
    %2691 = vmatprep.subr.mxu0 %v1492
    %2692 = vmatpush1.msra.mxu0 %v1491
    %2693 = vmatprep.subr.mxu0 %v1500
    %2694 = vmatpush1.msra.mxu0 %v1499
    %2695 = vmatprep.subr.mxu0 %v1508
    %2696 = vmatpush1.msra.mxu0 %v1507
    %2697 = vmatprep.subr.mxu0 %v1516
    %2698 = vmatpush1.msra.mxu0 %v1515
    %2699 = vmatprep.subr.mxu0 %v1524
    %2700 = vmatpush1.msra.mxu0 %v1523
    %2701 = vmatprep.subr.mxu0 %v1532
    %2702 = vmatpush1.msra.mxu0 %v1531
    %2703 = vmatprep.subr.mxu0 %v1540
    %2704 = vmatpush1.msra.mxu0 %v1539
    %2705 = vmatprep.subr.mxu0 %v1548
    %2706 = vmatpush1.msra.mxu0 %v1547
    %2707 = vmatprep.subr.mxu0 %v1556
    %2708 = vmatpush1.msra.mxu0 %v1555
    %2709 = vmatprep.subr.mxu0 %v1564
    %2710 = vmatpush1.msra.mxu0 %v1563
    %2711 = vmatprep.subr.mxu0 %v1572
    %2712 = vmatpush1.msra.mxu0 %v1571
    %2713 = vmatprep.subr.mxu0 %v1580
    %2714 = vmatpush1.msra.mxu0 %v1579
    %2715 = vmatprep.subr.mxu0 %v1588
    %2716 = vmatpush1.msra.mxu0 %v1587
    %2717 = vmatprep.mubr.f32.mxu0 %v2650
    %2718 = vmatmul.mubr.f32.gmra.mrb[0].mxu0 %v2649
    %v2719 = vpop.f32.mrb[0].mxu0
    %v2720 = vadd.f32 0.0, %v2719
    %v2721 = vpop.f32.mrb[0].mxu0
    %v2722 = vadd.f32 0.0, %v2721
    %2723 = vdwg.mxu0
    %2724 = vmatprep.subr.mxu0 %v1342
    %2725 = vmatpush1.msra.mxu0 %v1341
    %2726 = vmatprep.subr.mxu0 %v1350
    %2727 = vmatpush1.msra.mxu0 %v1349
    %2728 = vmatprep.subr.mxu0 %v1358
    %2729 = vmatpush1.msra.mxu0 %v1357
    %2730 = vmatprep.subr.mxu0 %v1366
    %2731 = vmatpush1.msra.mxu0 %v1365
    %2732 = vmatprep.subr.mxu0 %v1374
    %2733 = vmatpush1.msra.mxu0 %v1373
    %2734 = vmatprep.subr.mxu0 %v1382
    %2735 = vmatpush1.msra.mxu0 %v1381
    %2736 = vmatprep.subr.mxu0 %v1390
    %2737 = vmatpush1.msra.mxu0 %v1389
    %2738 = vmatprep.subr.mxu0 %v1398
    %2739 = vmatpush1.msra.mxu0 %v1397
    %2740 = vmatprep.subr.mxu0 %v1406
    %2741 = vmatpush1.msra.mxu0 %v1405
    %2742 = vmatprep.subr.mxu0 %v1414
    %2743 = vmatpush1.msra.mxu0 %v1413
    %2744 = vmatprep.subr.mxu0 %v1422
    %2745 = vmatpush1.msra.mxu0 %v1421
    %2746 = vmatprep.subr.mxu0 %v1430
    %2747 = vmatpush1.msra.mxu0 %v1429
    %2748 = vmatprep.subr.mxu0 %v1438
    %2749 = vmatpush1.msra.mxu0 %v1437
    %2750 = vmatprep.subr.mxu0 %v1446
    %2751 = vmatpush1.msra.mxu0 %v1445
    %2752 = vmatprep.subr.mxu0 %v1454
    %2753 = vmatpush1.msra.mxu0 %v1453
    %2754 = vmatprep.subr.mxu0 %v1462
    %2755 = vmatpush1.msra.mxu0 %v1461
    %2756 = vmatprep.subr.mxu0 %v1470
    %2757 = vmatpush1.msra.mxu0 %v1469
    %2758 = vmatprep.subr.mxu0 %v1478
    %2759 = vmatpush1.msra.mxu0 %v1477
    %2760 = vmatprep.subr.mxu0 %v1486
    %2761 = vmatpush1.msra.mxu0 %v1485
    %2762 = vmatprep.subr.mxu0 %v1494
    %2763 = vmatpush1.msra.mxu0 %v1493
    %2764 = vmatprep.subr.mxu0 %v1502
    %2765 = vmatpush1.msra.mxu0 %v1501
    %2766 = vmatprep.subr.mxu0 %v1510
    %2767 = vmatpush1.msra.mxu0 %v1509
    %2768 = vmatprep.subr.mxu0 %v1518
    %2769 = vmatpush1.msra.mxu0 %v1517
    %2770 = vmatprep.subr.mxu0 %v1526
    %2771 = vmatpush1.msra.mxu0 %v1525
    %2772 = vmatprep.subr.mxu0 %v1534
    %2773 = vmatpush1.msra.mxu0 %v1533
    %2774 = vmatprep.subr.mxu0 %v1542
    %2775 = vmatpush1.msra.mxu0 %v1541
    %2776 = vmatprep.subr.mxu0 %v1550
    %2777 = vmatpush1.msra.mxu0 %v1549
    %2778 = vmatprep.subr.mxu0 %v1558
    %2779 = vmatpush1.msra.mxu0 %v1557
    %2780 = vmatprep.subr.mxu0 %v1566
    %2781 = vmatpush1.msra.mxu0 %v1565
    %2782 = vmatprep.subr.mxu0 %v1574
    %2783 = vmatpush1.msra.mxu0 %v1573
    %2784 = vmatprep.subr.mxu0 %v1582
    %2785 = vmatpush1.msra.mxu0 %v1581
    %2786 = vmatprep.subr.mxu0 %v1590
    %2787 = vmatpush1.msra.mxu0 %v1589
    %2788 = vmatprep.mubr.f32.mxu0 %v2650
    %2789 = vmatmul.mubr.f32.gmra.mrb[0].mxu0 %v2649
    %v2790 = vpop.f32.mrb[0].mxu0
    %v2791 = vadd.f32 0.0, %v2790
    %v2792 = vpop.f32.mrb[0].mxu0
    %v2793 = vadd.f32 0.0, %v2792
    %2794 = vdwg.mxu0
    %2795 = vmatprep.subr.mxu0 %v1344
    %2796 = vmatpush1.msra.mxu0 %v1343
    %2797 = vmatprep.subr.mxu0 %v1352
    %2798 = vmatpush1.msra.mxu0 %v1351
    %2799 = vmatprep.subr.mxu0 %v1360
    %2800 = vmatpush1.msra.mxu0 %v1359
    %2801 = vmatprep.subr.mxu0 %v1368
    %2802 = vmatpush1.msra.mxu0 %v1367
    %2803 = vmatprep.subr.mxu0 %v1376
    %2804 = vmatpush1.msra.mxu0 %v1375
    %2805 = vmatprep.subr.mxu0 %v1384
    %2806 = vmatpush1.msra.mxu0 %v1383
    %2807 = vmatprep.subr.mxu0 %v1392
    %2808 = vmatpush1.msra.mxu0 %v1391
    %2809 = vmatprep.subr.mxu0 %v1400
    %2810 = vmatpush1.msra.mxu0 %v1399
    %2811 = vmatprep.subr.mxu0 %v1408
    %2812 = vmatpush1.msra.mxu0 %v1407
    %2813 = vmatprep.subr.mxu0 %v1416
    %2814 = vmatpush1.msra.mxu0 %v1415
    %2815 = vmatprep.subr.mxu0 %v1424
    %2816 = vmatpush1.msra.mxu0 %v1423
    %2817 = vmatprep.subr.mxu0 %v1432
    %2818 = vmatpush1.msra.mxu0 %v1431
    %2819 = vmatprep.subr.mxu0 %v1440
    %2820 = vmatpush1.msra.mxu0 %v1439
    %2821 = vmatprep.subr.mxu0 %v1448
    %2822 = vmatpush1.msra.mxu0 %v1447
    %2823 = vmatprep.subr.mxu0 %v1456
    %2824 = vmatpush1.msra.mxu0 %v1455
    %2825 = vmatprep.subr.mxu0 %v1464
    %2826 = vmatpush1.msra.mxu0 %v1463
    %2827 = vmatprep.subr.mxu0 %v1472
    %2828 = vmatpush1.msra.mxu0 %v1471
    %2829 = vmatprep.subr.mxu0 %v1480
    %2830 = vmatpush1.msra.mxu0 %v1479
    %2831 = vmatprep.subr.mxu0 %v1488
    %2832 = vmatpush1.msra.mxu0 %v1487
    %2833 = vmatprep.subr.mxu0 %v1496
    %2834 = vmatpush1.msra.mxu0 %v1495
    %2835 = vmatprep.subr.mxu0 %v1504
    %2836 = vmatpush1.msra.mxu0 %v1503
    %2837 = vmatprep.subr.mxu0 %v1512
    %2838 = vmatpush1.msra.mxu0 %v1511
    %2839 = vmatprep.subr.mxu0 %v1520
    %2840 = vmatpush1.msra.mxu0 %v1519
    %2841 = vmatprep.subr.mxu0 %v1528
    %2842 = vmatpush1.msra.mxu0 %v1527
    %2843 = vmatprep.subr.mxu0 %v1536
    %2844 = vmatpush1.msra.mxu0 %v1535
    %2845 = vmatprep.subr.mxu0 %v1544
    %2846 = vmatpush1.msra.mxu0 %v1543
    %2847 = vmatprep.subr.mxu0 %v1552
    %2848 = vmatpush1.msra.mxu0 %v1551
    %2849 = vmatprep.subr.mxu0 %v1560
    %2850 = vmatpush1.msra.mxu0 %v1559
    %2851 = vmatprep.subr.mxu0 %v1568
    %2852 = vmatpush1.msra.mxu0 %v1567
    %2853 = vmatprep.subr.mxu0 %v1576
    %2854 = vmatpush1.msra.mxu0 %v1575
    %2855 = vmatprep.subr.mxu0 %v1584
    %2856 = vmatpush1.msra.mxu0 %v1583
    %2857 = vmatprep.subr.mxu0 %v1592
    %2858 = vmatpush1.msra.mxu0 %v1591
    %2859 = vmatprep.mubr.f32.mxu0 %v2650
    %2860 = vmatmul.mubr.f32.gmra.mrb[0].mxu0 %v2649
    %v2861 = vpop.f32.mrb[0].mxu0
    %v2862 = vadd.f32 0.0, %v2861
    %v2863 = vpop.f32.mrb[0].mxu0
    %v2864 = vadd.f32 0.0, %v2863
    %2865 = vdwg.mxu0
    %2866 = vmatprep.subr.mxu0 %v1346
    %2867 = vmatpush1.msra.mxu0 %v1345
    %2868 = vmatprep.subr.mxu0 %v1354
    %2869 = vmatpush1.msra.mxu0 %v1353
    %2870 = vmatprep.subr.mxu0 %v1362
    %2871 = vmatpush1.msra.mxu0 %v1361
    %2872 = vmatprep.subr.mxu0 %v1370
    %2873 = vmatpush1.msra.mxu0 %v1369
    %2874 = vmatprep.subr.mxu0 %v1378
    %2875 = vmatpush1.msra.mxu0 %v1377
    %2876 = vmatprep.subr.mxu0 %v1386
    %2877 = vmatpush1.msra.mxu0 %v1385
    %2878 = vmatprep.subr.mxu0 %v1394
    %2879 = vmatpush1.msra.mxu0 %v1393
    %2880 = vmatprep.subr.mxu0 %v1402
    %2881 = vmatpush1.msra.mxu0 %v1401
    %2882 = vmatprep.subr.mxu0 %v1410
    %2883 = vmatpush1.msra.mxu0 %v1409
    %2884 = vmatprep.subr.mxu0 %v1418
    %2885 = vmatpush1.msra.mxu0 %v1417
    %2886 = vmatprep.subr.mxu0 %v1426
    %2887 = vmatpush1.msra.mxu0 %v1425
    %2888 = vmatprep.subr.mxu0 %v1434
    %2889 = vmatpush1.msra.mxu0 %v1433
    %2890 = vmatprep.subr.mxu0 %v1442
    %2891 = vmatpush1.msra.mxu0 %v1441
    %2892 = vmatprep.subr.mxu0 %v1450
    %2893 = vmatpush1.msra.mxu0 %v1449
    %2894 = vmatprep.subr.mxu0 %v1458
    %2895 = vmatpush1.msra.mxu0 %v1457
    %2896 = vmatprep.subr.mxu0 %v1466
    %2897 = vmatpush1.msra.mxu0 %v1465
    %2898 = vmatprep.subr.mxu0 %v1474
    %2899 = vmatpush1.msra.mxu0 %v1473
    %2900 = vmatprep.subr.mxu0 %v1482
    %2901 = vmatpush1.msra.mxu0 %v1481
    %2902 = vmatprep.subr.mxu0 %v1490
    %2903 = vmatpush1.msra.mxu0 %v1489
    %2904 = vmatprep.subr.mxu0 %v1498
    %2905 = vmatpush1.msra.mxu0 %v1497
    %2906 = vmatprep.subr.mxu0 %v1506
    %2907 = vmatpush1.msra.mxu0 %v1505
    %2908 = vmatprep.subr.mxu0 %v1514
    %2909 = vmatpush1.msra.mxu0 %v1513
    %2910 = vmatprep.subr.mxu0 %v1522
    %2911 = vmatpush1.msra.mxu0 %v1521
    %2912 = vmatprep.subr.mxu0 %v1530
    %2913 = vmatpush1.msra.mxu0 %v1529
    %2914 = vmatprep.subr.mxu0 %v1538
    %2915 = vmatpush1.msra.mxu0 %v1537
    %2916 = vmatprep.subr.mxu0 %v1546
    %2917 = vmatpush1.msra.mxu0 %v1545
    %2918 = vmatprep.subr.mxu0 %v1554
    %2919 = vmatpush1.msra.mxu0 %v1553
    %2920 = vmatprep.subr.mxu0 %v1562
    %2921 = vmatpush1.msra.mxu0 %v1561
    %2922 = vmatprep.subr.mxu0 %v1570
    %2923 = vmatpush1.msra.mxu0 %v1569
    %2924 = vmatprep.subr.mxu0 %v1578
    %2925 = vmatpush1.msra.mxu0 %v1577
    %2926 = vmatprep.subr.mxu0 %v1586
    %2927 = vmatpush1.msra.mxu0 %v1585
    %2928 = vmatprep.subr.mxu0 %v1594
    %2929 = vmatpush1.msra.mxu0 %v1593
    %2930 = vmatprep.mubr.f32.mxu0 %v2650
    %2931 = vmatmul.mubr.f32.gmra.mrb[0].mxu0 %v2649
    %v2932 = vpop.f32.mrb[0].mxu0
    %v2933 = vadd.f32 0.0, %v2932
    %v2934 = vpop.f32.mrb[0].mxu0
    %v2935 = vadd.f32 0.0, %v2934
    %2936 = vdwg.mxu0
    %v2945 = vrot.slane %v2720, 4
    %v2946 = vrot.slane %v2722, 4
    %v2947 = vrot.slane %v2791, 4
    %v2948 = vrot.slane %v2793, 4
    %v2949 = vrot.slane %v2862, 4
    %v2950 = vrot.slane %v2864, 4
    %v2951 = vrot.slane %v2933, 4
    %v2952 = vrot.slane %v2935, 4
    %v2961 = vadd.f32 %v2639, %v2945
    %v2962 = vadd.f32 %v2640, %v2946
    %v2963 = vadd.f32 %v2641, %v2947
    %v2964 = vadd.f32 %v2642, %v2948
    %v2965 = vadd.f32 %v2643, %v2949
    %v2966 = vadd.f32 %v2644, %v2950
    %v2967 = vadd.f32 %v2645, %v2951
    %v2968 = vadd.f32 %v2646, %v2952
    %v2969 = vxor.u32 %v2631, 2147483648
    %v2970 = vxor.u32 %v2632, 2147483648
    %v2971 = vmul.f32 %v2969, 1.442695
    %v2972 = vpow.pop %v2971
    %v2973 = vmul.f32 %v2970, 1.442695
    %v2974 = vpow.pop %v2973
    %v2975 = vadd.f32 %v2972, 1.0
    %v2976 = vadd.f32 %v2974, 1.0
    %v2977 = vrcp.pop %v2975
    %v2978 = vmul.f32 1.0, %v2977
    %v2979 = vrcp.pop %v2976
    %v2980 = vmul.f32 1.0, %v2979
    %v2981 = vxor.u32 %v2633, 2147483648
    %v2982 = vxor.u32 %v2634, 2147483648
    %v2983 = vmul.f32 %v2981, 1.442695
    %v2984 = vpow.pop %v2983
    %v2985 = vmul.f32 %v2982, 1.442695
    %v2986 = vpow.pop %v2985
    %v2987 = vadd.f32 %v2984, 1.0
    %v2988 = vadd.f32 %v2986, 1.0
    %v2989 = vrcp.pop %v2987
    %v2990 = vmul.f32 1.0, %v2989
    %v2991 = vrcp.pop %v2988
    %v2992 = vmul.f32 1.0, %v2991
    %v2993 = vtanh.pop %v2635
    %v2994 = vtanh.pop %v2636
    %v2995 = vxor.u32 %v2637, 2147483648
    %v2996 = vxor.u32 %v2638, 2147483648
    %v2997 = vmul.f32 %v2995, 1.442695
    %v2998 = vpow.pop %v2997
    %v2999 = vmul.f32 %v2996, 1.442695
    %v3000 = vpow.pop %v2999
    %v3001 = vadd.f32 %v2998, 1.0
    %v3002 = vadd.f32 %v3000, 1.0
    %v3003 = vrcp.pop %v3001
    %v3004 = vmul.f32 1.0, %v3003
    %v3005 = vrcp.pop %v3002
    %v3006 = vmul.f32 1.0, %v3005
    %v3009 = vrot.slane %v2261, 6
    %v3010 = vrot.slane %v2262, 6
    %v3013 = vmul.f32 %v2990, %v3009
    %v3014 = vmul.f32 %v2992, %v3010
    %v3015 = vmul.f32 %v2978, %v2993
    %v3016 = vmul.f32 %v2980, %v2994
    %v3017 = vadd.f32 %v3013, %v3015
    %v3018 = vadd.f32 %v3014, %v3016
    %v3019 = vtanh.pop %v3017
    %v3020 = vtanh.pop %v3018
    %v3021 = vmul.f32 %v3004, %v3019
    %v3022 = vmul.f32 %v3006, %v3020
    %v3023 = vxor.u32 %v2961, 2147483648
    %v3024 = vxor.u32 %v2962, 2147483648
    %v3025 = vmul.f32 %v3023, 1.442695
    %v3026 = vpow.pop %v3025
    %v3027 = vmul.f32 %v3024, 1.442695
    %v3028 = vpow.pop %v3027
    %v3029 = vadd.f32 %v3026, 1.0
    %v3030 = vadd.f32 %v3028, 1.0
    %v3031 = vrcp.pop %v3029
    %v3032 = vmul.f32 1.0, %v3031
    %v3033 = vrcp.pop %v3030
    %v3034 = vmul.f32 1.0, %v3033
    %v3035 = vxor.u32 %v2963, 2147483648
    %v3036 = vxor.u32 %v2964, 2147483648
    %v3037 = vmul.f32 %v3035, 1.442695
    %v3038 = vpow.pop %v3037
    %v3039 = vmul.f32 %v3036, 1.442695
    %v3040 = vpow.pop %v3039
    %v3041 = vadd.f32 %v3038, 1.0
    %v3042 = vadd.f32 %v3040, 1.0
    %v3043 = vrcp.pop %v3041
    %v3044 = vmul.f32 1.0, %v3043
    %v3045 = vrcp.pop %v3042
    %v3046 = vmul.f32 1.0, %v3045
    %v3047 = vtanh.pop %v2965
    %v3048 = vtanh.pop %v2966
    %v3049 = vxor.u32 %v2967, 2147483648
    %v3050 = vxor.u32 %v2968, 2147483648
    %v3051 = vmul.f32 %v3049, 1.442695
    %v3052 = vpow.pop %v3051
    %v3053 = vmul.f32 %v3050, 1.442695
    %v3054 = vpow.pop %v3053
    %v3055 = vadd.f32 %v3052, 1.0
    %v3056 = vadd.f32 %v3054, 1.0
    %v3057 = vrcp.pop %v3055
    %v3058 = vmul.f32 1.0, %v3057
    %v3059 = vrcp.pop %v3056
    %v3060 = vmul.f32 1.0, %v3059
    %v3063 = vrot.slane %v2309, 2
    %v3064 = vrot.slane %v2310, 2
    %v3067 = vmul.f32 %v3044, %v3063
    %v3068 = vmul.f32 %v3046, %v3064
    %v3069 = vmul.f32 %v3032, %v3047
    %v3070 = vmul.f32 %v3034, %v3048
    %v3071 = vadd.f32 %v3067, %v3069
    %v3072 = vadd.f32 %v3068, %v3070
    %v3073 = vtanh.pop %v3071
    %v3074 = vtanh.pop %v3072
    %v3075 = vmul.f32 %v3058, %v3073
    %v3076 = vmul.f32 %v3060, %v3074
    %v3077 = vld [vmem:[#allocation2] sm:$0x30]
    %v3078 = vld [vmem:[#allocation2 + $0x8] sm:$0x30]
    %v3079 = vld [vmem:[#allocation2 + $0x10] sm:$0x30]
    %v3080 = vld [vmem:[#allocation2 + $0x18] sm:$0x30]
    %v3081 = vld [vmem:[#allocation2 + $0x20] sm:$0x30]
    %v3082 = vld [vmem:[#allocation2 + $0x28] sm:$0x30]
    %v3083 = vld [vmem:[#allocation2 + $0x30] sm:$0x30]
    %v3084 = vld [vmem:[#allocation2 + $0x38] sm:$0x30]
    %v3087 = vrot.slane %v3021, 2
    %v3088 = vrot.slane %v3022, 2
    %3091 = vmatprep.subr.mxu0 %v1083
    %3092 = vmatpush1.msra.mxu0 %v1082
    %3093 = vmatprep.subr.mxu0 %v1091
    %3094 = vmatpush1.msra.mxu0 %v1090
    %3095 = vmatprep.subr.mxu0 %v1099
    %3096 = vmatpush1.msra.mxu0 %v1098
    %3097 = vmatprep.subr.mxu0 %v1107
    %3098 = vmatpush1.msra.mxu0 %v1106
    %3099 = vmatprep.subr.mxu0 %v1115
    %3100 = vmatpush1.msra.mxu0 %v1114
    %3101 = vmatprep.subr.mxu0 %v1123
    %3102 = vmatpush1.msra.mxu0 %v1122
    %3103 = vmatprep.subr.mxu0 %v1131
    %3104 = vmatpush1.msra.mxu0 %v1130
    %3105 = vmatprep.subr.mxu0 %v1139
    %3106 = vmatpush1.msra.mxu0 %v1138
    %3107 = vmatprep.subr.mxu0 %v1147
    %3108 = vmatpush1.msra.mxu0 %v1146
    %3109 = vmatprep.subr.mxu0 %v1155
    %3110 = vmatpush1.msra.mxu0 %v1154
    %3111 = vmatprep.subr.mxu0 %v1163
    %3112 = vmatpush1.msra.mxu0 %v1162
    %3113 = vmatprep.subr.mxu0 %v1171
    %3114 = vmatpush1.msra.mxu0 %v1170
    %3115 = vmatprep.subr.mxu0 %v1179
    %3116 = vmatpush1.msra.mxu0 %v1178
    %3117 = vmatprep.subr.mxu0 %v1187
    %3118 = vmatpush1.msra.mxu0 %v1186
    %3119 = vmatprep.subr.mxu0 %v1195
    %3120 = vmatpush1.msra.mxu0 %v1194
    %3121 = vmatprep.subr.mxu0 %v1203
    %3122 = vmatpush1.msra.mxu0 %v1202
    %3123 = vmatprep.subr.mxu0 %v1211
    %3124 = vmatpush1.msra.mxu0 %v1210
    %3125 = vmatprep.subr.mxu0 %v1219
    %3126 = vmatpush1.msra.mxu0 %v1218
    %3127 = vmatprep.subr.mxu0 %v1227
    %3128 = vmatpush1.msra.mxu0 %v1226
    %3129 = vmatprep.subr.mxu0 %v1235
    %3130 = vmatpush1.msra.mxu0 %v1234
    %3131 = vmatprep.subr.mxu0 %v1243
    %3132 = vmatpush1.msra.mxu0 %v1242
    %3133 = vmatprep.subr.mxu0 %v1251
    %3134 = vmatpush1.msra.mxu0 %v1250
    %3135 = vmatprep.subr.mxu0 %v1259
    %3136 = vmatpush1.msra.mxu0 %v1258
    %3137 = vmatprep.subr.mxu0 %v1267
    %3138 = vmatpush1.msra.mxu0 %v1266
    %3139 = vmatprep.subr.mxu0 %v1275
    %3140 = vmatpush1.msra.mxu0 %v1274
    %3141 = vmatprep.subr.mxu0 %v1283
    %3142 = vmatpush1.msra.mxu0 %v1282
    %3143 = vmatprep.subr.mxu0 %v1291
    %3144 = vmatpush1.msra.mxu0 %v1290
    %3145 = vmatprep.subr.mxu0 %v1299
    %3146 = vmatpush1.msra.mxu0 %v1298
    %3147 = vmatprep.subr.mxu0 %v1307
    %3148 = vmatpush1.msra.mxu0 %v1306
    %3149 = vmatprep.subr.mxu0 %v1315
    %3150 = vmatpush1.msra.mxu0 %v1314
    %3151 = vmatprep.subr.mxu0 %v1323
    %3152 = vmatpush1.msra.mxu0 %v1322
    %3153 = vmatprep.subr.mxu0 %v1331
    %3154 = vmatpush1.msra.mxu0 %v1330
    %3155 = vmatprep.mubr.f32.mxu0 %v3088
    %3156 = vmatmul.mubr.f32.gmra.mrb[0].mxu0 %v3087
    %v3157 = vpop.f32.mrb[0].mxu0
    %v3158 = vadd.f32 0.0, %v3157
    %v3159 = vpop.f32.mrb[0].mxu0
    %v3160 = vadd.f32 0.0, %v3159
    %3161 = vdwg.mxu0
    %3162 = vmatprep.subr.mxu0 %v1085
    %3163 = vmatpush1.msra.mxu0 %v1084
    %3164 = vmatprep.subr.mxu0 %v1093
    %3165 = vmatpush1.msra.mxu0 %v1092
    %3166 = vmatprep.subr.mxu0 %v1101
    %3167 = vmatpush1.msra.mxu0 %v1100
    %3168 = vmatprep.subr.mxu0 %v1109
    %3169 = vmatpush1.msra.mxu0 %v1108
    %3170 = vmatprep.subr.mxu0 %v1117
    %3171 = vmatpush1.msra.mxu0 %v1116
    %3172 = vmatprep.subr.mxu0 %v1125
    %3173 = vmatpush1.msra.mxu0 %v1124
    %3174 = vmatprep.subr.mxu0 %v1133
    %3175 = vmatpush1.msra.mxu0 %v1132
    %3176 = vmatprep.subr.mxu0 %v1141
    %3177 = vmatpush1.msra.mxu0 %v1140
    %3178 = vmatprep.subr.mxu0 %v1149
    %3179 = vmatpush1.msra.mxu0 %v1148
    %3180 = vmatprep.subr.mxu0 %v1157
    %3181 = vmatpush1.msra.mxu0 %v1156
    %3182 = vmatprep.subr.mxu0 %v1165
    %3183 = vmatpush1.msra.mxu0 %v1164
    %3184 = vmatprep.subr.mxu0 %v1173
    %3185 = vmatpush1.msra.mxu0 %v1172
    %3186 = vmatprep.subr.mxu0 %v1181
    %3187 = vmatpush1.msra.mxu0 %v1180
    %3188 = vmatprep.subr.mxu0 %v1189
    %3189 = vmatpush1.msra.mxu0 %v1188
    %3190 = vmatprep.subr.mxu0 %v1197
    %3191 = vmatpush1.msra.mxu0 %v1196
    %3192 = vmatprep.subr.mxu0 %v1205
    %3193 = vmatpush1.msra.mxu0 %v1204
    %3194 = vmatprep.subr.mxu0 %v1213
    %3195 = vmatpush1.msra.mxu0 %v1212
    %3196 = vmatprep.subr.mxu0 %v1221
    %3197 = vmatpush1.msra.mxu0 %v1220
    %3198 = vmatprep.subr.mxu0 %v1229
    %3199 = vmatpush1.msra.mxu0 %v1228
    %3200 = vmatprep.subr.mxu0 %v1237
    %3201 = vmatpush1.msra.mxu0 %v1236
    %3202 = vmatprep.subr.mxu0 %v1245
    %3203 = vmatpush1.msra.mxu0 %v1244
    %3204 = vmatprep.subr.mxu0 %v1253
    %3205 = vmatpush1.msra.mxu0 %v1252
    %3206 = vmatprep.subr.mxu0 %v1261
    %3207 = vmatpush1.msra.mxu0 %v1260
    %3208 = vmatprep.subr.mxu0 %v1269
    %3209 = vmatpush1.msra.mxu0 %v1268
    %3210 = vmatprep.subr.mxu0 %v1277
    %3211 = vmatpush1.msra.mxu0 %v1276
    %3212 = vmatprep.subr.mxu0 %v1285
    %3213 = vmatpush1.msra.mxu0 %v1284
    %3214 = vmatprep.subr.mxu0 %v1293
    %3215 = vmatpush1.msra.mxu0 %v1292
    %3216 = vmatprep.subr.mxu0 %v1301
    %3217 = vmatpush1.msra.mxu0 %v1300
    %3218 = vmatprep.subr.mxu0 %v1309
    %3219 = vmatpush1.msra.mxu0 %v1308
    %3220 = vmatprep.subr.mxu0 %v1317
    %3221 = vmatpush1.msra.mxu0 %v1316
    %3222 = vmatprep.subr.mxu0 %v1325
    %3223 = vmatpush1.msra.mxu0 %v1324
    %3224 = vmatprep.subr.mxu0 %v1333
    %3225 = vmatpush1.msra.mxu0 %v1332
    %3226 = vmatprep.mubr.f32.mxu0 %v3088
    %3227 = vmatmul.mubr.f32.gmra.mrb[0].mxu0 %v3087
    %v3228 = vpop.f32.mrb[0].mxu0
    %v3229 = vadd.f32 0.0, %v3228
    %v3230 = vpop.f32.mrb[0].mxu0
    %v3231 = vadd.f32 0.0, %v3230
    %3232 = vdwg.mxu0
    %3233 = vmatprep.subr.mxu0 %v1087
    %3234 = vmatpush1.msra.mxu0 %v1086
    %3235 = vmatprep.subr.mxu0 %v1095
    %3236 = vmatpush1.msra.mxu0 %v1094
    %3237 = vmatprep.subr.mxu0 %v1103
    %3238 = vmatpush1.msra.mxu0 %v1102
    %3239 = vmatprep.subr.mxu0 %v1111
    %3240 = vmatpush1.msra.mxu0 %v1110
    %3241 = vmatprep.subr.mxu0 %v1119
    %3242 = vmatpush1.msra.mxu0 %v1118
    %3243 = vmatprep.subr.mxu0 %v1127
    %3244 = vmatpush1.msra.mxu0 %v1126
    %3245 = vmatprep.subr.mxu0 %v1135
    %3246 = vmatpush1.msra.mxu0 %v1134
    %3247 = vmatprep.subr.mxu0 %v1143
    %3248 = vmatpush1.msra.mxu0 %v1142
    %3249 = vmatprep.subr.mxu0 %v1151
    %3250 = vmatpush1.msra.mxu0 %v1150
    %3251 = vmatprep.subr.mxu0 %v1159
    %3252 = vmatpush1.msra.mxu0 %v1158
    %3253 = vmatprep.subr.mxu0 %v1167
    %3254 = vmatpush1.msra.mxu0 %v1166
    %3255 = vmatprep.subr.mxu0 %v1175
    %3256 = vmatpush1.msra.mxu0 %v1174
    %3257 = vmatprep.subr.mxu0 %v1183
    %3258 = vmatpush1.msra.mxu0 %v1182
    %3259 = vmatprep.subr.mxu0 %v1191
    %3260 = vmatpush1.msra.mxu0 %v1190
    %3261 = vmatprep.subr.mxu0 %v1199
    %3262 = vmatpush1.msra.mxu0 %v1198
    %3263 = vmatprep.subr.mxu0 %v1207
    %3264 = vmatpush1.msra.mxu0 %v1206
    %3265 = vmatprep.subr.mxu0 %v1215
    %3266 = vmatpush1.msra.mxu0 %v1214
    %3267 = vmatprep.subr.mxu0 %v1223
    %3268 = vmatpush1.msra.mxu0 %v1222
    %3269 = vmatprep.subr.mxu0 %v1231
    %3270 = vmatpush1.msra.mxu0 %v1230
    %3271 = vmatprep.subr.mxu0 %v1239
    %3272 = vmatpush1.msra.mxu0 %v1238
    %3273 = vmatprep.subr.mxu0 %v1247
    %3274 = vmatpush1.msra.mxu0 %v1246
    %3275 = vmatprep.subr.mxu0 %v1255
    %3276 = vmatpush1.msra.mxu0 %v1254
    %3277 = vmatprep.subr.mxu0 %v1263
    %3278 = vmatpush1.msra.mxu0 %v1262
    %3279 = vmatprep.subr.mxu0 %v1271
    %3280 = vmatpush1.msra.mxu0 %v1270
    %3281 = vmatprep.subr.mxu0 %v1279
    %3282 = vmatpush1.msra.mxu0 %v1278
    %3283 = vmatprep.subr.mxu0 %v1287
    %3284 = vmatpush1.msra.mxu0 %v1286
    %3285 = vmatprep.subr.mxu0 %v1295
    %3286 = vmatpush1.msra.mxu0 %v1294
    %3287 = vmatprep.subr.mxu0 %v1303
    %3288 = vmatpush1.msra.mxu0 %v1302
    %3289 = vmatprep.subr.mxu0 %v1311
    %3290 = vmatpush1.msra.mxu0 %v1310
    %3291 = vmatprep.subr.mxu0 %v1319
    %3292 = vmatpush1.msra.mxu0 %v1318
    %3293 = vmatprep.subr.mxu0 %v1327
    %3294 = vmatpush1.msra.mxu0 %v1326
    %3295 = vmatprep.subr.mxu0 %v1335
    %3296 = vmatpush1.msra.mxu0 %v1334
    %3297 = vmatprep.mubr.f32.mxu0 %v3088
    %3298 = vmatmul.mubr.f32.gmra.mrb[0].mxu0 %v3087
    %v3299 = vpop.f32.mrb[0].mxu0
    %v3300 = vadd.f32 0.0, %v3299
    %v3301 = vpop.f32.mrb[0].mxu0
    %v3302 = vadd.f32 0.0, %v3301
    %3303 = vdwg.mxu0
    %3304 = vmatprep.subr.mxu0 %v1089
    %3305 = vmatpush1.msra.mxu0 %v1088
    %3306 = vmatprep.subr.mxu0 %v1097
    %3307 = vmatpush1.msra.mxu0 %v1096
    %3308 = vmatprep.subr.mxu0 %v1105
    %3309 = vmatpush1.msra.mxu0 %v1104
    %3310 = vmatprep.subr.mxu0 %v1113
    %3311 = vmatpush1.msra.mxu0 %v1112
    %3312 = vmatprep.subr.mxu0 %v1121
    %3313 = vmatpush1.msra.mxu0 %v1120
    %3314 = vmatprep.subr.mxu0 %v1129
    %3315 = vmatpush1.msra.mxu0 %v1128
    %3316 = vmatprep.subr.mxu0 %v1137
    %3317 = vmatpush1.msra.mxu0 %v1136
    %3318 = vmatprep.subr.mxu0 %v1145
    %3319 = vmatpush1.msra.mxu0 %v1144
    %3320 = vmatprep.subr.mxu0 %v1153
    %3321 = vmatpush1.msra.mxu0 %v1152
    %3322 = vmatprep.subr.mxu0 %v1161
    %3323 = vmatpush1.msra.mxu0 %v1160
    %3324 = vmatprep.subr.mxu0 %v1169
    %3325 = vmatpush1.msra.mxu0 %v1168
    %3326 = vmatprep.subr.mxu0 %v1177
    %3327 = vmatpush1.msra.mxu0 %v1176
    %3328 = vmatprep.subr.mxu0 %v1185
    %3329 = vmatpush1.msra.mxu0 %v1184
    %3330 = vmatprep.subr.mxu0 %v1193
    %3331 = vmatpush1.msra.mxu0 %v1192
    %3332 = vmatprep.subr.mxu0 %v1201
    %3333 = vmatpush1.msra.mxu0 %v1200
    %3334 = vmatprep.subr.mxu0 %v1209
    %3335 = vmatpush1.msra.mxu0 %v1208
    %3336 = vmatprep.subr.mxu0 %v1217
    %3337 = vmatpush1.msra.mxu0 %v1216
    %3338 = vmatprep.subr.mxu0 %v1225
    %3339 = vmatpush1.msra.mxu0 %v1224
    %3340 = vmatprep.subr.mxu0 %v1233
    %3341 = vmatpush1.msra.mxu0 %v1232
    %3342 = vmatprep.subr.mxu0 %v1241
    %3343 = vmatpush1.msra.mxu0 %v1240
    %3344 = vmatprep.subr.mxu0 %v1249
    %3345 = vmatpush1.msra.mxu0 %v1248
    %3346 = vmatprep.subr.mxu0 %v1257
    %3347 = vmatpush1.msra.mxu0 %v1256
    %3348 = vmatprep.subr.mxu0 %v1265
    %3349 = vmatpush1.msra.mxu0 %v1264
    %3350 = vmatprep.subr.mxu0 %v1273
    %3351 = vmatpush1.msra.mxu0 %v1272
    %3352 = vmatprep.subr.mxu0 %v1281
    %3353 = vmatpush1.msra.mxu0 %v1280
    %3354 = vmatprep.subr.mxu0 %v1289
    %3355 = vmatpush1.msra.mxu0 %v1288
    %3356 = vmatprep.subr.mxu0 %v1297
    %3357 = vmatpush1.msra.mxu0 %v1296
    %3358 = vmatprep.subr.mxu0 %v1305
    %3359 = vmatpush1.msra.mxu0 %v1304
    %3360 = vmatprep.subr.mxu0 %v1313
    %3361 = vmatpush1.msra.mxu0 %v1312
    %3362 = vmatprep.subr.mxu0 %v1321
    %3363 = vmatpush1.msra.mxu0 %v1320
    %3364 = vmatprep.subr.mxu0 %v1329
    %3365 = vmatpush1.msra.mxu0 %v1328
    %3366 = vmatprep.subr.mxu0 %v1337
    %3367 = vmatpush1.msra.mxu0 %v1336
    %3368 = vmatprep.mubr.f32.mxu0 %v3088
    %3369 = vmatmul.mubr.f32.gmra.mrb[0].mxu0 %v3087
    %v3370 = vpop.f32.mrb[0].mxu0
    %v3371 = vadd.f32 0.0, %v3370
    %v3372 = vpop.f32.mrb[0].mxu0
    %v3373 = vadd.f32 0.0, %v3372
    %3374 = vdwg.mxu0
    %v3383 = vrot.slane %v3158, 4
    %v3384 = vrot.slane %v3160, 4
    %v3385 = vrot.slane %v3229, 4
    %v3386 = vrot.slane %v3231, 4
    %v3387 = vrot.slane %v3300, 4
    %v3388 = vrot.slane %v3302, 4
    %v3389 = vrot.slane %v3371, 4
    %v3390 = vrot.slane %v3373, 4
    %v3399 = vadd.f32 %v3077, %v3383
    %v3400 = vadd.f32 %v3078, %v3384
    %v3401 = vadd.f32 %v3079, %v3385
    %v3402 = vadd.f32 %v3080, %v3386
    %v3403 = vadd.f32 %v3081, %v3387
    %v3404 = vadd.f32 %v3082, %v3388
    %v3405 = vadd.f32 %v3083, %v3389
    %v3406 = vadd.f32 %v3084, %v3390
    %v3407 = vld [vmem:[#allocation3 + $0x40] sm:$0xc]
    %v3408 = vld [vmem:[#allocation3 + $0x48] sm:$0xc]
    %v3409 = vld [vmem:[#allocation3 + $0x50] sm:$0xc]
    %v3410 = vld [vmem:[#allocation3 + $0x58] sm:$0xc]
    %v3411 = vld [vmem:[#allocation3 + $0x60] sm:$0xc]
    %v3412 = vld [vmem:[#allocation3 + $0x68] sm:$0xc]
    %v3413 = vld [vmem:[#allocation3 + $0x70] sm:$0xc]
    %v3414 = vld [vmem:[#allocation3 + $0x78] sm:$0xc]
    %v3417 = vrot.slane %v3075, 4
    %v3418 = vrot.slane %v3076, 4
    %3421 = vmatprep.subr.mxu0 %v1340
    %3422 = vmatpush1.msra.mxu0 %v1339
    %3423 = vmatprep.subr.mxu0 %v1348
    %3424 = vmatpush1.msra.mxu0 %v1347
    %3425 = vmatprep.subr.mxu0 %v1356
    %3426 = vmatpush1.msra.mxu0 %v1355
    %3427 = vmatprep.subr.mxu0 %v1364
    %3428 = vmatpush1.msra.mxu0 %v1363
    %3429 = vmatprep.subr.mxu0 %v1372
    %3430 = vmatpush1.msra.mxu0 %v1371
    %3431 = vmatprep.subr.mxu0 %v1380
    %3432 = vmatpush1.msra.mxu0 %v1379
    %3433 = vmatprep.subr.mxu0 %v1388
    %3434 = vmatpush1.msra.mxu0 %v1387
    %3435 = vmatprep.subr.mxu0 %v1396
    %3436 = vmatpush1.msra.mxu0 %v1395
    %3437 = vmatprep.subr.mxu0 %v1404
    %3438 = vmatpush1.msra.mxu0 %v1403
    %3439 = vmatprep.subr.mxu0 %v1412
    %3440 = vmatpush1.msra.mxu0 %v1411
    %3441 = vmatprep.subr.mxu0 %v1420
    %3442 = vmatpush1.msra.mxu0 %v1419
    %3443 = vmatprep.subr.mxu0 %v1428
    %3444 = vmatpush1.msra.mxu0 %v1427
    %3445 = vmatprep.subr.mxu0 %v1436
    %3446 = vmatpush1.msra.mxu0 %v1435
    %3447 = vmatprep.subr.mxu0 %v1444
    %3448 = vmatpush1.msra.mxu0 %v1443
    %3449 = vmatprep.subr.mxu0 %v1452
    %3450 = vmatpush1.msra.mxu0 %v1451
    %3451 = vmatprep.subr.mxu0 %v1460
    %3452 = vmatpush1.msra.mxu0 %v1459
    %3453 = vmatprep.subr.mxu0 %v1468
    %3454 = vmatpush1.msra.mxu0 %v1467
    %3455 = vmatprep.subr.mxu0 %v1476
    %3456 = vmatpush1.msra.mxu0 %v1475
    %3457 = vmatprep.subr.mxu0 %v1484
    %3458 = vmatpush1.msra.mxu0 %v1483
    %3459 = vmatprep.subr.mxu0 %v1492
    %3460 = vmatpush1.msra.mxu0 %v1491
    %3461 = vmatprep.subr.mxu0 %v1500
    %3462 = vmatpush1.msra.mxu0 %v1499
    %3463 = vmatprep.subr.mxu0 %v1508
    %3464 = vmatpush1.msra.mxu0 %v1507
    %3465 = vmatprep.subr.mxu0 %v1516
    %3466 = vmatpush1.msra.mxu0 %v1515
    %3467 = vmatprep.subr.mxu0 %v1524
    %3468 = vmatpush1.msra.mxu0 %v1523
    %3469 = vmatprep.subr.mxu0 %v1532
    %3470 = vmatpush1.msra.mxu0 %v1531
    %3471 = vmatprep.subr.mxu0 %v1540
    %3472 = vmatpush1.msra.mxu0 %v1539
    %3473 = vmatprep.subr.mxu0 %v1548
    %3474 = vmatpush1.msra.mxu0 %v1547
    %3475 = vmatprep.subr.mxu0 %v1556
    %3476 = vmatpush1.msra.mxu0 %v1555
    %3477 = vmatprep.subr.mxu0 %v1564
    %3478 = vmatpush1.msra.mxu0 %v1563
    %3479 = vmatprep.subr.mxu0 %v1572
    %3480 = vmatpush1.msra.mxu0 %v1571
    %3481 = vmatprep.subr.mxu0 %v1580
    %3482 = vmatpush1.msra.mxu0 %v1579
    %3483 = vmatprep.subr.mxu0 %v1588
    %3484 = vmatpush1.msra.mxu0 %v1587
    %3485 = vmatprep.mubr.f32.mxu0 %v3418
    %3486 = vmatmul.mubr.f32.gmra.mrb[0].mxu0 %v3417
    %v3487 = vpop.f32.mrb[0].mxu0
    %v3488 = vadd.f32 0.0, %v3487
    %v3489 = vpop.f32.mrb[0].mxu0
    %v3490 = vadd.f32 0.0, %v3489
    %3491 = vdwg.mxu0
    %3492 = vmatprep.subr.mxu0 %v1342
    %3493 = vmatpush1.msra.mxu0 %v1341
    %3494 = vmatprep.subr.mxu0 %v1350
    %3495 = vmatpush1.msra.mxu0 %v1349
    %3496 = vmatprep.subr.mxu0 %v1358
    %3497 = vmatpush1.msra.mxu0 %v1357
    %3498 = vmatprep.subr.mxu0 %v1366
    %3499 = vmatpush1.msra.mxu0 %v1365
    %3500 = vmatprep.subr.mxu0 %v1374
    %3501 = vmatpush1.msra.mxu0 %v1373
    %3502 = vmatprep.subr.mxu0 %v1382
    %3503 = vmatpush1.msra.mxu0 %v1381
    %3504 = vmatprep.subr.mxu0 %v1390
    %3505 = vmatpush1.msra.mxu0 %v1389
    %3506 = vmatprep.subr.mxu0 %v1398
    %3507 = vmatpush1.msra.mxu0 %v1397
    %3508 = vmatprep.subr.mxu0 %v1406
    %3509 = vmatpush1.msra.mxu0 %v1405
    %3510 = vmatprep.subr.mxu0 %v1414
    %3511 = vmatpush1.msra.mxu0 %v1413
    %3512 = vmatprep.subr.mxu0 %v1422
    %3513 = vmatpush1.msra.mxu0 %v1421
    %3514 = vmatprep.subr.mxu0 %v1430
    %3515 = vmatpush1.msra.mxu0 %v1429
    %3516 = vmatprep.subr.mxu0 %v1438
    %3517 = vmatpush1.msra.mxu0 %v1437
    %3518 = vmatprep.subr.mxu0 %v1446
    %3519 = vmatpush1.msra.mxu0 %v1445
    %3520 = vmatprep.subr.mxu0 %v1454
    %3521 = vmatpush1.msra.mxu0 %v1453
    %3522 = vmatprep.subr.mxu0 %v1462
    %3523 = vmatpush1.msra.mxu0 %v1461
    %3524 = vmatprep.subr.mxu0 %v1470
    %3525 = vmatpush1.msra.mxu0 %v1469
    %3526 = vmatprep.subr.mxu0 %v1478
    %3527 = vmatpush1.msra.mxu0 %v1477
    %3528 = vmatprep.subr.mxu0 %v1486
    %3529 = vmatpush1.msra.mxu0 %v1485
    %3530 = vmatprep.subr.mxu0 %v1494
    %3531 = vmatpush1.msra.mxu0 %v1493
    %3532 = vmatprep.subr.mxu0 %v1502
    %3533 = vmatpush1.msra.mxu0 %v1501
    %3534 = vmatprep.subr.mxu0 %v1510
    %3535 = vmatpush1.msra.mxu0 %v1509
    %3536 = vmatprep.subr.mxu0 %v1518
    %3537 = vmatpush1.msra.mxu0 %v1517
    %3538 = vmatprep.subr.mxu0 %v1526
    %3539 = vmatpush1.msra.mxu0 %v1525
    %3540 = vmatprep.subr.mxu0 %v1534
    %3541 = vmatpush1.msra.mxu0 %v1533
    %3542 = vmatprep.subr.mxu0 %v1542
    %3543 = vmatpush1.msra.mxu0 %v1541
    %3544 = vmatprep.subr.mxu0 %v1550
    %3545 = vmatpush1.msra.mxu0 %v1549
    %3546 = vmatprep.subr.mxu0 %v1558
    %3547 = vmatpush1.msra.mxu0 %v1557
    %3548 = vmatprep.subr.mxu0 %v1566
    %3549 = vmatpush1.msra.mxu0 %v1565
    %3550 = vmatprep.subr.mxu0 %v1574
    %3551 = vmatpush1.msra.mxu0 %v1573
    %3552 = vmatprep.subr.mxu0 %v1582
    %3553 = vmatpush1.msra.mxu0 %v1581
    %3554 = vmatprep.subr.mxu0 %v1590
    %3555 = vmatpush1.msra.mxu0 %v1589
    %3556 = vmatprep.mubr.f32.mxu0 %v3418
    %3557 = vmatmul.mubr.f32.gmra.mrb[0].mxu0 %v3417
    %v3558 = vpop.f32.mrb[0].mxu0
    %v3559 = vadd.f32 0.0, %v3558
    %v3560 = vpop.f32.mrb[0].mxu0
    %v3561 = vadd.f32 0.0, %v3560
    %3562 = vdwg.mxu0
    %3563 = vmatprep.subr.mxu0 %v1344
    %3564 = vmatpush1.msra.mxu0 %v1343
    %3565 = vmatprep.subr.mxu0 %v1352
    %3566 = vmatpush1.msra.mxu0 %v1351
    %3567 = vmatprep.subr.mxu0 %v1360
    %3568 = vmatpush1.msra.mxu0 %v1359
    %3569 = vmatprep.subr.mxu0 %v1368
    %3570 = vmatpush1.msra.mxu0 %v1367
    %3571 = vmatprep.subr.mxu0 %v1376
    %3572 = vmatpush1.msra.mxu0 %v1375
    %3573 = vmatprep.subr.mxu0 %v1384
    %3574 = vmatpush1.msra.mxu0 %v1383
    %3575 = vmatprep.subr.mxu0 %v1392
    %3576 = vmatpush1.msra.mxu0 %v1391
    %3577 = vmatprep.subr.mxu0 %v1400
    %3578 = vmatpush1.msra.mxu0 %v1399
    %3579 = vmatprep.subr.mxu0 %v1408
    %3580 = vmatpush1.msra.mxu0 %v1407
    %3581 = vmatprep.subr.mxu0 %v1416
    %3582 = vmatpush1.msra.mxu0 %v1415
    %3583 = vmatprep.subr.mxu0 %v1424
    %3584 = vmatpush1.msra.mxu0 %v1423
    %3585 = vmatprep.subr.mxu0 %v1432
    %3586 = vmatpush1.msra.mxu0 %v1431
    %3587 = vmatprep.subr.mxu0 %v1440
    %3588 = vmatpush1.msra.mxu0 %v1439
    %3589 = vmatprep.subr.mxu0 %v1448
    %3590 = vmatpush1.msra.mxu0 %v1447
    %3591 = vmatprep.subr.mxu0 %v1456
    %3592 = vmatpush1.msra.mxu0 %v1455
    %3593 = vmatprep.subr.mxu0 %v1464
    %3594 = vmatpush1.msra.mxu0 %v1463
    %3595 = vmatprep.subr.mxu0 %v1472
    %3596 = vmatpush1.msra.mxu0 %v1471
    %3597 = vmatprep.subr.mxu0 %v1480
    %3598 = vmatpush1.msra.mxu0 %v1479
    %3599 = vmatprep.subr.mxu0 %v1488
    %3600 = vmatpush1.msra.mxu0 %v1487
    %3601 = vmatprep.subr.mxu0 %v1496
    %3602 = vmatpush1.msra.mxu0 %v1495
    %3603 = vmatprep.subr.mxu0 %v1504
    %3604 = vmatpush1.msra.mxu0 %v1503
    %3605 = vmatprep.subr.mxu0 %v1512
    %3606 = vmatpush1.msra.mxu0 %v1511
    %3607 = vmatprep.subr.mxu0 %v1520
    %3608 = vmatpush1.msra.mxu0 %v1519
    %3609 = vmatprep.subr.mxu0 %v1528
    %3610 = vmatpush1.msra.mxu0 %v1527
    %3611 = vmatprep.subr.mxu0 %v1536
    %3612 = vmatpush1.msra.mxu0 %v1535
    %3613 = vmatprep.subr.mxu0 %v1544
    %3614 = vmatpush1.msra.mxu0 %v1543
    %3615 = vmatprep.subr.mxu0 %v1552
    %3616 = vmatpush1.msra.mxu0 %v1551
    %3617 = vmatprep.subr.mxu0 %v1560
    %3618 = vmatpush1.msra.mxu0 %v1559
    %3619 = vmatprep.subr.mxu0 %v1568
    %3620 = vmatpush1.msra.mxu0 %v1567
    %3621 = vmatprep.subr.mxu0 %v1576
    %3622 = vmatpush1.msra.mxu0 %v1575
    %3623 = vmatprep.subr.mxu0 %v1584
    %3624 = vmatpush1.msra.mxu0 %v1583
    %3625 = vmatprep.subr.mxu0 %v1592
    %3626 = vmatpush1.msra.mxu0 %v1591
    %3627 = vmatprep.mubr.f32.mxu0 %v3418
    %3628 = vmatmul.mubr.f32.gmra.mrb[0].mxu0 %v3417
    %v3629 = vpop.f32.mrb[0].mxu0
    %v3630 = vadd.f32 0.0, %v3629
    %v3631 = vpop.f32.mrb[0].mxu0
    %v3632 = vadd.f32 0.0, %v3631
    %3633 = vdwg.mxu0
    %3634 = vmatprep.subr.mxu0 %v1346
    %3635 = vmatpush1.msra.mxu0 %v1345
    %3636 = vmatprep.subr.mxu0 %v1354
    %3637 = vmatpush1.msra.mxu0 %v1353
    %3638 = vmatprep.subr.mxu0 %v1362
    %3639 = vmatpush1.msra.mxu0 %v1361
    %3640 = vmatprep.subr.mxu0 %v1370
    %3641 = vmatpush1.msra.mxu0 %v1369
    %3642 = vmatprep.subr.mxu0 %v1378
    %3643 = vmatpush1.msra.mxu0 %v1377
    %3644 = vmatprep.subr.mxu0 %v1386
    %3645 = vmatpush1.msra.mxu0 %v1385
    %3646 = vmatprep.subr.mxu0 %v1394
    %3647 = vmatpush1.msra.mxu0 %v1393
    %3648 = vmatprep.subr.mxu0 %v1402
    %3649 = vmatpush1.msra.mxu0 %v1401
    %3650 = vmatprep.subr.mxu0 %v1410
    %3651 = vmatpush1.msra.mxu0 %v1409
    %3652 = vmatprep.subr.mxu0 %v1418
    %3653 = vmatpush1.msra.mxu0 %v1417
    %3654 = vmatprep.subr.mxu0 %v1426
    %3655 = vmatpush1.msra.mxu0 %v1425
    %3656 = vmatprep.subr.mxu0 %v1434
    %3657 = vmatpush1.msra.mxu0 %v1433
    %3658 = vmatprep.subr.mxu0 %v1442
    %3659 = vmatpush1.msra.mxu0 %v1441
    %3660 = vmatprep.subr.mxu0 %v1450
    %3661 = vmatpush1.msra.mxu0 %v1449
    %3662 = vmatprep.subr.mxu0 %v1458
    %3663 = vmatpush1.msra.mxu0 %v1457
    %3664 = vmatprep.subr.mxu0 %v1466
    %3665 = vmatpush1.msra.mxu0 %v1465
    %3666 = vmatprep.subr.mxu0 %v1474
    %3667 = vmatpush1.msra.mxu0 %v1473
    %3668 = vmatprep.subr.mxu0 %v1482
    %3669 = vmatpush1.msra.mxu0 %v1481
    %3670 = vmatprep.subr.mxu0 %v1490
    %3671 = vmatpush1.msra.mxu0 %v1489
    %3672 = vmatprep.subr.mxu0 %v1498
    %3673 = vmatpush1.msra.mxu0 %v1497
    %3674 = vmatprep.subr.mxu0 %v1506
    %3675 = vmatpush1.msra.mxu0 %v1505
    %3676 = vmatprep.subr.mxu0 %v1514
    %3677 = vmatpush1.msra.mxu0 %v1513
    %3678 = vmatprep.subr.mxu0 %v1522
    %3679 = vmatpush1.msra.mxu0 %v1521
    %3680 = vmatprep.subr.mxu0 %v1530
    %3681 = vmatpush1.msra.mxu0 %v1529
    %3682 = vmatprep.subr.mxu0 %v1538
    %3683 = vmatpush1.msra.mxu0 %v1537
    %3684 = vmatprep.subr.mxu0 %v1546
    %3685 = vmatpush1.msra.mxu0 %v1545
    %3686 = vmatprep.subr.mxu0 %v1554
    %3687 = vmatpush1.msra.mxu0 %v1553
    %3688 = vmatprep.subr.mxu0 %v1562
    %3689 = vmatpush1.msra.mxu0 %v1561
    %3690 = vmatprep.subr.mxu0 %v1570
    %3691 = vmatpush1.msra.mxu0 %v1569
    %3692 = vmatprep.subr.mxu0 %v1578
    %3693 = vmatpush1.msra.mxu0 %v1577
    %3694 = vmatprep.subr.mxu0 %v1586
    %3695 = vmatpush1.msra.mxu0 %v1585
    %3696 = vmatprep.subr.mxu0 %v1594
    %3697 = vmatpush1.msra.mxu0 %v1593
    %3698 = vmatprep.mubr.f32.mxu0 %v3418
    %3699 = vmatmul.mubr.f32.gmra.mrb[0].mxu0 %v3417
    %v3700 = vpop.f32.mrb[0].mxu0
    %v3701 = vadd.f32 0.0, %v3700
    %v3702 = vpop.f32.mrb[0].mxu0
    %v3703 = vadd.f32 0.0, %v3702
    %3704 = vdwg.mxu0
    %v3713 = vrot.slane %v3488, 6
    %v3714 = vrot.slane %v3490, 6
    %v3715 = vrot.slane %v3559, 6
    %v3716 = vrot.slane %v3561, 6
    %v3717 = vrot.slane %v3630, 6
    %v3718 = vrot.slane %v3632, 6
    %v3719 = vrot.slane %v3701, 6
    %v3720 = vrot.slane %v3703, 6
    %v3729 = vadd.f32 %v3407, %v3713
    %v3730 = vadd.f32 %v3408, %v3714
    %v3731 = vadd.f32 %v3409, %v3715
    %v3732 = vadd.f32 %v3410, %v3716
    %v3733 = vadd.f32 %v3411, %v3717
    %v3734 = vadd.f32 %v3412, %v3718
    %v3735 = vadd.f32 %v3413, %v3719
    %v3736 = vadd.f32 %v3414, %v3720
    %v3737 = vxor.u32 %v3399, 2147483648
    %v3738 = vxor.u32 %v3400, 2147483648
    %v3739 = vmul.f32 %v3737, 1.442695
    %v3740 = vpow.pop %v3739
    %v3741 = vmul.f32 %v3738, 1.442695
    %v3742 = vpow.pop %v3741
    %v3743 = vadd.f32 %v3740, 1.0
    %v3744 = vadd.f32 %v3742, 1.0
    %v3745 = vrcp.pop %v3743
    %v3746 = vmul.f32 1.0, %v3745
    %v3747 = vrcp.pop %v3744
    %v3748 = vmul.f32 1.0, %v3747
    %v3749 = vxor.u32 %v3401, 2147483648
    %v3750 = vxor.u32 %v3402, 2147483648
    %v3751 = vmul.f32 %v3749, 1.442695
    %v3752 = vpow.pop %v3751
    %v3753 = vmul.f32 %v3750, 1.442695
    %v3754 = vpow.pop %v3753
    %v3755 = vadd.f32 %v3752, 1.0
    %v3756 = vadd.f32 %v3754, 1.0
    %v3757 = vrcp.pop %v3755
    %v3758 = vmul.f32 1.0, %v3757
    %v3759 = vrcp.pop %v3756
    %v3760 = vmul.f32 1.0, %v3759
    %v3761 = vtanh.pop %v3403
    %v3762 = vtanh.pop %v3404
    %v3763 = vxor.u32 %v3405, 2147483648
    %v3764 = vxor.u32 %v3406, 2147483648
    %v3765 = vmul.f32 %v3763, 1.442695
    %v3766 = vpow.pop %v3765
    %v3767 = vmul.f32 %v3764, 1.442695
    %v3768 = vpow.pop %v3767
    %v3769 = vadd.f32 %v3766, 1.0
    %v3770 = vadd.f32 %v3768, 1.0
    %v3771 = vrcp.pop %v3769
    %v3772 = vmul.f32 1.0, %v3771
    %v3773 = vrcp.pop %v3770
    %v3774 = vmul.f32 1.0, %v3773
    %v3777 = vrot.slane %v3017, 6
    %v3778 = vrot.slane %v3018, 6
    %v3781 = vmul.f32 %v3758, %v3777
    %v3782 = vmul.f32 %v3760, %v3778
    %v3783 = vmul.f32 %v3746, %v3761
    %v3784 = vmul.f32 %v3748, %v3762
    %v3785 = vadd.f32 %v3781, %v3783
    %v3786 = vadd.f32 %v3782, %v3784
    %v3787 = vtanh.pop %v3785
    %v3788 = vtanh.pop %v3786
    %v3789 = vmul.f32 %v3772, %v3787
    %v3790 = vmul.f32 %v3774, %v3788
    %v3791 = vxor.u32 %v3729, 2147483648
    %v3792 = vxor.u32 %v3730, 2147483648
    %v3793 = vmul.f32 %v3791, 1.442695
    %v3794 = vpow.pop %v3793
    %v3795 = vmul.f32 %v3792, 1.442695
    %v3796 = vpow.pop %v3795
    %v3797 = vadd.f32 %v3794, 1.0
    %v3798 = vadd.f32 %v3796, 1.0
    %v3799 = vrcp.pop %v3797
    %v3800 = vmul.f32 1.0, %v3799
    %v3801 = vrcp.pop %v3798
    %v3802 = vmul.f32 1.0, %v3801
    %v3803 = vxor.u32 %v3731, 2147483648
    %v3804 = vxor.u32 %v3732, 2147483648
    %v3805 = vmul.f32 %v3803, 1.442695
    %v3806 = vpow.pop %v3805
    %v3807 = vmul.f32 %v3804, 1.442695
    %v3808 = vpow.pop %v3807
    %v3809 = vadd.f32 %v3806, 1.0
    %v3810 = vadd.f32 %v3808, 1.0
    %v3811 = vrcp.pop %v3809
    %v3812 = vmul.f32 1.0, %v3811
    %v3813 = vrcp.pop %v3810
    %v3814 = vmul.f32 1.0, %v3813
    %v3815 = vtanh.pop %v3733
    %v3816 = vtanh.pop %v3734
    %v3817 = vxor.u32 %v3735, 2147483648
    %v3818 = vxor.u32 %v3736, 2147483648
    %v3819 = vmul.f32 %v3817, 1.442695
    %v3820 = vpow.pop %v3819
    %v3821 = vmul.f32 %v3818, 1.442695
    %v3822 = vpow.pop %v3821
    %v3823 = vadd.f32 %v3820, 1.0
    %v3824 = vadd.f32 %v3822, 1.0
    %v3825 = vrcp.pop %v3823
    %v3826 = vmul.f32 1.0, %v3825
    %v3827 = vrcp.pop %v3824
    %v3828 = vmul.f32 1.0, %v3827
    %v3831 = vrot.slane %v3071, 2
    %v3832 = vrot.slane %v3072, 2
    %v3835 = vmul.f32 %v3812, %v3831
    %v3836 = vmul.f32 %v3814, %v3832
    %v3837 = vmul.f32 %v3800, %v3815
    %v3838 = vmul.f32 %v3802, %v3816
    %v3839 = vadd.f32 %v3835, %v3837
    %v3840 = vadd.f32 %v3836, %v3838
    %v3841 = vtanh.pop %v3839
    %v3842 = vtanh.pop %v3840
    %v3843 = vmul.f32 %v3826, %v3841
    %v3844 = vmul.f32 %v3828, %v3842
    %v3845 = vld [vmem:[#allocation2] sm:$0xc0]
    %v3846 = vld [vmem:[#allocation2 + $0x8] sm:$0xc0]
    %v3847 = vld [vmem:[#allocation2 + $0x10] sm:$0xc0]
    %v3848 = vld [vmem:[#allocation2 + $0x18] sm:$0xc0]
    %v3849 = vld [vmem:[#allocation2 + $0x20] sm:$0xc0]
    %v3850 = vld [vmem:[#allocation2 + $0x28] sm:$0xc0]
    %v3851 = vld [vmem:[#allocation2 + $0x30] sm:$0xc0]
    %v3852 = vld [vmem:[#allocation2 + $0x38] sm:$0xc0]
    %v3855 = vrot.slane %v3789, 4
    %v3856 = vrot.slane %v3790, 4
    %3859 = vmatprep.subr.mxu0 %v1083
    %3860 = vmatpush1.msra.mxu0 %v1082
    %3861 = vmatprep.subr.mxu0 %v1091
    %3862 = vmatpush1.msra.mxu0 %v1090
    %3863 = vmatprep.subr.mxu0 %v1099
    %3864 = vmatpush1.msra.mxu0 %v1098
    %3865 = vmatprep.subr.mxu0 %v1107
    %3866 = vmatpush1.msra.mxu0 %v1106
    %3867 = vmatprep.subr.mxu0 %v1115
    %3868 = vmatpush1.msra.mxu0 %v1114
    %3869 = vmatprep.subr.mxu0 %v1123
    %3870 = vmatpush1.msra.mxu0 %v1122
    %3871 = vmatprep.subr.mxu0 %v1131
    %3872 = vmatpush1.msra.mxu0 %v1130
    %3873 = vmatprep.subr.mxu0 %v1139
    %3874 = vmatpush1.msra.mxu0 %v1138
    %3875 = vmatprep.subr.mxu0 %v1147
    %3876 = vmatpush1.msra.mxu0 %v1146
    %3877 = vmatprep.subr.mxu0 %v1155
    %3878 = vmatpush1.msra.mxu0 %v1154
    %3879 = vmatprep.subr.mxu0 %v1163
    %3880 = vmatpush1.msra.mxu0 %v1162
    %3881 = vmatprep.subr.mxu0 %v1171
    %3882 = vmatpush1.msra.mxu0 %v1170
    %3883 = vmatprep.subr.mxu0 %v1179
    %3884 = vmatpush1.msra.mxu0 %v1178
    %3885 = vmatprep.subr.mxu0 %v1187
    %3886 = vmatpush1.msra.mxu0 %v1186
    %3887 = vmatprep.subr.mxu0 %v1195
    %3888 = vmatpush1.msra.mxu0 %v1194
    %3889 = vmatprep.subr.mxu0 %v1203
    %3890 = vmatpush1.msra.mxu0 %v1202
    %3891 = vmatprep.subr.mxu0 %v1211
    %3892 = vmatpush1.msra.mxu0 %v1210
    %3893 = vmatprep.subr.mxu0 %v1219
    %3894 = vmatpush1.msra.mxu0 %v1218
    %3895 = vmatprep.subr.mxu0 %v1227
    %3896 = vmatpush1.msra.mxu0 %v1226
    %3897 = vmatprep.subr.mxu0 %v1235
    %3898 = vmatpush1.msra.mxu0 %v1234
    %3899 = vmatprep.subr.mxu0 %v1243
    %3900 = vmatpush1.msra.mxu0 %v1242
    %3901 = vmatprep.subr.mxu0 %v1251
    %3902 = vmatpush1.msra.mxu0 %v1250
    %3903 = vmatprep.subr.mxu0 %v1259
    %3904 = vmatpush1.msra.mxu0 %v1258
    %3905 = vmatprep.subr.mxu0 %v1267
    %3906 = vmatpush1.msra.mxu0 %v1266
    %3907 = vmatprep.subr.mxu0 %v1275
    %3908 = vmatpush1.msra.mxu0 %v1274
    %3909 = vmatprep.subr.mxu0 %v1283
    %3910 = vmatpush1.msra.mxu0 %v1282
    %3911 = vmatprep.subr.mxu0 %v1291
    %3912 = vmatpush1.msra.mxu0 %v1290
    %3913 = vmatprep.subr.mxu0 %v1299
    %3914 = vmatpush1.msra.mxu0 %v1298
    %3915 = vmatprep.subr.mxu0 %v1307
    %3916 = vmatpush1.msra.mxu0 %v1306
    %3917 = vmatprep.subr.mxu0 %v1315
    %3918 = vmatpush1.msra.mxu0 %v1314
    %3919 = vmatprep.subr.mxu0 %v1323
    %3920 = vmatpush1.msra.mxu0 %v1322
    %3921 = vmatprep.subr.mxu0 %v1331
    %3922 = vmatpush1.msra.mxu0 %v1330
    %3923 = vmatprep.mubr.f32.mxu0 %v3856
    %3924 = vmatmul.mubr.f32.gmra.mrb[0].mxu0 %v3855
    %v3925 = vpop.f32.mrb[0].mxu0
    %v3926 = vadd.f32 0.0, %v3925
    %v3927 = vpop.f32.mrb[0].mxu0
    %v3928 = vadd.f32 0.0, %v3927
    %3929 = vdwg.mxu0
    %3930 = vmatprep.subr.mxu0 %v1085
    %3931 = vmatpush1.msra.mxu0 %v1084
    %3932 = vmatprep.subr.mxu0 %v1093
    %3933 = vmatpush1.msra.mxu0 %v1092
    %3934 = vmatprep.subr.mxu0 %v1101
    %3935 = vmatpush1.msra.mxu0 %v1100
    %3936 = vmatprep.subr.mxu0 %v1109
    %3937 = vmatpush1.msra.mxu0 %v1108
    %3938 = vmatprep.subr.mxu0 %v1117
    %3939 = vmatpush1.msra.mxu0 %v1116
    %3940 = vmatprep.subr.mxu0 %v1125
    %3941 = vmatpush1.msra.mxu0 %v1124
    %3942 = vmatprep.subr.mxu0 %v1133
    %3943 = vmatpush1.msra.mxu0 %v1132
    %3944 = vmatprep.subr.mxu0 %v1141
    %3945 = vmatpush1.msra.mxu0 %v1140
    %3946 = vmatprep.subr.mxu0 %v1149
    %3947 = vmatpush1.msra.mxu0 %v1148
    %3948 = vmatprep.subr.mxu0 %v1157
    %3949 = vmatpush1.msra.mxu0 %v1156
    %3950 = vmatprep.subr.mxu0 %v1165
    %3951 = vmatpush1.msra.mxu0 %v1164
    %3952 = vmatprep.subr.mxu0 %v1173
    %3953 = vmatpush1.msra.mxu0 %v1172
    %3954 = vmatprep.subr.mxu0 %v1181
    %3955 = vmatpush1.msra.mxu0 %v1180
    %3956 = vmatprep.subr.mxu0 %v1189
    %3957 = vmatpush1.msra.mxu0 %v1188
    %3958 = vmatprep.subr.mxu0 %v1197
    %3959 = vmatpush1.msra.mxu0 %v1196
    %3960 = vmatprep.subr.mxu0 %v1205
    %3961 = vmatpush1.msra.mxu0 %v1204
    %3962 = vmatprep.subr.mxu0 %v1213
    %3963 = vmatpush1.msra.mxu0 %v1212
    %3964 = vmatprep.subr.mxu0 %v1221
    %3965 = vmatpush1.msra.mxu0 %v1220
    %3966 = vmatprep.subr.mxu0 %v1229
    %3967 = vmatpush1.msra.mxu0 %v1228
    %3968 = vmatprep.subr.mxu0 %v1237
    %3969 = vmatpush1.msra.mxu0 %v1236
    %3970 = vmatprep.subr.mxu0 %v1245
    %3971 = vmatpush1.msra.mxu0 %v1244
    %3972 = vmatprep.subr.mxu0 %v1253
    %3973 = vmatpush1.msra.mxu0 %v1252
    %3974 = vmatprep.subr.mxu0 %v1261
    %3975 = vmatpush1.msra.mxu0 %v1260
    %3976 = vmatprep.subr.mxu0 %v1269
    %3977 = vmatpush1.msra.mxu0 %v1268
    %3978 = vmatprep.subr.mxu0 %v1277
    %3979 = vmatpush1.msra.mxu0 %v1276
    %3980 = vmatprep.subr.mxu0 %v1285
    %3981 = vmatpush1.msra.mxu0 %v1284
    %3982 = vmatprep.subr.mxu0 %v1293
    %3983 = vmatpush1.msra.mxu0 %v1292
    %3984 = vmatprep.subr.mxu0 %v1301
    %3985 = vmatpush1.msra.mxu0 %v1300
    %3986 = vmatprep.subr.mxu0 %v1309
    %3987 = vmatpush1.msra.mxu0 %v1308
    %3988 = vmatprep.subr.mxu0 %v1317
    %3989 = vmatpush1.msra.mxu0 %v1316
    %3990 = vmatprep.subr.mxu0 %v1325
    %3991 = vmatpush1.msra.mxu0 %v1324
    %3992 = vmatprep.subr.mxu0 %v1333
    %3993 = vmatpush1.msra.mxu0 %v1332
    %3994 = vmatprep.mubr.f32.mxu0 %v3856
    %3995 = vmatmul.mubr.f32.gmra.mrb[0].mxu0 %v3855
    %v3996 = vpop.f32.mrb[0].mxu0
    %v3997 = vadd.f32 0.0, %v3996
    %v3998 = vpop.f32.mrb[0].mxu0
    %v3999 = vadd.f32 0.0, %v3998
    %4000 = vdwg.mxu0
    %4001 = vmatprep.subr.mxu0 %v1087
    %4002 = vmatpush1.msra.mxu0 %v1086
    %4003 = vmatprep.subr.mxu0 %v1095
    %4004 = vmatpush1.msra.mxu0 %v1094
    %4005 = vmatprep.subr.mxu0 %v1103
    %4006 = vmatpush1.msra.mxu0 %v1102
    %4007 = vmatprep.subr.mxu0 %v1111
    %4008 = vmatpush1.msra.mxu0 %v1110
    %4009 = vmatprep.subr.mxu0 %v1119
    %4010 = vmatpush1.msra.mxu0 %v1118
    %4011 = vmatprep.subr.mxu0 %v1127
    %4012 = vmatpush1.msra.mxu0 %v1126
    %4013 = vmatprep.subr.mxu0 %v1135
    %4014 = vmatpush1.msra.mxu0 %v1134
    %4015 = vmatprep.subr.mxu0 %v1143
    %4016 = vmatpush1.msra.mxu0 %v1142
    %4017 = vmatprep.subr.mxu0 %v1151
    %4018 = vmatpush1.msra.mxu0 %v1150
    %4019 = vmatprep.subr.mxu0 %v1159
    %4020 = vmatpush1.msra.mxu0 %v1158
    %4021 = vmatprep.subr.mxu0 %v1167
    %4022 = vmatpush1.msra.mxu0 %v1166
    %4023 = vmatprep.subr.mxu0 %v1175
    %4024 = vmatpush1.msra.mxu0 %v1174
    %4025 = vmatprep.subr.mxu0 %v1183
    %4026 = vmatpush1.msra.mxu0 %v1182
    %4027 = vmatprep.subr.mxu0 %v1191
    %4028 = vmatpush1.msra.mxu0 %v1190
    %4029 = vmatprep.subr.mxu0 %v1199
    %4030 = vmatpush1.msra.mxu0 %v1198
    %4031 = vmatprep.subr.mxu0 %v1207
    %4032 = vmatpush1.msra.mxu0 %v1206
    %4033 = vmatprep.subr.mxu0 %v1215
    %4034 = vmatpush1.msra.mxu0 %v1214
    %4035 = vmatprep.subr.mxu0 %v1223
    %4036 = vmatpush1.msra.mxu0 %v1222
    %4037 = vmatprep.subr.mxu0 %v1231
    %4038 = vmatpush1.msra.mxu0 %v1230
    %4039 = vmatprep.subr.mxu0 %v1239
    %4040 = vmatpush1.msra.mxu0 %v1238
    %4041 = vmatprep.subr.mxu0 %v1247
    %4042 = vmatpush1.msra.mxu0 %v1246
    %4043 = vmatprep.subr.mxu0 %v1255
    %4044 = vmatpush1.msra.mxu0 %v1254
    %4045 = vmatprep.subr.mxu0 %v1263
    %4046 = vmatpush1.msra.mxu0 %v1262
    %4047 = vmatprep.subr.mxu0 %v1271
    %4048 = vmatpush1.msra.mxu0 %v1270
    %4049 = vmatprep.subr.mxu0 %v1279
    %4050 = vmatpush1.msra.mxu0 %v1278
    %4051 = vmatprep.subr.mxu0 %v1287
    %4052 = vmatpush1.msra.mxu0 %v1286
    %4053 = vmatprep.subr.mxu0 %v1295
    %4054 = vmatpush1.msra.mxu0 %v1294
    %4055 = vmatprep.subr.mxu0 %v1303
    %4056 = vmatpush1.msra.mxu0 %v1302
    %4057 = vmatprep.subr.mxu0 %v1311
    %4058 = vmatpush1.msra.mxu0 %v1310
    %4059 = vmatprep.subr.mxu0 %v1319
    %4060 = vmatpush1.msra.mxu0 %v1318
    %4061 = vmatprep.subr.mxu0 %v1327
    %4062 = vmatpush1.msra.mxu0 %v1326
    %4063 = vmatprep.subr.mxu0 %v1335
    %4064 = vmatpush1.msra.mxu0 %v1334
    %4065 = vmatprep.mubr.f32.mxu0 %v3856
    %4066 = vmatmul.mubr.f32.gmra.mrb[0].mxu0 %v3855
    %v4067 = vpop.f32.mrb[0].mxu0
    %v4068 = vadd.f32 0.0, %v4067
    %v4069 = vpop.f32.mrb[0].mxu0
    %v4070 = vadd.f32 0.0, %v4069
    %4071 = vdwg.mxu0
    %4072 = vmatprep.subr.mxu0 %v1089
    %4073 = vmatpush1.msra.mxu0 %v1088
    %4074 = vmatprep.subr.mxu0 %v1097
    %4075 = vmatpush1.msra.mxu0 %v1096
    %4076 = vmatprep.subr.mxu0 %v1105
    %4077 = vmatpush1.msra.mxu0 %v1104
    %4078 = vmatprep.subr.mxu0 %v1113
    %4079 = vmatpush1.msra.mxu0 %v1112
    %4080 = vmatprep.subr.mxu0 %v1121
    %4081 = vmatpush1.msra.mxu0 %v1120
    %4082 = vmatprep.subr.mxu0 %v1129
    %4083 = vmatpush1.msra.mxu0 %v1128
    %4084 = vmatprep.subr.mxu0 %v1137
    %4085 = vmatpush1.msra.mxu0 %v1136
    %4086 = vmatprep.subr.mxu0 %v1145
    %4087 = vmatpush1.msra.mxu0 %v1144
    %4088 = vmatprep.subr.mxu0 %v1153
    %4089 = vmatpush1.msra.mxu0 %v1152
    %4090 = vmatprep.subr.mxu0 %v1161
    %4091 = vmatpush1.msra.mxu0 %v1160
    %4092 = vmatprep.subr.mxu0 %v1169
    %4093 = vmatpush1.msra.mxu0 %v1168
    %4094 = vmatprep.subr.mxu0 %v1177
    %4095 = vmatpush1.msra.mxu0 %v1176
    %4096 = vmatprep.subr.mxu0 %v1185
    %4097 = vmatpush1.msra.mxu0 %v1184
    %4098 = vmatprep.subr.mxu0 %v1193
    %4099 = vmatpush1.msra.mxu0 %v1192
    %4100 = vmatprep.subr.mxu0 %v1201
    %4101 = vmatpush1.msra.mxu0 %v1200
    %4102 = vmatprep.subr.mxu0 %v1209
    %4103 = vmatpush1.msra.mxu0 %v1208
    %4104 = vmatprep.subr.mxu0 %v1217
    %4105 = vmatpush1.msra.mxu0 %v1216
    %4106 = vmatprep.subr.mxu0 %v1225
    %4107 = vmatpush1.msra.mxu0 %v1224
    %4108 = vmatprep.subr.mxu0 %v1233
    %4109 = vmatpush1.msra.mxu0 %v1232
    %4110 = vmatprep.subr.mxu0 %v1241
    %4111 = vmatpush1.msra.mxu0 %v1240
    %4112 = vmatprep.subr.mxu0 %v1249
    %4113 = vmatpush1.msra.mxu0 %v1248
    %4114 = vmatprep.subr.mxu0 %v1257
    %4115 = vmatpush1.msra.mxu0 %v1256
    %4116 = vmatprep.subr.mxu0 %v1265
    %4117 = vmatpush1.msra.mxu0 %v1264
    %4118 = vmatprep.subr.mxu0 %v1273
    %4119 = vmatpush1.msra.mxu0 %v1272
    %4120 = vmatprep.subr.mxu0 %v1281
    %4121 = vmatpush1.msra.mxu0 %v1280
    %4122 = vmatprep.subr.mxu0 %v1289
    %4123 = vmatpush1.msra.mxu0 %v1288
    %4124 = vmatprep.subr.mxu0 %v1297
    %4125 = vmatpush1.msra.mxu0 %v1296
    %4126 = vmatprep.subr.mxu0 %v1305
    %4127 = vmatpush1.msra.mxu0 %v1304
    %4128 = vmatprep.subr.mxu0 %v1313
    %4129 = vmatpush1.msra.mxu0 %v1312
    %4130 = vmatprep.subr.mxu0 %v1321
    %4131 = vmatpush1.msra.mxu0 %v1320
    %4132 = vmatprep.subr.mxu0 %v1329
    %4133 = vmatpush1.msra.mxu0 %v1328
    %4134 = vmatprep.subr.mxu0 %v1337
    %4135 = vmatpush1.msra.mxu0 %v1336
    %4136 = vmatprep.mubr.f32.mxu0 %v3856
    %4137 = vmatmul.mubr.f32.gmra.mrb[0].mxu0 %v3855
    %v4138 = vpop.f32.mrb[0].mxu0
    %v4139 = vadd.f32 0.0, %v4138
    %v4140 = vpop.f32.mrb[0].mxu0
    %v4141 = vadd.f32 0.0, %v4140
    %4142 = vdwg.mxu0
    %v4151 = vrot.slane %v3926, 2
    %v4152 = vrot.slane %v3928, 2
    %v4153 = vrot.slane %v3997, 2
    %v4154 = vrot.slane %v3999, 2
    %v4155 = vrot.slane %v4068, 2
    %v4156 = vrot.slane %v4070, 2
    %v4157 = vrot.slane %v4139, 2
    %v4158 = vrot.slane %v4141, 2
    %v4167 = vadd.f32 %v3845, %v4151
    %v4168 = vadd.f32 %v3846, %v4152
    %v4169 = vadd.f32 %v3847, %v4153
    %v4170 = vadd.f32 %v3848, %v4154
    %v4171 = vadd.f32 %v3849, %v4155
    %v4172 = vadd.f32 %v3850, %v4156
    %v4173 = vadd.f32 %v3851, %v4157
    %v4174 = vadd.f32 %v3852, %v4158
    %v4175 = vld [vmem:[#allocation3 + $0x40] sm:$0x3]
    %v4176 = vld [vmem:[#allocation3 + $0x48] sm:$0x3]
    %v4177 = vld [vmem:[#allocation3 + $0x50] sm:$0x3]
    %v4178 = vld [vmem:[#allocation3 + $0x58] sm:$0x3]
    %v4179 = vld [vmem:[#allocation3 + $0x60] sm:$0x3]
    %v4180 = vld [vmem:[#allocation3 + $0x68] sm:$0x3]
    %v4181 = vld [vmem:[#allocation3 + $0x70] sm:$0x3]
    %v4182 = vld [vmem:[#allocation3 + $0x78] sm:$0x3]
    %v4185 = vrot.slane %v3843, 2
    %v4186 = vrot.slane %v3844, 2
    %4189 = vmatprep.subr.mxu0 %v1340
    %4190 = vmatpush1.msra.mxu0 %v1339
    %4191 = vmatprep.subr.mxu0 %v1348
    %4192 = vmatpush1.msra.mxu0 %v1347
    %4193 = vmatprep.subr.mxu0 %v1356
    %4194 = vmatpush1.msra.mxu0 %v1355
    %4195 = vmatprep.subr.mxu0 %v1364
    %4196 = vmatpush1.msra.mxu0 %v1363
    %4197 = vmatprep.subr.mxu0 %v1372
    %4198 = vmatpush1.msra.mxu0 %v1371
    %4199 = vmatprep.subr.mxu0 %v1380
    %4200 = vmatpush1.msra.mxu0 %v1379
    %4201 = vmatprep.subr.mxu0 %v1388
    %4202 = vmatpush1.msra.mxu0 %v1387
    %4203 = vmatprep.subr.mxu0 %v1396
    %4204 = vmatpush1.msra.mxu0 %v1395
    %4205 = vmatprep.subr.mxu0 %v1404
    %4206 = vmatpush1.msra.mxu0 %v1403
    %4207 = vmatprep.subr.mxu0 %v1412
    %4208 = vmatpush1.msra.mxu0 %v1411
    %4209 = vmatprep.subr.mxu0 %v1420
    %4210 = vmatpush1.msra.mxu0 %v1419
    %4211 = vmatprep.subr.mxu0 %v1428
    %4212 = vmatpush1.msra.mxu0 %v1427
    %4213 = vmatprep.subr.mxu0 %v1436
    %4214 = vmatpush1.msra.mxu0 %v1435
    %4215 = vmatprep.subr.mxu0 %v1444
    %4216 = vmatpush1.msra.mxu0 %v1443
    %4217 = vmatprep.subr.mxu0 %v1452
    %4218 = vmatpush1.msra.mxu0 %v1451
    %4219 = vmatprep.subr.mxu0 %v1460
    %4220 = vmatpush1.msra.mxu0 %v1459
    %4221 = vmatprep.subr.mxu0 %v1468
    %4222 = vmatpush1.msra.mxu0 %v1467
    %4223 = vmatprep.subr.mxu0 %v1476
    %4224 = vmatpush1.msra.mxu0 %v1475
    %4225 = vmatprep.subr.mxu0 %v1484
    %4226 = vmatpush1.msra.mxu0 %v1483
    %4227 = vmatprep.subr.mxu0 %v1492
    %4228 = vmatpush1.msra.mxu0 %v1491
    %4229 = vmatprep.subr.mxu0 %v1500
    %4230 = vmatpush1.msra.mxu0 %v1499
    %4231 = vmatprep.subr.mxu0 %v1508
    %4232 = vmatpush1.msra.mxu0 %v1507
    %4233 = vmatprep.subr.mxu0 %v1516
    %4234 = vmatpush1.msra.mxu0 %v1515
    %4235 = vmatprep.subr.mxu0 %v1524
    %4236 = vmatpush1.msra.mxu0 %v1523
    %4237 = vmatprep.subr.mxu0 %v1532
    %4238 = vmatpush1.msra.mxu0 %v1531
    %4239 = vmatprep.subr.mxu0 %v1540
    %4240 = vmatpush1.msra.mxu0 %v1539
    %4241 = vmatprep.subr.mxu0 %v1548
    %4242 = vmatpush1.msra.mxu0 %v1547
    %4243 = vmatprep.subr.mxu0 %v1556
    %4244 = vmatpush1.msra.mxu0 %v1555
    %4245 = vmatprep.subr.mxu0 %v1564
    %4246 = vmatpush1.msra.mxu0 %v1563
    %4247 = vmatprep.subr.mxu0 %v1572
    %4248 = vmatpush1.msra.mxu0 %v1571
    %4249 = vmatprep.subr.mxu0 %v1580
    %4250 = vmatpush1.msra.mxu0 %v1579
    %4251 = vmatprep.subr.mxu0 %v1588
    %4252 = vmatpush1.msra.mxu0 %v1587
    %4253 = vmatprep.mubr.f32.mxu0 %v4186
    %4254 = vmatmul.mubr.f32.gmra.mrb[0].mxu0 %v4185
    %v4255 = vpop.f32.mrb[0].mxu0
    %v4256 = vadd.f32 0.0, %v4255
    %v4257 = vpop.f32.mrb[0].mxu0
    %v4258 = vadd.f32 0.0, %v4257
    %4259 = vdwg.mxu0
    %4260 = vmatprep.subr.mxu0 %v1342
    %4261 = vmatpush1.msra.mxu0 %v1341
    %4262 = vmatprep.subr.mxu0 %v1350
    %4263 = vmatpush1.msra.mxu0 %v1349
    %4264 = vmatprep.subr.mxu0 %v1358
    %4265 = vmatpush1.msra.mxu0 %v1357
    %4266 = vmatprep.subr.mxu0 %v1366
    %4267 = vmatpush1.msra.mxu0 %v1365
    %4268 = vmatprep.subr.mxu0 %v1374
    %4269 = vmatpush1.msra.mxu0 %v1373
    %4270 = vmatprep.subr.mxu0 %v1382
    %4271 = vmatpush1.msra.mxu0 %v1381
    %4272 = vmatprep.subr.mxu0 %v1390
    %4273 = vmatpush1.msra.mxu0 %v1389
    %4274 = vmatprep.subr.mxu0 %v1398
    %4275 = vmatpush1.msra.mxu0 %v1397
    %4276 = vmatprep.subr.mxu0 %v1406
    %4277 = vmatpush1.msra.mxu0 %v1405
    %4278 = vmatprep.subr.mxu0 %v1414
    %4279 = vmatpush1.msra.mxu0 %v1413
    %4280 = vmatprep.subr.mxu0 %v1422
    %4281 = vmatpush1.msra.mxu0 %v1421
    %4282 = vmatprep.subr.mxu0 %v1430
    %4283 = vmatpush1.msra.mxu0 %v1429
    %4284 = vmatprep.subr.mxu0 %v1438
    %4285 = vmatpush1.msra.mxu0 %v1437
    %4286 = vmatprep.subr.mxu0 %v1446
    %4287 = vmatpush1.msra.mxu0 %v1445
    %4288 = vmatprep.subr.mxu0 %v1454
    %4289 = vmatpush1.msra.mxu0 %v1453
    %4290 = vmatprep.subr.mxu0 %v1462
    %4291 = vmatpush1.msra.mxu0 %v1461
    %4292 = vmatprep.subr.mxu0 %v1470
    %4293 = vmatpush1.msra.mxu0 %v1469
    %4294 = vmatprep.subr.mxu0 %v1478
    %4295 = vmatpush1.msra.mxu0 %v1477
    %4296 = vmatprep.subr.mxu0 %v1486
    %4297 = vmatpush1.msra.mxu0 %v1485
    %4298 = vmatprep.subr.mxu0 %v1494
    %4299 = vmatpush1.msra.mxu0 %v1493
    %4300 = vmatprep.subr.mxu0 %v1502
    %4301 = vmatpush1.msra.mxu0 %v1501
    %4302 = vmatprep.subr.mxu0 %v1510
    %4303 = vmatpush1.msra.mxu0 %v1509
    %4304 = vmatprep.subr.mxu0 %v1518
    %4305 = vmatpush1.msra.mxu0 %v1517
    %4306 = vmatprep.subr.mxu0 %v1526
    %4307 = vmatpush1.msra.mxu0 %v1525
    %4308 = vmatprep.subr.mxu0 %v1534
    %4309 = vmatpush1.msra.mxu0 %v1533
    %4310 = vmatprep.subr.mxu0 %v1542
    %4311 = vmatpush1.msra.mxu0 %v1541
    %4312 = vmatprep.subr.mxu0 %v1550
    %4313 = vmatpush1.msra.mxu0 %v1549
    %4314 = vmatprep.subr.mxu0 %v1558
    %4315 = vmatpush1.msra.mxu0 %v1557
    %4316 = vmatprep.subr.mxu0 %v1566
    %4317 = vmatpush1.msra.mxu0 %v1565
    %4318 = vmatprep.subr.mxu0 %v1574
    %4319 = vmatpush1.msra.mxu0 %v1573
    %4320 = vmatprep.subr.mxu0 %v1582
    %4321 = vmatpush1.msra.mxu0 %v1581
    %4322 = vmatprep.subr.mxu0 %v1590
    %4323 = vmatpush1.msra.mxu0 %v1589
    %4324 = vmatprep.mubr.f32.mxu0 %v4186
    %4325 = vmatmul.mubr.f32.gmra.mrb[0].mxu0 %v4185
    %v4326 = vpop.f32.mrb[0].mxu0
    %v4327 = vadd.f32 0.0, %v4326
    %v4328 = vpop.f32.mrb[0].mxu0
    %v4329 = vadd.f32 0.0, %v4328
    %4330 = vdwg.mxu0
    %4331 = vmatprep.subr.mxu0 %v1344
    %4332 = vmatpush1.msra.mxu0 %v1343
    %4333 = vmatprep.subr.mxu0 %v1352
    %4334 = vmatpush1.msra.mxu0 %v1351
    %4335 = vmatprep.subr.mxu0 %v1360
    %4336 = vmatpush1.msra.mxu0 %v1359
    %4337 = vmatprep.subr.mxu0 %v1368
    %4338 = vmatpush1.msra.mxu0 %v1367
    %4339 = vmatprep.subr.mxu0 %v1376
    %4340 = vmatpush1.msra.mxu0 %v1375
    %4341 = vmatprep.subr.mxu0 %v1384
    %4342 = vmatpush1.msra.mxu0 %v1383
    %4343 = vmatprep.subr.mxu0 %v1392
    %4344 = vmatpush1.msra.mxu0 %v1391
    %4345 = vmatprep.subr.mxu0 %v1400
    %4346 = vmatpush1.msra.mxu0 %v1399
    %4347 = vmatprep.subr.mxu0 %v1408
    %4348 = vmatpush1.msra.mxu0 %v1407
    %4349 = vmatprep.subr.mxu0 %v1416
    %4350 = vmatpush1.msra.mxu0 %v1415
    %4351 = vmatprep.subr.mxu0 %v1424
    %4352 = vmatpush1.msra.mxu0 %v1423
    %4353 = vmatprep.subr.mxu0 %v1432
    %4354 = vmatpush1.msra.mxu0 %v1431
    %4355 = vmatprep.subr.mxu0 %v1440
    %4356 = vmatpush1.msra.mxu0 %v1439
    %4357 = vmatprep.subr.mxu0 %v1448
    %4358 = vmatpush1.msra.mxu0 %v1447
    %4359 = vmatprep.subr.mxu0 %v1456
    %4360 = vmatpush1.msra.mxu0 %v1455
    %4361 = vmatprep.subr.mxu0 %v1464
    %4362 = vmatpush1.msra.mxu0 %v1463
    %4363 = vmatprep.subr.mxu0 %v1472
    %4364 = vmatpush1.msra.mxu0 %v1471
    %4365 = vmatprep.subr.mxu0 %v1480
    %4366 = vmatpush1.msra.mxu0 %v1479
    %4367 = vmatprep.subr.mxu0 %v1488
    %4368 = vmatpush1.msra.mxu0 %v1487
    %4369 = vmatprep.subr.mxu0 %v1496
    %4370 = vmatpush1.msra.mxu0 %v1495
    %4371 = vmatprep.subr.mxu0 %v1504
    %4372 = vmatpush1.msra.mxu0 %v1503
    %4373 = vmatprep.subr.mxu0 %v1512
    %4374 = vmatpush1.msra.mxu0 %v1511
    %4375 = vmatprep.subr.mxu0 %v1520
    %4376 = vmatpush1.msra.mxu0 %v1519
    %4377 = vmatprep.subr.mxu0 %v1528
    %4378 = vmatpush1.msra.mxu0 %v1527
    %4379 = vmatprep.subr.mxu0 %v1536
    %4380 = vmatpush1.msra.mxu0 %v1535
    %4381 = vmatprep.subr.mxu0 %v1544
    %4382 = vmatpush1.msra.mxu0 %v1543
    %4383 = vmatprep.subr.mxu0 %v1552
    %4384 = vmatpush1.msra.mxu0 %v1551
    %4385 = vmatprep.subr.mxu0 %v1560
    %4386 = vmatpush1.msra.mxu0 %v1559
    %4387 = vmatprep.subr.mxu0 %v1568
    %4388 = vmatpush1.msra.mxu0 %v1567
    %4389 = vmatprep.subr.mxu0 %v1576
    %4390 = vmatpush1.msra.mxu0 %v1575
    %4391 = vmatprep.subr.mxu0 %v1584
    %4392 = vmatpush1.msra.mxu0 %v1583
    %4393 = vmatprep.subr.mxu0 %v1592
    %4394 = vmatpush1.msra.mxu0 %v1591
    %4395 = vmatprep.mubr.f32.mxu0 %v4186
    %4396 = vmatmul.mubr.f32.gmra.mrb[0].mxu0 %v4185
    %v4397 = vpop.f32.mrb[0].mxu0
    %v4398 = vadd.f32 0.0, %v4397
    %v4399 = vpop.f32.mrb[0].mxu0
    %v4400 = vadd.f32 0.0, %v4399
    %4401 = vdwg.mxu0
    %4402 = vmatprep.subr.mxu0 %v1346
    %4403 = vmatpush1.msra.mxu0 %v1345
    %4404 = vmatprep.subr.mxu0 %v1354
    %4405 = vmatpush1.msra.mxu0 %v1353
    %4406 = vmatprep.subr.mxu0 %v1362
    %4407 = vmatpush1.msra.mxu0 %v1361
    %4408 = vmatprep.subr.mxu0 %v1370
    %4409 = vmatpush1.msra.mxu0 %v1369
    %4410 = vmatprep.subr.mxu0 %v1378
    %4411 = vmatpush1.msra.mxu0 %v1377
    %4412 = vmatprep.subr.mxu0 %v1386
    %4413 = vmatpush1.msra.mxu0 %v1385
    %4414 = vmatprep.subr.mxu0 %v1394
    %4415 = vmatpush1.msra.mxu0 %v1393
    %4416 = vmatprep.subr.mxu0 %v1402
    %4417 = vmatpush1.msra.mxu0 %v1401
    %4418 = vmatprep.subr.mxu0 %v1410
    %4419 = vmatpush1.msra.mxu0 %v1409
    %4420 = vmatprep.subr.mxu0 %v1418
    %4421 = vmatpush1.msra.mxu0 %v1417
    %4422 = vmatprep.subr.mxu0 %v1426
    %4423 = vmatpush1.msra.mxu0 %v1425
    %4424 = vmatprep.subr.mxu0 %v1434
    %4425 = vmatpush1.msra.mxu0 %v1433
    %4426 = vmatprep.subr.mxu0 %v1442
    %4427 = vmatpush1.msra.mxu0 %v1441
    %4428 = vmatprep.subr.mxu0 %v1450
    %4429 = vmatpush1.msra.mxu0 %v1449
    %4430 = vmatprep.subr.mxu0 %v1458
    %4431 = vmatpush1.msra.mxu0 %v1457
    %4432 = vmatprep.subr.mxu0 %v1466
    %4433 = vmatpush1.msra.mxu0 %v1465
    %4434 = vmatprep.subr.mxu0 %v1474
    %4435 = vmatpush1.msra.mxu0 %v1473
    %4436 = vmatprep.subr.mxu0 %v1482
    %4437 = vmatpush1.msra.mxu0 %v1481
    %4438 = vmatprep.subr.mxu0 %v1490
    %4439 = vmatpush1.msra.mxu0 %v1489
    %4440 = vmatprep.subr.mxu0 %v1498
    %4441 = vmatpush1.msra.mxu0 %v1497
    %4442 = vmatprep.subr.mxu0 %v1506
    %4443 = vmatpush1.msra.mxu0 %v1505
    %4444 = vmatprep.subr.mxu0 %v1514
    %4445 = vmatpush1.msra.mxu0 %v1513
    %4446 = vmatprep.subr.mxu0 %v1522
    %4447 = vmatpush1.msra.mxu0 %v1521
    %4448 = vmatprep.subr.mxu0 %v1530
    %4449 = vmatpush1.msra.mxu0 %v1529
    %4450 = vmatprep.subr.mxu0 %v1538
    %4451 = vmatpush1.msra.mxu0 %v1537
    %4452 = vmatprep.subr.mxu0 %v1546
    %4453 = vmatpush1.msra.mxu0 %v1545
    %4454 = vmatprep.subr.mxu0 %v1554
    %4455 = vmatpush1.msra.mxu0 %v1553
    %4456 = vmatprep.subr.mxu0 %v1562
    %4457 = vmatpush1.msra.mxu0 %v1561
    %4458 = vmatprep.subr.mxu0 %v1570
    %4459 = vmatpush1.msra.mxu0 %v1569
    %4460 = vmatprep.subr.mxu0 %v1578
    %4461 = vmatpush1.msra.mxu0 %v1577
    %4462 = vmatprep.subr.mxu0 %v1586
    %4463 = vmatpush1.msra.mxu0 %v1585
    %4464 = vmatprep.subr.mxu0 %v1594
    %4465 = vmatpush1.msra.mxu0 %v1593
    %4466 = vmatprep.mubr.f32.mxu0 %v4186
    %4467 = vmatmul.mubr.f32.gmra.mrb[0].mxu0 %v4185
    %v4468 = vpop.f32.mrb[0].mxu0
    %v4469 = vadd.f32 0.0, %v4468
    %v4470 = vpop.f32.mrb[0].mxu0
    %v4471 = vadd.f32 0.0, %v4470
    %4472 = vdwg.mxu0
    %v4473 = vadd.f32 %v4175, %v4256
    %v4474 = vadd.f32 %v4176, %v4258
    %v4475 = vadd.f32 %v4177, %v4327
    %v4476 = vadd.f32 %v4178, %v4329
    %v4477 = vadd.f32 %v4179, %v4398
    %v4478 = vadd.f32 %v4180, %v4400
    %v4479 = vadd.f32 %v4181, %v4469
    %v4480 = vadd.f32 %v4182, %v4471
    %v4481 = vxor.u32 %v4167, 2147483648
    %v4482 = vxor.u32 %v4168, 2147483648
    %v4483 = vmul.f32 %v4481, 1.442695
    %v4484 = vpow.pop %v4483
    %v4485 = vmul.f32 %v4482, 1.442695
    %v4486 = vpow.pop %v4485
    %v4487 = vadd.f32 %v4484, 1.0
    %v4488 = vadd.f32 %v4486, 1.0
    %v4489 = vrcp.pop %v4487
    %v4490 = vmul.f32 1.0, %v4489
    %v4491 = vrcp.pop %v4488
    %v4492 = vmul.f32 1.0, %v4491
    %v4493 = vxor.u32 %v4169, 2147483648
    %v4494 = vxor.u32 %v4170, 2147483648
    %v4495 = vmul.f32 %v4493, 1.442695
    %v4496 = vpow.pop %v4495
    %v4497 = vmul.f32 %v4494, 1.442695
    %v4498 = vpow.pop %v4497
    %v4499 = vadd.f32 %v4496, 1.0
    %v4500 = vadd.f32 %v4498, 1.0
    %v4501 = vrcp.pop %v4499
    %v4502 = vmul.f32 1.0, %v4501
    %v4503 = vrcp.pop %v4500
    %v4504 = vmul.f32 1.0, %v4503
    %v4505 = vtanh.pop %v4171
    %v4506 = vtanh.pop %v4172
    %v4507 = vxor.u32 %v4173, 2147483648
    %v4508 = vxor.u32 %v4174, 2147483648
    %v4509 = vmul.f32 %v4507, 1.442695
    %v4510 = vpow.pop %v4509
    %v4511 = vmul.f32 %v4508, 1.442695
    %v4512 = vpow.pop %v4511
    %v4513 = vadd.f32 %v4510, 1.0
    %v4514 = vadd.f32 %v4512, 1.0
    %v4515 = vrcp.pop %v4513
    %v4516 = vmul.f32 1.0, %v4515
    %v4517 = vrcp.pop %v4514
    %v4518 = vmul.f32 1.0, %v4517
    %v4521 = vrot.slane %v3785, 6
    %v4522 = vrot.slane %v3786, 6
    %v4525 = vmul.f32 %v4502, %v4521
    %v4526 = vmul.f32 %v4504, %v4522
    %v4527 = vmul.f32 %v4490, %v4505
    %v4528 = vmul.f32 %v4492, %v4506
    %v4529 = vadd.f32 %v4525, %v4527
    %v4530 = vadd.f32 %v4526, %v4528
    %v4531 = vtanh.pop %v4529
    %v4532 = vtanh.pop %v4530
    %v4533 = vmul.f32 %v4516, %v4531
    %v4534 = vmul.f32 %v4518, %v4532
    %v4535 = vxor.u32 %v4473, 2147483648
    %v4536 = vxor.u32 %v4474, 2147483648
    %v4537 = vmul.f32 %v4535, 1.442695
    %v4538 = vpow.pop %v4537
    %v4539 = vmul.f32 %v4536, 1.442695
    %v4540 = vpow.pop %v4539
    %v4541 = vadd.f32 %v4538, 1.0
    %v4542 = vadd.f32 %v4540, 1.0
    %v4543 = vrcp.pop %v4541
    %v4544 = vmul.f32 1.0, %v4543
    %v4545 = vrcp.pop %v4542
    %v4546 = vmul.f32 1.0, %v4545
    %v4547 = vxor.u32 %v4475, 2147483648
    %v4548 = vxor.u32 %v4476, 2147483648
    %v4549 = vmul.f32 %v4547, 1.442695
    %v4550 = vpow.pop %v4549
    %v4551 = vmul.f32 %v4548, 1.442695
    %v4552 = vpow.pop %v4551
    %v4553 = vadd.f32 %v4550, 1.0
    %v4554 = vadd.f32 %v4552, 1.0
    %v4555 = vrcp.pop %v4553
    %v4556 = vmul.f32 1.0, %v4555
    %v4557 = vrcp.pop %v4554
    %v4558 = vmul.f32 1.0, %v4557
    %v4559 = vtanh.pop %v4477
    %v4560 = vtanh.pop %v4478
    %v4561 = vxor.u32 %v4479, 2147483648
    %v4562 = vxor.u32 %v4480, 2147483648
    %v4563 = vmul.f32 %v4561, 1.442695
    %v4564 = vpow.pop %v4563
    %v4565 = vmul.f32 %v4562, 1.442695
    %v4566 = vpow.pop %v4565
    %v4567 = vadd.f32 %v4564, 1.0
    %v4568 = vadd.f32 %v4566, 1.0
    %v4569 = vrcp.pop %v4567
    %v4570 = vmul.f32 1.0, %v4569
    %v4571 = vrcp.pop %v4568
    %v4572 = vmul.f32 1.0, %v4571
    %v4575 = vrot.slane %v3839, 2
    %v4576 = vrot.slane %v3840, 2
    %v4579 = vmul.f32 %v4556, %v4575
    %v4580 = vmul.f32 %v4558, %v4576
    %v4581 = vmul.f32 %v4544, %v4559
    %v4582 = vmul.f32 %v4546, %v4560
    %v4583 = vadd.f32 %v4579, %v4581
    %v4584 = vadd.f32 %v4580, %v4582
    %v4585 = vtanh.pop %v4583
    %v4586 = vtanh.pop %v4584
    %v4587 = vmul.f32 %v4570, %v4585
    %v4588 = vmul.f32 %v4572, %v4586
    %v4589 = vld [vmem:[#allocation2 + $0x40] sm:$0x3]
    %v4590 = vld [vmem:[#allocation2 + $0x48] sm:$0x3]
    %v4591 = vld [vmem:[#allocation2 + $0x50] sm:$0x3]
    %v4592 = vld [vmem:[#allocation2 + $0x58] sm:$0x3]
    %v4593 = vld [vmem:[#allocation2 + $0x60] sm:$0x3]
    %v4594 = vld [vmem:[#allocation2 + $0x68] sm:$0x3]
    %v4595 = vld [vmem:[#allocation2 + $0x70] sm:$0x3]
    %v4596 = vld [vmem:[#allocation2 + $0x78] sm:$0x3]
    %v4599 = vrot.slane %v4533, 6
    %v4600 = vrot.slane %v4534, 6
    %4603 = vmatprep.subr.mxu0 %v1083
    %4604 = vmatpush1.msra.mxu0 %v1082
    %4605 = vmatprep.subr.mxu0 %v1091
    %4606 = vmatpush1.msra.mxu0 %v1090
    %4607 = vmatprep.subr.mxu0 %v1099
    %4608 = vmatpush1.msra.mxu0 %v1098
    %4609 = vmatprep.subr.mxu0 %v1107
    %4610 = vmatpush1.msra.mxu0 %v1106
    %4611 = vmatprep.subr.mxu0 %v1115
    %4612 = vmatpush1.msra.mxu0 %v1114
    %4613 = vmatprep.subr.mxu0 %v1123
    %4614 = vmatpush1.msra.mxu0 %v1122
    %4615 = vmatprep.subr.mxu0 %v1131
    %4616 = vmatpush1.msra.mxu0 %v1130
    %4617 = vmatprep.subr.mxu0 %v1139
    %4618 = vmatpush1.msra.mxu0 %v1138
    %4619 = vmatprep.subr.mxu0 %v1147
    %4620 = vmatpush1.msra.mxu0 %v1146
    %4621 = vmatprep.subr.mxu0 %v1155
    %4622 = vmatpush1.msra.mxu0 %v1154
    %4623 = vmatprep.subr.mxu0 %v1163
    %4624 = vmatpush1.msra.mxu0 %v1162
    %4625 = vmatprep.subr.mxu0 %v1171
    %4626 = vmatpush1.msra.mxu0 %v1170
    %4627 = vmatprep.subr.mxu0 %v1179
    %4628 = vmatpush1.msra.mxu0 %v1178
    %4629 = vmatprep.subr.mxu0 %v1187
    %4630 = vmatpush1.msra.mxu0 %v1186
    %4631 = vmatprep.subr.mxu0 %v1195
    %4632 = vmatpush1.msra.mxu0 %v1194
    %4633 = vmatprep.subr.mxu0 %v1203
    %4634 = vmatpush1.msra.mxu0 %v1202
    %4635 = vmatprep.subr.mxu0 %v1211
    %4636 = vmatpush1.msra.mxu0 %v1210
    %4637 = vmatprep.subr.mxu0 %v1219
    %4638 = vmatpush1.msra.mxu0 %v1218
    %4639 = vmatprep.subr.mxu0 %v1227
    %4640 = vmatpush1.msra.mxu0 %v1226
    %4641 = vmatprep.subr.mxu0 %v1235
    %4642 = vmatpush1.msra.mxu0 %v1234
    %4643 = vmatprep.subr.mxu0 %v1243
    %4644 = vmatpush1.msra.mxu0 %v1242
    %4645 = vmatprep.subr.mxu0 %v1251
    %4646 = vmatpush1.msra.mxu0 %v1250
    %4647 = vmatprep.subr.mxu0 %v1259
    %4648 = vmatpush1.msra.mxu0 %v1258
    %4649 = vmatprep.subr.mxu0 %v1267
    %4650 = vmatpush1.msra.mxu0 %v1266
    %4651 = vmatprep.subr.mxu0 %v1275
    %4652 = vmatpush1.msra.mxu0 %v1274
    %4653 = vmatprep.subr.mxu0 %v1283
    %4654 = vmatpush1.msra.mxu0 %v1282
    %4655 = vmatprep.subr.mxu0 %v1291
    %4656 = vmatpush1.msra.mxu0 %v1290
    %4657 = vmatprep.subr.mxu0 %v1299
    %4658 = vmatpush1.msra.mxu0 %v1298
    %4659 = vmatprep.subr.mxu0 %v1307
    %4660 = vmatpush1.msra.mxu0 %v1306
    %4661 = vmatprep.subr.mxu0 %v1315
    %4662 = vmatpush1.msra.mxu0 %v1314
    %4663 = vmatprep.subr.mxu0 %v1323
    %4664 = vmatpush1.msra.mxu0 %v1322
    %4665 = vmatprep.subr.mxu0 %v1331
    %4666 = vmatpush1.msra.mxu0 %v1330
    %4667 = vmatprep.mubr.f32.mxu0 %v4600
    %4668 = vmatmul.mubr.f32.gmra.mrb[0].mxu0 %v4599
    %v4669 = vpop.f32.mrb[0].mxu0
    %v4670 = vadd.f32 0.0, %v4669
    %v4671 = vpop.f32.mrb[0].mxu0
    %v4672 = vadd.f32 0.0, %v4671
    %4673 = vdwg.mxu0
    %4674 = vmatprep.subr.mxu0 %v1085
    %4675 = vmatpush1.msra.mxu0 %v1084
    %4676 = vmatprep.subr.mxu0 %v1093
    %4677 = vmatpush1.msra.mxu0 %v1092
    %4678 = vmatprep.subr.mxu0 %v1101
    %4679 = vmatpush1.msra.mxu0 %v1100
    %4680 = vmatprep.subr.mxu0 %v1109
    %4681 = vmatpush1.msra.mxu0 %v1108
    %4682 = vmatprep.subr.mxu0 %v1117
    %4683 = vmatpush1.msra.mxu0 %v1116
    %4684 = vmatprep.subr.mxu0 %v1125
    %4685 = vmatpush1.msra.mxu0 %v1124
    %4686 = vmatprep.subr.mxu0 %v1133
    %4687 = vmatpush1.msra.mxu0 %v1132
    %4688 = vmatprep.subr.mxu0 %v1141
    %4689 = vmatpush1.msra.mxu0 %v1140
    %4690 = vmatprep.subr.mxu0 %v1149
    %4691 = vmatpush1.msra.mxu0 %v1148
    %4692 = vmatprep.subr.mxu0 %v1157
    %4693 = vmatpush1.msra.mxu0 %v1156
    %4694 = vmatprep.subr.mxu0 %v1165
    %4695 = vmatpush1.msra.mxu0 %v1164
    %4696 = vmatprep.subr.mxu0 %v1173
    %4697 = vmatpush1.msra.mxu0 %v1172
    %4698 = vmatprep.subr.mxu0 %v1181
    %4699 = vmatpush1.msra.mxu0 %v1180
    %4700 = vmatprep.subr.mxu0 %v1189
    %4701 = vmatpush1.msra.mxu0 %v1188
    %4702 = vmatprep.subr.mxu0 %v1197
    %4703 = vmatpush1.msra.mxu0 %v1196
    %4704 = vmatprep.subr.mxu0 %v1205
    %4705 = vmatpush1.msra.mxu0 %v1204
    %4706 = vmatprep.subr.mxu0 %v1213
    %4707 = vmatpush1.msra.mxu0 %v1212
    %4708 = vmatprep.subr.mxu0 %v1221
    %4709 = vmatpush1.msra.mxu0 %v1220
    %4710 = vmatprep.subr.mxu0 %v1229
    %4711 = vmatpush1.msra.mxu0 %v1228
    %4712 = vmatprep.subr.mxu0 %v1237
    %4713 = vmatpush1.msra.mxu0 %v1236
    %4714 = vmatprep.subr.mxu0 %v1245
    %4715 = vmatpush1.msra.mxu0 %v1244
    %4716 = vmatprep.subr.mxu0 %v1253
    %4717 = vmatpush1.msra.mxu0 %v1252
    %4718 = vmatprep.subr.mxu0 %v1261
    %4719 = vmatpush1.msra.mxu0 %v1260
    %4720 = vmatprep.subr.mxu0 %v1269
    %4721 = vmatpush1.msra.mxu0 %v1268
    %4722 = vmatprep.subr.mxu0 %v1277
    %4723 = vmatpush1.msra.mxu0 %v1276
    %4724 = vmatprep.subr.mxu0 %v1285
    %4725 = vmatpush1.msra.mxu0 %v1284
    %4726 = vmatprep.subr.mxu0 %v1293
    %4727 = vmatpush1.msra.mxu0 %v1292
    %4728 = vmatprep.subr.mxu0 %v1301
    %4729 = vmatpush1.msra.mxu0 %v1300
    %4730 = vmatprep.subr.mxu0 %v1309
    %4731 = vmatpush1.msra.mxu0 %v1308
    %4732 = vmatprep.subr.mxu0 %v1317
    %4733 = vmatpush1.msra.mxu0 %v1316
    %4734 = vmatprep.subr.mxu0 %v1325
    %4735 = vmatpush1.msra.mxu0 %v1324
    %4736 = vmatprep.subr.mxu0 %v1333
    %4737 = vmatpush1.msra.mxu0 %v1332
    %4738 = vmatprep.mubr.f32.mxu0 %v4600
    %4739 = vmatmul.mubr.f32.gmra.mrb[0].mxu0 %v4599
    %v4740 = vpop.f32.mrb[0].mxu0
    %v4741 = vadd.f32 0.0, %v4740
    %v4742 = vpop.f32.mrb[0].mxu0
    %v4743 = vadd.f32 0.0, %v4742
    %4744 = vdwg.mxu0
    %4745 = vmatprep.subr.mxu0 %v1087
    %4746 = vmatpush1.msra.mxu0 %v1086
    %4747 = vmatprep.subr.mxu0 %v1095
    %4748 = vmatpush1.msra.mxu0 %v1094
    %4749 = vmatprep.subr.mxu0 %v1103
    %4750 = vmatpush1.msra.mxu0 %v1102
    %4751 = vmatprep.subr.mxu0 %v1111
    %4752 = vmatpush1.msra.mxu0 %v1110
    %4753 = vmatprep.subr.mxu0 %v1119
    %4754 = vmatpush1.msra.mxu0 %v1118
    %4755 = vmatprep.subr.mxu0 %v1127
    %4756 = vmatpush1.msra.mxu0 %v1126
    %4757 = vmatprep.subr.mxu0 %v1135
    %4758 = vmatpush1.msra.mxu0 %v1134
    %4759 = vmatprep.subr.mxu0 %v1143
    %4760 = vmatpush1.msra.mxu0 %v1142
    %4761 = vmatprep.subr.mxu0 %v1151
    %4762 = vmatpush1.msra.mxu0 %v1150
    %4763 = vmatprep.subr.mxu0 %v1159
    %4764 = vmatpush1.msra.mxu0 %v1158
    %4765 = vmatprep.subr.mxu0 %v1167
    %4766 = vmatpush1.msra.mxu0 %v1166
    %4767 = vmatprep.subr.mxu0 %v1175
    %4768 = vmatpush1.msra.mxu0 %v1174
    %4769 = vmatprep.subr.mxu0 %v1183
    %4770 = vmatpush1.msra.mxu0 %v1182
    %4771 = vmatprep.subr.mxu0 %v1191
    %4772 = vmatpush1.msra.mxu0 %v1190
    %4773 = vmatprep.subr.mxu0 %v1199
    %4774 = vmatpush1.msra.mxu0 %v1198
    %4775 = vmatprep.subr.mxu0 %v1207
    %4776 = vmatpush1.msra.mxu0 %v1206
    %4777 = vmatprep.subr.mxu0 %v1215
    %4778 = vmatpush1.msra.mxu0 %v1214
    %4779 = vmatprep.subr.mxu0 %v1223
    %4780 = vmatpush1.msra.mxu0 %v1222
    %4781 = vmatprep.subr.mxu0 %v1231
    %4782 = vmatpush1.msra.mxu0 %v1230
    %4783 = vmatprep.subr.mxu0 %v1239
    %4784 = vmatpush1.msra.mxu0 %v1238
    %4785 = vmatprep.subr.mxu0 %v1247
    %4786 = vmatpush1.msra.mxu0 %v1246
    %4787 = vmatprep.subr.mxu0 %v1255
    %4788 = vmatpush1.msra.mxu0 %v1254
    %4789 = vmatprep.subr.mxu0 %v1263
    %4790 = vmatpush1.msra.mxu0 %v1262
    %4791 = vmatprep.subr.mxu0 %v1271
    %4792 = vmatpush1.msra.mxu0 %v1270
    %4793 = vmatprep.subr.mxu0 %v1279
    %4794 = vmatpush1.msra.mxu0 %v1278
    %4795 = vmatprep.subr.mxu0 %v1287
    %4796 = vmatpush1.msra.mxu0 %v1286
    %4797 = vmatprep.subr.mxu0 %v1295
    %4798 = vmatpush1.msra.mxu0 %v1294
    %4799 = vmatprep.subr.mxu0 %v1303
    %4800 = vmatpush1.msra.mxu0 %v1302
    %4801 = vmatprep.subr.mxu0 %v1311
    %4802 = vmatpush1.msra.mxu0 %v1310
    %4803 = vmatprep.subr.mxu0 %v1319
    %4804 = vmatpush1.msra.mxu0 %v1318
    %4805 = vmatprep.subr.mxu0 %v1327
    %4806 = vmatpush1.msra.mxu0 %v1326
    %4807 = vmatprep.subr.mxu0 %v1335
    %4808 = vmatpush1.msra.mxu0 %v1334
    %4809 = vmatprep.mubr.f32.mxu0 %v4600
    %4810 = vmatmul.mubr.f32.gmra.mrb[0].mxu0 %v4599
    %v4811 = vpop.f32.mrb[0].mxu0
    %v4812 = vadd.f32 0.0, %v4811
    %v4813 = vpop.f32.mrb[0].mxu0
    %v4814 = vadd.f32 0.0, %v4813
    %4815 = vdwg.mxu0
    %4816 = vmatprep.subr.mxu0 %v1089
    %4817 = vmatpush1.msra.mxu0 %v1088
    %4818 = vmatprep.subr.mxu0 %v1097
    %4819 = vmatpush1.msra.mxu0 %v1096
    %4820 = vmatprep.subr.mxu0 %v1105
    %4821 = vmatpush1.msra.mxu0 %v1104
    %4822 = vmatprep.subr.mxu0 %v1113
    %4823 = vmatpush1.msra.mxu0 %v1112
    %4824 = vmatprep.subr.mxu0 %v1121
    %4825 = vmatpush1.msra.mxu0 %v1120
    %4826 = vmatprep.subr.mxu0 %v1129
    %4827 = vmatpush1.msra.mxu0 %v1128
    %4828 = vmatprep.subr.mxu0 %v1137
    %4829 = vmatpush1.msra.mxu0 %v1136
    %4830 = vmatprep.subr.mxu0 %v1145
    %4831 = vmatpush1.msra.mxu0 %v1144
    %4832 = vmatprep.subr.mxu0 %v1153
    %4833 = vmatpush1.msra.mxu0 %v1152
    %4834 = vmatprep.subr.mxu0 %v1161
    %4835 = vmatpush1.msra.mxu0 %v1160
    %4836 = vmatprep.subr.mxu0 %v1169
    %4837 = vmatpush1.msra.mxu0 %v1168
    %4838 = vmatprep.subr.mxu0 %v1177
    %4839 = vmatpush1.msra.mxu0 %v1176
    %4840 = vmatprep.subr.mxu0 %v1185
    %4841 = vmatpush1.msra.mxu0 %v1184
    %4842 = vmatprep.subr.mxu0 %v1193
    %4843 = vmatpush1.msra.mxu0 %v1192
    %4844 = vmatprep.subr.mxu0 %v1201
    %4845 = vmatpush1.msra.mxu0 %v1200
    %4846 = vmatprep.subr.mxu0 %v1209
    %4847 = vmatpush1.msra.mxu0 %v1208
    %4848 = vmatprep.subr.mxu0 %v1217
    %4849 = vmatpush1.msra.mxu0 %v1216
    %4850 = vmatprep.subr.mxu0 %v1225
    %4851 = vmatpush1.msra.mxu0 %v1224
    %4852 = vmatprep.subr.mxu0 %v1233
    %4853 = vmatpush1.msra.mxu0 %v1232
    %4854 = vmatprep.subr.mxu0 %v1241
    %4855 = vmatpush1.msra.mxu0 %v1240
    %4856 = vmatprep.subr.mxu0 %v1249
    %4857 = vmatpush1.msra.mxu0 %v1248
    %4858 = vmatprep.subr.mxu0 %v1257
    %4859 = vmatpush1.msra.mxu0 %v1256
    %4860 = vmatprep.subr.mxu0 %v1265
    %4861 = vmatpush1.msra.mxu0 %v1264
    %4862 = vmatprep.subr.mxu0 %v1273
    %4863 = vmatpush1.msra.mxu0 %v1272
    %4864 = vmatprep.subr.mxu0 %v1281
    %4865 = vmatpush1.msra.mxu0 %v1280
    %4866 = vmatprep.subr.mxu0 %v1289
    %4867 = vmatpush1.msra.mxu0 %v1288
    %4868 = vmatprep.subr.mxu0 %v1297
    %4869 = vmatpush1.msra.mxu0 %v1296
    %4870 = vmatprep.subr.mxu0 %v1305
    %4871 = vmatpush1.msra.mxu0 %v1304
    %4872 = vmatprep.subr.mxu0 %v1313
    %4873 = vmatpush1.msra.mxu0 %v1312
    %4874 = vmatprep.subr.mxu0 %v1321
    %4875 = vmatpush1.msra.mxu0 %v1320
    %4876 = vmatprep.subr.mxu0 %v1329
    %4877 = vmatpush1.msra.mxu0 %v1328
    %4878 = vmatprep.subr.mxu0 %v1337
    %4879 = vmatpush1.msra.mxu0 %v1336
    %4880 = vmatprep.mubr.f32.mxu0 %v4600
    %4881 = vmatmul.mubr.f32.gmra.mrb[0].mxu0 %v4599
    %v4882 = vpop.f32.mrb[0].mxu0
    %v4883 = vadd.f32 0.0, %v4882
    %v4884 = vpop.f32.mrb[0].mxu0
    %v4885 = vadd.f32 0.0, %v4884
    %4886 = vdwg.mxu0
    %v4887 = vadd.f32 %v4589, %v4670
    %v4888 = vadd.f32 %v4590, %v4672
    %v4889 = vadd.f32 %v4591, %v4741
    %v4890 = vadd.f32 %v4592, %v4743
    %v4891 = vadd.f32 %v4593, %v4812
    %v4892 = vadd.f32 %v4594, %v4814
    %v4893 = vadd.f32 %v4595, %v4883
    %v4894 = vadd.f32 %v4596, %v4885
    %v4895 = vld [vmem:[#allocation3] sm:$0xc0]
    %v4896 = vld [vmem:[#allocation3 + $0x8] sm:$0xc0]
    %v4897 = vld [vmem:[#allocation3 + $0x10] sm:$0xc0]
    %v4898 = vld [vmem:[#allocation3 + $0x18] sm:$0xc0]
    %v4899 = vld [vmem:[#allocation3 + $0x20] sm:$0xc0]
    %v4900 = vld [vmem:[#allocation3 + $0x28] sm:$0xc0]
    %v4901 = vld [vmem:[#allocation3 + $0x30] sm:$0xc0]
    %v4902 = vld [vmem:[#allocation3 + $0x38] sm:$0xc0]
    %4903 = vmatprep.subr.mxu0 %v1340
    %4904 = vmatpush1.msra.mxu0 %v1339
    %4905 = vmatprep.subr.mxu0 %v1348
    %4906 = vmatpush1.msra.mxu0 %v1347
    %4907 = vmatprep.subr.mxu0 %v1356
    %4908 = vmatpush1.msra.mxu0 %v1355
    %4909 = vmatprep.subr.mxu0 %v1364
    %4910 = vmatpush1.msra.mxu0 %v1363
    %4911 = vmatprep.subr.mxu0 %v1372
    %4912 = vmatpush1.msra.mxu0 %v1371
    %4913 = vmatprep.subr.mxu0 %v1380
    %4914 = vmatpush1.msra.mxu0 %v1379
    %4915 = vmatprep.subr.mxu0 %v1388
    %4916 = vmatpush1.msra.mxu0 %v1387
    %4917 = vmatprep.subr.mxu0 %v1396
    %4918 = vmatpush1.msra.mxu0 %v1395
    %4919 = vmatprep.subr.mxu0 %v1404
    %4920 = vmatpush1.msra.mxu0 %v1403
    %4921 = vmatprep.subr.mxu0 %v1412
    %4922 = vmatpush1.msra.mxu0 %v1411
    %4923 = vmatprep.subr.mxu0 %v1420
    %4924 = vmatpush1.msra.mxu0 %v1419
    %4925 = vmatprep.subr.mxu0 %v1428
    %4926 = vmatpush1.msra.mxu0 %v1427
    %4927 = vmatprep.subr.mxu0 %v1436
    %4928 = vmatpush1.msra.mxu0 %v1435
    %4929 = vmatprep.subr.mxu0 %v1444
    %4930 = vmatpush1.msra.mxu0 %v1443
    %4931 = vmatprep.subr.mxu0 %v1452
    %4932 = vmatpush1.msra.mxu0 %v1451
    %4933 = vmatprep.subr.mxu0 %v1460
    %4934 = vmatpush1.msra.mxu0 %v1459
    %4935 = vmatprep.subr.mxu0 %v1468
    %4936 = vmatpush1.msra.mxu0 %v1467
    %4937 = vmatprep.subr.mxu0 %v1476
    %4938 = vmatpush1.msra.mxu0 %v1475
    %4939 = vmatprep.subr.mxu0 %v1484
    %4940 = vmatpush1.msra.mxu0 %v1483
    %4941 = vmatprep.subr.mxu0 %v1492
    %4942 = vmatpush1.msra.mxu0 %v1491
    %4943 = vmatprep.subr.mxu0 %v1500
    %4944 = vmatpush1.msra.mxu0 %v1499
    %4945 = vmatprep.subr.mxu0 %v1508
    %4946 = vmatpush1.msra.mxu0 %v1507
    %4947 = vmatprep.subr.mxu0 %v1516
    %4948 = vmatpush1.msra.mxu0 %v1515
    %4949 = vmatprep.subr.mxu0 %v1524
    %4950 = vmatpush1.msra.mxu0 %v1523
    %4951 = vmatprep.subr.mxu0 %v1532
    %4952 = vmatpush1.msra.mxu0 %v1531
    %4953 = vmatprep.subr.mxu0 %v1540
    %4954 = vmatpush1.msra.mxu0 %v1539
    %4955 = vmatprep.subr.mxu0 %v1548
    %4956 = vmatpush1.msra.mxu0 %v1547
    %4957 = vmatprep.subr.mxu0 %v1556
    %4958 = vmatpush1.msra.mxu0 %v1555
    %4959 = vmatprep.subr.mxu0 %v1564
    %4960 = vmatpush1.msra.mxu0 %v1563
    %4961 = vmatprep.subr.mxu0 %v1572
    %4962 = vmatpush1.msra.mxu0 %v1571
    %4963 = vmatprep.subr.mxu0 %v1580
    %4964 = vmatpush1.msra.mxu0 %v1579
    %4965 = vmatprep.subr.mxu0 %v1588
    %4966 = vmatpush1.msra.mxu0 %v1587
    %4967 = vmatprep.mubr.f32.mxu0 %v4588
    %4968 = vmatmul.mubr.f32.gmra.mrb[0].mxu0 %v4587
    %v4969 = vpop.f32.mrb[0].mxu0
    %v4970 = vadd.f32 0.0, %v4969
    %v4971 = vpop.f32.mrb[0].mxu0
    %v4972 = vadd.f32 0.0, %v4971
    %4973 = vdwg.mxu0
    %4974 = vmatprep.subr.mxu0 %v1342
    %4975 = vmatpush1.msra.mxu0 %v1341
    %4976 = vmatprep.subr.mxu0 %v1350
    %4977 = vmatpush1.msra.mxu0 %v1349
    %4978 = vmatprep.subr.mxu0 %v1358
    %4979 = vmatpush1.msra.mxu0 %v1357
    %4980 = vmatprep.subr.mxu0 %v1366
    %4981 = vmatpush1.msra.mxu0 %v1365
    %4982 = vmatprep.subr.mxu0 %v1374
    %4983 = vmatpush1.msra.mxu0 %v1373
    %4984 = vmatprep.subr.mxu0 %v1382
    %4985 = vmatpush1.msra.mxu0 %v1381
    %4986 = vmatprep.subr.mxu0 %v1390
    %4987 = vmatpush1.msra.mxu0 %v1389
    %4988 = vmatprep.subr.mxu0 %v1398
    %4989 = vmatpush1.msra.mxu0 %v1397
    %4990 = vmatprep.subr.mxu0 %v1406
    %4991 = vmatpush1.msra.mxu0 %v1405
    %4992 = vmatprep.subr.mxu0 %v1414
    %4993 = vmatpush1.msra.mxu0 %v1413
    %4994 = vmatprep.subr.mxu0 %v1422
    %4995 = vmatpush1.msra.mxu0 %v1421
    %4996 = vmatprep.subr.mxu0 %v1430
    %4997 = vmatpush1.msra.mxu0 %v1429
    %4998 = vmatprep.subr.mxu0 %v1438
    %4999 = vmatpush1.msra.mxu0 %v1437
    %5000 = vmatprep.subr.mxu0 %v1446
    %5001 = vmatpush1.msra.mxu0 %v1445
    %5002 = vmatprep.subr.mxu0 %v1454
    %5003 = vmatpush1.msra.mxu0 %v1453
    %5004 = vmatprep.subr.mxu0 %v1462
    %5005 = vmatpush1.msra.mxu0 %v1461
    %5006 = vmatprep.subr.mxu0 %v1470
    %5007 = vmatpush1.msra.mxu0 %v1469
    %5008 = vmatprep.subr.mxu0 %v1478
    %5009 = vmatpush1.msra.mxu0 %v1477
    %5010 = vmatprep.subr.mxu0 %v1486
    %5011 = vmatpush1.msra.mxu0 %v1485
    %5012 = vmatprep.subr.mxu0 %v1494
    %5013 = vmatpush1.msra.mxu0 %v1493
    %5014 = vmatprep.subr.mxu0 %v1502
    %5015 = vmatpush1.msra.mxu0 %v1501
    %5016 = vmatprep.subr.mxu0 %v1510
    %5017 = vmatpush1.msra.mxu0 %v1509
    %5018 = vmatprep.subr.mxu0 %v1518
    %5019 = vmatpush1.msra.mxu0 %v1517
    %5020 = vmatprep.subr.mxu0 %v1526
    %5021 = vmatpush1.msra.mxu0 %v1525
    %5022 = vmatprep.subr.mxu0 %v1534
    %5023 = vmatpush1.msra.mxu0 %v1533
    %5024 = vmatprep.subr.mxu0 %v1542
    %5025 = vmatpush1.msra.mxu0 %v1541
    %5026 = vmatprep.subr.mxu0 %v1550
    %5027 = vmatpush1.msra.mxu0 %v1549
    %5028 = vmatprep.subr.mxu0 %v1558
    %5029 = vmatpush1.msra.mxu0 %v1557
    %5030 = vmatprep.subr.mxu0 %v1566
    %5031 = vmatpush1.msra.mxu0 %v1565
    %5032 = vmatprep.subr.mxu0 %v1574
    %5033 = vmatpush1.msra.mxu0 %v1573
    %5034 = vmatprep.subr.mxu0 %v1582
    %5035 = vmatpush1.msra.mxu0 %v1581
    %5036 = vmatprep.subr.mxu0 %v1590
    %5037 = vmatpush1.msra.mxu0 %v1589
    %5038 = vmatprep.mubr.f32.mxu0 %v4588
    %5039 = vmatmul.mubr.f32.gmra.mrb[0].mxu0 %v4587
    %v5040 = vpop.f32.mrb[0].mxu0
    %v5041 = vadd.f32 0.0, %v5040
    %v5042 = vpop.f32.mrb[0].mxu0
    %v5043 = vadd.f32 0.0, %v5042
    %5044 = vdwg.mxu0
    %5045 = vmatprep.subr.mxu0 %v1344
    %5046 = vmatpush1.msra.mxu0 %v1343
    %5047 = vmatprep.subr.mxu0 %v1352
    %5048 = vmatpush1.msra.mxu0 %v1351
    %5049 = vmatprep.subr.mxu0 %v1360
    %5050 = vmatpush1.msra.mxu0 %v1359
    %5051 = vmatprep.subr.mxu0 %v1368
    %5052 = vmatpush1.msra.mxu0 %v1367
    %5053 = vmatprep.subr.mxu0 %v1376
    %5054 = vmatpush1.msra.mxu0 %v1375
    %5055 = vmatprep.subr.mxu0 %v1384
    %5056 = vmatpush1.msra.mxu0 %v1383
    %5057 = vmatprep.subr.mxu0 %v1392
    %5058 = vmatpush1.msra.mxu0 %v1391
    %5059 = vmatprep.subr.mxu0 %v1400
    %5060 = vmatpush1.msra.mxu0 %v1399
    %5061 = vmatprep.subr.mxu0 %v1408
    %5062 = vmatpush1.msra.mxu0 %v1407
    %5063 = vmatprep.subr.mxu0 %v1416
    %5064 = vmatpush1.msra.mxu0 %v1415
    %5065 = vmatprep.subr.mxu0 %v1424
    %5066 = vmatpush1.msra.mxu0 %v1423
    %5067 = vmatprep.subr.mxu0 %v1432
    %5068 = vmatpush1.msra.mxu0 %v1431
    %5069 = vmatprep.subr.mxu0 %v1440
    %5070 = vmatpush1.msra.mxu0 %v1439
    %5071 = vmatprep.subr.mxu0 %v1448
    %5072 = vmatpush1.msra.mxu0 %v1447
    %5073 = vmatprep.subr.mxu0 %v1456
    %5074 = vmatpush1.msra.mxu0 %v1455
    %5075 = vmatprep.subr.mxu0 %v1464
    %5076 = vmatpush1.msra.mxu0 %v1463
    %5077 = vmatprep.subr.mxu0 %v1472
    %5078 = vmatpush1.msra.mxu0 %v1471
    %5079 = vmatprep.subr.mxu0 %v1480
    %5080 = vmatpush1.msra.mxu0 %v1479
    %5081 = vmatprep.subr.mxu0 %v1488
    %5082 = vmatpush1.msra.mxu0 %v1487
    %5083 = vmatprep.subr.mxu0 %v1496
    %5084 = vmatpush1.msra.mxu0 %v1495
    %5085 = vmatprep.subr.mxu0 %v1504
    %5086 = vmatpush1.msra.mxu0 %v1503
    %5087 = vmatprep.subr.mxu0 %v1512
    %5088 = vmatpush1.msra.mxu0 %v1511
    %5089 = vmatprep.subr.mxu0 %v1520
    %5090 = vmatpush1.msra.mxu0 %v1519
    %5091 = vmatprep.subr.mxu0 %v1528
    %5092 = vmatpush1.msra.mxu0 %v1527
    %5093 = vmatprep.subr.mxu0 %v1536
    %5094 = vmatpush1.msra.mxu0 %v1535
    %5095 = vmatprep.subr.mxu0 %v1544
    %5096 = vmatpush1.msra.mxu0 %v1543
    %5097 = vmatprep.subr.mxu0 %v1552
    %5098 = vmatpush1.msra.mxu0 %v1551
    %5099 = vmatprep.subr.mxu0 %v1560
    %5100 = vmatpush1.msra.mxu0 %v1559
    %5101 = vmatprep.subr.mxu0 %v1568
    %5102 = vmatpush1.msra.mxu0 %v1567
    %5103 = vmatprep.subr.mxu0 %v1576
    %5104 = vmatpush1.msra.mxu0 %v1575
    %5105 = vmatprep.subr.mxu0 %v1584
    %5106 = vmatpush1.msra.mxu0 %v1583
    %5107 = vmatprep.subr.mxu0 %v1592
    %5108 = vmatpush1.msra.mxu0 %v1591
    %5109 = vmatprep.mubr.f32.mxu0 %v4588
    %5110 = vmatmul.mubr.f32.gmra.mrb[0].mxu0 %v4587
    %v5111 = vpop.f32.mrb[0].mxu0
    %v5112 = vadd.f32 0.0, %v5111
    %v5113 = vpop.f32.mrb[0].mxu0
    %v5114 = vadd.f32 0.0, %v5113
    %5115 = vdwg.mxu0
    %5116 = vmatprep.subr.mxu0 %v1346
    %5117 = vmatpush1.msra.mxu0 %v1345
    %5118 = vmatprep.subr.mxu0 %v1354
    %5119 = vmatpush1.msra.mxu0 %v1353
    %5120 = vmatprep.subr.mxu0 %v1362
    %5121 = vmatpush1.msra.mxu0 %v1361
    %5122 = vmatprep.subr.mxu0 %v1370
    %5123 = vmatpush1.msra.mxu0 %v1369
    %5124 = vmatprep.subr.mxu0 %v1378
    %5125 = vmatpush1.msra.mxu0 %v1377
    %5126 = vmatprep.subr.mxu0 %v1386
    %5127 = vmatpush1.msra.mxu0 %v1385
    %5128 = vmatprep.subr.mxu0 %v1394
    %5129 = vmatpush1.msra.mxu0 %v1393
    %5130 = vmatprep.subr.mxu0 %v1402
    %5131 = vmatpush1.msra.mxu0 %v1401
    %5132 = vmatprep.subr.mxu0 %v1410
    %5133 = vmatpush1.msra.mxu0 %v1409
    %5134 = vmatprep.subr.mxu0 %v1418
    %5135 = vmatpush1.msra.mxu0 %v1417
    %5136 = vmatprep.subr.mxu0 %v1426
    %5137 = vmatpush1.msra.mxu0 %v1425
    %5138 = vmatprep.subr.mxu0 %v1434
    %5139 = vmatpush1.msra.mxu0 %v1433
    %5140 = vmatprep.subr.mxu0 %v1442
    %5141 = vmatpush1.msra.mxu0 %v1441
    %5142 = vmatprep.subr.mxu0 %v1450
    %5143 = vmatpush1.msra.mxu0 %v1449
    %5144 = vmatprep.subr.mxu0 %v1458
    %5145 = vmatpush1.msra.mxu0 %v1457
    %5146 = vmatprep.subr.mxu0 %v1466
    %5147 = vmatpush1.msra.mxu0 %v1465
    %5148 = vmatprep.subr.mxu0 %v1474
    %5149 = vmatpush1.msra.mxu0 %v1473
    %5150 = vmatprep.subr.mxu0 %v1482
    %5151 = vmatpush1.msra.mxu0 %v1481
    %5152 = vmatprep.subr.mxu0 %v1490
    %5153 = vmatpush1.msra.mxu0 %v1489
    %5154 = vmatprep.subr.mxu0 %v1498
    %5155 = vmatpush1.msra.mxu0 %v1497
    %5156 = vmatprep.subr.mxu0 %v1506
    %5157 = vmatpush1.msra.mxu0 %v1505
    %5158 = vmatprep.subr.mxu0 %v1514
    %5159 = vmatpush1.msra.mxu0 %v1513
    %5160 = vmatprep.subr.mxu0 %v1522
    %5161 = vmatpush1.msra.mxu0 %v1521
    %5162 = vmatprep.subr.mxu0 %v1530
    %5163 = vmatpush1.msra.mxu0 %v1529
    %5164 = vmatprep.subr.mxu0 %v1538
    %5165 = vmatpush1.msra.mxu0 %v1537
    %5166 = vmatprep.subr.mxu0 %v1546
    %5167 = vmatpush1.msra.mxu0 %v1545
    %5168 = vmatprep.subr.mxu0 %v1554
    %5169 = vmatpush1.msra.mxu0 %v1553
    %5170 = vmatprep.subr.mxu0 %v1562
    %5171 = vmatpush1.msra.mxu0 %v1561
    %5172 = vmatprep.subr.mxu0 %v1570
    %5173 = vmatpush1.msra.mxu0 %v1569
    %5174 = vmatprep.subr.mxu0 %v1578
    %5175 = vmatpush1.msra.mxu0 %v1577
    %5176 = vmatprep.subr.mxu0 %v1586
    %5177 = vmatpush1.msra.mxu0 %v1585
    %5178 = vmatprep.subr.mxu0 %v1594
    %5179 = vmatpush1.msra.mxu0 %v1593
    %5180 = vmatprep.mubr.f32.mxu0 %v4588
    %5181 = vmatmul.mubr.f32.gmra.mrb[0].mxu0 %v4587
    %v5182 = vpop.f32.mrb[0].mxu0
    %v5183 = vadd.f32 0.0, %v5182
    %v5184 = vpop.f32.mrb[0].mxu0
    %v5185 = vadd.f32 0.0, %v5184
    %5186 = vdwg.mxu0
    %v5195 = vrot.slane %v4970, 2
    %v5196 = vrot.slane %v4972, 2
    %v5197 = vrot.slane %v5041, 2
    %v5198 = vrot.slane %v5043, 2
    %v5199 = vrot.slane %v5112, 2
    %v5200 = vrot.slane %v5114, 2
    %v5201 = vrot.slane %v5183, 2
    %v5202 = vrot.slane %v5185, 2
    %v5211 = vadd.f32 %v4895, %v5195
    %v5212 = vadd.f32 %v4896, %v5196
    %v5213 = vadd.f32 %v4897, %v5197
    %v5214 = vadd.f32 %v4898, %v5198
    %v5215 = vadd.f32 %v4899, %v5199
    %v5216 = vadd.f32 %v4900, %v5200
    %v5217 = vadd.f32 %v4901, %v5201
    %v5218 = vadd.f32 %v4902, %v5202
    %v5219 = vxor.u32 %v4887, 2147483648
    %v5220 = vxor.u32 %v4888, 2147483648
    %v5221 = vmul.f32 %v5219, 1.442695
    %v5222 = vpow.pop %v5221
    %v5223 = vmul.f32 %v5220, 1.442695
    %v5224 = vpow.pop %v5223
    %v5225 = vadd.f32 %v5222, 1.0
    %v5226 = vadd.f32 %v5224, 1.0
    %v5227 = vrcp.pop %v5225
    %v5228 = vmul.f32 1.0, %v5227
    %v5229 = vrcp.pop %v5226
    %v5230 = vmul.f32 1.0, %v5229
    %v5231 = vxor.u32 %v4889, 2147483648
    %v5232 = vxor.u32 %v4890, 2147483648
    %v5233 = vmul.f32 %v5231, 1.442695
    %v5234 = vpow.pop %v5233
    %v5235 = vmul.f32 %v5232, 1.442695
    %v5236 = vpow.pop %v5235
    %v5237 = vadd.f32 %v5234, 1.0
    %v5238 = vadd.f32 %v5236, 1.0
    %v5239 = vrcp.pop %v5237
    %v5240 = vmul.f32 1.0, %v5239
    %v5241 = vrcp.pop %v5238
    %v5242 = vmul.f32 1.0, %v5241
    %v5243 = vtanh.pop %v4891
    %v5244 = vtanh.pop %v4892
    %v5245 = vxor.u32 %v4893, 2147483648
    %v5246 = vxor.u32 %v4894, 2147483648
    %v5247 = vmul.f32 %v5245, 1.442695
    %v5248 = vpow.pop %v5247
    %v5249 = vmul.f32 %v5246, 1.442695
    %v5250 = vpow.pop %v5249
    %v5251 = vadd.f32 %v5248, 1.0
    %v5252 = vadd.f32 %v5250, 1.0
    %v5253 = vrcp.pop %v5251
    %v5254 = vmul.f32 1.0, %v5253
    %v5255 = vrcp.pop %v5252
    %v5256 = vmul.f32 1.0, %v5255
    %v5259 = vrot.slane %v4529, 6
    %v5260 = vrot.slane %v4530, 6
    %v5263 = vmul.f32 %v5240, %v5259
    %v5264 = vmul.f32 %v5242, %v5260
    %v5265 = vmul.f32 %v5228, %v5243
    %v5266 = vmul.f32 %v5230, %v5244
    %v5267 = vadd.f32 %v5263, %v5265
    %v5268 = vadd.f32 %v5264, %v5266
    %v5269 = vtanh.pop %v5267
    %v5270 = vtanh.pop %v5268
    %v5271 = vmul.f32 %v5254, %v5269
    %v5272 = vmul.f32 %v5256, %v5270
    %v5273 = vxor.u32 %v5211, 2147483648
    %v5274 = vxor.u32 %v5212, 2147483648
    %v5275 = vmul.f32 %v5273, 1.442695
    %v5276 = vpow.pop %v5275
    %v5277 = vmul.f32 %v5274, 1.442695
    %v5278 = vpow.pop %v5277
    %v5279 = vadd.f32 %v5276, 1.0
    %v5280 = vadd.f32 %v5278, 1.0
    %v5281 = vrcp.pop %v5279
    %v5282 = vmul.f32 1.0, %v5281
    %v5283 = vrcp.pop %v5280
    %v5284 = vmul.f32 1.0, %v5283
    %v5285 = vxor.u32 %v5213, 2147483648
    %v5286 = vxor.u32 %v5214, 2147483648
    %v5287 = vmul.f32 %v5285, 1.442695
    %v5288 = vpow.pop %v5287
    %v5289 = vmul.f32 %v5286, 1.442695
    %v5290 = vpow.pop %v5289
    %v5291 = vadd.f32 %v5288, 1.0
    %v5292 = vadd.f32 %v5290, 1.0
    %v5293 = vrcp.pop %v5291
    %v5294 = vmul.f32 1.0, %v5293
    %v5295 = vrcp.pop %v5292
    %v5296 = vmul.f32 1.0, %v5295
    %v5297 = vtanh.pop %v5215
    %v5298 = vtanh.pop %v5216
    %v5299 = vxor.u32 %v5217, 2147483648
    %v5300 = vxor.u32 %v5218, 2147483648
    %v5301 = vmul.f32 %v5299, 1.442695
    %v5302 = vpow.pop %v5301
    %v5303 = vmul.f32 %v5300, 1.442695
    %v5304 = vpow.pop %v5303
    %v5305 = vadd.f32 %v5302, 1.0
    %v5306 = vadd.f32 %v5304, 1.0
    %v5307 = vrcp.pop %v5305
    %v5308 = vmul.f32 1.0, %v5307
    %v5309 = vrcp.pop %v5306
    %v5310 = vmul.f32 1.0, %v5309
    %v5313 = vrot.slane %v4583, 2
    %v5314 = vrot.slane %v4584, 2
    %v5317 = vmul.f32 %v5294, %v5313
    %v5318 = vmul.f32 %v5296, %v5314
    %v5319 = vmul.f32 %v5282, %v5297
    %v5320 = vmul.f32 %v5284, %v5298
    %v5321 = vadd.f32 %v5317, %v5319
    %v5322 = vadd.f32 %v5318, %v5320
    %v5323 = vtanh.pop %v5321
    %v5324 = vtanh.pop %v5322
    %v5325 = vmul.f32 %v5308, %v5323
    %v5326 = vmul.f32 %v5310, %v5324
    %v5327 = vld [vmem:[#allocation2 + $0x40] sm:$0xc]
    %v5328 = vld [vmem:[#allocation2 + $0x48] sm:$0xc]
    %v5329 = vld [vmem:[#allocation2 + $0x50] sm:$0xc]
    %v5330 = vld [vmem:[#allocation2 + $0x58] sm:$0xc]
    %v5331 = vld [vmem:[#allocation2 + $0x60] sm:$0xc]
    %v5332 = vld [vmem:[#allocation2 + $0x68] sm:$0xc]
    %v5333 = vld [vmem:[#allocation2 + $0x70] sm:$0xc]
    %v5334 = vld [vmem:[#allocation2 + $0x78] sm:$0xc]
    %5335 = vmatprep.subr.mxu0 %v1083
    %5336 = vmatpush1.msra.mxu0 %v1082
    %5337 = vmatprep.subr.mxu0 %v1091
    %5338 = vmatpush1.msra.mxu0 %v1090
    %5339 = vmatprep.subr.mxu0 %v1099
    %5340 = vmatpush1.msra.mxu0 %v1098
    %5341 = vmatprep.subr.mxu0 %v1107
    %5342 = vmatpush1.msra.mxu0 %v1106
    %5343 = vmatprep.subr.mxu0 %v1115
    %5344 = vmatpush1.msra.mxu0 %v1114
    %5345 = vmatprep.subr.mxu0 %v1123
    %5346 = vmatpush1.msra.mxu0 %v1122
    %5347 = vmatprep.subr.mxu0 %v1131
    %5348 = vmatpush1.msra.mxu0 %v1130
    %5349 = vmatprep.subr.mxu0 %v1139
    %5350 = vmatpush1.msra.mxu0 %v1138
    %5351 = vmatprep.subr.mxu0 %v1147
    %5352 = vmatpush1.msra.mxu0 %v1146
    %5353 = vmatprep.subr.mxu0 %v1155
    %5354 = vmatpush1.msra.mxu0 %v1154
    %5355 = vmatprep.subr.mxu0 %v1163
    %5356 = vmatpush1.msra.mxu0 %v1162
    %5357 = vmatprep.subr.mxu0 %v1171
    %5358 = vmatpush1.msra.mxu0 %v1170
    %5359 = vmatprep.subr.mxu0 %v1179
    %5360 = vmatpush1.msra.mxu0 %v1178
    %5361 = vmatprep.subr.mxu0 %v1187
    %5362 = vmatpush1.msra.mxu0 %v1186
    %5363 = vmatprep.subr.mxu0 %v1195
    %5364 = vmatpush1.msra.mxu0 %v1194
    %5365 = vmatprep.subr.mxu0 %v1203
    %5366 = vmatpush1.msra.mxu0 %v1202
    %5367 = vmatprep.subr.mxu0 %v1211
    %5368 = vmatpush1.msra.mxu0 %v1210
    %5369 = vmatprep.subr.mxu0 %v1219
    %5370 = vmatpush1.msra.mxu0 %v1218
    %5371 = vmatprep.subr.mxu0 %v1227
    %5372 = vmatpush1.msra.mxu0 %v1226
    %5373 = vmatprep.subr.mxu0 %v1235
    %5374 = vmatpush1.msra.mxu0 %v1234
    %5375 = vmatprep.subr.mxu0 %v1243
    %5376 = vmatpush1.msra.mxu0 %v1242
    %5377 = vmatprep.subr.mxu0 %v1251
    %5378 = vmatpush1.msra.mxu0 %v1250
    %5379 = vmatprep.subr.mxu0 %v1259
    %5380 = vmatpush1.msra.mxu0 %v1258
    %5381 = vmatprep.subr.mxu0 %v1267
    %5382 = vmatpush1.msra.mxu0 %v1266
    %5383 = vmatprep.subr.mxu0 %v1275
    %5384 = vmatpush1.msra.mxu0 %v1274
    %5385 = vmatprep.subr.mxu0 %v1283
    %5386 = vmatpush1.msra.mxu0 %v1282
    %5387 = vmatprep.subr.mxu0 %v1291
    %5388 = vmatpush1.msra.mxu0 %v1290
    %5389 = vmatprep.subr.mxu0 %v1299
    %5390 = vmatpush1.msra.mxu0 %v1298
    %5391 = vmatprep.subr.mxu0 %v1307
    %5392 = vmatpush1.msra.mxu0 %v1306
    %5393 = vmatprep.subr.mxu0 %v1315
    %5394 = vmatpush1.msra.mxu0 %v1314
    %5395 = vmatprep.subr.mxu0 %v1323
    %5396 = vmatpush1.msra.mxu0 %v1322
    %5397 = vmatprep.subr.mxu0 %v1331
    %5398 = vmatpush1.msra.mxu0 %v1330
    %5399 = vmatprep.mubr.f32.mxu0 %v5272
    %5400 = vmatmul.mubr.f32.gmra.mrb[0].mxu0 %v5271
    %v5401 = vpop.f32.mrb[0].mxu0
    %v5402 = vadd.f32 0.0, %v5401
    %v5403 = vpop.f32.mrb[0].mxu0
    %v5404 = vadd.f32 0.0, %v5403
    %5405 = vdwg.mxu0
    %5406 = vmatprep.subr.mxu0 %v1085
    %5407 = vmatpush1.msra.mxu0 %v1084
    %5408 = vmatprep.subr.mxu0 %v1093
    %5409 = vmatpush1.msra.mxu0 %v1092
    %5410 = vmatprep.subr.mxu0 %v1101
    %5411 = vmatpush1.msra.mxu0 %v1100
    %5412 = vmatprep.subr.mxu0 %v1109
    %5413 = vmatpush1.msra.mxu0 %v1108
    %5414 = vmatprep.subr.mxu0 %v1117
    %5415 = vmatpush1.msra.mxu0 %v1116
    %5416 = vmatprep.subr.mxu0 %v1125
    %5417 = vmatpush1.msra.mxu0 %v1124
    %5418 = vmatprep.subr.mxu0 %v1133
    %5419 = vmatpush1.msra.mxu0 %v1132
    %5420 = vmatprep.subr.mxu0 %v1141
    %5421 = vmatpush1.msra.mxu0 %v1140
    %5422 = vmatprep.subr.mxu0 %v1149
    %5423 = vmatpush1.msra.mxu0 %v1148
    %5424 = vmatprep.subr.mxu0 %v1157
    %5425 = vmatpush1.msra.mxu0 %v1156
    %5426 = vmatprep.subr.mxu0 %v1165
    %5427 = vmatpush1.msra.mxu0 %v1164
    %5428 = vmatprep.subr.mxu0 %v1173
    %5429 = vmatpush1.msra.mxu0 %v1172
    %5430 = vmatprep.subr.mxu0 %v1181
    %5431 = vmatpush1.msra.mxu0 %v1180
    %5432 = vmatprep.subr.mxu0 %v1189
    %5433 = vmatpush1.msra.mxu0 %v1188
    %5434 = vmatprep.subr.mxu0 %v1197
    %5435 = vmatpush1.msra.mxu0 %v1196
    %5436 = vmatprep.subr.mxu0 %v1205
    %5437 = vmatpush1.msra.mxu0 %v1204
    %5438 = vmatprep.subr.mxu0 %v1213
    %5439 = vmatpush1.msra.mxu0 %v1212
    %5440 = vmatprep.subr.mxu0 %v1221
    %5441 = vmatpush1.msra.mxu0 %v1220
    %5442 = vmatprep.subr.mxu0 %v1229
    %5443 = vmatpush1.msra.mxu0 %v1228
    %5444 = vmatprep.subr.mxu0 %v1237
    %5445 = vmatpush1.msra.mxu0 %v1236
    %5446 = vmatprep.subr.mxu0 %v1245
    %5447 = vmatpush1.msra.mxu0 %v1244
    %5448 = vmatprep.subr.mxu0 %v1253
    %5449 = vmatpush1.msra.mxu0 %v1252
    %5450 = vmatprep.subr.mxu0 %v1261
    %5451 = vmatpush1.msra.mxu0 %v1260
    %5452 = vmatprep.subr.mxu0 %v1269
    %5453 = vmatpush1.msra.mxu0 %v1268
    %5454 = vmatprep.subr.mxu0 %v1277
    %5455 = vmatpush1.msra.mxu0 %v1276
    %5456 = vmatprep.subr.mxu0 %v1285
    %5457 = vmatpush1.msra.mxu0 %v1284
    %5458 = vmatprep.subr.mxu0 %v1293
    %5459 = vmatpush1.msra.mxu0 %v1292
    %5460 = vmatprep.subr.mxu0 %v1301
    %5461 = vmatpush1.msra.mxu0 %v1300
    %5462 = vmatprep.subr.mxu0 %v1309
    %5463 = vmatpush1.msra.mxu0 %v1308
    %5464 = vmatprep.subr.mxu0 %v1317
    %5465 = vmatpush1.msra.mxu0 %v1316
    %5466 = vmatprep.subr.mxu0 %v1325
    %5467 = vmatpush1.msra.mxu0 %v1324
    %5468 = vmatprep.subr.mxu0 %v1333
    %5469 = vmatpush1.msra.mxu0 %v1332
    %5470 = vmatprep.mubr.f32.mxu0 %v5272
    %5471 = vmatmul.mubr.f32.gmra.mrb[0].mxu0 %v5271
    %v5472 = vpop.f32.mrb[0].mxu0
    %v5473 = vadd.f32 0.0, %v5472
    %v5474 = vpop.f32.mrb[0].mxu0
    %v5475 = vadd.f32 0.0, %v5474
    %5476 = vdwg.mxu0
    %5477 = vmatprep.subr.mxu0 %v1087
    %5478 = vmatpush1.msra.mxu0 %v1086
    %5479 = vmatprep.subr.mxu0 %v1095
    %5480 = vmatpush1.msra.mxu0 %v1094
    %5481 = vmatprep.subr.mxu0 %v1103
    %5482 = vmatpush1.msra.mxu0 %v1102
    %5483 = vmatprep.subr.mxu0 %v1111
    %5484 = vmatpush1.msra.mxu0 %v1110
    %5485 = vmatprep.subr.mxu0 %v1119
    %5486 = vmatpush1.msra.mxu0 %v1118
    %5487 = vmatprep.subr.mxu0 %v1127
    %5488 = vmatpush1.msra.mxu0 %v1126
    %5489 = vmatprep.subr.mxu0 %v1135
    %5490 = vmatpush1.msra.mxu0 %v1134
    %5491 = vmatprep.subr.mxu0 %v1143
    %5492 = vmatpush1.msra.mxu0 %v1142
    %5493 = vmatprep.subr.mxu0 %v1151
    %5494 = vmatpush1.msra.mxu0 %v1150
    %5495 = vmatprep.subr.mxu0 %v1159
    %5496 = vmatpush1.msra.mxu0 %v1158
    %5497 = vmatprep.subr.mxu0 %v1167
    %5498 = vmatpush1.msra.mxu0 %v1166
    %5499 = vmatprep.subr.mxu0 %v1175
    %5500 = vmatpush1.msra.mxu0 %v1174
    %5501 = vmatprep.subr.mxu0 %v1183
    %5502 = vmatpush1.msra.mxu0 %v1182
    %5503 = vmatprep.subr.mxu0 %v1191
    %5504 = vmatpush1.msra.mxu0 %v1190
    %5505 = vmatprep.subr.mxu0 %v1199
    %5506 = vmatpush1.msra.mxu0 %v1198
    %5507 = vmatprep.subr.mxu0 %v1207
    %5508 = vmatpush1.msra.mxu0 %v1206
    %5509 = vmatprep.subr.mxu0 %v1215
    %5510 = vmatpush1.msra.mxu0 %v1214
    %5511 = vmatprep.subr.mxu0 %v1223
    %5512 = vmatpush1.msra.mxu0 %v1222
    %5513 = vmatprep.subr.mxu0 %v1231
    %5514 = vmatpush1.msra.mxu0 %v1230
    %5515 = vmatprep.subr.mxu0 %v1239
    %5516 = vmatpush1.msra.mxu0 %v1238
    %5517 = vmatprep.subr.mxu0 %v1247
    %5518 = vmatpush1.msra.mxu0 %v1246
    %5519 = vmatprep.subr.mxu0 %v1255
    %5520 = vmatpush1.msra.mxu0 %v1254
    %5521 = vmatprep.subr.mxu0 %v1263
    %5522 = vmatpush1.msra.mxu0 %v1262
    %5523 = vmatprep.subr.mxu0 %v1271
    %5524 = vmatpush1.msra.mxu0 %v1270
    %5525 = vmatprep.subr.mxu0 %v1279
    %5526 = vmatpush1.msra.mxu0 %v1278
    %5527 = vmatprep.subr.mxu0 %v1287
    %5528 = vmatpush1.msra.mxu0 %v1286
    %5529 = vmatprep.subr.mxu0 %v1295
    %5530 = vmatpush1.msra.mxu0 %v1294
    %5531 = vmatprep.subr.mxu0 %v1303
    %5532 = vmatpush1.msra.mxu0 %v1302
    %5533 = vmatprep.subr.mxu0 %v1311
    %5534 = vmatpush1.msra.mxu0 %v1310
    %5535 = vmatprep.subr.mxu0 %v1319
    %5536 = vmatpush1.msra.mxu0 %v1318
    %5537 = vmatprep.subr.mxu0 %v1327
    %5538 = vmatpush1.msra.mxu0 %v1326
    %5539 = vmatprep.subr.mxu0 %v1335
    %5540 = vmatpush1.msra.mxu0 %v1334
    %5541 = vmatprep.mubr.f32.mxu0 %v5272
    %5542 = vmatmul.mubr.f32.gmra.mrb[0].mxu0 %v5271
    %v5543 = vpop.f32.mrb[0].mxu0
    %v5544 = vadd.f32 0.0, %v5543
    %v5545 = vpop.f32.mrb[0].mxu0
    %v5546 = vadd.f32 0.0, %v5545
    %5547 = vdwg.mxu0
    %5548 = vmatprep.subr.mxu0 %v1089
    %5549 = vmatpush1.msra.mxu0 %v1088
    %5550 = vmatprep.subr.mxu0 %v1097
    %5551 = vmatpush1.msra.mxu0 %v1096
    %5552 = vmatprep.subr.mxu0 %v1105
    %5553 = vmatpush1.msra.mxu0 %v1104
    %5554 = vmatprep.subr.mxu0 %v1113
    %5555 = vmatpush1.msra.mxu0 %v1112
    %5556 = vmatprep.subr.mxu0 %v1121
    %5557 = vmatpush1.msra.mxu0 %v1120
    %5558 = vmatprep.subr.mxu0 %v1129
    %5559 = vmatpush1.msra.mxu0 %v1128
    %5560 = vmatprep.subr.mxu0 %v1137
    %5561 = vmatpush1.msra.mxu0 %v1136
    %5562 = vmatprep.subr.mxu0 %v1145
    %5563 = vmatpush1.msra.mxu0 %v1144
    %5564 = vmatprep.subr.mxu0 %v1153
    %5565 = vmatpush1.msra.mxu0 %v1152
    %5566 = vmatprep.subr.mxu0 %v1161
    %5567 = vmatpush1.msra.mxu0 %v1160
    %5568 = vmatprep.subr.mxu0 %v1169
    %5569 = vmatpush1.msra.mxu0 %v1168
    %5570 = vmatprep.subr.mxu0 %v1177
    %5571 = vmatpush1.msra.mxu0 %v1176
    %5572 = vmatprep.subr.mxu0 %v1185
    %5573 = vmatpush1.msra.mxu0 %v1184
    %5574 = vmatprep.subr.mxu0 %v1193
    %5575 = vmatpush1.msra.mxu0 %v1192
    %5576 = vmatprep.subr.mxu0 %v1201
    %5577 = vmatpush1.msra.mxu0 %v1200
    %5578 = vmatprep.subr.mxu0 %v1209
    %5579 = vmatpush1.msra.mxu0 %v1208
    %5580 = vmatprep.subr.mxu0 %v1217
    %5581 = vmatpush1.msra.mxu0 %v1216
    %5582 = vmatprep.subr.mxu0 %v1225
    %5583 = vmatpush1.msra.mxu0 %v1224
    %5584 = vmatprep.subr.mxu0 %v1233
    %5585 = vmatpush1.msra.mxu0 %v1232
    %5586 = vmatprep.subr.mxu0 %v1241
    %5587 = vmatpush1.msra.mxu0 %v1240
    %5588 = vmatprep.subr.mxu0 %v1249
    %5589 = vmatpush1.msra.mxu0 %v1248
    %5590 = vmatprep.subr.mxu0 %v1257
    %5591 = vmatpush1.msra.mxu0 %v1256
    %5592 = vmatprep.subr.mxu0 %v1265
    %5593 = vmatpush1.msra.mxu0 %v1264
    %5594 = vmatprep.subr.mxu0 %v1273
    %5595 = vmatpush1.msra.mxu0 %v1272
    %5596 = vmatprep.subr.mxu0 %v1281
    %5597 = vmatpush1.msra.mxu0 %v1280
    %5598 = vmatprep.subr.mxu0 %v1289
    %5599 = vmatpush1.msra.mxu0 %v1288
    %5600 = vmatprep.subr.mxu0 %v1297
    %5601 = vmatpush1.msra.mxu0 %v1296
    %5602 = vmatprep.subr.mxu0 %v1305
    %5603 = vmatpush1.msra.mxu0 %v1304
    %5604 = vmatprep.subr.mxu0 %v1313
    %5605 = vmatpush1.msra.mxu0 %v1312
    %5606 = vmatprep.subr.mxu0 %v1321
    %5607 = vmatpush1.msra.mxu0 %v1320
    %5608 = vmatprep.subr.mxu0 %v1329
    %5609 = vmatpush1.msra.mxu0 %v1328
    %5610 = vmatprep.subr.mxu0 %v1337
    %5611 = vmatpush1.msra.mxu0 %v1336
    %5612 = vmatprep.mubr.f32.mxu0 %v5272
    %5613 = vmatmul.mubr.f32.gmra.mrb[0].mxu0 %v5271
    %v5614 = vpop.f32.mrb[0].mxu0
    %v5615 = vadd.f32 0.0, %v5614
    %v5616 = vpop.f32.mrb[0].mxu0
    %v5617 = vadd.f32 0.0, %v5616
    %5618 = vdwg.mxu0
    %v5627 = vrot.slane %v5402, 6
    %v5628 = vrot.slane %v5404, 6
    %v5629 = vrot.slane %v5473, 6
    %v5630 = vrot.slane %v5475, 6
    %v5631 = vrot.slane %v5544, 6
    %v5632 = vrot.slane %v5546, 6
    %v5633 = vrot.slane %v5615, 6
    %v5634 = vrot.slane %v5617, 6
    %v5643 = vadd.f32 %v5327, %v5627
    %v5644 = vadd.f32 %v5328, %v5628
    %v5645 = vadd.f32 %v5329, %v5629
    %v5646 = vadd.f32 %v5330, %v5630
    %v5647 = vadd.f32 %v5331, %v5631
    %v5648 = vadd.f32 %v5332, %v5632
    %v5649 = vadd.f32 %v5333, %v5633
    %v5650 = vadd.f32 %v5334, %v5634
    %v5651 = vld [vmem:[#allocation3] sm:$0x30]
    %v5652 = vld [vmem:[#allocation3 + $0x8] sm:$0x30]
    %v5653 = vld [vmem:[#allocation3 + $0x10] sm:$0x30]
    %v5654 = vld [vmem:[#allocation3 + $0x18] sm:$0x30]
    %v5655 = vld [vmem:[#allocation3 + $0x20] sm:$0x30]
    %v5656 = vld [vmem:[#allocation3 + $0x28] sm:$0x30]
    %v5657 = vld [vmem:[#allocation3 + $0x30] sm:$0x30]
    %v5658 = vld [vmem:[#allocation3 + $0x38] sm:$0x30]
    %v5661 = vrot.slane %v5325, 6
    %v5662 = vrot.slane %v5326, 6
    %5665 = vmatprep.subr.mxu0 %v1340
    %5666 = vmatpush1.msra.mxu0 %v1339
    %5667 = vmatprep.subr.mxu0 %v1348
    %5668 = vmatpush1.msra.mxu0 %v1347
    %5669 = vmatprep.subr.mxu0 %v1356
    %5670 = vmatpush1.msra.mxu0 %v1355
    %5671 = vmatprep.subr.mxu0 %v1364
    %5672 = vmatpush1.msra.mxu0 %v1363
    %5673 = vmatprep.subr.mxu0 %v1372
    %5674 = vmatpush1.msra.mxu0 %v1371
    %5675 = vmatprep.subr.mxu0 %v1380
    %5676 = vmatpush1.msra.mxu0 %v1379
    %5677 = vmatprep.subr.mxu0 %v1388
    %5678 = vmatpush1.msra.mxu0 %v1387
    %5679 = vmatprep.subr.mxu0 %v1396
    %5680 = vmatpush1.msra.mxu0 %v1395
    %5681 = vmatprep.subr.mxu0 %v1404
    %5682 = vmatpush1.msra.mxu0 %v1403
    %5683 = vmatprep.subr.mxu0 %v1412
    %5684 = vmatpush1.msra.mxu0 %v1411
    %5685 = vmatprep.subr.mxu0 %v1420
    %5686 = vmatpush1.msra.mxu0 %v1419
    %5687 = vmatprep.subr.mxu0 %v1428
    %5688 = vmatpush1.msra.mxu0 %v1427
    %5689 = vmatprep.subr.mxu0 %v1436
    %5690 = vmatpush1.msra.mxu0 %v1435
    %5691 = vmatprep.subr.mxu0 %v1444
    %5692 = vmatpush1.msra.mxu0 %v1443
    %5693 = vmatprep.subr.mxu0 %v1452
    %5694 = vmatpush1.msra.mxu0 %v1451
    %5695 = vmatprep.subr.mxu0 %v1460
    %5696 = vmatpush1.msra.mxu0 %v1459
    %5697 = vmatprep.subr.mxu0 %v1468
    %5698 = vmatpush1.msra.mxu0 %v1467
    %5699 = vmatprep.subr.mxu0 %v1476
    %5700 = vmatpush1.msra.mxu0 %v1475
    %5701 = vmatprep.subr.mxu0 %v1484
    %5702 = vmatpush1.msra.mxu0 %v1483
    %5703 = vmatprep.subr.mxu0 %v1492
    %5704 = vmatpush1.msra.mxu0 %v1491
    %5705 = vmatprep.subr.mxu0 %v1500
    %5706 = vmatpush1.msra.mxu0 %v1499
    %5707 = vmatprep.subr.mxu0 %v1508
    %5708 = vmatpush1.msra.mxu0 %v1507
    %5709 = vmatprep.subr.mxu0 %v1516
    %5710 = vmatpush1.msra.mxu0 %v1515
    %5711 = vmatprep.subr.mxu0 %v1524
    %5712 = vmatpush1.msra.mxu0 %v1523
    %5713 = vmatprep.subr.mxu0 %v1532
    %5714 = vmatpush1.msra.mxu0 %v1531
    %5715 = vmatprep.subr.mxu0 %v1540
    %5716 = vmatpush1.msra.mxu0 %v1539
    %5717 = vmatprep.subr.mxu0 %v1548
    %5718 = vmatpush1.msra.mxu0 %v1547
    %5719 = vmatprep.subr.mxu0 %v1556
    %5720 = vmatpush1.msra.mxu0 %v1555
    %5721 = vmatprep.subr.mxu0 %v1564
    %5722 = vmatpush1.msra.mxu0 %v1563
    %5723 = vmatprep.subr.mxu0 %v1572
    %5724 = vmatpush1.msra.mxu0 %v1571
    %5725 = vmatprep.subr.mxu0 %v1580
    %5726 = vmatpush1.msra.mxu0 %v1579
    %5727 = vmatprep.subr.mxu0 %v1588
    %5728 = vmatpush1.msra.mxu0 %v1587
    %5729 = vmatprep.mubr.f32.mxu0 %v5662
    %5730 = vmatmul.mubr.f32.gmra.mrb[0].mxu0 %v5661
    %v5731 = vpop.f32.mrb[0].mxu0
    %v5732 = vadd.f32 0.0, %v5731
    %v5733 = vpop.f32.mrb[0].mxu0
    %v5734 = vadd.f32 0.0, %v5733
    %5735 = vdwg.mxu0
    %5736 = vmatprep.subr.mxu0 %v1342
    %5737 = vmatpush1.msra.mxu0 %v1341
    %5738 = vmatprep.subr.mxu0 %v1350
    %5739 = vmatpush1.msra.mxu0 %v1349
    %5740 = vmatprep.subr.mxu0 %v1358
    %5741 = vmatpush1.msra.mxu0 %v1357
    %5742 = vmatprep.subr.mxu0 %v1366
    %5743 = vmatpush1.msra.mxu0 %v1365
    %5744 = vmatprep.subr.mxu0 %v1374
    %5745 = vmatpush1.msra.mxu0 %v1373
    %5746 = vmatprep.subr.mxu0 %v1382
    %5747 = vmatpush1.msra.mxu0 %v1381
    %5748 = vmatprep.subr.mxu0 %v1390
    %5749 = vmatpush1.msra.mxu0 %v1389
    %5750 = vmatprep.subr.mxu0 %v1398
    %5751 = vmatpush1.msra.mxu0 %v1397
    %5752 = vmatprep.subr.mxu0 %v1406
    %5753 = vmatpush1.msra.mxu0 %v1405
    %5754 = vmatprep.subr.mxu0 %v1414
    %5755 = vmatpush1.msra.mxu0 %v1413
    %5756 = vmatprep.subr.mxu0 %v1422
    %5757 = vmatpush1.msra.mxu0 %v1421
    %5758 = vmatprep.subr.mxu0 %v1430
    %5759 = vmatpush1.msra.mxu0 %v1429
    %5760 = vmatprep.subr.mxu0 %v1438
    %5761 = vmatpush1.msra.mxu0 %v1437
    %5762 = vmatprep.subr.mxu0 %v1446
    %5763 = vmatpush1.msra.mxu0 %v1445
    %5764 = vmatprep.subr.mxu0 %v1454
    %5765 = vmatpush1.msra.mxu0 %v1453
    %5766 = vmatprep.subr.mxu0 %v1462
    %5767 = vmatpush1.msra.mxu0 %v1461
    %5768 = vmatprep.subr.mxu0 %v1470
    %5769 = vmatpush1.msra.mxu0 %v1469
    %5770 = vmatprep.subr.mxu0 %v1478
    %5771 = vmatpush1.msra.mxu0 %v1477
    %5772 = vmatprep.subr.mxu0 %v1486
    %5773 = vmatpush1.msra.mxu0 %v1485
    %5774 = vmatprep.subr.mxu0 %v1494
    %5775 = vmatpush1.msra.mxu0 %v1493
    %5776 = vmatprep.subr.mxu0 %v1502
    %5777 = vmatpush1.msra.mxu0 %v1501
    %5778 = vmatprep.subr.mxu0 %v1510
    %5779 = vmatpush1.msra.mxu0 %v1509
    %5780 = vmatprep.subr.mxu0 %v1518
    %5781 = vmatpush1.msra.mxu0 %v1517
    %5782 = vmatprep.subr.mxu0 %v1526
    %5783 = vmatpush1.msra.mxu0 %v1525
    %5784 = vmatprep.subr.mxu0 %v1534
    %5785 = vmatpush1.msra.mxu0 %v1533
    %5786 = vmatprep.subr.mxu0 %v1542
    %5787 = vmatpush1.msra.mxu0 %v1541
    %5788 = vmatprep.subr.mxu0 %v1550
    %5789 = vmatpush1.msra.mxu0 %v1549
    %5790 = vmatprep.subr.mxu0 %v1558
    %5791 = vmatpush1.msra.mxu0 %v1557
    %5792 = vmatprep.subr.mxu0 %v1566
    %5793 = vmatpush1.msra.mxu0 %v1565
    %5794 = vmatprep.subr.mxu0 %v1574
    %5795 = vmatpush1.msra.mxu0 %v1573
    %5796 = vmatprep.subr.mxu0 %v1582
    %5797 = vmatpush1.msra.mxu0 %v1581
    %5798 = vmatprep.subr.mxu0 %v1590
    %5799 = vmatpush1.msra.mxu0 %v1589
    %5800 = vmatprep.mubr.f32.mxu0 %v5662
    %5801 = vmatmul.mubr.f32.gmra.mrb[0].mxu0 %v5661
    %v5802 = vpop.f32.mrb[0].mxu0
    %v5803 = vadd.f32 0.0, %v5802
    %v5804 = vpop.f32.mrb[0].mxu0
    %v5805 = vadd.f32 0.0, %v5804
    %5806 = vdwg.mxu0
    %5807 = vmatprep.subr.mxu0 %v1344
    %5808 = vmatpush1.msra.mxu0 %v1343
    %5809 = vmatprep.subr.mxu0 %v1352
    %5810 = vmatpush1.msra.mxu0 %v1351
    %5811 = vmatprep.subr.mxu0 %v1360
    %5812 = vmatpush1.msra.mxu0 %v1359
    %5813 = vmatprep.subr.mxu0 %v1368
    %5814 = vmatpush1.msra.mxu0 %v1367
    %5815 = vmatprep.subr.mxu0 %v1376
    %5816 = vmatpush1.msra.mxu0 %v1375
    %5817 = vmatprep.subr.mxu0 %v1384
    %5818 = vmatpush1.msra.mxu0 %v1383
    %5819 = vmatprep.subr.mxu0 %v1392
    %5820 = vmatpush1.msra.mxu0 %v1391
    %5821 = vmatprep.subr.mxu0 %v1400
    %5822 = vmatpush1.msra.mxu0 %v1399
    %5823 = vmatprep.subr.mxu0 %v1408
    %5824 = vmatpush1.msra.mxu0 %v1407
    %5825 = vmatprep.subr.mxu0 %v1416
    %5826 = vmatpush1.msra.mxu0 %v1415
    %5827 = vmatprep.subr.mxu0 %v1424
    %5828 = vmatpush1.msra.mxu0 %v1423
    %5829 = vmatprep.subr.mxu0 %v1432
    %5830 = vmatpush1.msra.mxu0 %v1431
    %5831 = vmatprep.subr.mxu0 %v1440
    %5832 = vmatpush1.msra.mxu0 %v1439
    %5833 = vmatprep.subr.mxu0 %v1448
    %5834 = vmatpush1.msra.mxu0 %v1447
    %5835 = vmatprep.subr.mxu0 %v1456
    %5836 = vmatpush1.msra.mxu0 %v1455
    %5837 = vmatprep.subr.mxu0 %v1464
    %5838 = vmatpush1.msra.mxu0 %v1463
    %5839 = vmatprep.subr.mxu0 %v1472
    %5840 = vmatpush1.msra.mxu0 %v1471
    %5841 = vmatprep.subr.mxu0 %v1480
    %5842 = vmatpush1.msra.mxu0 %v1479
    %5843 = vmatprep.subr.mxu0 %v1488
    %5844 = vmatpush1.msra.mxu0 %v1487
    %5845 = vmatprep.subr.mxu0 %v1496
    %5846 = vmatpush1.msra.mxu0 %v1495
    %5847 = vmatprep.subr.mxu0 %v1504
    %5848 = vmatpush1.msra.mxu0 %v1503
    %5849 = vmatprep.subr.mxu0 %v1512
    %5850 = vmatpush1.msra.mxu0 %v1511
    %5851 = vmatprep.subr.mxu0 %v1520
    %5852 = vmatpush1.msra.mxu0 %v1519
    %5853 = vmatprep.subr.mxu0 %v1528
    %5854 = vmatpush1.msra.mxu0 %v1527
    %5855 = vmatprep.subr.mxu0 %v1536
    %5856 = vmatpush1.msra.mxu0 %v1535
    %5857 = vmatprep.subr.mxu0 %v1544
    %5858 = vmatpush1.msra.mxu0 %v1543
    %5859 = vmatprep.subr.mxu0 %v1552
    %5860 = vmatpush1.msra.mxu0 %v1551
    %5861 = vmatprep.subr.mxu0 %v1560
    %5862 = vmatpush1.msra.mxu0 %v1559
    %5863 = vmatprep.subr.mxu0 %v1568
    %5864 = vmatpush1.msra.mxu0 %v1567
    %5865 = vmatprep.subr.mxu0 %v1576
    %5866 = vmatpush1.msra.mxu0 %v1575
    %5867 = vmatprep.subr.mxu0 %v1584
    %5868 = vmatpush1.msra.mxu0 %v1583
    %5869 = vmatprep.subr.mxu0 %v1592
    %5870 = vmatpush1.msra.mxu0 %v1591
    %5871 = vmatprep.mubr.f32.mxu0 %v5662
    %5872 = vmatmul.mubr.f32.gmra.mrb[0].mxu0 %v5661
    %v5873 = vpop.f32.mrb[0].mxu0
    %v5874 = vadd.f32 0.0, %v5873
    %v5875 = vpop.f32.mrb[0].mxu0
    %v5876 = vadd.f32 0.0, %v5875
    %5877 = vdwg.mxu0
    %5878 = vmatprep.subr.mxu0 %v1346
    %5879 = vmatpush1.msra.mxu0 %v1345
    %5880 = vmatprep.subr.mxu0 %v1354
    %5881 = vmatpush1.msra.mxu0 %v1353
    %5882 = vmatprep.subr.mxu0 %v1362
    %5883 = vmatpush1.msra.mxu0 %v1361
    %5884 = vmatprep.subr.mxu0 %v1370
    %5885 = vmatpush1.msra.mxu0 %v1369
    %5886 = vmatprep.subr.mxu0 %v1378
    %5887 = vmatpush1.msra.mxu0 %v1377
    %5888 = vmatprep.subr.mxu0 %v1386
    %5889 = vmatpush1.msra.mxu0 %v1385
    %5890 = vmatprep.subr.mxu0 %v1394
    %5891 = vmatpush1.msra.mxu0 %v1393
    %5892 = vmatprep.subr.mxu0 %v1402
    %5893 = vmatpush1.msra.mxu0 %v1401
    %5894 = vmatprep.subr.mxu0 %v1410
    %5895 = vmatpush1.msra.mxu0 %v1409
    %5896 = vmatprep.subr.mxu0 %v1418
    %5897 = vmatpush1.msra.mxu0 %v1417
    %5898 = vmatprep.subr.mxu0 %v1426
    %5899 = vmatpush1.msra.mxu0 %v1425
    %5900 = vmatprep.subr.mxu0 %v1434
    %5901 = vmatpush1.msra.mxu0 %v1433
    %5902 = vmatprep.subr.mxu0 %v1442
    %5903 = vmatpush1.msra.mxu0 %v1441
    %5904 = vmatprep.subr.mxu0 %v1450
    %5905 = vmatpush1.msra.mxu0 %v1449
    %5906 = vmatprep.subr.mxu0 %v1458
    %5907 = vmatpush1.msra.mxu0 %v1457
    %5908 = vmatprep.subr.mxu0 %v1466
    %5909 = vmatpush1.msra.mxu0 %v1465
    %5910 = vmatprep.subr.mxu0 %v1474
    %5911 = vmatpush1.msra.mxu0 %v1473
    %5912 = vmatprep.subr.mxu0 %v1482
    %5913 = vmatpush1.msra.mxu0 %v1481
    %5914 = vmatprep.subr.mxu0 %v1490
    %5915 = vmatpush1.msra.mxu0 %v1489
    %5916 = vmatprep.subr.mxu0 %v1498
    %5917 = vmatpush1.msra.mxu0 %v1497
    %5918 = vmatprep.subr.mxu0 %v1506
    %5919 = vmatpush1.msra.mxu0 %v1505
    %5920 = vmatprep.subr.mxu0 %v1514
    %5921 = vmatpush1.msra.mxu0 %v1513
    %5922 = vmatprep.subr.mxu0 %v1522
    %5923 = vmatpush1.msra.mxu0 %v1521
    %5924 = vmatprep.subr.mxu0 %v1530
    %5925 = vmatpush1.msra.mxu0 %v1529
    %5926 = vmatprep.subr.mxu0 %v1538
    %5927 = vmatpush1.msra.mxu0 %v1537
    %5928 = vmatprep.subr.mxu0 %v1546
    %5929 = vmatpush1.msra.mxu0 %v1545
    %5930 = vmatprep.subr.mxu0 %v1554
    %5931 = vmatpush1.msra.mxu0 %v1553
    %5932 = vmatprep.subr.mxu0 %v1562
    %5933 = vmatpush1.msra.mxu0 %v1561
    %5934 = vmatprep.subr.mxu0 %v1570
    %5935 = vmatpush1.msra.mxu0 %v1569
    %5936 = vmatprep.subr.mxu0 %v1578
    %5937 = vmatpush1.msra.mxu0 %v1577
    %5938 = vmatprep.subr.mxu0 %v1586
    %5939 = vmatpush1.msra.mxu0 %v1585
    %5940 = vmatprep.subr.mxu0 %v1594
    %5941 = vmatpush1.msra.mxu0 %v1593
    %5942 = vmatprep.mubr.f32.mxu0 %v5662
    %5943 = vmatmul.mubr.f32.gmra.mrb[0].mxu0 %v5661
    %v5944 = vpop.f32.mrb[0].mxu0
    %v5945 = vadd.f32 0.0, %v5944
    %v5946 = vpop.f32.mrb[0].mxu0
    %v5947 = vadd.f32 0.0, %v5946
    %5948 = vdwg.mxu0
    %v5957 = vrot.slane %v5732, 4
    %v5958 = vrot.slane %v5734, 4
    %v5959 = vrot.slane %v5803, 4
    %v5960 = vrot.slane %v5805, 4
    %v5961 = vrot.slane %v5874, 4
    %v5962 = vrot.slane %v5876, 4
    %v5963 = vrot.slane %v5945, 4
    %v5964 = vrot.slane %v5947, 4
    %v5973 = vadd.f32 %v5651, %v5957
    %v5974 = vadd.f32 %v5652, %v5958
    %v5975 = vadd.f32 %v5653, %v5959
    %v5976 = vadd.f32 %v5654, %v5960
    %v5977 = vadd.f32 %v5655, %v5961
    %v5978 = vadd.f32 %v5656, %v5962
    %v5979 = vadd.f32 %v5657, %v5963
    %v5980 = vadd.f32 %v5658, %v5964
    %v5981 = vxor.u32 %v5643, 2147483648
    %v5982 = vxor.u32 %v5644, 2147483648
    %v5983 = vmul.f32 %v5981, 1.442695
    %v5984 = vpow.pop %v5983
    %v5985 = vmul.f32 %v5982, 1.442695
    %v5986 = vpow.pop %v5985
    %v5987 = vadd.f32 %v5984, 1.0
    %v5988 = vadd.f32 %v5986, 1.0
    %v5989 = vrcp.pop %v5987
    %v5990 = vmul.f32 1.0, %v5989
    %v5991 = vrcp.pop %v5988
    %v5992 = vmul.f32 1.0, %v5991
    %v5993 = vxor.u32 %v5645, 2147483648
    %v5994 = vxor.u32 %v5646, 2147483648
    %v5995 = vmul.f32 %v5993, 1.442695
    %v5996 = vpow.pop %v5995
    %v5997 = vmul.f32 %v5994, 1.442695
    %v5998 = vpow.pop %v5997
    %v5999 = vadd.f32 %v5996, 1.0
    %v6000 = vadd.f32 %v5998, 1.0
    %v6001 = vrcp.pop %v5999
    %v6002 = vmul.f32 1.0, %v6001
    %v6003 = vrcp.pop %v6000
    %v6004 = vmul.f32 1.0, %v6003
    %v6005 = vtanh.pop %v5647
    %v6006 = vtanh.pop %v5648
    %v6007 = vxor.u32 %v5649, 2147483648
    %v6008 = vxor.u32 %v5650, 2147483648
    %v6009 = vmul.f32 %v6007, 1.442695
    %v6010 = vpow.pop %v6009
    %v6011 = vmul.f32 %v6008, 1.442695
    %v6012 = vpow.pop %v6011
    %v6013 = vadd.f32 %v6010, 1.0
    %v6014 = vadd.f32 %v6012, 1.0
    %v6015 = vrcp.pop %v6013
    %v6016 = vmul.f32 1.0, %v6015
    %v6017 = vrcp.pop %v6014
    %v6018 = vmul.f32 1.0, %v6017
    %v6021 = vrot.slane %v5267, 6
    %v6022 = vrot.slane %v5268, 6
    %v6025 = vmul.f32 %v6002, %v6021
    %v6026 = vmul.f32 %v6004, %v6022
    %v6027 = vmul.f32 %v5990, %v6005
    %v6028 = vmul.f32 %v5992, %v6006
    %v6029 = vadd.f32 %v6025, %v6027
    %v6030 = vadd.f32 %v6026, %v6028
    %v6031 = vtanh.pop %v6029
    %v6032 = vtanh.pop %v6030
    %v6033 = vmul.f32 %v6016, %v6031
    %v6034 = vmul.f32 %v6018, %v6032
    %v6035 = vxor.u32 %v5973, 2147483648
    %v6036 = vxor.u32 %v5974, 2147483648
    %v6037 = vmul.f32 %v6035, 1.442695
    %v6038 = vpow.pop %v6037
    %v6039 = vmul.f32 %v6036, 1.442695
    %v6040 = vpow.pop %v6039
    %v6041 = vadd.f32 %v6038, 1.0
    %v6042 = vadd.f32 %v6040, 1.0
    %v6043 = vrcp.pop %v6041
    %v6044 = vmul.f32 1.0, %v6043
    %v6045 = vrcp.pop %v6042
    %v6046 = vmul.f32 1.0, %v6045
    %v6047 = vxor.u32 %v5975, 2147483648
    %v6048 = vxor.u32 %v5976, 2147483648
    %v6049 = vmul.f32 %v6047, 1.442695
    %v6050 = vpow.pop %v6049
    %v6051 = vmul.f32 %v6048, 1.442695
    %v6052 = vpow.pop %v6051
    %v6053 = vadd.f32 %v6050, 1.0
    %v6054 = vadd.f32 %v6052, 1.0
    %v6055 = vrcp.pop %v6053
    %v6056 = vmul.f32 1.0, %v6055
    %v6057 = vrcp.pop %v6054
    %v6058 = vmul.f32 1.0, %v6057
    %v6059 = vtanh.pop %v5977
    %v6060 = vtanh.pop %v5978
    %v6061 = vxor.u32 %v5979, 2147483648
    %v6062 = vxor.u32 %v5980, 2147483648
    %v6063 = vmul.f32 %v6061, 1.442695
    %v6064 = vpow.pop %v6063
    %v6065 = vmul.f32 %v6062, 1.442695
    %v6066 = vpow.pop %v6065
    %v6067 = vadd.f32 %v6064, 1.0
    %v6068 = vadd.f32 %v6066, 1.0
    %v6069 = vrcp.pop %v6067
    %v6070 = vmul.f32 1.0, %v6069
    %v6071 = vrcp.pop %v6068
    %v6072 = vmul.f32 1.0, %v6071
    %v6075 = vrot.slane %v5321, 2
    %v6076 = vrot.slane %v5322, 2
    %v6079 = vmul.f32 %v6056, %v6075
    %v6080 = vmul.f32 %v6058, %v6076
    %v6081 = vmul.f32 %v6044, %v6059
    %v6082 = vmul.f32 %v6046, %v6060
    %v6083 = vadd.f32 %v6079, %v6081
    %v6084 = vadd.f32 %v6080, %v6082
    %v6085 = vtanh.pop %v6083
    %v6086 = vtanh.pop %v6084
    %v6087 = vmul.f32 %v6070, %v6085
    %v6088 = vmul.f32 %v6072, %v6086
    %v6089 = vld [vmem:[#allocation2 + $0x40] sm:$0x30]
    %v6090 = vld [vmem:[#allocation2 + $0x48] sm:$0x30]
    %v6091 = vld [vmem:[#allocation2 + $0x50] sm:$0x30]
    %v6092 = vld [vmem:[#allocation2 + $0x58] sm:$0x30]
    %v6093 = vld [vmem:[#allocation2 + $0x60] sm:$0x30]
    %v6094 = vld [vmem:[#allocation2 + $0x68] sm:$0x30]
    %v6095 = vld [vmem:[#allocation2 + $0x70] sm:$0x30]
    %v6096 = vld [vmem:[#allocation2 + $0x78] sm:$0x30]
    %v6099 = vrot.slane %v6033, 2
    %v6100 = vrot.slane %v6034, 2
    %6103 = vmatprep.subr.mxu0 %v1083
    %6104 = vmatpush1.msra.mxu0 %v1082
    %6105 = vmatprep.subr.mxu0 %v1091
    %6106 = vmatpush1.msra.mxu0 %v1090
    %6107 = vmatprep.subr.mxu0 %v1099
    %6108 = vmatpush1.msra.mxu0 %v1098
    %6109 = vmatprep.subr.mxu0 %v1107
    %6110 = vmatpush1.msra.mxu0 %v1106
    %6111 = vmatprep.subr.mxu0 %v1115
    %6112 = vmatpush1.msra.mxu0 %v1114
    %6113 = vmatprep.subr.mxu0 %v1123
    %6114 = vmatpush1.msra.mxu0 %v1122
    %6115 = vmatprep.subr.mxu0 %v1131
    %6116 = vmatpush1.msra.mxu0 %v1130
    %6117 = vmatprep.subr.mxu0 %v1139
    %6118 = vmatpush1.msra.mxu0 %v1138
    %6119 = vmatprep.subr.mxu0 %v1147
    %6120 = vmatpush1.msra.mxu0 %v1146
    %6121 = vmatprep.subr.mxu0 %v1155
    %6122 = vmatpush1.msra.mxu0 %v1154
    %6123 = vmatprep.subr.mxu0 %v1163
    %6124 = vmatpush1.msra.mxu0 %v1162
    %6125 = vmatprep.subr.mxu0 %v1171
    %6126 = vmatpush1.msra.mxu0 %v1170
    %6127 = vmatprep.subr.mxu0 %v1179
    %6128 = vmatpush1.msra.mxu0 %v1178
    %6129 = vmatprep.subr.mxu0 %v1187
    %6130 = vmatpush1.msra.mxu0 %v1186
    %6131 = vmatprep.subr.mxu0 %v1195
    %6132 = vmatpush1.msra.mxu0 %v1194
    %6133 = vmatprep.subr.mxu0 %v1203
    %6134 = vmatpush1.msra.mxu0 %v1202
    %6135 = vmatprep.subr.mxu0 %v1211
    %6136 = vmatpush1.msra.mxu0 %v1210
    %6137 = vmatprep.subr.mxu0 %v1219
    %6138 = vmatpush1.msra.mxu0 %v1218
    %6139 = vmatprep.subr.mxu0 %v1227
    %6140 = vmatpush1.msra.mxu0 %v1226
    %6141 = vmatprep.subr.mxu0 %v1235
    %6142 = vmatpush1.msra.mxu0 %v1234
    %6143 = vmatprep.subr.mxu0 %v1243
    %6144 = vmatpush1.msra.mxu0 %v1242
    %6145 = vmatprep.subr.mxu0 %v1251
    %6146 = vmatpush1.msra.mxu0 %v1250
    %6147 = vmatprep.subr.mxu0 %v1259
    %6148 = vmatpush1.msra.mxu0 %v1258
    %6149 = vmatprep.subr.mxu0 %v1267
    %6150 = vmatpush1.msra.mxu0 %v1266
    %6151 = vmatprep.subr.mxu0 %v1275
    %6152 = vmatpush1.msra.mxu0 %v1274
    %6153 = vmatprep.subr.mxu0 %v1283
    %6154 = vmatpush1.msra.mxu0 %v1282
    %6155 = vmatprep.subr.mxu0 %v1291
    %6156 = vmatpush1.msra.mxu0 %v1290
    %6157 = vmatprep.subr.mxu0 %v1299
    %6158 = vmatpush1.msra.mxu0 %v1298
    %6159 = vmatprep.subr.mxu0 %v1307
    %6160 = vmatpush1.msra.mxu0 %v1306
    %6161 = vmatprep.subr.mxu0 %v1315
    %6162 = vmatpush1.msra.mxu0 %v1314
    %6163 = vmatprep.subr.mxu0 %v1323
    %6164 = vmatpush1.msra.mxu0 %v1322
    %6165 = vmatprep.subr.mxu0 %v1331
    %6166 = vmatpush1.msra.mxu0 %v1330
    %6167 = vmatprep.mubr.f32.mxu0 %v6100
    %6168 = vmatmul.mubr.f32.gmra.mrb[0].mxu0 %v6099
    %v6169 = vpop.f32.mrb[0].mxu0
    %v6170 = vadd.f32 0.0, %v6169
    %v6171 = vpop.f32.mrb[0].mxu0
    %v6172 = vadd.f32 0.0, %v6171
    %6173 = vdwg.mxu0
    %6174 = vmatprep.subr.mxu0 %v1085
    %6175 = vmatpush1.msra.mxu0 %v1084
    %6176 = vmatprep.subr.mxu0 %v1093
    %6177 = vmatpush1.msra.mxu0 %v1092
    %6178 = vmatprep.subr.mxu0 %v1101
    %6179 = vmatpush1.msra.mxu0 %v1100
    %6180 = vmatprep.subr.mxu0 %v1109
    %6181 = vmatpush1.msra.mxu0 %v1108
    %6182 = vmatprep.subr.mxu0 %v1117
    %6183 = vmatpush1.msra.mxu0 %v1116
    %6184 = vmatprep.subr.mxu0 %v1125
    %6185 = vmatpush1.msra.mxu0 %v1124
    %6186 = vmatprep.subr.mxu0 %v1133
    %6187 = vmatpush1.msra.mxu0 %v1132
    %6188 = vmatprep.subr.mxu0 %v1141
    %6189 = vmatpush1.msra.mxu0 %v1140
    %6190 = vmatprep.subr.mxu0 %v1149
    %6191 = vmatpush1.msra.mxu0 %v1148
    %6192 = vmatprep.subr.mxu0 %v1157
    %6193 = vmatpush1.msra.mxu0 %v1156
    %6194 = vmatprep.subr.mxu0 %v1165
    %6195 = vmatpush1.msra.mxu0 %v1164
    %6196 = vmatprep.subr.mxu0 %v1173
    %6197 = vmatpush1.msra.mxu0 %v1172
    %6198 = vmatprep.subr.mxu0 %v1181
    %6199 = vmatpush1.msra.mxu0 %v1180
    %6200 = vmatprep.subr.mxu0 %v1189
    %6201 = vmatpush1.msra.mxu0 %v1188
    %6202 = vmatprep.subr.mxu0 %v1197
    %6203 = vmatpush1.msra.mxu0 %v1196
    %6204 = vmatprep.subr.mxu0 %v1205
    %6205 = vmatpush1.msra.mxu0 %v1204
    %6206 = vmatprep.subr.mxu0 %v1213
    %6207 = vmatpush1.msra.mxu0 %v1212
    %6208 = vmatprep.subr.mxu0 %v1221
    %6209 = vmatpush1.msra.mxu0 %v1220
    %6210 = vmatprep.subr.mxu0 %v1229
    %6211 = vmatpush1.msra.mxu0 %v1228
    %6212 = vmatprep.subr.mxu0 %v1237
    %6213 = vmatpush1.msra.mxu0 %v1236
    %6214 = vmatprep.subr.mxu0 %v1245
    %6215 = vmatpush1.msra.mxu0 %v1244
    %6216 = vmatprep.subr.mxu0 %v1253
    %6217 = vmatpush1.msra.mxu0 %v1252
    %6218 = vmatprep.subr.mxu0 %v1261
    %6219 = vmatpush1.msra.mxu0 %v1260
    %6220 = vmatprep.subr.mxu0 %v1269
    %6221 = vmatpush1.msra.mxu0 %v1268
    %6222 = vmatprep.subr.mxu0 %v1277
    %6223 = vmatpush1.msra.mxu0 %v1276
    %6224 = vmatprep.subr.mxu0 %v1285
    %6225 = vmatpush1.msra.mxu0 %v1284
    %6226 = vmatprep.subr.mxu0 %v1293
    %6227 = vmatpush1.msra.mxu0 %v1292
    %6228 = vmatprep.subr.mxu0 %v1301
    %6229 = vmatpush1.msra.mxu0 %v1300
    %6230 = vmatprep.subr.mxu0 %v1309
    %6231 = vmatpush1.msra.mxu0 %v1308
    %6232 = vmatprep.subr.mxu0 %v1317
    %6233 = vmatpush1.msra.mxu0 %v1316
    %6234 = vmatprep.subr.mxu0 %v1325
    %6235 = vmatpush1.msra.mxu0 %v1324
    %6236 = vmatprep.subr.mxu0 %v1333
    %6237 = vmatpush1.msra.mxu0 %v1332
    %6238 = vmatprep.mubr.f32.mxu0 %v6100
    %6239 = vmatmul.mubr.f32.gmra.mrb[0].mxu0 %v6099
    %v6240 = vpop.f32.mrb[0].mxu0
    %v6241 = vadd.f32 0.0, %v6240
    %v6242 = vpop.f32.mrb[0].mxu0
    %v6243 = vadd.f32 0.0, %v6242
    %6244 = vdwg.mxu0
    %6245 = vmatprep.subr.mxu0 %v1087
    %6246 = vmatpush1.msra.mxu0 %v1086
    %6247 = vmatprep.subr.mxu0 %v1095
    %6248 = vmatpush1.msra.mxu0 %v1094
    %6249 = vmatprep.subr.mxu0 %v1103
    %6250 = vmatpush1.msra.mxu0 %v1102
    %6251 = vmatprep.subr.mxu0 %v1111
    %6252 = vmatpush1.msra.mxu0 %v1110
    %6253 = vmatprep.subr.mxu0 %v1119
    %6254 = vmatpush1.msra.mxu0 %v1118
    %6255 = vmatprep.subr.mxu0 %v1127
    %6256 = vmatpush1.msra.mxu0 %v1126
    %6257 = vmatprep.subr.mxu0 %v1135
    %6258 = vmatpush1.msra.mxu0 %v1134
    %6259 = vmatprep.subr.mxu0 %v1143
    %6260 = vmatpush1.msra.mxu0 %v1142
    %6261 = vmatprep.subr.mxu0 %v1151
    %6262 = vmatpush1.msra.mxu0 %v1150
    %6263 = vmatprep.subr.mxu0 %v1159
    %6264 = vmatpush1.msra.mxu0 %v1158
    %6265 = vmatprep.subr.mxu0 %v1167
    %6266 = vmatpush1.msra.mxu0 %v1166
    %6267 = vmatprep.subr.mxu0 %v1175
    %6268 = vmatpush1.msra.mxu0 %v1174
    %6269 = vmatprep.subr.mxu0 %v1183
    %6270 = vmatpush1.msra.mxu0 %v1182
    %6271 = vmatprep.subr.mxu0 %v1191
    %6272 = vmatpush1.msra.mxu0 %v1190
    %6273 = vmatprep.subr.mxu0 %v1199
    %6274 = vmatpush1.msra.mxu0 %v1198
    %6275 = vmatprep.subr.mxu0 %v1207
    %6276 = vmatpush1.msra.mxu0 %v1206
    %6277 = vmatprep.subr.mxu0 %v1215
    %6278 = vmatpush1.msra.mxu0 %v1214
    %6279 = vmatprep.subr.mxu0 %v1223
    %6280 = vmatpush1.msra.mxu0 %v1222
    %6281 = vmatprep.subr.mxu0 %v1231
    %6282 = vmatpush1.msra.mxu0 %v1230
    %6283 = vmatprep.subr.mxu0 %v1239
    %6284 = vmatpush1.msra.mxu0 %v1238
    %6285 = vmatprep.subr.mxu0 %v1247
    %6286 = vmatpush1.msra.mxu0 %v1246
    %6287 = vmatprep.subr.mxu0 %v1255
    %6288 = vmatpush1.msra.mxu0 %v1254
    %6289 = vmatprep.subr.mxu0 %v1263
    %6290 = vmatpush1.msra.mxu0 %v1262
    %6291 = vmatprep.subr.mxu0 %v1271
    %6292 = vmatpush1.msra.mxu0 %v1270
    %6293 = vmatprep.subr.mxu0 %v1279
    %6294 = vmatpush1.msra.mxu0 %v1278
    %6295 = vmatprep.subr.mxu0 %v1287
    %6296 = vmatpush1.msra.mxu0 %v1286
    %6297 = vmatprep.subr.mxu0 %v1295
    %6298 = vmatpush1.msra.mxu0 %v1294
    %6299 = vmatprep.subr.mxu0 %v1303
    %6300 = vmatpush1.msra.mxu0 %v1302
    %6301 = vmatprep.subr.mxu0 %v1311
    %6302 = vmatpush1.msra.mxu0 %v1310
    %6303 = vmatprep.subr.mxu0 %v1319
    %6304 = vmatpush1.msra.mxu0 %v1318
    %6305 = vmatprep.subr.mxu0 %v1327
    %6306 = vmatpush1.msra.mxu0 %v1326
    %6307 = vmatprep.subr.mxu0 %v1335
    %6308 = vmatpush1.msra.mxu0 %v1334
    %6309 = vmatprep.mubr.f32.mxu0 %v6100
    %6310 = vmatmul.mubr.f32.gmra.mrb[0].mxu0 %v6099
    %v6311 = vpop.f32.mrb[0].mxu0
    %v6312 = vadd.f32 0.0, %v6311
    %v6313 = vpop.f32.mrb[0].mxu0
    %v6314 = vadd.f32 0.0, %v6313
    %6315 = vdwg.mxu0
    %6316 = vmatprep.subr.mxu0 %v1089
    %6317 = vmatpush1.msra.mxu0 %v1088
    %6318 = vmatprep.subr.mxu0 %v1097
    %6319 = vmatpush1.msra.mxu0 %v1096
    %6320 = vmatprep.subr.mxu0 %v1105
    %6321 = vmatpush1.msra.mxu0 %v1104
    %6322 = vmatprep.subr.mxu0 %v1113
    %6323 = vmatpush1.msra.mxu0 %v1112
    %6324 = vmatprep.subr.mxu0 %v1121
    %6325 = vmatpush1.msra.mxu0 %v1120
    %6326 = vmatprep.subr.mxu0 %v1129
    %6327 = vmatpush1.msra.mxu0 %v1128
    %6328 = vmatprep.subr.mxu0 %v1137
    %6329 = vmatpush1.msra.mxu0 %v1136
    %6330 = vmatprep.subr.mxu0 %v1145
    %6331 = vmatpush1.msra.mxu0 %v1144
    %6332 = vmatprep.subr.mxu0 %v1153
    %6333 = vmatpush1.msra.mxu0 %v1152
    %6334 = vmatprep.subr.mxu0 %v1161
    %6335 = vmatpush1.msra.mxu0 %v1160
    %6336 = vmatprep.subr.mxu0 %v1169
    %6337 = vmatpush1.msra.mxu0 %v1168
    %6338 = vmatprep.subr.mxu0 %v1177
    %6339 = vmatpush1.msra.mxu0 %v1176
    %6340 = vmatprep.subr.mxu0 %v1185
    %6341 = vmatpush1.msra.mxu0 %v1184
    %6342 = vmatprep.subr.mxu0 %v1193
    %6343 = vmatpush1.msra.mxu0 %v1192
    %6344 = vmatprep.subr.mxu0 %v1201
    %6345 = vmatpush1.msra.mxu0 %v1200
    %6346 = vmatprep.subr.mxu0 %v1209
    %6347 = vmatpush1.msra.mxu0 %v1208
    %6348 = vmatprep.subr.mxu0 %v1217
    %6349 = vmatpush1.msra.mxu0 %v1216
    %6350 = vmatprep.subr.mxu0 %v1225
    %6351 = vmatpush1.msra.mxu0 %v1224
    %6352 = vmatprep.subr.mxu0 %v1233
    %6353 = vmatpush1.msra.mxu0 %v1232
    %6354 = vmatprep.subr.mxu0 %v1241
    %6355 = vmatpush1.msra.mxu0 %v1240
    %6356 = vmatprep.subr.mxu0 %v1249
    %6357 = vmatpush1.msra.mxu0 %v1248
    %6358 = vmatprep.subr.mxu0 %v1257
    %6359 = vmatpush1.msra.mxu0 %v1256
    %6360 = vmatprep.subr.mxu0 %v1265
    %6361 = vmatpush1.msra.mxu0 %v1264
    %6362 = vmatprep.subr.mxu0 %v1273
    %6363 = vmatpush1.msra.mxu0 %v1272
    %6364 = vmatprep.subr.mxu0 %v1281
    %6365 = vmatpush1.msra.mxu0 %v1280
    %6366 = vmatprep.subr.mxu0 %v1289
    %6367 = vmatpush1.msra.mxu0 %v1288
    %6368 = vmatprep.subr.mxu0 %v1297
    %6369 = vmatpush1.msra.mxu0 %v1296
    %6370 = vmatprep.subr.mxu0 %v1305
    %6371 = vmatpush1.msra.mxu0 %v1304
    %6372 = vmatprep.subr.mxu0 %v1313
    %6373 = vmatpush1.msra.mxu0 %v1312
    %6374 = vmatprep.subr.mxu0 %v1321
    %6375 = vmatpush1.msra.mxu0 %v1320
    %6376 = vmatprep.subr.mxu0 %v1329
    %6377 = vmatpush1.msra.mxu0 %v1328
    %6378 = vmatprep.subr.mxu0 %v1337
    %6379 = vmatpush1.msra.mxu0 %v1336
    %6380 = vmatprep.mubr.f32.mxu0 %v6100
    %6381 = vmatmul.mubr.f32.gmra.mrb[0].mxu0 %v6099
    %v6382 = vpop.f32.mrb[0].mxu0
    %v6383 = vadd.f32 0.0, %v6382
    %v6384 = vpop.f32.mrb[0].mxu0
    %v6385 = vadd.f32 0.0, %v6384
    %6386 = vdwg.mxu0
    %v6395 = vrot.slane %v6170, 4
    %v6396 = vrot.slane %v6172, 4
    %v6397 = vrot.slane %v6241, 4
    %v6398 = vrot.slane %v6243, 4
    %v6399 = vrot.slane %v6312, 4
    %v6400 = vrot.slane %v6314, 4
    %v6401 = vrot.slane %v6383, 4
    %v6402 = vrot.slane %v6385, 4
    %v6411 = vadd.f32 %v6089, %v6395
    %v6412 = vadd.f32 %v6090, %v6396
    %v6413 = vadd.f32 %v6091, %v6397
    %v6414 = vadd.f32 %v6092, %v6398
    %v6415 = vadd.f32 %v6093, %v6399
    %v6416 = vadd.f32 %v6094, %v6400
    %v6417 = vadd.f32 %v6095, %v6401
    %v6418 = vadd.f32 %v6096, %v6402
    %v6419 = vld [vmem:[#allocation3] sm:$0xc]
    %v6420 = vld [vmem:[#allocation3 + $0x8] sm:$0xc]
    %v6421 = vld [vmem:[#allocation3 + $0x10] sm:$0xc]
    %v6422 = vld [vmem:[#allocation3 + $0x18] sm:$0xc]
    %v6423 = vld [vmem:[#allocation3 + $0x20] sm:$0xc]
    %v6424 = vld [vmem:[#allocation3 + $0x28] sm:$0xc]
    %v6425 = vld [vmem:[#allocation3 + $0x30] sm:$0xc]
    %v6426 = vld [vmem:[#allocation3 + $0x38] sm:$0xc]
    %v6429 = vrot.slane %v6087, 4
    %v6430 = vrot.slane %v6088, 4
    %6433 = vmatprep.subr.mxu0 %v1340
    %6434 = vmatpush1.msra.mxu0 %v1339
    %6435 = vmatprep.subr.mxu0 %v1348
    %6436 = vmatpush1.msra.mxu0 %v1347
    %6437 = vmatprep.subr.mxu0 %v1356
    %6438 = vmatpush1.msra.mxu0 %v1355
    %6439 = vmatprep.subr.mxu0 %v1364
    %6440 = vmatpush1.msra.mxu0 %v1363
    %6441 = vmatprep.subr.mxu0 %v1372
    %6442 = vmatpush1.msra.mxu0 %v1371
    %6443 = vmatprep.subr.mxu0 %v1380
    %6444 = vmatpush1.msra.mxu0 %v1379
    %6445 = vmatprep.subr.mxu0 %v1388
    %6446 = vmatpush1.msra.mxu0 %v1387
    %6447 = vmatprep.subr.mxu0 %v1396
    %6448 = vmatpush1.msra.mxu0 %v1395
    %6449 = vmatprep.subr.mxu0 %v1404
    %6450 = vmatpush1.msra.mxu0 %v1403
    %6451 = vmatprep.subr.mxu0 %v1412
    %6452 = vmatpush1.msra.mxu0 %v1411
    %6453 = vmatprep.subr.mxu0 %v1420
    %6454 = vmatpush1.msra.mxu0 %v1419
    %6455 = vmatprep.subr.mxu0 %v1428
    %6456 = vmatpush1.msra.mxu0 %v1427
    %6457 = vmatprep.subr.mxu0 %v1436
    %6458 = vmatpush1.msra.mxu0 %v1435
    %6459 = vmatprep.subr.mxu0 %v1444
    %6460 = vmatpush1.msra.mxu0 %v1443
    %6461 = vmatprep.subr.mxu0 %v1452
    %6462 = vmatpush1.msra.mxu0 %v1451
    %6463 = vmatprep.subr.mxu0 %v1460
    %6464 = vmatpush1.msra.mxu0 %v1459
    %6465 = vmatprep.subr.mxu0 %v1468
    %6466 = vmatpush1.msra.mxu0 %v1467
    %6467 = vmatprep.subr.mxu0 %v1476
    %6468 = vmatpush1.msra.mxu0 %v1475
    %6469 = vmatprep.subr.mxu0 %v1484
    %6470 = vmatpush1.msra.mxu0 %v1483
    %6471 = vmatprep.subr.mxu0 %v1492
    %6472 = vmatpush1.msra.mxu0 %v1491
    %6473 = vmatprep.subr.mxu0 %v1500
    %6474 = vmatpush1.msra.mxu0 %v1499
    %6475 = vmatprep.subr.mxu0 %v1508
    %6476 = vmatpush1.msra.mxu0 %v1507
    %6477 = vmatprep.subr.mxu0 %v1516
    %6478 = vmatpush1.msra.mxu0 %v1515
    %6479 = vmatprep.subr.mxu0 %v1524
    %6480 = vmatpush1.msra.mxu0 %v1523
    %6481 = vmatprep.subr.mxu0 %v1532
    %6482 = vmatpush1.msra.mxu0 %v1531
    %6483 = vmatprep.subr.mxu0 %v1540
    %6484 = vmatpush1.msra.mxu0 %v1539
    %6485 = vmatprep.subr.mxu0 %v1548
    %6486 = vmatpush1.msra.mxu0 %v1547
    %6487 = vmatprep.subr.mxu0 %v1556
    %6488 = vmatpush1.msra.mxu0 %v1555
    %6489 = vmatprep.subr.mxu0 %v1564
    %6490 = vmatpush1.msra.mxu0 %v1563
    %6491 = vmatprep.subr.mxu0 %v1572
    %6492 = vmatpush1.msra.mxu0 %v1571
    %6493 = vmatprep.subr.mxu0 %v1580
    %6494 = vmatpush1.msra.mxu0 %v1579
    %6495 = vmatprep.subr.mxu0 %v1588
    %6496 = vmatpush1.msra.mxu0 %v1587
    %6497 = vmatprep.mubr.f32.mxu0 %v6430
    %6498 = vmatmul.mubr.f32.gmra.mrb[0].mxu0 %v6429
    %v6499 = vpop.f32.mrb[0].mxu0
    %v6500 = vadd.f32 0.0, %v6499
    %v6501 = vpop.f32.mrb[0].mxu0
    %v6502 = vadd.f32 0.0, %v6501
    %6503 = vdwg.mxu0
    %6504 = vmatprep.subr.mxu0 %v1342
    %6505 = vmatpush1.msra.mxu0 %v1341
    %6506 = vmatprep.subr.mxu0 %v1350
    %6507 = vmatpush1.msra.mxu0 %v1349
    %6508 = vmatprep.subr.mxu0 %v1358
    %6509 = vmatpush1.msra.mxu0 %v1357
    %6510 = vmatprep.subr.mxu0 %v1366
    %6511 = vmatpush1.msra.mxu0 %v1365
    %6512 = vmatprep.subr.mxu0 %v1374
    %6513 = vmatpush1.msra.mxu0 %v1373
    %6514 = vmatprep.subr.mxu0 %v1382
    %6515 = vmatpush1.msra.mxu0 %v1381
    %6516 = vmatprep.subr.mxu0 %v1390
    %6517 = vmatpush1.msra.mxu0 %v1389
    %6518 = vmatprep.subr.mxu0 %v1398
    %6519 = vmatpush1.msra.mxu0 %v1397
    %6520 = vmatprep.subr.mxu0 %v1406
    %6521 = vmatpush1.msra.mxu0 %v1405
    %6522 = vmatprep.subr.mxu0 %v1414
    %6523 = vmatpush1.msra.mxu0 %v1413
    %6524 = vmatprep.subr.mxu0 %v1422
    %6525 = vmatpush1.msra.mxu0 %v1421
    %6526 = vmatprep.subr.mxu0 %v1430
    %6527 = vmatpush1.msra.mxu0 %v1429
    %6528 = vmatprep.subr.mxu0 %v1438
    %6529 = vmatpush1.msra.mxu0 %v1437
    %6530 = vmatprep.subr.mxu0 %v1446
    %6531 = vmatpush1.msra.mxu0 %v1445
    %6532 = vmatprep.subr.mxu0 %v1454
    %6533 = vmatpush1.msra.mxu0 %v1453
    %6534 = vmatprep.subr.mxu0 %v1462
    %6535 = vmatpush1.msra.mxu0 %v1461
    %6536 = vmatprep.subr.mxu0 %v1470
    %6537 = vmatpush1.msra.mxu0 %v1469
    %6538 = vmatprep.subr.mxu0 %v1478
    %6539 = vmatpush1.msra.mxu0 %v1477
    %6540 = vmatprep.subr.mxu0 %v1486
    %6541 = vmatpush1.msra.mxu0 %v1485
    %6542 = vmatprep.subr.mxu0 %v1494
    %6543 = vmatpush1.msra.mxu0 %v1493
    %6544 = vmatprep.subr.mxu0 %v1502
    %6545 = vmatpush1.msra.mxu0 %v1501
    %6546 = vmatprep.subr.mxu0 %v1510
    %6547 = vmatpush1.msra.mxu0 %v1509
    %6548 = vmatprep.subr.mxu0 %v1518
    %6549 = vmatpush1.msra.mxu0 %v1517
    %6550 = vmatprep.subr.mxu0 %v1526
    %6551 = vmatpush1.msra.mxu0 %v1525
    %6552 = vmatprep.subr.mxu0 %v1534
    %6553 = vmatpush1.msra.mxu0 %v1533
    %6554 = vmatprep.subr.mxu0 %v1542
    %6555 = vmatpush1.msra.mxu0 %v1541
    %6556 = vmatprep.subr.mxu0 %v1550
    %6557 = vmatpush1.msra.mxu0 %v1549
    %6558 = vmatprep.subr.mxu0 %v1558
    %6559 = vmatpush1.msra.mxu0 %v1557
    %6560 = vmatprep.subr.mxu0 %v1566
    %6561 = vmatpush1.msra.mxu0 %v1565
    %6562 = vmatprep.subr.mxu0 %v1574
    %6563 = vmatpush1.msra.mxu0 %v1573
    %6564 = vmatprep.subr.mxu0 %v1582
    %6565 = vmatpush1.msra.mxu0 %v1581
    %6566 = vmatprep.subr.mxu0 %v1590
    %6567 = vmatpush1.msra.mxu0 %v1589
    %6568 = vmatprep.mubr.f32.mxu0 %v6430
    %6569 = vmatmul.mubr.f32.gmra.mrb[0].mxu0 %v6429
    %v6570 = vpop.f32.mrb[0].mxu0
    %v6571 = vadd.f32 0.0, %v6570
    %v6572 = vpop.f32.mrb[0].mxu0
    %v6573 = vadd.f32 0.0, %v6572
    %6574 = vdwg.mxu0
    %6575 = vmatprep.subr.mxu0 %v1344
    %6576 = vmatpush1.msra.mxu0 %v1343
    %6577 = vmatprep.subr.mxu0 %v1352
    %6578 = vmatpush1.msra.mxu0 %v1351
    %6579 = vmatprep.subr.mxu0 %v1360
    %6580 = vmatpush1.msra.mxu0 %v1359
    %6581 = vmatprep.subr.mxu0 %v1368
    %6582 = vmatpush1.msra.mxu0 %v1367
    %6583 = vmatprep.subr.mxu0 %v1376
    %6584 = vmatpush1.msra.mxu0 %v1375
    %6585 = vmatprep.subr.mxu0 %v1384
    %6586 = vmatpush1.msra.mxu0 %v1383
    %6587 = vmatprep.subr.mxu0 %v1392
    %6588 = vmatpush1.msra.mxu0 %v1391
    %6589 = vmatprep.subr.mxu0 %v1400
    %6590 = vmatpush1.msra.mxu0 %v1399
    %6591 = vmatprep.subr.mxu0 %v1408
    %6592 = vmatpush1.msra.mxu0 %v1407
    %6593 = vmatprep.subr.mxu0 %v1416
    %6594 = vmatpush1.msra.mxu0 %v1415
    %6595 = vmatprep.subr.mxu0 %v1424
    %6596 = vmatpush1.msra.mxu0 %v1423
    %6597 = vmatprep.subr.mxu0 %v1432
    %6598 = vmatpush1.msra.mxu0 %v1431
    %6599 = vmatprep.subr.mxu0 %v1440
    %6600 = vmatpush1.msra.mxu0 %v1439
    %6601 = vmatprep.subr.mxu0 %v1448
    %6602 = vmatpush1.msra.mxu0 %v1447
    %6603 = vmatprep.subr.mxu0 %v1456
    %6604 = vmatpush1.msra.mxu0 %v1455
    %6605 = vmatprep.subr.mxu0 %v1464
    %6606 = vmatpush1.msra.mxu0 %v1463
    %6607 = vmatprep.subr.mxu0 %v1472
    %6608 = vmatpush1.msra.mxu0 %v1471
    %6609 = vmatprep.subr.mxu0 %v1480
    %6610 = vmatpush1.msra.mxu0 %v1479
    %6611 = vmatprep.subr.mxu0 %v1488
    %6612 = vmatpush1.msra.mxu0 %v1487
    %6613 = vmatprep.subr.mxu0 %v1496
    %6614 = vmatpush1.msra.mxu0 %v1495
    %6615 = vmatprep.subr.mxu0 %v1504
    %6616 = vmatpush1.msra.mxu0 %v1503
    %6617 = vmatprep.subr.mxu0 %v1512
    %6618 = vmatpush1.msra.mxu0 %v1511
    %6619 = vmatprep.subr.mxu0 %v1520
    %6620 = vmatpush1.msra.mxu0 %v1519
    %6621 = vmatprep.subr.mxu0 %v1528
    %6622 = vmatpush1.msra.mxu0 %v1527
    %6623 = vmatprep.subr.mxu0 %v1536
    %6624 = vmatpush1.msra.mxu0 %v1535
    %6625 = vmatprep.subr.mxu0 %v1544
    %6626 = vmatpush1.msra.mxu0 %v1543
    %6627 = vmatprep.subr.mxu0 %v1552
    %6628 = vmatpush1.msra.mxu0 %v1551
    %6629 = vmatprep.subr.mxu0 %v1560
    %6630 = vmatpush1.msra.mxu0 %v1559
    %6631 = vmatprep.subr.mxu0 %v1568
    %6632 = vmatpush1.msra.mxu0 %v1567
    %6633 = vmatprep.subr.mxu0 %v1576
    %6634 = vmatpush1.msra.mxu0 %v1575
    %6635 = vmatprep.subr.mxu0 %v1584
    %6636 = vmatpush1.msra.mxu0 %v1583
    %6637 = vmatprep.subr.mxu0 %v1592
    %6638 = vmatpush1.msra.mxu0 %v1591
    %6639 = vmatprep.mubr.f32.mxu0 %v6430
    %6640 = vmatmul.mubr.f32.gmra.mrb[0].mxu0 %v6429
    %v6641 = vpop.f32.mrb[0].mxu0
    %v6642 = vadd.f32 0.0, %v6641
    %v6643 = vpop.f32.mrb[0].mxu0
    %v6644 = vadd.f32 0.0, %v6643
    %6645 = vdwg.mxu0
    %6646 = vmatprep.subr.mxu0 %v1346
    %6647 = vmatpush1.msra.mxu0 %v1345
    %6648 = vmatprep.subr.mxu0 %v1354
    %6649 = vmatpush1.msra.mxu0 %v1353
    %6650 = vmatprep.subr.mxu0 %v1362
    %6651 = vmatpush1.msra.mxu0 %v1361
    %6652 = vmatprep.subr.mxu0 %v1370
    %6653 = vmatpush1.msra.mxu0 %v1369
    %6654 = vmatprep.subr.mxu0 %v1378
    %6655 = vmatpush1.msra.mxu0 %v1377
    %6656 = vmatprep.subr.mxu0 %v1386
    %6657 = vmatpush1.msra.mxu0 %v1385
    %6658 = vmatprep.subr.mxu0 %v1394
    %6659 = vmatpush1.msra.mxu0 %v1393
    %6660 = vmatprep.subr.mxu0 %v1402
    %6661 = vmatpush1.msra.mxu0 %v1401
    %6662 = vmatprep.subr.mxu0 %v1410
    %6663 = vmatpush1.msra.mxu0 %v1409
    %6664 = vmatprep.subr.mxu0 %v1418
    %6665 = vmatpush1.msra.mxu0 %v1417
    %6666 = vmatprep.subr.mxu0 %v1426
    %6667 = vmatpush1.msra.mxu0 %v1425
    %6668 = vmatprep.subr.mxu0 %v1434
    %6669 = vmatpush1.msra.mxu0 %v1433
    %6670 = vmatprep.subr.mxu0 %v1442
    %6671 = vmatpush1.msra.mxu0 %v1441
    %6672 = vmatprep.subr.mxu0 %v1450
    %6673 = vmatpush1.msra.mxu0 %v1449
    %6674 = vmatprep.subr.mxu0 %v1458
    %6675 = vmatpush1.msra.mxu0 %v1457
    %6676 = vmatprep.subr.mxu0 %v1466
    %6677 = vmatpush1.msra.mxu0 %v1465
    %6678 = vmatprep.subr.mxu0 %v1474
    %6679 = vmatpush1.msra.mxu0 %v1473
    %6680 = vmatprep.subr.mxu0 %v1482
    %6681 = vmatpush1.msra.mxu0 %v1481
    %6682 = vmatprep.subr.mxu0 %v1490
    %6683 = vmatpush1.msra.mxu0 %v1489
    %6684 = vmatprep.subr.mxu0 %v1498
    %6685 = vmatpush1.msra.mxu0 %v1497
    %6686 = vmatprep.subr.mxu0 %v1506
    %6687 = vmatpush1.msra.mxu0 %v1505
    %6688 = vmatprep.subr.mxu0 %v1514
    %6689 = vmatpush1.msra.mxu0 %v1513
    %6690 = vmatprep.subr.mxu0 %v1522
    %6691 = vmatpush1.msra.mxu0 %v1521
    %6692 = vmatprep.subr.mxu0 %v1530
    %6693 = vmatpush1.msra.mxu0 %v1529
    %6694 = vmatprep.subr.mxu0 %v1538
    %6695 = vmatpush1.msra.mxu0 %v1537
    %6696 = vmatprep.subr.mxu0 %v1546
    %6697 = vmatpush1.msra.mxu0 %v1545
    %6698 = vmatprep.subr.mxu0 %v1554
    %6699 = vmatpush1.msra.mxu0 %v1553
    %6700 = vmatprep.subr.mxu0 %v1562
    %6701 = vmatpush1.msra.mxu0 %v1561
    %6702 = vmatprep.subr.mxu0 %v1570
    %6703 = vmatpush1.msra.mxu0 %v1569
    %6704 = vmatprep.subr.mxu0 %v1578
    %6705 = vmatpush1.msra.mxu0 %v1577
    %6706 = vmatprep.subr.mxu0 %v1586
    %6707 = vmatpush1.msra.mxu0 %v1585
    %6708 = vmatprep.subr.mxu0 %v1594
    %6709 = vmatpush1.msra.mxu0 %v1593
    %6710 = vmatprep.mubr.f32.mxu0 %v6430
    %6711 = vmatmul.mubr.f32.gmra.mrb[0].mxu0 %v6429
    %v6712 = vpop.f32.mrb[0].mxu0
    %v6713 = vadd.f32 0.0, %v6712
    %v6714 = vpop.f32.mrb[0].mxu0
    %v6715 = vadd.f32 0.0, %v6714
    %6716 = vdwg.mxu0
    %v6725 = vrot.slane %v6500, 6
    %v6726 = vrot.slane %v6502, 6
    %v6727 = vrot.slane %v6571, 6
    %v6728 = vrot.slane %v6573, 6
    %v6729 = vrot.slane %v6642, 6
    %v6730 = vrot.slane %v6644, 6
    %v6731 = vrot.slane %v6713, 6
    %v6732 = vrot.slane %v6715, 6
    %v6741 = vadd.f32 %v6419, %v6725
    %v6742 = vadd.f32 %v6420, %v6726
    %v6743 = vadd.f32 %v6421, %v6727
    %v6744 = vadd.f32 %v6422, %v6728
    %v6745 = vadd.f32 %v6423, %v6729
    %v6746 = vadd.f32 %v6424, %v6730
    %v6747 = vadd.f32 %v6425, %v6731
    %v6748 = vadd.f32 %v6426, %v6732
    %v6749 = vxor.u32 %v6411, 2147483648
    %v6750 = vxor.u32 %v6412, 2147483648
    %v6751 = vmul.f32 %v6749, 1.442695
    %v6752 = vpow.pop %v6751
    %v6753 = vmul.f32 %v6750, 1.442695
    %v6754 = vpow.pop %v6753
    %v6755 = vadd.f32 %v6752, 1.0
    %v6756 = vadd.f32 %v6754, 1.0
    %v6757 = vrcp.pop %v6755
    %v6758 = vmul.f32 1.0, %v6757
    %v6759 = vrcp.pop %v6756
    %v6760 = vmul.f32 1.0, %v6759
    %v6761 = vxor.u32 %v6413, 2147483648
    %v6762 = vxor.u32 %v6414, 2147483648
    %v6763 = vmul.f32 %v6761, 1.442695
    %v6764 = vpow.pop %v6763
    %v6765 = vmul.f32 %v6762, 1.442695
    %v6766 = vpow.pop %v6765
    %v6767 = vadd.f32 %v6764, 1.0
    %v6768 = vadd.f32 %v6766, 1.0
    %v6769 = vrcp.pop %v6767
    %v6770 = vmul.f32 1.0, %v6769
    %v6771 = vrcp.pop %v6768
    %v6772 = vmul.f32 1.0, %v6771
    %v6773 = vtanh.pop %v6415
    %v6774 = vtanh.pop %v6416
    %v6775 = vxor.u32 %v6417, 2147483648
    %v6776 = vxor.u32 %v6418, 2147483648
    %v6777 = vmul.f32 %v6775, 1.442695
    %v6778 = vpow.pop %v6777
    %v6779 = vmul.f32 %v6776, 1.442695
    %v6780 = vpow.pop %v6779
    %v6781 = vadd.f32 %v6778, 1.0
    %v6782 = vadd.f32 %v6780, 1.0
    %v6783 = vrcp.pop %v6781
    %v6784 = vmul.f32 1.0, %v6783
    %v6785 = vrcp.pop %v6782
    %v6786 = vmul.f32 1.0, %v6785
    %v6789 = vrot.slane %v6029, 6
    %v6790 = vrot.slane %v6030, 6
    %v6793 = vmul.f32 %v6770, %v6789
    %v6794 = vmul.f32 %v6772, %v6790
    %v6795 = vmul.f32 %v6758, %v6773
    %v6796 = vmul.f32 %v6760, %v6774
    %v6797 = vadd.f32 %v6793, %v6795
    %v6798 = vadd.f32 %v6794, %v6796
    %v6799 = vtanh.pop %v6797
    %v6800 = vtanh.pop %v6798
    %v6801 = vmul.f32 %v6784, %v6799
    %v6802 = vmul.f32 %v6786, %v6800
    %v6803 = vxor.u32 %v6741, 2147483648
    %v6804 = vxor.u32 %v6742, 2147483648
    %v6805 = vmul.f32 %v6803, 1.442695
    %v6806 = vpow.pop %v6805
    %v6807 = vmul.f32 %v6804, 1.442695
    %v6808 = vpow.pop %v6807
    %v6809 = vadd.f32 %v6806, 1.0
    %v6810 = vadd.f32 %v6808, 1.0
    %v6811 = vrcp.pop %v6809
    %v6812 = vmul.f32 1.0, %v6811
    %v6813 = vrcp.pop %v6810
    %v6814 = vmul.f32 1.0, %v6813
    %v6815 = vxor.u32 %v6743, 2147483648
    %v6816 = vxor.u32 %v6744, 2147483648
    %v6817 = vmul.f32 %v6815, 1.442695
    %v6818 = vpow.pop %v6817
    %v6819 = vmul.f32 %v6816, 1.442695
    %v6820 = vpow.pop %v6819
    %v6821 = vadd.f32 %v6818, 1.0
    %v6822 = vadd.f32 %v6820, 1.0
    %v6823 = vrcp.pop %v6821
    %v6824 = vmul.f32 1.0, %v6823
    %v6825 = vrcp.pop %v6822
    %v6826 = vmul.f32 1.0, %v6825
    %v6827 = vtanh.pop %v6745
    %v6828 = vtanh.pop %v6746
    %v6829 = vxor.u32 %v6747, 2147483648
    %v6830 = vxor.u32 %v6748, 2147483648
    %v6831 = vmul.f32 %v6829, 1.442695
    %v6832 = vpow.pop %v6831
    %v6833 = vmul.f32 %v6830, 1.442695
    %v6834 = vpow.pop %v6833
    %v6835 = vadd.f32 %v6832, 1.0
    %v6836 = vadd.f32 %v6834, 1.0
    %v6837 = vrcp.pop %v6835
    %v6838 = vmul.f32 1.0, %v6837
    %v6839 = vrcp.pop %v6836
    %v6840 = vmul.f32 1.0, %v6839
    %v6843 = vrot.slane %v6083, 2
    %v6844 = vrot.slane %v6084, 2
    %v6847 = vmul.f32 %v6824, %v6843
    %v6848 = vmul.f32 %v6826, %v6844
    %v6849 = vmul.f32 %v6812, %v6827
    %v6850 = vmul.f32 %v6814, %v6828
    %v6851 = vadd.f32 %v6847, %v6849
    %v6852 = vadd.f32 %v6848, %v6850
    %v6853 = vtanh.pop %v6851
    %v6854 = vtanh.pop %v6852
    %v6855 = vmul.f32 %v6838, %v6853
    %v6856 = vmul.f32 %v6840, %v6854
    %v6857 = vld [vmem:[#allocation2 + $0x40] sm:$0xc0]
    %v6858 = vld [vmem:[#allocation2 + $0x48] sm:$0xc0]
    %v6859 = vld [vmem:[#allocation2 + $0x50] sm:$0xc0]
    %v6860 = vld [vmem:[#allocation2 + $0x58] sm:$0xc0]
    %v6861 = vld [vmem:[#allocation2 + $0x60] sm:$0xc0]
    %v6862 = vld [vmem:[#allocation2 + $0x68] sm:$0xc0]
    %v6863 = vld [vmem:[#allocation2 + $0x70] sm:$0xc0]
    %v6864 = vld [vmem:[#allocation2 + $0x78] sm:$0xc0]
    %v6867 = vrot.slane %v6801, 4
    %v6868 = vrot.slane %v6802, 4
    %6871 = vmatprep.subr.mxu0 %v1083
    %6872 = vmatpush1.msra.mxu0 %v1082
    %6873 = vmatprep.subr.mxu0 %v1091
    %6874 = vmatpush1.msra.mxu0 %v1090
    %6875 = vmatprep.subr.mxu0 %v1099
    %6876 = vmatpush1.msra.mxu0 %v1098
    %6877 = vmatprep.subr.mxu0 %v1107
    %6878 = vmatpush1.msra.mxu0 %v1106
    %6879 = vmatprep.subr.mxu0 %v1115
    %6880 = vmatpush1.msra.mxu0 %v1114
    %6881 = vmatprep.subr.mxu0 %v1123
    %6882 = vmatpush1.msra.mxu0 %v1122
    %6883 = vmatprep.subr.mxu0 %v1131
    %6884 = vmatpush1.msra.mxu0 %v1130
    %6885 = vmatprep.subr.mxu0 %v1139
    %6886 = vmatpush1.msra.mxu0 %v1138
    %6887 = vmatprep.subr.mxu0 %v1147
    %6888 = vmatpush1.msra.mxu0 %v1146
    %6889 = vmatprep.subr.mxu0 %v1155
    %6890 = vmatpush1.msra.mxu0 %v1154
    %6891 = vmatprep.subr.mxu0 %v1163
    %6892 = vmatpush1.msra.mxu0 %v1162
    %6893 = vmatprep.subr.mxu0 %v1171
    %6894 = vmatpush1.msra.mxu0 %v1170
    %6895 = vmatprep.subr.mxu0 %v1179
    %6896 = vmatpush1.msra.mxu0 %v1178
    %6897 = vmatprep.subr.mxu0 %v1187
    %6898 = vmatpush1.msra.mxu0 %v1186
    %6899 = vmatprep.subr.mxu0 %v1195
    %6900 = vmatpush1.msra.mxu0 %v1194
    %6901 = vmatprep.subr.mxu0 %v1203
    %6902 = vmatpush1.msra.mxu0 %v1202
    %6903 = vmatprep.subr.mxu0 %v1211
    %6904 = vmatpush1.msra.mxu0 %v1210
    %6905 = vmatprep.subr.mxu0 %v1219
    %6906 = vmatpush1.msra.mxu0 %v1218
    %6907 = vmatprep.subr.mxu0 %v1227
    %6908 = vmatpush1.msra.mxu0 %v1226
    %6909 = vmatprep.subr.mxu0 %v1235
    %6910 = vmatpush1.msra.mxu0 %v1234
    %6911 = vmatprep.subr.mxu0 %v1243
    %6912 = vmatpush1.msra.mxu0 %v1242
    %6913 = vmatprep.subr.mxu0 %v1251
    %6914 = vmatpush1.msra.mxu0 %v1250
    %6915 = vmatprep.subr.mxu0 %v1259
    %6916 = vmatpush1.msra.mxu0 %v1258
    %6917 = vmatprep.subr.mxu0 %v1267
    %6918 = vmatpush1.msra.mxu0 %v1266
    %6919 = vmatprep.subr.mxu0 %v1275
    %6920 = vmatpush1.msra.mxu0 %v1274
    %6921 = vmatprep.subr.mxu0 %v1283
    %6922 = vmatpush1.msra.mxu0 %v1282
    %6923 = vmatprep.subr.mxu0 %v1291
    %6924 = vmatpush1.msra.mxu0 %v1290
    %6925 = vmatprep.subr.mxu0 %v1299
    %6926 = vmatpush1.msra.mxu0 %v1298
    %6927 = vmatprep.subr.mxu0 %v1307
    %6928 = vmatpush1.msra.mxu0 %v1306
    %6929 = vmatprep.subr.mxu0 %v1315
    %6930 = vmatpush1.msra.mxu0 %v1314
    %6931 = vmatprep.subr.mxu0 %v1323
    %6932 = vmatpush1.msra.mxu0 %v1322
    %6933 = vmatprep.subr.mxu0 %v1331
    %6934 = vmatpush1.msra.mxu0 %v1330
    %6935 = vmatprep.mubr.f32.mxu0 %v6868
    %6936 = vmatmul.mubr.f32.gmra.mrb[0].mxu0 %v6867
    %v6937 = vpop.f32.mrb[0].mxu0
    %v6938 = vadd.f32 0.0, %v6937
    %v6939 = vpop.f32.mrb[0].mxu0
    %v6940 = vadd.f32 0.0, %v6939
    %6941 = vdwg.mxu0
    %6942 = vmatprep.subr.mxu0 %v1085
    %6943 = vmatpush1.msra.mxu0 %v1084
    %6944 = vmatprep.subr.mxu0 %v1093
    %6945 = vmatpush1.msra.mxu0 %v1092
    %6946 = vmatprep.subr.mxu0 %v1101
    %6947 = vmatpush1.msra.mxu0 %v1100
    %6948 = vmatprep.subr.mxu0 %v1109
    %6949 = vmatpush1.msra.mxu0 %v1108
    %6950 = vmatprep.subr.mxu0 %v1117
    %6951 = vmatpush1.msra.mxu0 %v1116
    %6952 = vmatprep.subr.mxu0 %v1125
    %6953 = vmatpush1.msra.mxu0 %v1124
    %6954 = vmatprep.subr.mxu0 %v1133
    %6955 = vmatpush1.msra.mxu0 %v1132
    %6956 = vmatprep.subr.mxu0 %v1141
    %6957 = vmatpush1.msra.mxu0 %v1140
    %6958 = vmatprep.subr.mxu0 %v1149
    %6959 = vmatpush1.msra.mxu0 %v1148
    %6960 = vmatprep.subr.mxu0 %v1157
    %6961 = vmatpush1.msra.mxu0 %v1156
    %6962 = vmatprep.subr.mxu0 %v1165
    %6963 = vmatpush1.msra.mxu0 %v1164
    %6964 = vmatprep.subr.mxu0 %v1173
    %6965 = vmatpush1.msra.mxu0 %v1172
    %6966 = vmatprep.subr.mxu0 %v1181
    %6967 = vmatpush1.msra.mxu0 %v1180
    %6968 = vmatprep.subr.mxu0 %v1189
    %6969 = vmatpush1.msra.mxu0 %v1188
    %6970 = vmatprep.subr.mxu0 %v1197
    %6971 = vmatpush1.msra.mxu0 %v1196
    %6972 = vmatprep.subr.mxu0 %v1205
    %6973 = vmatpush1.msra.mxu0 %v1204
    %6974 = vmatprep.subr.mxu0 %v1213
    %6975 = vmatpush1.msra.mxu0 %v1212
    %6976 = vmatprep.subr.mxu0 %v1221
    %6977 = vmatpush1.msra.mxu0 %v1220
    %6978 = vmatprep.subr.mxu0 %v1229
    %6979 = vmatpush1.msra.mxu0 %v1228
    %6980 = vmatprep.subr.mxu0 %v1237
    %6981 = vmatpush1.msra.mxu0 %v1236
    %6982 = vmatprep.subr.mxu0 %v1245
    %6983 = vmatpush1.msra.mxu0 %v1244
    %6984 = vmatprep.subr.mxu0 %v1253
    %6985 = vmatpush1.msra.mxu0 %v1252
    %6986 = vmatprep.subr.mxu0 %v1261
    %6987 = vmatpush1.msra.mxu0 %v1260
    %6988 = vmatprep.subr.mxu0 %v1269
    %6989 = vmatpush1.msra.mxu0 %v1268
    %6990 = vmatprep.subr.mxu0 %v1277
    %6991 = vmatpush1.msra.mxu0 %v1276
    %6992 = vmatprep.subr.mxu0 %v1285
    %6993 = vmatpush1.msra.mxu0 %v1284
    %6994 = vmatprep.subr.mxu0 %v1293
    %6995 = vmatpush1.msra.mxu0 %v1292
    %6996 = vmatprep.subr.mxu0 %v1301
    %6997 = vmatpush1.msra.mxu0 %v1300
    %6998 = vmatprep.subr.mxu0 %v1309
    %6999 = vmatpush1.msra.mxu0 %v1308
    %7000 = vmatprep.subr.mxu0 %v1317
    %7001 = vmatpush1.msra.mxu0 %v1316
    %7002 = vmatprep.subr.mxu0 %v1325
    %7003 = vmatpush1.msra.mxu0 %v1324
    %7004 = vmatprep.subr.mxu0 %v1333
    %7005 = vmatpush1.msra.mxu0 %v1332
    %7006 = vmatprep.mubr.f32.mxu0 %v6868
    %7007 = vmatmul.mubr.f32.gmra.mrb[0].mxu0 %v6867
    %v7008 = vpop.f32.mrb[0].mxu0
    %v7009 = vadd.f32 0.0, %v7008
    %v7010 = vpop.f32.mrb[0].mxu0
    %v7011 = vadd.f32 0.0, %v7010
    %7012 = vdwg.mxu0
    %7013 = vmatprep.subr.mxu0 %v1087
    %7014 = vmatpush1.msra.mxu0 %v1086
    %7015 = vmatprep.subr.mxu0 %v1095
    %7016 = vmatpush1.msra.mxu0 %v1094
    %7017 = vmatprep.subr.mxu0 %v1103
    %7018 = vmatpush1.msra.mxu0 %v1102
    %7019 = vmatprep.subr.mxu0 %v1111
    %7020 = vmatpush1.msra.mxu0 %v1110
    %7021 = vmatprep.subr.mxu0 %v1119
    %7022 = vmatpush1.msra.mxu0 %v1118
    %7023 = vmatprep.subr.mxu0 %v1127
    %7024 = vmatpush1.msra.mxu0 %v1126
    %7025 = vmatprep.subr.mxu0 %v1135
    %7026 = vmatpush1.msra.mxu0 %v1134
    %7027 = vmatprep.subr.mxu0 %v1143
    %7028 = vmatpush1.msra.mxu0 %v1142
    %7029 = vmatprep.subr.mxu0 %v1151
    %7030 = vmatpush1.msra.mxu0 %v1150
    %7031 = vmatprep.subr.mxu0 %v1159
    %7032 = vmatpush1.msra.mxu0 %v1158
    %7033 = vmatprep.subr.mxu0 %v1167
    %7034 = vmatpush1.msra.mxu0 %v1166
    %7035 = vmatprep.subr.mxu0 %v1175
    %7036 = vmatpush1.msra.mxu0 %v1174
    %7037 = vmatprep.subr.mxu0 %v1183
    %7038 = vmatpush1.msra.mxu0 %v1182
    %7039 = vmatprep.subr.mxu0 %v1191
    %7040 = vmatpush1.msra.mxu0 %v1190
    %7041 = vmatprep.subr.mxu0 %v1199
    %7042 = vmatpush1.msra.mxu0 %v1198
    %7043 = vmatprep.subr.mxu0 %v1207
    %7044 = vmatpush1.msra.mxu0 %v1206
    %7045 = vmatprep.subr.mxu0 %v1215
    %7046 = vmatpush1.msra.mxu0 %v1214
    %7047 = vmatprep.subr.mxu0 %v1223
    %7048 = vmatpush1.msra.mxu0 %v1222
    %7049 = vmatprep.subr.mxu0 %v1231
    %7050 = vmatpush1.msra.mxu0 %v1230
    %7051 = vmatprep.subr.mxu0 %v1239
    %7052 = vmatpush1.msra.mxu0 %v1238
    %7053 = vmatprep.subr.mxu0 %v1247
    %7054 = vmatpush1.msra.mxu0 %v1246
    %7055 = vmatprep.subr.mxu0 %v1255
    %7056 = vmatpush1.msra.mxu0 %v1254
    %7057 = vmatprep.subr.mxu0 %v1263
    %7058 = vmatpush1.msra.mxu0 %v1262
    %7059 = vmatprep.subr.mxu0 %v1271
    %7060 = vmatpush1.msra.mxu0 %v1270
    %7061 = vmatprep.subr.mxu0 %v1279
    %7062 = vmatpush1.msra.mxu0 %v1278
    %7063 = vmatprep.subr.mxu0 %v1287
    %7064 = vmatpush1.msra.mxu0 %v1286
    %7065 = vmatprep.subr.mxu0 %v1295
    %7066 = vmatpush1.msra.mxu0 %v1294
    %7067 = vmatprep.subr.mxu0 %v1303
    %7068 = vmatpush1.msra.mxu0 %v1302
    %7069 = vmatprep.subr.mxu0 %v1311
    %7070 = vmatpush1.msra.mxu0 %v1310
    %7071 = vmatprep.subr.mxu0 %v1319
    %7072 = vmatpush1.msra.mxu0 %v1318
    %7073 = vmatprep.subr.mxu0 %v1327
    %7074 = vmatpush1.msra.mxu0 %v1326
    %7075 = vmatprep.subr.mxu0 %v1335
    %7076 = vmatpush1.msra.mxu0 %v1334
    %7077 = vmatprep.mubr.f32.mxu0 %v6868
    %7078 = vmatmul.mubr.f32.gmra.mrb[0].mxu0 %v6867
    %v7079 = vpop.f32.mrb[0].mxu0
    %v7080 = vadd.f32 0.0, %v7079
    %v7081 = vpop.f32.mrb[0].mxu0
    %v7082 = vadd.f32 0.0, %v7081
    %7083 = vdwg.mxu0
    %7084 = vmatprep.subr.mxu0 %v1089
    %7085 = vmatpush1.msra.mxu0 %v1088
    %7086 = vmatprep.subr.mxu0 %v1097
    %7087 = vmatpush1.msra.mxu0 %v1096
    %7088 = vmatprep.subr.mxu0 %v1105
    %7089 = vmatpush1.msra.mxu0 %v1104
    %7090 = vmatprep.subr.mxu0 %v1113
    %7091 = vmatpush1.msra.mxu0 %v1112
    %7092 = vmatprep.subr.mxu0 %v1121
    %7093 = vmatpush1.msra.mxu0 %v1120
    %7094 = vmatprep.subr.mxu0 %v1129
    %7095 = vmatpush1.msra.mxu0 %v1128
    %7096 = vmatprep.subr.mxu0 %v1137
    %7097 = vmatpush1.msra.mxu0 %v1136
    %7098 = vmatprep.subr.mxu0 %v1145
    %7099 = vmatpush1.msra.mxu0 %v1144
    %7100 = vmatprep.subr.mxu0 %v1153
    %7101 = vmatpush1.msra.mxu0 %v1152
    %7102 = vmatprep.subr.mxu0 %v1161
    %7103 = vmatpush1.msra.mxu0 %v1160
    %7104 = vmatprep.subr.mxu0 %v1169
    %7105 = vmatpush1.msra.mxu0 %v1168
    %7106 = vmatprep.subr.mxu0 %v1177
    %7107 = vmatpush1.msra.mxu0 %v1176
    %7108 = vmatprep.subr.mxu0 %v1185
    %7109 = vmatpush1.msra.mxu0 %v1184
    %7110 = vmatprep.subr.mxu0 %v1193
    %7111 = vmatpush1.msra.mxu0 %v1192
    %7112 = vmatprep.subr.mxu0 %v1201
    %7113 = vmatpush1.msra.mxu0 %v1200
    %7114 = vmatprep.subr.mxu0 %v1209
    %7115 = vmatpush1.msra.mxu0 %v1208
    %7116 = vmatprep.subr.mxu0 %v1217
    %7117 = vmatpush1.msra.mxu0 %v1216
    %7118 = vmatprep.subr.mxu0 %v1225
    %7119 = vmatpush1.msra.mxu0 %v1224
    %7120 = vmatprep.subr.mxu0 %v1233
    %7121 = vmatpush1.msra.mxu0 %v1232
    %7122 = vmatprep.subr.mxu0 %v1241
    %7123 = vmatpush1.msra.mxu0 %v1240
    %7124 = vmatprep.subr.mxu0 %v1249
    %7125 = vmatpush1.msra.mxu0 %v1248
    %7126 = vmatprep.subr.mxu0 %v1257
    %7127 = vmatpush1.msra.mxu0 %v1256
    %7128 = vmatprep.subr.mxu0 %v1265
    %7129 = vmatpush1.msra.mxu0 %v1264
    %7130 = vmatprep.subr.mxu0 %v1273
    %7131 = vmatpush1.msra.mxu0 %v1272
    %7132 = vmatprep.subr.mxu0 %v1281
    %7133 = vmatpush1.msra.mxu0 %v1280
    %7134 = vmatprep.subr.mxu0 %v1289
    %7135 = vmatpush1.msra.mxu0 %v1288
    %7136 = vmatprep.subr.mxu0 %v1297
    %7137 = vmatpush1.msra.mxu0 %v1296
    %7138 = vmatprep.subr.mxu0 %v1305
    %7139 = vmatpush1.msra.mxu0 %v1304
    %7140 = vmatprep.subr.mxu0 %v1313
    %7141 = vmatpush1.msra.mxu0 %v1312
    %7142 = vmatprep.subr.mxu0 %v1321
    %7143 = vmatpush1.msra.mxu0 %v1320
    %7144 = vmatprep.subr.mxu0 %v1329
    %7145 = vmatpush1.msra.mxu0 %v1328
    %7146 = vmatprep.subr.mxu0 %v1337
    %7147 = vmatpush1.msra.mxu0 %v1336
    %7148 = vmatprep.mubr.f32.mxu0 %v6868
    %7149 = vmatmul.mubr.f32.gmra.mrb[0].mxu0 %v6867
    %v7150 = vpop.f32.mrb[0].mxu0
    %v7151 = vadd.f32 0.0, %v7150
    %v7152 = vpop.f32.mrb[0].mxu0
    %v7153 = vadd.f32 0.0, %v7152
    %7154 = vdwg.mxu0
    %v7163 = vrot.slane %v6938, 2
    %v7164 = vrot.slane %v6940, 2
    %v7165 = vrot.slane %v7009, 2
    %v7166 = vrot.slane %v7011, 2
    %v7167 = vrot.slane %v7080, 2
    %v7168 = vrot.slane %v7082, 2
    %v7169 = vrot.slane %v7151, 2
    %v7170 = vrot.slane %v7153, 2
    %v7179 = vadd.f32 %v6857, %v7163
    %v7180 = vadd.f32 %v6858, %v7164
    %v7181 = vadd.f32 %v6859, %v7165
    %v7182 = vadd.f32 %v6860, %v7166
    %v7183 = vadd.f32 %v6861, %v7167
    %v7184 = vadd.f32 %v6862, %v7168
    %v7185 = vadd.f32 %v6863, %v7169
    %v7186 = vadd.f32 %v6864, %v7170
    %v7187 = vld [vmem:[#allocation3] sm:$0x3]
    %v7188 = vld [vmem:[#allocation3 + $0x8] sm:$0x3]
    %v7189 = vld [vmem:[#allocation3 + $0x10] sm:$0x3]
    %v7190 = vld [vmem:[#allocation3 + $0x18] sm:$0x3]
    %v7191 = vld [vmem:[#allocation3 + $0x20] sm:$0x3]
    %v7192 = vld [vmem:[#allocation3 + $0x28] sm:$0x3]
    %v7193 = vld [vmem:[#allocation3 + $0x30] sm:$0x3]
    %v7194 = vld [vmem:[#allocation3 + $0x38] sm:$0x3]
    %v7197 = vrot.slane %v6855, 2
    %v7198 = vrot.slane %v6856, 2
    %7201 = vmatprep.subr.mxu0 %v1340
    %7202 = vmatpush1.msra.mxu0 %v1339
    %7203 = vmatprep.subr.mxu0 %v1348
    %7204 = vmatpush1.msra.mxu0 %v1347
    %7205 = vmatprep.subr.mxu0 %v1356
    %7206 = vmatpush1.msra.mxu0 %v1355
    %7207 = vmatprep.subr.mxu0 %v1364
    %7208 = vmatpush1.msra.mxu0 %v1363
    %7209 = vmatprep.subr.mxu0 %v1372
    %7210 = vmatpush1.msra.mxu0 %v1371
    %7211 = vmatprep.subr.mxu0 %v1380
    %7212 = vmatpush1.msra.mxu0 %v1379
    %7213 = vmatprep.subr.mxu0 %v1388
    %7214 = vmatpush1.msra.mxu0 %v1387
    %7215 = vmatprep.subr.mxu0 %v1396
    %7216 = vmatpush1.msra.mxu0 %v1395
    %7217 = vmatprep.subr.mxu0 %v1404
    %7218 = vmatpush1.msra.mxu0 %v1403
    %7219 = vmatprep.subr.mxu0 %v1412
    %7220 = vmatpush1.msra.mxu0 %v1411
    %7221 = vmatprep.subr.mxu0 %v1420
    %7222 = vmatpush1.msra.mxu0 %v1419
    %7223 = vmatprep.subr.mxu0 %v1428
    %7224 = vmatpush1.msra.mxu0 %v1427
    %7225 = vmatprep.subr.mxu0 %v1436
    %7226 = vmatpush1.msra.mxu0 %v1435
    %7227 = vmatprep.subr.mxu0 %v1444
    %7228 = vmatpush1.msra.mxu0 %v1443
    %7229 = vmatprep.subr.mxu0 %v1452
    %7230 = vmatpush1.msra.mxu0 %v1451
    %7231 = vmatprep.subr.mxu0 %v1460
    %7232 = vmatpush1.msra.mxu0 %v1459
    %7233 = vmatprep.subr.mxu0 %v1468
    %7234 = vmatpush1.msra.mxu0 %v1467
    %7235 = vmatprep.subr.mxu0 %v1476
    %7236 = vmatpush1.msra.mxu0 %v1475
    %7237 = vmatprep.subr.mxu0 %v1484
    %7238 = vmatpush1.msra.mxu0 %v1483
    %7239 = vmatprep.subr.mxu0 %v1492
    %7240 = vmatpush1.msra.mxu0 %v1491
    %7241 = vmatprep.subr.mxu0 %v1500
    %7242 = vmatpush1.msra.mxu0 %v1499
    %7243 = vmatprep.subr.mxu0 %v1508
    %7244 = vmatpush1.msra.mxu0 %v1507
    %7245 = vmatprep.subr.mxu0 %v1516
    %7246 = vmatpush1.msra.mxu0 %v1515
    %7247 = vmatprep.subr.mxu0 %v1524
    %7248 = vmatpush1.msra.mxu0 %v1523
    %7249 = vmatprep.subr.mxu0 %v1532
    %7250 = vmatpush1.msra.mxu0 %v1531
    %7251 = vmatprep.subr.mxu0 %v1540
    %7252 = vmatpush1.msra.mxu0 %v1539
    %7253 = vmatprep.subr.mxu0 %v1548
    %7254 = vmatpush1.msra.mxu0 %v1547
    %7255 = vmatprep.subr.mxu0 %v1556
    %7256 = vmatpush1.msra.mxu0 %v1555
    %7257 = vmatprep.subr.mxu0 %v1564
    %7258 = vmatpush1.msra.mxu0 %v1563
    %7259 = vmatprep.subr.mxu0 %v1572
    %7260 = vmatpush1.msra.mxu0 %v1571
    %7261 = vmatprep.subr.mxu0 %v1580
    %7262 = vmatpush1.msra.mxu0 %v1579
    %7263 = vmatprep.subr.mxu0 %v1588
    %7264 = vmatpush1.msra.mxu0 %v1587
    %7265 = vmatprep.mubr.f32.mxu0 %v7198
    %7266 = vmatmul.mubr.f32.gmra.mrb[0].mxu0 %v7197
    %v7267 = vpop.f32.mrb[0].mxu0
    %v7268 = vadd.f32 0.0, %v7267
    %v7269 = vpop.f32.mrb[0].mxu0
    %v7270 = vadd.f32 0.0, %v7269
    %7271 = vdwg.mxu0
    %7272 = vmatprep.subr.mxu0 %v1342
    %7273 = vmatpush1.msra.mxu0 %v1341
    %7274 = vmatprep.subr.mxu0 %v1350
    %7275 = vmatpush1.msra.mxu0 %v1349
    %7276 = vmatprep.subr.mxu0 %v1358
    %7277 = vmatpush1.msra.mxu0 %v1357
    %7278 = vmatprep.subr.mxu0 %v1366
    %7279 = vmatpush1.msra.mxu0 %v1365
    %7280 = vmatprep.subr.mxu0 %v1374
    %7281 = vmatpush1.msra.mxu0 %v1373
    %7282 = vmatprep.subr.mxu0 %v1382
    %7283 = vmatpush1.msra.mxu0 %v1381
    %7284 = vmatprep.subr.mxu0 %v1390
    %7285 = vmatpush1.msra.mxu0 %v1389
    %7286 = vmatprep.subr.mxu0 %v1398
    %7287 = vmatpush1.msra.mxu0 %v1397
    %7288 = vmatprep.subr.mxu0 %v1406
    %7289 = vmatpush1.msra.mxu0 %v1405
    %7290 = vmatprep.subr.mxu0 %v1414
    %7291 = vmatpush1.msra.mxu0 %v1413
    %7292 = vmatprep.subr.mxu0 %v1422
    %7293 = vmatpush1.msra.mxu0 %v1421
    %7294 = vmatprep.subr.mxu0 %v1430
    %7295 = vmatpush1.msra.mxu0 %v1429
    %7296 = vmatprep.subr.mxu0 %v1438
    %7297 = vmatpush1.msra.mxu0 %v1437
    %7298 = vmatprep.subr.mxu0 %v1446
    %7299 = vmatpush1.msra.mxu0 %v1445
    %7300 = vmatprep.subr.mxu0 %v1454
    %7301 = vmatpush1.msra.mxu0 %v1453
    %7302 = vmatprep.subr.mxu0 %v1462
    %7303 = vmatpush1.msra.mxu0 %v1461
    %7304 = vmatprep.subr.mxu0 %v1470
    %7305 = vmatpush1.msra.mxu0 %v1469
    %7306 = vmatprep.subr.mxu0 %v1478
    %7307 = vmatpush1.msra.mxu0 %v1477
    %7308 = vmatprep.subr.mxu0 %v1486
    %7309 = vmatpush1.msra.mxu0 %v1485
    %7310 = vmatprep.subr.mxu0 %v1494
    %7311 = vmatpush1.msra.mxu0 %v1493
    %7312 = vmatprep.subr.mxu0 %v1502
    %7313 = vmatpush1.msra.mxu0 %v1501
    %7314 = vmatprep.subr.mxu0 %v1510
    %7315 = vmatpush1.msra.mxu0 %v1509
    %7316 = vmatprep.subr.mxu0 %v1518
    %7317 = vmatpush1.msra.mxu0 %v1517
    %7318 = vmatprep.subr.mxu0 %v1526
    %7319 = vmatpush1.msra.mxu0 %v1525
    %7320 = vmatprep.subr.mxu0 %v1534
    %7321 = vmatpush1.msra.mxu0 %v1533
    %7322 = vmatprep.subr.mxu0 %v1542
    %7323 = vmatpush1.msra.mxu0 %v1541
    %7324 = vmatprep.subr.mxu0 %v1550
    %7325 = vmatpush1.msra.mxu0 %v1549
    %7326 = vmatprep.subr.mxu0 %v1558
    %7327 = vmatpush1.msra.mxu0 %v1557
    %7328 = vmatprep.subr.mxu0 %v1566
    %7329 = vmatpush1.msra.mxu0 %v1565
    %7330 = vmatprep.subr.mxu0 %v1574
    %7331 = vmatpush1.msra.mxu0 %v1573
    %7332 = vmatprep.subr.mxu0 %v1582
    %7333 = vmatpush1.msra.mxu0 %v1581
    %7334 = vmatprep.subr.mxu0 %v1590
    %7335 = vmatpush1.msra.mxu0 %v1589
    %7336 = vmatprep.mubr.f32.mxu0 %v7198
    %7337 = vmatmul.mubr.f32.gmra.mrb[0].mxu0 %v7197
    %v7338 = vpop.f32.mrb[0].mxu0
    %v7339 = vadd.f32 0.0, %v7338
    %v7340 = vpop.f32.mrb[0].mxu0
    %v7341 = vadd.f32 0.0, %v7340
    %7342 = vdwg.mxu0
    %7343 = vmatprep.subr.mxu0 %v1344
    %7344 = vmatpush1.msra.mxu0 %v1343
    %7345 = vmatprep.subr.mxu0 %v1352
    %7346 = vmatpush1.msra.mxu0 %v1351
    %7347 = vmatprep.subr.mxu0 %v1360
    %7348 = vmatpush1.msra.mxu0 %v1359
    %7349 = vmatprep.subr.mxu0 %v1368
    %7350 = vmatpush1.msra.mxu0 %v1367
    %7351 = vmatprep.subr.mxu0 %v1376
    %7352 = vmatpush1.msra.mxu0 %v1375
    %7353 = vmatprep.subr.mxu0 %v1384
    %7354 = vmatpush1.msra.mxu0 %v1383
    %7355 = vmatprep.subr.mxu0 %v1392
    %7356 = vmatpush1.msra.mxu0 %v1391
    %7357 = vmatprep.subr.mxu0 %v1400
    %7358 = vmatpush1.msra.mxu0 %v1399
    %7359 = vmatprep.subr.mxu0 %v1408
    %7360 = vmatpush1.msra.mxu0 %v1407
    %7361 = vmatprep.subr.mxu0 %v1416
    %7362 = vmatpush1.msra.mxu0 %v1415
    %7363 = vmatprep.subr.mxu0 %v1424
    %7364 = vmatpush1.msra.mxu0 %v1423
    %7365 = vmatprep.subr.mxu0 %v1432
    %7366 = vmatpush1.msra.mxu0 %v1431
    %7367 = vmatprep.subr.mxu0 %v1440
    %7368 = vmatpush1.msra.mxu0 %v1439
    %7369 = vmatprep.subr.mxu0 %v1448
    %7370 = vmatpush1.msra.mxu0 %v1447
    %7371 = vmatprep.subr.mxu0 %v1456
    %7372 = vmatpush1.msra.mxu0 %v1455
    %7373 = vmatprep.subr.mxu0 %v1464
    %7374 = vmatpush1.msra.mxu0 %v1463
    %7375 = vmatprep.subr.mxu0 %v1472
    %7376 = vmatpush1.msra.mxu0 %v1471
    %7377 = vmatprep.subr.mxu0 %v1480
    %7378 = vmatpush1.msra.mxu0 %v1479
    %7379 = vmatprep.subr.mxu0 %v1488
    %7380 = vmatpush1.msra.mxu0 %v1487
    %7381 = vmatprep.subr.mxu0 %v1496
    %7382 = vmatpush1.msra.mxu0 %v1495
    %7383 = vmatprep.subr.mxu0 %v1504
    %7384 = vmatpush1.msra.mxu0 %v1503
    %7385 = vmatprep.subr.mxu0 %v1512
    %7386 = vmatpush1.msra.mxu0 %v1511
    %7387 = vmatprep.subr.mxu0 %v1520
    %7388 = vmatpush1.msra.mxu0 %v1519
    %7389 = vmatprep.subr.mxu0 %v1528
    %7390 = vmatpush1.msra.mxu0 %v1527
    %7391 = vmatprep.subr.mxu0 %v1536
    %7392 = vmatpush1.msra.mxu0 %v1535
    %7393 = vmatprep.subr.mxu0 %v1544
    %7394 = vmatpush1.msra.mxu0 %v1543
    %7395 = vmatprep.subr.mxu0 %v1552
    %7396 = vmatpush1.msra.mxu0 %v1551
    %7397 = vmatprep.subr.mxu0 %v1560
    %7398 = vmatpush1.msra.mxu0 %v1559
    %7399 = vmatprep.subr.mxu0 %v1568
    %7400 = vmatpush1.msra.mxu0 %v1567
    %7401 = vmatprep.subr.mxu0 %v1576
    %7402 = vmatpush1.msra.mxu0 %v1575
    %7403 = vmatprep.subr.mxu0 %v1584
    %7404 = vmatpush1.msra.mxu0 %v1583
    %7405 = vmatprep.subr.mxu0 %v1592
    %7406 = vmatpush1.msra.mxu0 %v1591
    %7407 = vmatprep.mubr.f32.mxu0 %v7198
    %7408 = vmatmul.mubr.f32.gmra.mrb[0].mxu0 %v7197
    %v7409 = vpop.f32.mrb[0].mxu0
    %v7410 = vadd.f32 0.0, %v7409
    %v7411 = vpop.f32.mrb[0].mxu0
    %v7412 = vadd.f32 0.0, %v7411
    %7413 = vdwg.mxu0
    %7414 = vmatprep.subr.mxu0 %v1346
    %7415 = vmatpush1.msra.mxu0 %v1345
    %7416 = vmatprep.subr.mxu0 %v1354
    %7417 = vmatpush1.msra.mxu0 %v1353
    %7418 = vmatprep.subr.mxu0 %v1362
    %7419 = vmatpush1.msra.mxu0 %v1361
    %7420 = vmatprep.subr.mxu0 %v1370
    %7421 = vmatpush1.msra.mxu0 %v1369
    %7422 = vmatprep.subr.mxu0 %v1378
    %7423 = vmatpush1.msra.mxu0 %v1377
    %7424 = vmatprep.subr.mxu0 %v1386
    %7425 = vmatpush1.msra.mxu0 %v1385
    %7426 = vmatprep.subr.mxu0 %v1394
    %7427 = vmatpush1.msra.mxu0 %v1393
    %7428 = vmatprep.subr.mxu0 %v1402
    %7429 = vmatpush1.msra.mxu0 %v1401
    %7430 = vmatprep.subr.mxu0 %v1410
    %7431 = vmatpush1.msra.mxu0 %v1409
    %7432 = vmatprep.subr.mxu0 %v1418
    %7433 = vmatpush1.msra.mxu0 %v1417
    %7434 = vmatprep.subr.mxu0 %v1426
    %7435 = vmatpush1.msra.mxu0 %v1425
    %7436 = vmatprep.subr.mxu0 %v1434
    %7437 = vmatpush1.msra.mxu0 %v1433
    %7438 = vmatprep.subr.mxu0 %v1442
    %7439 = vmatpush1.msra.mxu0 %v1441
    %7440 = vmatprep.subr.mxu0 %v1450
    %7441 = vmatpush1.msra.mxu0 %v1449
    %7442 = vmatprep.subr.mxu0 %v1458
    %7443 = vmatpush1.msra.mxu0 %v1457
    %7444 = vmatprep.subr.mxu0 %v1466
    %7445 = vmatpush1.msra.mxu0 %v1465
    %7446 = vmatprep.subr.mxu0 %v1474
    %7447 = vmatpush1.msra.mxu0 %v1473
    %7448 = vmatprep.subr.mxu0 %v1482
    %7449 = vmatpush1.msra.mxu0 %v1481
    %7450 = vmatprep.subr.mxu0 %v1490
    %7451 = vmatpush1.msra.mxu0 %v1489
    %7452 = vmatprep.subr.mxu0 %v1498
    %7453 = vmatpush1.msra.mxu0 %v1497
    %7454 = vmatprep.subr.mxu0 %v1506
    %7455 = vmatpush1.msra.mxu0 %v1505
    %7456 = vmatprep.subr.mxu0 %v1514
    %7457 = vmatpush1.msra.mxu0 %v1513
    %7458 = vmatprep.subr.mxu0 %v1522
    %7459 = vmatpush1.msra.mxu0 %v1521
    %7460 = vmatprep.subr.mxu0 %v1530
    %7461 = vmatpush1.msra.mxu0 %v1529
    %7462 = vmatprep.subr.mxu0 %v1538
    %7463 = vmatpush1.msra.mxu0 %v1537
    %7464 = vmatprep.subr.mxu0 %v1546
    %7465 = vmatpush1.msra.mxu0 %v1545
    %7466 = vmatprep.subr.mxu0 %v1554
    %7467 = vmatpush1.msra.mxu0 %v1553
    %7468 = vmatprep.subr.mxu0 %v1562
    %7469 = vmatpush1.msra.mxu0 %v1561
    %7470 = vmatprep.subr.mxu0 %v1570
    %7471 = vmatpush1.msra.mxu0 %v1569
    %7472 = vmatprep.subr.mxu0 %v1578
    %7473 = vmatpush1.msra.mxu0 %v1577
    %7474 = vmatprep.subr.mxu0 %v1586
    %7475 = vmatpush1.msra.mxu0 %v1585
    %7476 = vmatprep.subr.mxu0 %v1594
    %7477 = vmatpush1.msra.mxu0 %v1593
    %7478 = vmatprep.mubr.f32.mxu0 %v7198
    %7479 = vmatmul.mubr.f32.gmra.mrb[0].mxu0 %v7197
    %v7480 = vpop.f32.mrb[0].mxu0
    %v7481 = vadd.f32 0.0, %v7480
    %v7482 = vpop.f32.mrb[0].mxu0
    %v7483 = vadd.f32 0.0, %v7482
    %7484 = vdwg.mxu0
    %v7485 = vadd.f32 %v7187, %v7268
    %v7486 = vadd.f32 %v7188, %v7270
    %v7487 = vadd.f32 %v7189, %v7339
    %v7488 = vadd.f32 %v7190, %v7341
    %v7489 = vadd.f32 %v7191, %v7410
    %v7490 = vadd.f32 %v7192, %v7412
    %v7491 = vadd.f32 %v7193, %v7481
    %v7492 = vadd.f32 %v7194, %v7483
    %v7493 = vxor.u32 %v7179, 2147483648
    %v7494 = vxor.u32 %v7180, 2147483648
    %v7495 = vmul.f32 %v7493, 1.442695
    %v7496 = vpow.pop %v7495
    %v7497 = vmul.f32 %v7494, 1.442695
    %v7498 = vpow.pop %v7497
    %v7499 = vadd.f32 %v7496, 1.0
    %v7500 = vadd.f32 %v7498, 1.0
    %v7501 = vrcp.pop %v7499
    %v7502 = vmul.f32 1.0, %v7501
    %v7503 = vrcp.pop %v7500
    %v7504 = vmul.f32 1.0, %v7503
    %v7505 = vxor.u32 %v7181, 2147483648
    %v7506 = vxor.u32 %v7182, 2147483648
    %v7507 = vmul.f32 %v7505, 1.442695
    %v7508 = vpow.pop %v7507
    %v7509 = vmul.f32 %v7506, 1.442695
    %v7510 = vpow.pop %v7509
    %v7511 = vadd.f32 %v7508, 1.0
    %v7512 = vadd.f32 %v7510, 1.0
    %v7513 = vrcp.pop %v7511
    %v7514 = vmul.f32 1.0, %v7513
    %v7515 = vrcp.pop %v7512
    %v7516 = vmul.f32 1.0, %v7515
    %v7517 = vtanh.pop %v7183
    %v7518 = vtanh.pop %v7184
    %v7519 = vxor.u32 %v7185, 2147483648
    %v7520 = vxor.u32 %v7186, 2147483648
    %v7521 = vmul.f32 %v7519, 1.442695
    %v7522 = vpow.pop %v7521
    %v7523 = vmul.f32 %v7520, 1.442695
    %v7524 = vpow.pop %v7523
    %v7525 = vadd.f32 %v7522, 1.0
    %v7526 = vadd.f32 %v7524, 1.0
    %v7527 = vrcp.pop %v7525
    %v7528 = vmul.f32 1.0, %v7527
    %v7529 = vrcp.pop %v7526
    %v7530 = vmul.f32 1.0, %v7529
    %v7533 = vrot.slane %v6797, 6
    %v7534 = vrot.slane %v6798, 6
    %v7537 = vmul.f32 %v7514, %v7533
    %v7538 = vmul.f32 %v7516, %v7534
    %v7539 = vmul.f32 %v7502, %v7517
    %v7540 = vmul.f32 %v7504, %v7518
    %v7541 = vadd.f32 %v7537, %v7539
    %v7542 = vadd.f32 %v7538, %v7540
    %v7543 = vtanh.pop %v7541
    %v7544 = vtanh.pop %v7542
    %v7545 = vmul.f32 %v7528, %v7543
    %v7546 = vmul.f32 %v7530, %v7544
    %v7547 = vxor.u32 %v7485, 2147483648
    %v7548 = vxor.u32 %v7486, 2147483648
    %v7549 = vmul.f32 %v7547, 1.442695
    %v7550 = vpow.pop %v7549
    %v7551 = vmul.f32 %v7548, 1.442695
    %v7552 = vpow.pop %v7551
    %v7553 = vadd.f32 %v7550, 1.0
    %v7554 = vadd.f32 %v7552, 1.0
    %v7555 = vrcp.pop %v7553
    %v7556 = vmul.f32 1.0, %v7555
    %v7557 = vrcp.pop %v7554
    %v7558 = vmul.f32 1.0, %v7557
    %v7559 = vxor.u32 %v7487, 2147483648
    %v7560 = vxor.u32 %v7488, 2147483648
    %v7561 = vmul.f32 %v7559, 1.442695
    %v7562 = vpow.pop %v7561
    %v7563 = vmul.f32 %v7560, 1.442695
    %v7564 = vpow.pop %v7563
    %v7565 = vadd.f32 %v7562, 1.0
    %v7566 = vadd.f32 %v7564, 1.0
    %v7567 = vrcp.pop %v7565
    %v7568 = vmul.f32 1.0, %v7567
    %v7569 = vrcp.pop %v7566
    %v7570 = vmul.f32 1.0, %v7569
    %v7571 = vtanh.pop %v7489
    %v7572 = vtanh.pop %v7490
    %v7573 = vxor.u32 %v7491, 2147483648
    %v7574 = vxor.u32 %v7492, 2147483648
    %v7575 = vmul.f32 %v7573, 1.442695
    %v7576 = vpow.pop %v7575
    %v7577 = vmul.f32 %v7574, 1.442695
    %v7578 = vpow.pop %v7577
    %v7579 = vadd.f32 %v7576, 1.0
    %v7580 = vadd.f32 %v7578, 1.0
    %v7581 = vrcp.pop %v7579
    %v7582 = vmul.f32 1.0, %v7581
    %v7583 = vrcp.pop %v7580
    %v7584 = vmul.f32 1.0, %v7583
    %v7587 = vrot.slane %v6851, 2
    %v7588 = vrot.slane %v6852, 2
    %v7591 = vmul.f32 %v7568, %v7587
    %v7592 = vmul.f32 %v7570, %v7588
    %v7593 = vmul.f32 %v7556, %v7571
    %v7594 = vmul.f32 %v7558, %v7572
    %v7595 = vadd.f32 %v7591, %v7593
    %v7596 = vadd.f32 %v7592, %v7594
    %v7597 = vtanh.pop %v7595
    %v7598 = vtanh.pop %v7596
    %v7599 = vmul.f32 %v7582, %v7597
    %v7600 = vmul.f32 %v7584, %v7598
    %v7603 = vrot.slane %v7545, 1
    %v7604 = vrot.slane %v7546, 1
    %v7607 = vrot.slane %v7599, 1
    %v7608 = vrot.slane %v7600, 1
    %v7609 = vrot.slane %v7545, 6
    %v7610 = vrot.slane %v7546, 6
    %v7611 = vrot.slane %v7603, 6
    %v7612 = vrot.slane %v7604, 6
    %v7617 = vrot.slane %v7599, 7
    %v7618 = vrot.slane %v7600, 7
    %v7619 = vrot.slane %v7607, 7
    %v7620 = vrot.slane %v7608, 7
    %vm7625 = vcmask 1040384
    %v7626 = vsel %vm7625, %v7609, %v7617
    %v7627 = vsel %vm7625, %v7610, %v7618
    %v7628 = vsel %vm7625, %v7611, %v7619
    %v7629 = vsel %vm7625, %v7612, %v7620
    %v7630 = vld [vmem:[%s4] sm:$0xff]
    %v7631 = vld [vmem:[%s4 + $0x8] sm:$0xff]
    %v7632 = vld [vmem:[%s4 + $0x10] sm:$0xff]
    %v7633 = vld [vmem:[%s4 + $0x18] sm:$0xff]
    %v7634 = vld [vmem:[%s4 + $0x20] sm:$0xff]
    %v7635 = vld [vmem:[%s4 + $0x28] sm:$0xff]
    %v7636 = vld [vmem:[%s4 + $0x30] sm:$0xff]
    %v7637 = vld [vmem:[%s4 + $0x38] sm:$0xff]
    %v7638 = vld [vmem:[%s4 + $0x40] sm:$0xff]
    %v7639 = vld [vmem:[%s4 + $0x48] sm:$0xff]
    %v7640 = vld [vmem:[%s4 + $0x50] sm:$0xff]
    %v7641 = vld [vmem:[%s4 + $0x58] sm:$0xff]
    %v7642 = vld [vmem:[%s4 + $0x60] sm:$0xff]
    %v7643 = vld [vmem:[%s4 + $0x68] sm:$0xff]
    %v7644 = vld [vmem:[%s4 + $0x70] sm:$0xff]
    %v7645 = vld [vmem:[%s4 + $0x78] sm:$0xff]
    %v7646 = vld [vmem:[%s4 + $0x80] sm:$0xff]
    %v7647 = vld [vmem:[%s4 + $0x88] sm:$0xff]
    %v7648 = vld [vmem:[%s4 + $0x90] sm:$0xff]
    %v7649 = vld [vmem:[%s4 + $0x98] sm:$0xff]
    %v7650 = vld [vmem:[%s4 + $0xa0] sm:$0xff]
    %v7651 = vld [vmem:[%s4 + $0xa8] sm:$0xff]
    %v7652 = vld [vmem:[%s4 + $0xb0] sm:$0xff]
    %v7653 = vld [vmem:[%s4 + $0xb8] sm:$0xff]
    %v7654 = vld [vmem:[%s4 + $0xc0] sm:$0xff]
    %v7655 = vld [vmem:[%s4 + $0xc8] sm:$0xff]
    %v7656 = vld [vmem:[%s4 + $0xd0] sm:$0xff]
    %v7657 = vld [vmem:[%s4 + $0xd8] sm:$0xff]
    %v7658 = vld [vmem:[%s4 + $0xe0] sm:$0xff]
    %v7659 = vld [vmem:[%s4 + $0xe8] sm:$0xff]
    %v7660 = vld [vmem:[%s4 + $0xf0] sm:$0xff]
    %v7661 = vld [vmem:[%s4 + $0xf8] sm:$0xff]
    %v7662 = vld [vmem:[%s4 + $0x100] sm:$0xff]
    %v7663 = vld [vmem:[%s4 + $0x108] sm:$0xff]
    %v7664 = vld [vmem:[%s4 + $0x110] sm:$0xff]
    %v7665 = vld [vmem:[%s4 + $0x118] sm:$0xff]
    %v7666 = vld [vmem:[%s4 + $0x120] sm:$0xff]
    %v7667 = vld [vmem:[%s4 + $0x128] sm:$0xff]
    %v7668 = vld [vmem:[%s4 + $0x130] sm:$0xff]
    %v7669 = vld [vmem:[%s4 + $0x138] sm:$0xff]
    %v7670 = vld [vmem:[%s4 + $0x140] sm:$0xff]
    %v7671 = vld [vmem:[%s4 + $0x148] sm:$0xff]
    %v7672 = vld [vmem:[%s4 + $0x150] sm:$0xff]
    %v7673 = vld [vmem:[%s4 + $0x158] sm:$0xff]
    %v7674 = vld [vmem:[%s4 + $0x160] sm:$0xff]
    %v7675 = vld [vmem:[%s4 + $0x168] sm:$0xff]
    %v7676 = vld [vmem:[%s4 + $0x170] sm:$0xff]
    %v7677 = vld [vmem:[%s4 + $0x178] sm:$0xff]
    %v7678 = vld [vmem:[%s4 + $0x180] sm:$0xff]
    %v7679 = vld [vmem:[%s4 + $0x188] sm:$0xff]
    %v7680 = vld [vmem:[%s4 + $0x190] sm:$0xff]
    %v7681 = vld [vmem:[%s4 + $0x198] sm:$0xff]
    %v7682 = vld [vmem:[%s4 + $0x1a0] sm:$0xff]
    %v7683 = vld [vmem:[%s4 + $0x1a8] sm:$0xff]
    %v7684 = vld [vmem:[%s4 + $0x1b0] sm:$0xff]
    %v7685 = vld [vmem:[%s4 + $0x1b8] sm:$0xff]
    %v7686 = vld [vmem:[%s4 + $0x1c0] sm:$0xff]
    %v7687 = vld [vmem:[%s4 + $0x1c8] sm:$0xff]
    %v7688 = vld [vmem:[%s4 + $0x1d0] sm:$0xff]
    %v7689 = vld [vmem:[%s4 + $0x1d8] sm:$0xff]
    %v7690 = vld [vmem:[%s4 + $0x1e0] sm:$0xff]
    %v7691 = vld [vmem:[%s4 + $0x1e8] sm:$0xff]
    %v7692 = vld [vmem:[%s4 + $0x1f0] sm:$0xff]
    %v7693 = vld [vmem:[%s4 + $0x1f8] sm:$0xff]
    %v7694 = vld [vmem:[#allocation10] sm:$0x1]
    %v7696 = vlaneseq
    %v7697 = vshrl.u32 %v7696, 7
    %v7698 = vsub.s32 0, %v7697
    %v7699 = vrot.slane %v7694, %v7698
    %7701 = vmatprep.subr.mxu0 0.0
    %7702 = vmatpush1.msra.mxu0 %v7630
    %7703 = vmatprep.subr.mxu0 0.0
    %7704 = vmatpush1.msra.mxu0 %v7631
    %7705 = vmatprep.subr.mxu0 0.0
    %7706 = vmatpush1.msra.mxu0 %v7632
    %7707 = vmatprep.subr.mxu0 0.0
    %7708 = vmatpush1.msra.mxu0 %v7633
    %7709 = vmatprep.subr.mxu0 0.0
    %7710 = vmatpush1.msra.mxu0 %v7634
    %7711 = vmatprep.subr.mxu0 0.0
    %7712 = vmatpush1.msra.mxu0 %v7635
    %7713 = vmatprep.subr.mxu0 0.0
    %7714 = vmatpush1.msra.mxu0 %v7636
    %7715 = vmatprep.subr.mxu0 0.0
    %7716 = vmatpush1.msra.mxu0 %v7637
    %7717 = vmatprep.subr.mxu0 0.0
    %7718 = vmatpush1.msra.mxu0 %v7638
    %7719 = vmatprep.subr.mxu0 0.0
    %7720 = vmatpush1.msra.mxu0 %v7639
    %7721 = vmatprep.subr.mxu0 0.0
    %7722 = vmatpush1.msra.mxu0 %v7640
    %7723 = vmatprep.subr.mxu0 0.0
    %7724 = vmatpush1.msra.mxu0 %v7641
    %7725 = vmatprep.subr.mxu0 0.0
    %7726 = vmatpush1.msra.mxu0 %v7642
    %7727 = vmatprep.subr.mxu0 0.0
    %7728 = vmatpush1.msra.mxu0 %v7643
    %7729 = vmatprep.subr.mxu0 0.0
    %7730 = vmatpush1.msra.mxu0 %v7644
    %7731 = vmatprep.subr.mxu0 0.0
    %7732 = vmatpush1.msra.mxu0 %v7645
    %7733 = vmatprep.subr.mxu0 0.0
    %7734 = vmatpush1.msra.mxu0 %v7646
    %7735 = vmatprep.subr.mxu0 0.0
    %7736 = vmatpush1.msra.mxu0 %v7647
    %7737 = vmatprep.subr.mxu0 0.0
    %7738 = vmatpush1.msra.mxu0 %v7648
    %7739 = vmatprep.subr.mxu0 0.0
    %7740 = vmatpush1.msra.mxu0 %v7649
    %7741 = vmatprep.subr.mxu0 0.0
    %7742 = vmatpush1.msra.mxu0 %v7650
    %7743 = vmatprep.subr.mxu0 0.0
    %7744 = vmatpush1.msra.mxu0 %v7651
    %7745 = vmatprep.subr.mxu0 0.0
    %7746 = vmatpush1.msra.mxu0 %v7652
    %7747 = vmatprep.subr.mxu0 0.0
    %7748 = vmatpush1.msra.mxu0 %v7653
    %7749 = vmatprep.subr.mxu0 0.0
    %7750 = vmatpush1.msra.mxu0 %v7654
    %7751 = vmatprep.subr.mxu0 0.0
    %7752 = vmatpush1.msra.mxu0 %v7655
    %7753 = vmatprep.subr.mxu0 0.0
    %7754 = vmatpush1.msra.mxu0 %v7656
    %7755 = vmatprep.subr.mxu0 0.0
    %7756 = vmatpush1.msra.mxu0 %v7657
    %7757 = vmatprep.subr.mxu0 0.0
    %7758 = vmatpush1.msra.mxu0 %v7658
    %7759 = vmatprep.subr.mxu0 0.0
    %7760 = vmatpush1.msra.mxu0 %v7659
    %7761 = vmatprep.subr.mxu0 0.0
    %7762 = vmatpush1.msra.mxu0 %v7660
    %7763 = vmatprep.subr.mxu0 0.0
    %7764 = vmatpush1.msra.mxu0 %v7661
    %7765 = vmatprep.mubr.f32.mxu0 %v7627
    %7766 = vmatmul.mubr.f32.gmra.mrb[0].mxu0 %v7626
    %v7767 = vpop.f32.mrb[0].mxu0
    %v7768 = vadd.f32 %v7699, %v7767
    %v7769 = vpop.f32.mrb[0].mxu0
    %7770 = vdwg.mxu0
    %7771 = vmatprep.subr.mxu0 0.0
    %7772 = vmatpush1.msra.mxu0 %v7662
    %7773 = vmatprep.subr.mxu0 0.0
    %7774 = vmatpush1.msra.mxu0 %v7663
    %7775 = vmatprep.subr.mxu0 0.0
    %7776 = vmatpush1.msra.mxu0 %v7664
    %7777 = vmatprep.subr.mxu0 0.0
    %7778 = vmatpush1.msra.mxu0 %v7665
    %7779 = vmatprep.subr.mxu0 0.0
    %7780 = vmatpush1.msra.mxu0 %v7666
    %7781 = vmatprep.subr.mxu0 0.0
    %7782 = vmatpush1.msra.mxu0 %v7667
    %7783 = vmatprep.subr.mxu0 0.0
    %7784 = vmatpush1.msra.mxu0 %v7668
    %7785 = vmatprep.subr.mxu0 0.0
    %7786 = vmatpush1.msra.mxu0 %v7669
    %7787 = vmatprep.subr.mxu0 0.0
    %7788 = vmatpush1.msra.mxu0 %v7670
    %7789 = vmatprep.subr.mxu0 0.0
    %7790 = vmatpush1.msra.mxu0 %v7671
    %7791 = vmatprep.subr.mxu0 0.0
    %7792 = vmatpush1.msra.mxu0 %v7672
    %7793 = vmatprep.subr.mxu0 0.0
    %7794 = vmatpush1.msra.mxu0 %v7673
    %7795 = vmatprep.subr.mxu0 0.0
    %7796 = vmatpush1.msra.mxu0 %v7674
    %7797 = vmatprep.subr.mxu0 0.0
    %7798 = vmatpush1.msra.mxu0 %v7675
    %7799 = vmatprep.subr.mxu0 0.0
    %7800 = vmatpush1.msra.mxu0 %v7676
    %7801 = vmatprep.subr.mxu0 0.0
    %7802 = vmatpush1.msra.mxu0 %v7677
    %7803 = vmatprep.subr.mxu0 0.0
    %7804 = vmatpush1.msra.mxu0 %v7678
    %7805 = vmatprep.subr.mxu0 0.0
    %7806 = vmatpush1.msra.mxu0 %v7679
    %7807 = vmatprep.subr.mxu0 0.0
    %7808 = vmatpush1.msra.mxu0 %v7680
    %7809 = vmatprep.subr.mxu0 0.0
    %7810 = vmatpush1.msra.mxu0 %v7681
    %7811 = vmatprep.subr.mxu0 0.0
    %7812 = vmatpush1.msra.mxu0 %v7682
    %7813 = vmatprep.subr.mxu0 0.0
    %7814 = vmatpush1.msra.mxu0 %v7683
    %7815 = vmatprep.subr.mxu0 0.0
    %7816 = vmatpush1.msra.mxu0 %v7684
    %7817 = vmatprep.subr.mxu0 0.0
    %7818 = vmatpush1.msra.mxu0 %v7685
    %7819 = vmatprep.subr.mxu0 0.0
    %7820 = vmatpush1.msra.mxu0 %v7686
    %7821 = vmatprep.subr.mxu0 0.0
    %7822 = vmatpush1.msra.mxu0 %v7687
    %7823 = vmatprep.subr.mxu0 0.0
    %7824 = vmatpush1.msra.mxu0 %v7688
    %7825 = vmatprep.subr.mxu0 0.0
    %7826 = vmatpush1.msra.mxu0 %v7689
    %7827 = vmatprep.subr.mxu0 0.0
    %7828 = vmatpush1.msra.mxu0 %v7690
    %7829 = vmatprep.subr.mxu0 0.0
    %7830 = vmatpush1.msra.mxu0 %v7691
    %7831 = vmatprep.subr.mxu0 0.0
    %7832 = vmatpush1.msra.mxu0 %v7692
    %7833 = vmatprep.subr.mxu0 0.0
    %7834 = vmatpush1.msra.mxu0 %v7693
    %7835 = vmatprep.mubr.f32.mxu0 %v7629
    %7836 = vmatmul.mubr.f32.gmra.mrb[0].mxu0 %v7628
    %v7837 = vpop.f32.mrb[0].mxu0
    %v7838 = vadd.f32 %v7768, %v7837
    %v7839 = vpop.f32.mrb[0].mxu0
    %7840 = vdwg.mxu0
    %v7841 = vmax.f32 %v7838, 0.0
    %v7842 = vld [vmem:[%s6] sm:$0xff]
    %v7843 = vld [vmem:[%s6 + $0x8] sm:$0xff]
    %v7844 = vld [vmem:[%s6 + $0x10] sm:$0xff]
    %v7845 = vld [vmem:[%s6 + $0x18] sm:$0xff]
    %v7846 = vld [vmem:[%s6 + $0x20] sm:$0xff]
    %v7847 = vld [vmem:[%s6 + $0x28] sm:$0xff]
    %v7848 = vld [vmem:[%s6 + $0x30] sm:$0x3]
    %v7849 = vld [vmem:[#allocation12] sm:$0x1]
    %v7851 = vlaneseq
    %v7852 = vshrl.u32 %v7851, 7
    %v7853 = vsub.s32 0, %v7852
    %v7854 = vrot.slane %v7849, %v7853
    %vm7856 = vcmask 408576
    %v7858 = vsel %vm7856, %v7841, 0
    %vm7860 = vcmask 1041408
    %v7862 = vsel %vm7860, %v7848, 0
    %7864 = vmatprep.subr.mxu0 0.0
    %7865 = vmatpush1.msra.mxu0 %v7842
    %7866 = vmatprep.subr.mxu0 0.0
    %7867 = vmatpush1.msra.mxu0 %v7843
    %7868 = vmatprep.subr.mxu0 0.0
    %7869 = vmatpush1.msra.mxu0 %v7844
    %7870 = vmatprep.subr.mxu0 0.0
    %7871 = vmatpush1.msra.mxu0 %v7845
    %7872 = vmatprep.subr.mxu0 0.0
    %7873 = vmatpush1.msra.mxu0 %v7846
    %7874 = vmatprep.subr.mxu0 0.0
    %7875 = vmatpush1.msra.mxu0 %v7847
    %7876 = vmatprep.subr.mxu0 0.0
    %7877 = vmatpush1.msra.mxu0 %v7862
    %7878 = vmatprep.subr.mxu0 0.0
    %7879 = vmatpush1.msra.mxu0 0.0
    %7880 = vmatprep.subr.mxu0 0.0
    %7881 = vmatpush1.msra.mxu0 0.0
    %7882 = vmatprep.subr.mxu0 0.0
    %7883 = vmatpush1.msra.mxu0 0.0
    %7884 = vmatprep.subr.mxu0 0.0
    %7885 = vmatpush1.msra.mxu0 0.0
    %7886 = vmatprep.subr.mxu0 0.0
    %7887 = vmatpush1.msra.mxu0 0.0
    %7888 = vmatprep.subr.mxu0 0.0
    %7889 = vmatpush1.msra.mxu0 0.0
    %7890 = vmatprep.subr.mxu0 0.0
    %7891 = vmatpush1.msra.mxu0 0.0
    %7892 = vmatprep.subr.mxu0 0.0
    %7893 = vmatpush1.msra.mxu0 0.0
    %7894 = vmatprep.subr.mxu0 0.0
    %7895 = vmatpush1.msra.mxu0 0.0
    %7896 = vmatprep.subr.mxu0 0.0
    %7897 = vmatpush1.msra.mxu0 0.0
    %7898 = vmatprep.subr.mxu0 0.0
    %7899 = vmatpush1.msra.mxu0 0.0
    %7900 = vmatprep.subr.mxu0 0.0
    %7901 = vmatpush1.msra.mxu0 0.0
    %7902 = vmatprep.subr.mxu0 0.0
    %7903 = vmatpush1.msra.mxu0 0.0
    %7904 = vmatprep.subr.mxu0 0.0
    %7905 = vmatpush1.msra.mxu0 0.0
    %7906 = vmatprep.subr.mxu0 0.0
    %7907 = vmatpush1.msra.mxu0 0.0
    %7908 = vmatprep.subr.mxu0 0.0
    %7909 = vmatpush1.msra.mxu0 0.0
    %7910 = vmatprep.subr.mxu0 0.0
    %7911 = vmatpush1.msra.mxu0 0.0
    %7912 = vmatprep.subr.mxu0 0.0
    %7913 = vmatpush1.msra.mxu0 0.0
    %7914 = vmatprep.subr.mxu0 0.0
    %7915 = vmatpush1.msra.mxu0 0.0
    %7916 = vmatprep.subr.mxu0 0.0
    %7917 = vmatpush1.msra.mxu0 0.0
    %7918 = vmatprep.subr.mxu0 0.0
    %7919 = vmatpush1.msra.mxu0 0.0
    %7920 = vmatprep.subr.mxu0 0.0
    %7921 = vmatpush1.msra.mxu0 0.0
    %7922 = vmatprep.subr.mxu0 0.0
    %7923 = vmatpush1.msra.mxu0 0.0
    %7924 = vmatprep.subr.mxu0 0.0
    %7925 = vmatpush1.msra.mxu0 0.0
    %7926 = vmatprep.subr.mxu0 0.0
    %7927 = vmatpush1.msra.mxu0 0.0
    %7928 = vmatprep.mubr.f32.mxu0 0.0
    %7929 = vmatmul.mubr.f32.gmra.mrb[0].mxu0 %v7858
    %v7930 = vpop.f32.mrb[0].mxu0
    %v7931 = vadd.f32 %v7854, %v7930
    %v7932 = vpop.f32.mrb[0].mxu0
    %7933 = vdwg.mxu0
    %vm7934 = vcmask 17408
    %v7935 = vsel %vm7934, %v7931, -inf
    %7936 = vmax.xlane.f32.xlu0 %v7935
    %v7937 = vpop.xlane.xlu0 %7936
    %v7938 = vsub.f32 %v7931, %v7937
    %v7939 = vmul.f32 %v7938, 1.442695
    %v7940 = vpow.pop %v7939
    %v7941 = vsel %vm7934, %v7940, 0.0
    %7942 = vadd.xlane.f32.xlu0 %v7941
    %v7943 = vpop.xlane.xlu0 %7942
    %v7944 = vlog2.pop %v7943
    %v7945 = vmul.f32 %v7944, 0.6931472
    %v7946 = vadd.f32 %v7945, %v7937
    %v7947 = vsub.f32 %v7931, %v7946
    %7948 = vst.msk [vmem:[#allocation13] sm:$0x3] %vm7934, %v7947
    // Predicated region
    $region54: #{model_lstm_fc.1} parent=1 // pred_check
      _
    $region55: #{model_lstm_fc.1} parent=1 // pred_check_branch
      %7950 = sbr.rel (0) target = $region57
    $region56: #{model_lstm_fc.1} parent=1 // pred_region
      %s7952 = ssub.s32 32, 32
      %7953 = vsyncadd [#allocation6], %s7952
      %s7955 = sshll.u32 [#allocation13], 4
      %s7956 = int_to_ptr.vmem [resolvable:$true] %s7955
      %7958 = dma.vmem_to_hbm [thread:$0]  %s7956, 32, %s8, [#allocation6]
    $region57: #{model_lstm_fc.1} parent=1 // pred_fallthru
      _
    // Predicated region
    $region58: #{model_lstm_fc.1} parent=1 // pred_check
      _
    $region59: #{model_lstm_fc.1} parent=1 // pred_check_branch
      %7960 = sbr.rel (0) target = $region61
    $region60: #{model_lstm_fc.1} parent=1 // pred_region
      %7961 = dma.done [#allocation6], 32
    $region61: #{model_lstm_fc.1} parent=1 // pred_fallthru
      _
    %7962 = vsyncpa [#allocation5], 1
    %7963 = vsyncpa [#allocation8], 1
    %7964 = vsyncpa [#allocation11], 1
    %7965 = vsyncpa [#allocation6], 1

</llo_original>
